<compile_context>
chip_gen: v7x
topology: tpu7x:2x2x1
jax: 0.10.0
libtpu: 0.0.40
codegen_flags: <defaults>
</compile_context>

<pallas_src>
import math
from functools import partial

import jax
import jax.numpy as jnp
from jax.experimental import pallas as pl
from jax.experimental.pallas import tpu as pltpu

F32 = jnp.float32
EPS = 1e-5
_VMEM = pl.BlockSpec(memory_space=pltpu.MemorySpace.VMEM)


# ----------------------------- fused kernel ----------------------------------


def _fused_kernel(x_ref, p_ref, out_ref, *, off, B, S, H):
    Hd = H // 2
    SB = S * B

    def ld(name):                            # static slice of the packed buffer
        o, r, c = off[name]
        return p_ref[o:o + r, :c]

    def dot(a, b):
        return jnp.dot(a, b, preferred_element_type=F32)

    def sigmoid(z):                          # exact divide (review correctness note)
        return 1.0 / (1.0 + jnp.exp(-z))

    def erf_approx(z):
        # TODO(synk): swap to lax.erf once its Mosaic lowering is confirmed.
        # Abramowitz & Stegun 7.1.26, |abs err| < 1.5e-7 — exact-GELU quality.
        p = 0.3275911
        a1, a2, a3, a4, a5 = (0.254829592, -0.284496736, 1.421413741,
                              -1.453152027, 1.061405429)
        az = jnp.abs(z)
        t = 1.0 / (1.0 + p * az)
        poly = ((((a5 * t + a4) * t + a3) * t + a2) * t + a1) * t
        y = 1.0 - poly * jnp.exp(-az * az)
        return jnp.where(z < 0.0, -y, y)

    def gelu(z):                             # exact (erf-based), like nn.GELU()
        return 0.5 * z * (1.0 + erf_approx(z * 0.7071067811865476))

    def layernorm(v, gam, bet):              # over last (feature) axis, eps=1e-5
        mu = jnp.mean(v, axis=-1, keepdims=True)
        d = v - mu
        var = jnp.mean(d * d, axis=-1, keepdims=True)
        return d * jax.lax.rsqrt(var + EPS) * gam + bet

    # ---------------- feature extractor: Linear -> BN(folded) -> ReLU --------
    h = jnp.maximum(dot(x_ref[...], ld('feat_w')) + ld('feat_b'), 0.0)  # (SB,H)

    # ---------------- 3 residual conv blocks: per-tap matmuls ----------------
    zrow = jnp.zeros((B, H), F32)

    def shift_prev(v):                       # row i <- v[i-B], zeros for s == 0
        return jnp.concatenate([zrow, v[:SB - B, :]], axis=0)

    def shift_next(v):                       # row i <- v[i+B], zeros for s == S-1
        return jnp.concatenate([v[B:, :], zrow], axis=0)

    def conv3(v, nm):                        # Conv1d(k=3, pad=1) + folded BN
        y = dot(v, ld(nm + '_B'))
        y = y + dot(shift_prev(v), ld(nm + '_A'))
        y = y + dot(shift_next(v), ld(nm + '_C'))
        return y + ld(nm + '_b')

    for blk in range(3):
        y = jnp.maximum(conv3(h, f'conv{blk}1'), 0.0)
        y = conv3(y, f'conv{blk}2') + h                      # residual
        h = jnp.maximum(y, 0.0)

    # ---------------- positional encoding (dropout = identity) ---------------
    h = h + ld('pe')                                         # pre-expanded (SB,H)

    # ---------------- 2-layer bidirectional LSTM -----------------------------
    # gate-column layout: [i_f i_b | f_f f_b | g_f g_b | o_f o_b], Hd lanes each
    lane_g = jax.lax.broadcasted_iota(jnp.int32, (1, 8 * Hd), 1)
    fdir = ((lane_g % (2 * Hd)) < Hd).astype(F32)            # fwd-direction lanes
    bdir = 1.0 - fdir
    lane_h = jax.lax.broadcasted_iota(jnp.int32, (1, 2 * Hd), 1)
    fhalf = (lane_h < Hd).astype(F32)                        # fwd half of (.,2Hd)
    bhalf = 1.0 - fhalf

    # TODO(synk): hold whh resident in the MXU across the recurrence with
    # pltpu.matmul_push_rhs/matmul_acc_lhs/matmul_pop to shave the per-step
    # weight push; kept as plain jnp.dot for lowering robustness.
    for layer in range(2):
        wih = ld(f'lstm{layer}_wih')                         # (H_in, 8*Hd)
        whh = ld(f'lstm{layer}_whh')                         # (2*Hd, 8*Hd)
        bias = ld(f'lstm{layer}_b')                          # (1, 8*Hd)
        xg = dot(h, wih) + bias                              # hoisted x-projection
        xin = [xg[t * B:(t + 1) * B, :] * fdir
               + xg[(S - 1 - t) * B:(S - t) * B, :] * bdir for t in range(S)]
        hs_t = jnp.zeros((B, 2 * Hd), F32)                   # [h_fwd | h_bwd]
        cs_t = jnp.zeros((B, 2 * Hd), F32)
        hs = []
        for t in range(S):                                   # static unroll (S=8)
            pre = xin[t] + dot(hs_t, whh)                    # (B, 8*Hd)
            sg = sigmoid(pre)                                # ONE full-row EUP pass
            i_g = sg[:, 0:2 * Hd]                            # aligned 2*Hd blocks
            f_g = sg[:, 2 * Hd:4 * Hd]
            o_g = sg[:, 6 * Hd:8 * Hd]
            g_g = jnp.tanh(pre[:, 4 * Hd:6 * Hd])
            cs_t = f_g * cs_t + i_g * g_g
            hs_t = o_g * jnp.tanh(cs_t)
            hs.append(hs_t)                                  # live vregs, no scratch
        # re-time-align bwd outputs; off the recurrence critical path
        h = jnp.concatenate(
            [hs[s] * fhalf + hs[S - 1 - s] * bhalf for s in range(S)], axis=0)
    lstm_out = h                                             # (SB, H)

    # ---------------- batched multi-head attention ---------------------------
    # Reference quirk reproduced: (B,S,H) is fed to nn.MultiheadAttention with
    # batch_first=False => L=B (softmax over the batch axis), N=S, E=H.
    # Specialized to L=B=2 via a constant pair-swap matrix.
    pool, poolT, swap = ld('pool'), ld('poolT'), ld('swap')

    def mha(xv, nm):
        q = dot(xv, ld(nm + '_wq')) + ld(nm + '_bq')         # 1/sqrt(hd) folded in
        k = dot(xv, ld(nm + '_wk')) + ld(nm + '_bk')
        v = dot(xv, ld(nm + '_wv')) + ld(nm + '_bv')
        k_sw = dot(swap, k)                                  # partner row (other l)
        v_sw = dot(swap, v)
        s_same = dot(q * k, pool)                            # (SB, heads)
        s_cross = dot(q * k_sw, pool)
        m = jnp.maximum(s_same, s_cross)
        e0 = jnp.exp(s_same - m)
        e1 = jnp.exp(s_cross - m)
        den = e0 + e1                                        # exact softmax divide
        ctx = dot(e0 / den, poolT) * v + dot(e1 / den, poolT) * v_sw
        return dot(ctx, ld(nm + '_wo')) + ld(nm + '_bo')

    # ---------------- (last) transformer block — dead-block skip -------------
    att = mha(lstm_out, 'tb')
    x1 = layernorm(lstm_out + att, ld('ln1_g'), ld('ln1_b'))
    ff = dot(gelu(dot(x1, ld('ff_w1')) + ld('ff_b1')), ld('ff_w2')) + ld('ff_b2')
    x2 = layernorm(x1 + ff, ld('ln2_g'), ld('ln2_b'))

    # ---------------- final attention + mean over seq + classifier -----------
    att2 = mha(x2, 'fin')
    xm = dot(ld('mean_mat'), att2)                           # (B, H) mean over S
    z = jnp.maximum(dot(xm, ld('cls_w1')) + ld('cls_b1'), 0.0)   # BN folded
    out_ref[...] = dot(z, ld('cls_w2')) + ld('cls_b2')


# ----------------------------- wrapper ----------------------------------------


def build_forward(offsets, *, B, S, C, H, num_classes):
    kernel = partial(_fused_kernel, off=offsets, B=B, S=S, H=H)

    @jax.jit
    def fwd(x, packed):
        # x: (B, C, S) PyTorch layout -> 2-D time-major rows (s, b)
        x_tm = jnp.transpose(x, (2, 0, 1)).reshape(S * B, C)
        return pl.pallas_call(
            kernel,
            out_shape=jax.ShapeDtypeStruct((B, num_classes), F32),
            in_specs=[_VMEM, _VMEM],
            out_specs=_VMEM,
        )(x_tm, packed)

    return fwd


# ----------------------------- parameter packing -------------------------------


class _Packer:
    """Concatenate all params into one tile-padded (rows,128) f32 buffer."""

    def __init__(self, width=128):
        self.width = width
        self.chunks = []
        self.off = {}
        self.rows = 0

    def add(self, name, a):
        a = jnp.asarray(a, F32)
        if a.ndim == 1:
            a = a.reshape(1, -1)
        r, c = a.shape
        assert c <= self.width, (name, a.shape)
        rp = ((r + 7) // 8) * 8                              # sublane-align rows
        self.chunks.append(jnp.pad(a, ((0, rp - r), (0, self.width - c))))
        self.off[name] = (self.rows, r, c)
        self.rows += rp

    def pack(self):
        return jnp.concatenate(self.chunks, axis=0), self.off


def _bn_fold(w, b, bn, eps=EPS):
    # y = ((x@w + b) - mean)/sqrt(var+eps)*gamma + beta == x@(w*s) + (b*s + t)
    s = bn['gamma'] / jnp.sqrt(bn['var'] + eps)
    t = bn['beta'] - bn['mean'] * s
    return w * s[None, :], b * s[None, :] + t[None, :]


def pack_params(p, *, S, B, num_heads):
    """Built ONCE at param-creation time; returns (packed_buffer, offsets)."""
    assert B == 2, "MHA pair-swap softmax specialization requires batch == 2"
    H = p['feat_w'].shape[1]
    Hd = H // 2
    hd = H // num_heads
    R = S * B
    pk = _Packer(128)

    # feature extractor (BN folded)
    w, b = _bn_fold(p['feat_w'], p['feat_b'], p['feat_bn'])
    pk.add('feat_w', w)
    pk.add('feat_b', b)

    # residual conv blocks: fold BN, split taps [-1 | 0 | +1]
    for i, rb in enumerate(p['res_blocks']):
        for j in (1, 2):
            w, b = _bn_fold(rb[f'w{j}'], rb[f'b{j}'], rb[f'bn{j}'])
            nm = f'conv{i}{j}'
            pk.add(nm + '_A', w[:H])
            pk.add(nm + '_B', w[H:2 * H])
            pk.add(nm + '_C', w[2 * H:])
            pk.add(nm + '_b', b)

    # positional encoding, pre-expanded over batch (row s*B+b gets pe[s])
    pk.add('pe', jnp.repeat(p['pe'][:S], B, axis=0))

    # LSTM: interleave fwd/bwd per gate block -> [i_f i_b | f_f f_b | g_f g_b | o_f o_b]
    for li, lp in enumerate(p['lstm']):
        In = lp['wih_f'].shape[0]
        wih = jnp.zeros((In, 8 * Hd), F32)
        whh = jnp.zeros((2 * Hd, 8 * Hd), F32)
        bias = jnp.zeros((1, 8 * Hd), F32)
        for g in range(4):                                   # PyTorch order i,f,g,o
            col = g * 2 * Hd
            src = slice(g * Hd, (g + 1) * Hd)
            wih = wih.at[:, col:col + Hd].set(lp['wih_f'][:, src])
            wih = wih.at[:, col + Hd:col + 2 * Hd].set(lp['wih_b'][:, src])
            whh = whh.at[:Hd, col:col + Hd].set(lp['whh_f'][:, src])
            whh = whh.at[Hd:, col + Hd:col + 2 * Hd].set(lp['whh_b'][:, src])
            bias = bias.at[:, col:col + Hd].set(lp['b_f'][:, src])
            bias = bias.at[:, col + Hd:col + 2 * Hd].set(lp['b_b'][:, src])
        pk.add(f'lstm{li}_wih', wih)
        pk.add(f'lstm{li}_whh', whh)
        pk.add(f'lstm{li}_b', bias)

    # attention blocks: split q/k/v and fold 1/sqrt(head_dim) into q
    def add_attn(nm, a):
        scale = 1.0 / math.sqrt(hd)
        w_in, b_in = a['w_in'], a['b_in']
        pk.add(nm + '_wq', w_in[:, :H] * scale)
        pk.add(nm + '_bq', b_in[:, :H] * scale)
        pk.add(nm + '_wk', w_in[:, H:2 * H])
        pk.add(nm + '_bk', b_in[:, H:2 * H])
        pk.add(nm + '_wv', w_in[:, 2 * H:])
        pk.add(nm + '_bv', b_in[:, 2 * H:])
        pk.add(nm + '_wo', a['w_out'])
        pk.add(nm + '_bo', a['b_out'])

    tb = p['transformers'][-1]         # dead-block skip (reference feeds lstm_out
    add_attn('tb', tb['attn'])         # into every block; only the last survives)
    pk.add('ln1_g', tb['ln1_g'])
    pk.add('ln1_b', tb['ln1_b'])
    pk.add('ff_w1', tb['ff_w1'])
    pk.add('ff_b1', tb['ff_b1'])
    pk.add('ff_w2', tb['ff_w2'])
    pk.add('ff_b2', tb['ff_b2'])
    pk.add('ln2_g', tb['ln2_g'])
    pk.add('ln2_b', tb['ln2_b'])
    add_attn('fin', p['final_attn'])

    # classifier (BN folded into its first linear)
    w, b = _bn_fold(p['cls_w1'], p['cls_b1'], p['cls_bn'])
    pk.add('cls_w1', w)
    pk.add('cls_b1', b)
    pk.add('cls_w2', p['cls_w2'])
    pk.add('cls_b2', p['cls_b2'])

    # constants for batched MHA / pooling (built once here, not per call)
    head_of = jnp.arange(H) // hd
    pool = (head_of[:, None] == jnp.arange(num_heads)[None, :]).astype(F32)
    pk.add('pool', pool)
    pk.add('poolT', pool.T)
    r_idx = jnp.arange(R)
    pk.add('swap', jnp.zeros((R, R), F32).at[r_idx, r_idx ^ 1].set(1.0))
    pk.add('mean_mat', jnp.zeros((B, R), F32).at[r_idx % B, r_idx].set(1.0 / S))

    return pk.pack()


# ----------------------------- parameters --------------------------------------


def positional_encoding(max_len, d_model):
    position = jnp.arange(max_len, dtype=F32)[:, None]
    div_term = jnp.exp(jnp.arange(0, d_model, 2, dtype=F32)
                       * (-math.log(10000.0) / d_model))
    pe = jnp.zeros((max_len, d_model), F32)
    pe = pe.at[:, 0::2].set(jnp.sin(position * div_term))
    pe = pe.at[:, 1::2].set(jnp.cos(position * div_term))
    return pe


class Init:
    def __init__(self, key):
        self._key = key

    def normal(self, shape, scale=0.08):
        self._key, sub = jax.random.split(self._key)
        return (scale * jax.random.normal(sub, shape)).astype(F32)


def make_params(key, *, input_size, hidden, num_classes, max_len):
    g = Init(key)
    H, Hd = hidden, hidden // 2
    zeros = lambda *s: jnp.zeros(s, F32)

    def bn(n):   # eval-mode running stats (init values); real stats fold the same way
        return dict(gamma=jnp.ones((n,), F32), beta=jnp.zeros((n,), F32),
                    mean=jnp.zeros((n,), F32), var=jnp.ones((n,), F32))

    def res_block():
        # conv weights in im2col layout (3*H, H), rows = [tap-1 | tap0 | tap+1]
        return dict(w1=g.normal((3 * H, H)), b1=zeros(1, H), bn1=bn(H),
                    w2=g.normal((3 * H, H)), b2=zeros(1, H), bn2=bn(H))

    def lstm_layer(in_size):
        # per-direction weights, gate column order [i | f | g | o]
        return dict(wih_f=g.normal((in_size, 4 * Hd)),
                    wih_b=g.normal((in_size, 4 * Hd)),
                    whh_f=g.normal((Hd, 4 * Hd)),
                    whh_b=g.normal((Hd, 4 * Hd)),
                    b_f=zeros(1, 4 * Hd), b_b=zeros(1, 4 * Hd))

    def attn():
        return dict(w_in=g.normal((H, 3 * H)), b_in=zeros(1, 3 * H),
                    w_out=g.normal((H, H)), b_out=zeros(1, H))

    def tblock():
        return dict(attn=attn(),
                    ln1_g=jnp.ones((1, H), F32), ln1_b=zeros(1, H),
                    ff_w1=g.normal((H, 4 * H)), ff_b1=zeros(1, 4 * H),
                    ff_w2=g.normal((4 * H, H)), ff_b2=zeros(1, H),
                    ln2_g=jnp.ones((1, H), F32), ln2_b=zeros(1, H))

    return dict(
        feat_w=g.normal((input_size, H)), feat_b=zeros(1, H), feat_bn=bn(H),
        res_blocks=[res_block() for _ in range(3)],
        pe=positional_encoding(max_len, H),
        lstm=[lstm_layer(H), lstm_layer(2 * Hd)],
        transformers=[tblock() for _ in range(2)],
        final_attn=attn(),
        cls_w1=g.normal((H, Hd)), cls_b1=zeros(1, Hd), cls_bn=bn(Hd),
        cls_w2=g.normal((Hd, num_classes)), cls_b2=zeros(1, num_classes),
    )


# ----------------------------- main ---------------------------------------------


if __name__ == "__main__":
    B, C, S = 2, 16, 8          # batch, input_size (channels), seq_len
    H, NUM_CLASSES, NUM_HEADS = 32, 64, 8

    key = jax.random.PRNGKey(0)
    pkey, xkey = jax.random.split(key)
    params = make_params(pkey, input_size=C, hidden=H,
                         num_classes=NUM_CLASSES, max_len=S)
    packed, offsets = pack_params(params, S=S, B=B, num_heads=NUM_HEADS)
    x = jax.random.normal(xkey, (B, C, S), dtype=F32)

    fwd = build_forward(offsets, B=B, S=S, C=C, H=H, num_classes=NUM_CLASSES)
    out = jax.block_until_ready(fwd(x, packed))

    assert out.shape == (B, NUM_CLASSES), out.shape
    assert bool(jnp.all(jnp.isfinite(out)))
    print("KERNEL_OK")
</pallas_src>

<mosaic_0001>
module attributes {stable_mosaic.version = 11 : i64} {
  func.func @_fused_kernel(%arg0: memref<16x16xf32, #tpu.memory_space<vmem>>, %arg1: memref<1464x128xf32, #tpu.memory_space<vmem>>, %arg2: memref<2x64xf32, #tpu.memory_space<vmem>>) attributes {dimension_semantics = [], scalar_prefetch = 0 : i64, scratch_operands = 0 : i64, tpu.core_type = #tpu.core_type<tc>} {
    %c0 = arith.constant 0 : index
    %c0_0 = arith.constant 0 : index
    %0 = vector.load %arg0[%c0, %c0_0] : memref<16x16xf32, #tpu.memory_space<vmem>>, vector<16x16xf32>
    %c0_1 = arith.constant 0 : index
    %c0_2 = arith.constant 0 : index
    %1 = vector.load %arg1[%c0_1, %c0_2] : memref<1464x128xf32, #tpu.memory_space<vmem>>, vector<16x32xf32>
    %cst = arith.constant dense<0.000000e+00> : vector<16x32xf32>
    %2 = tpu.matmul %0, %1, %cst {dimension_numbers = #tpu.dot_dimension_numbers<[1], [0], [0], [1], [0, 0, 1, 1], [], []>} : vector<16x16xf32>, vector<16x32xf32>, vector<16x32xf32> -> vector<16x32xf32>
    %c16 = arith.constant 16 : index
    %c0_3 = arith.constant 0 : index
    %3 = vector.load %arg1[%c16, %c0_3] : memref<1464x128xf32, #tpu.memory_space<vmem>>, vector<1x32xf32>
    %4 = vector.broadcast %3 : vector<1x32xf32> to vector<16x32xf32>
    %5 = arith.addf %2, %4 : vector<16x32xf32>
    %cst_4 = arith.constant 0.000000e+00 : f32
    %6 = vector.broadcast %cst_4 : f32 to vector<16x32xf32>
    %7 = arith.maximumf %5, %6 : vector<16x32xf32>
    %cst_5 = arith.constant 0.000000e+00 : f32
    %8 = vector.broadcast %cst_5 : f32 to vector<2x32xf32>
    %c56 = arith.constant 56 : index
    %c0_6 = arith.constant 0 : index
    %9 = vector.load %arg1[%c56, %c0_6] : memref<1464x128xf32, #tpu.memory_space<vmem>>, vector<32x32xf32>
    %cst_7 = arith.constant dense<0.000000e+00> : vector<16x32xf32>
    %10 = tpu.matmul %7, %9, %cst_7 {dimension_numbers = #tpu.dot_dimension_numbers<[1], [0], [0], [1], [0, 0, 1, 1], [], []>} : vector<16x32xf32>, vector<32x32xf32>, vector<16x32xf32> -> vector<16x32xf32>
    %11 = vector.extract_strided_slice %7 {offsets = [0, 0], sizes = [14, 32], strides = [1, 1]} : vector<16x32xf32> to vector<14x32xf32>
    %12 = tpu.concatenate %8, %11 in 0 : vector<2x32xf32>, vector<14x32xf32> -> vector<16x32xf32>
    %c24 = arith.constant 24 : index
    %c0_8 = arith.constant 0 : index
    %13 = vector.load %arg1[%c24, %c0_8] : memref<1464x128xf32, #tpu.memory_space<vmem>>, vector<32x32xf32>
    %cst_9 = arith.constant dense<0.000000e+00> : vector<16x32xf32>
    %14 = tpu.matmul %12, %13, %cst_9 {dimension_numbers = #tpu.dot_dimension_numbers<[1], [0], [0], [1], [0, 0, 1, 1], [], []>} : vector<16x32xf32>, vector<32x32xf32>, vector<16x32xf32> -> vector<16x32xf32>
    %15 = arith.addf %10, %14 : vector<16x32xf32>
    %16 = vector.extract_strided_slice %7 {offsets = [2, 0], sizes = [14, 32], strides = [1, 1]} : vector<16x32xf32> to vector<14x32xf32>
    %17 = tpu.concatenate %16, %8 in 0 : vector<14x32xf32>, vector<2x32xf32> -> vector<16x32xf32>
    %c88 = arith.constant 88 : index
    %c0_10 = arith.constant 0 : index
    %18 = vector.load %arg1[%c88, %c0_10] : memref<1464x128xf32, #tpu.memory_space<vmem>>, vector<32x32xf32>
    %cst_11 = arith.constant dense<0.000000e+00> : vector<16x32xf32>
    %19 = tpu.matmul %17, %18, %cst_11 {dimension_numbers = #tpu.dot_dimension_numbers<[1], [0], [0], [1], [0, 0, 1, 1], [], []>} : vector<16x32xf32>, vector<32x32xf32>, vector<16x32xf32> -> vector<16x32xf32>
    %20 = arith.addf %15, %19 : vector<16x32xf32>
    %c120 = arith.constant 120 : index
    %c0_12 = arith.constant 0 : index
    %21 = vector.load %arg1[%c120, %c0_12] : memref<1464x128xf32, #tpu.memory_space<vmem>>, vector<1x32xf32>
    %22 = vector.broadcast %21 : vector<1x32xf32> to vector<16x32xf32>
    %23 = arith.addf %20, %22 : vector<16x32xf32>
    %cst_13 = arith.constant 0.000000e+00 : f32
    %24 = vector.broadcast %cst_13 : f32 to vector<16x32xf32>
    %25 = arith.maximumf %23, %24 : vector<16x32xf32>
    %c160 = arith.constant 160 : index
    %c0_14 = arith.constant 0 : index
    %26 = vector.load %arg1[%c160, %c0_14] : memref<1464x128xf32, #tpu.memory_space<vmem>>, vector<32x32xf32>
    %cst_15 = arith.constant dense<0.000000e+00> : vector<16x32xf32>
    %27 = tpu.matmul %25, %26, %cst_15 {dimension_numbers = #tpu.dot_dimension_numbers<[1], [0], [0], [1], [0, 0, 1, 1], [], []>} : vector<16x32xf32>, vector<32x32xf32>, vector<16x32xf32> -> vector<16x32xf32>
    %28 = vector.extract_strided_slice %25 {offsets = [0, 0], sizes = [14, 32], strides = [1, 1]} : vector<16x32xf32> to vector<14x32xf32>
    %29 = tpu.concatenate %8, %28 in 0 : vector<2x32xf32>, vector<14x32xf32> -> vector<16x32xf32>
    %c128 = arith.constant 128 : index
    %c0_16 = arith.constant 0 : index
    %30 = vector.load %arg1[%c128, %c0_16] : memref<1464x128xf32, #tpu.memory_space<vmem>>, vector<32x32xf32>
    %cst_17 = arith.constant dense<0.000000e+00> : vector<16x32xf32>
    %31 = tpu.matmul %29, %30, %cst_17 {dimension_numbers = #tpu.dot_dimension_numbers<[1], [0], [0], [1], [0, 0, 1, 1], [], []>} : vector<16x32xf32>, vector<32x32xf32>, vector<16x32xf32> -> vector<16x32xf32>
    %32 = arith.addf %27, %31 : vector<16x32xf32>
    %33 = vector.extract_strided_slice %25 {offsets = [2, 0], sizes = [14, 32], strides = [1, 1]} : vector<16x32xf32> to vector<14x32xf32>
    %34 = tpu.concatenate %33, %8 in 0 : vector<14x32xf32>, vector<2x32xf32> -> vector<16x32xf32>
    %c192 = arith.constant 192 : index
    %c0_18 = arith.constant 0 : index
    %35 = vector.load %arg1[%c192, %c0_18] : memref<1464x128xf32, #tpu.memory_space<vmem>>, vector<32x32xf32>
    %cst_19 = arith.constant dense<0.000000e+00> : vector<16x32xf32>
    %36 = tpu.matmul %34, %35, %cst_19 {dimension_numbers = #tpu.dot_dimension_numbers<[1], [0], [0], [1], [0, 0, 1, 1], [], []>} : vector<16x32xf32>, vector<32x32xf32>, vector<16x32xf32> -> vector<16x32xf32>
    %37 = arith.addf %32, %36 : vector<16x32xf32>
    %c224 = arith.constant 224 : index
    %c0_20 = arith.constant 0 : index
    %38 = vector.load %arg1[%c224, %c0_20] : memref<1464x128xf32, #tpu.memory_space<vmem>>, vector<1x32xf32>
    %39 = vector.broadcast %38 : vector<1x32xf32> to vector<16x32xf32>
    %40 = arith.addf %37, %39 : vector<16x32xf32>
    %41 = arith.addf %40, %7 : vector<16x32xf32>
    %cst_21 = arith.constant 0.000000e+00 : f32
    %42 = vector.broadcast %cst_21 : f32 to vector<16x32xf32>
    %43 = arith.maximumf %41, %42 : vector<16x32xf32>
    %c264 = arith.constant 264 : index
    %c0_22 = arith.constant 0 : index
    %44 = vector.load %arg1[%c264, %c0_22] : memref<1464x128xf32, #tpu.memory_space<vmem>>, vector<32x32xf32>
    %cst_23 = arith.constant dense<0.000000e+00> : vector<16x32xf32>
    %45 = tpu.matmul %43, %44, %cst_23 {dimension_numbers = #tpu.dot_dimension_numbers<[1], [0], [0], [1], [0, 0, 1, 1], [], []>} : vector<16x32xf32>, vector<32x32xf32>, vector<16x32xf32> -> vector<16x32xf32>
    %46 = vector.extract_strided_slice %43 {offsets = [0, 0], sizes = [14, 32], strides = [1, 1]} : vector<16x32xf32> to vector<14x32xf32>
    %47 = tpu.concatenate %8, %46 in 0 : vector<2x32xf32>, vector<14x32xf32> -> vector<16x32xf32>
    %c232 = arith.constant 232 : index
    %c0_24 = arith.constant 0 : index
    %48 = vector.load %arg1[%c232, %c0_24] : memref<1464x128xf32, #tpu.memory_space<vmem>>, vector<32x32xf32>
    %cst_25 = arith.constant dense<0.000000e+00> : vector<16x32xf32>
    %49 = tpu.matmul %47, %48, %cst_25 {dimension_numbers = #tpu.dot_dimension_numbers<[1], [0], [0], [1], [0, 0, 1, 1], [], []>} : vector<16x32xf32>, vector<32x32xf32>, vector<16x32xf32> -> vector<16x32xf32>
    %50 = arith.addf %45, %49 : vector<16x32xf32>
    %51 = vector.extract_strided_slice %43 {offsets = [2, 0], sizes = [14, 32], strides = [1, 1]} : vector<16x32xf32> to vector<14x32xf32>
    %52 = tpu.concatenate %51, %8 in 0 : vector<14x32xf32>, vector<2x32xf32> -> vector<16x32xf32>
    %c296 = arith.constant 296 : index
    %c0_26 = arith.constant 0 : index
    %53 = vector.load %arg1[%c296, %c0_26] : memref<1464x128xf32, #tpu.memory_space<vmem>>, vector<32x32xf32>
    %cst_27 = arith.constant dense<0.000000e+00> : vector<16x32xf32>
    %54 = tpu.matmul %52, %53, %cst_27 {dimension_numbers = #tpu.dot_dimension_numbers<[1], [0], [0], [1], [0, 0, 1, 1], [], []>} : vector<16x32xf32>, vector<32x32xf32>, vector<16x32xf32> -> vector<16x32xf32>
    %55 = arith.addf %50, %54 : vector<16x32xf32>
    %c328 = arith.constant 328 : index
    %c0_28 = arith.constant 0 : index
    %56 = vector.load %arg1[%c328, %c0_28] : memref<1464x128xf32, #tpu.memory_space<vmem>>, vector<1x32xf32>
    %57 = vector.broadcast %56 : vector<1x32xf32> to vector<16x32xf32>
    %58 = arith.addf %55, %57 : vector<16x32xf32>
    %cst_29 = arith.constant 0.000000e+00 : f32
    %59 = vector.broadcast %cst_29 : f32 to vector<16x32xf32>
    %60 = arith.maximumf %58, %59 : vector<16x32xf32>
    %c368 = arith.constant 368 : index
    %c0_30 = arith.constant 0 : index
    %61 = vector.load %arg1[%c368, %c0_30] : memref<1464x128xf32, #tpu.memory_space<vmem>>, vector<32x32xf32>
    %cst_31 = arith.constant dense<0.000000e+00> : vector<16x32xf32>
    %62 = tpu.matmul %60, %61, %cst_31 {dimension_numbers = #tpu.dot_dimension_numbers<[1], [0], [0], [1], [0, 0, 1, 1], [], []>} : vector<16x32xf32>, vector<32x32xf32>, vector<16x32xf32> -> vector<16x32xf32>
    %63 = vector.extract_strided_slice %60 {offsets = [0, 0], sizes = [14, 32], strides = [1, 1]} : vector<16x32xf32> to vector<14x32xf32>
    %64 = tpu.concatenate %8, %63 in 0 : vector<2x32xf32>, vector<14x32xf32> -> vector<16x32xf32>
    %c336 = arith.constant 336 : index
    %c0_32 = arith.constant 0 : index
    %65 = vector.load %arg1[%c336, %c0_32] : memref<1464x128xf32, #tpu.memory_space<vmem>>, vector<32x32xf32>
    %cst_33 = arith.constant dense<0.000000e+00> : vector<16x32xf32>
    %66 = tpu.matmul %64, %65, %cst_33 {dimension_numbers = #tpu.dot_dimension_numbers<[1], [0], [0], [1], [0, 0, 1, 1], [], []>} : vector<16x32xf32>, vector<32x32xf32>, vector<16x32xf32> -> vector<16x32xf32>
    %67 = arith.addf %62, %66 : vector<16x32xf32>
    %68 = vector.extract_strided_slice %60 {offsets = [2, 0], sizes = [14, 32], strides = [1, 1]} : vector<16x32xf32> to vector<14x32xf32>
    %69 = tpu.concatenate %68, %8 in 0 : vector<14x32xf32>, vector<2x32xf32> -> vector<16x32xf32>
    %c400 = arith.constant 400 : index
    %c0_34 = arith.constant 0 : index
    %70 = vector.load %arg1[%c400, %c0_34] : memref<1464x128xf32, #tpu.memory_space<vmem>>, vector<32x32xf32>
    %cst_35 = arith.constant dense<0.000000e+00> : vector<16x32xf32>
    %71 = tpu.matmul %69, %70, %cst_35 {dimension_numbers = #tpu.dot_dimension_numbers<[1], [0], [0], [1], [0, 0, 1, 1], [], []>} : vector<16x32xf32>, vector<32x32xf32>, vector<16x32xf32> -> vector<16x32xf32>
    %72 = arith.addf %67, %71 : vector<16x32xf32>
    %c432 = arith.constant 432 : index
    %c0_36 = arith.constant 0 : index
    %73 = vector.load %arg1[%c432, %c0_36] : memref<1464x128xf32, #tpu.memory_space<vmem>>, vector<1x32xf32>
    %74 = vector.broadcast %73 : vector<1x32xf32> to vector<16x32xf32>
    %75 = arith.addf %72, %74 : vector<16x32xf32>
    %76 = arith.addf %75, %43 : vector<16x32xf32>
    %cst_37 = arith.constant 0.000000e+00 : f32
    %77 = vector.broadcast %cst_37 : f32 to vector<16x32xf32>
    %78 = arith.maximumf %76, %77 : vector<16x32xf32>
    %c472 = arith.constant 472 : index
    %c0_38 = arith.constant 0 : index
    %79 = vector.load %arg1[%c472, %c0_38] : memref<1464x128xf32, #tpu.memory_space<vmem>>, vector<32x32xf32>
    %cst_39 = arith.constant dense<0.000000e+00> : vector<16x32xf32>
    %80 = tpu.matmul %78, %79, %cst_39 {dimension_numbers = #tpu.dot_dimension_numbers<[1], [0], [0], [1], [0, 0, 1, 1], [], []>} : vector<16x32xf32>, vector<32x32xf32>, vector<16x32xf32> -> vector<16x32xf32>
    %81 = vector.extract_strided_slice %78 {offsets = [0, 0], sizes = [14, 32], strides = [1, 1]} : vector<16x32xf32> to vector<14x32xf32>
    %82 = tpu.concatenate %8, %81 in 0 : vector<2x32xf32>, vector<14x32xf32> -> vector<16x32xf32>
    %c440 = arith.constant 440 : index
    %c0_40 = arith.constant 0 : index
    %83 = vector.load %arg1[%c440, %c0_40] : memref<1464x128xf32, #tpu.memory_space<vmem>>, vector<32x32xf32>
    %cst_41 = arith.constant dense<0.000000e+00> : vector<16x32xf32>
    %84 = tpu.matmul %82, %83, %cst_41 {dimension_numbers = #tpu.dot_dimension_numbers<[1], [0], [0], [1], [0, 0, 1, 1], [], []>} : vector<16x32xf32>, vector<32x32xf32>, vector<16x32xf32> -> vector<16x32xf32>
    %85 = arith.addf %80, %84 : vector<16x32xf32>
    %86 = vector.extract_strided_slice %78 {offsets = [2, 0], sizes = [14, 32], strides = [1, 1]} : vector<16x32xf32> to vector<14x32xf32>
    %87 = tpu.concatenate %86, %8 in 0 : vector<14x32xf32>, vector<2x32xf32> -> vector<16x32xf32>
    %c504 = arith.constant 504 : index
    %c0_42 = arith.constant 0 : index
    %88 = vector.load %arg1[%c504, %c0_42] : memref<1464x128xf32, #tpu.memory_space<vmem>>, vector<32x32xf32>
    %cst_43 = arith.constant dense<0.000000e+00> : vector<16x32xf32>
    %89 = tpu.matmul %87, %88, %cst_43 {dimension_numbers = #tpu.dot_dimension_numbers<[1], [0], [0], [1], [0, 0, 1, 1], [], []>} : vector<16x32xf32>, vector<32x32xf32>, vector<16x32xf32> -> vector<16x32xf32>
    %90 = arith.addf %85, %89 : vector<16x32xf32>
    %c536 = arith.constant 536 : index
    %c0_44 = arith.constant 0 : index
    %91 = vector.load %arg1[%c536, %c0_44] : memref<1464x128xf32, #tpu.memory_space<vmem>>, vector<1x32xf32>
    %92 = vector.broadcast %91 : vector<1x32xf32> to vector<16x32xf32>
    %93 = arith.addf %90, %92 : vector<16x32xf32>
    %cst_45 = arith.constant 0.000000e+00 : f32
    %94 = vector.broadcast %cst_45 : f32 to vector<16x32xf32>
    %95 = arith.maximumf %93, %94 : vector<16x32xf32>
    %c576 = arith.constant 576 : index
    %c0_46 = arith.constant 0 : index
    %96 = vector.load %arg1[%c576, %c0_46] : memref<1464x128xf32, #tpu.memory_space<vmem>>, vector<32x32xf32>
    %cst_47 = arith.constant dense<0.000000e+00> : vector<16x32xf32>
    %97 = tpu.matmul %95, %96, %cst_47 {dimension_numbers = #tpu.dot_dimension_numbers<[1], [0], [0], [1], [0, 0, 1, 1], [], []>} : vector<16x32xf32>, vector<32x32xf32>, vector<16x32xf32> -> vector<16x32xf32>
    %98 = vector.extract_strided_slice %95 {offsets = [0, 0], sizes = [14, 32], strides = [1, 1]} : vector<16x32xf32> to vector<14x32xf32>
    %99 = tpu.concatenate %8, %98 in 0 : vector<2x32xf32>, vector<14x32xf32> -> vector<16x32xf32>
    %c544 = arith.constant 544 : index
    %c0_48 = arith.constant 0 : index
    %100 = vector.load %arg1[%c544, %c0_48] : memref<1464x128xf32, #tpu.memory_space<vmem>>, vector<32x32xf32>
    %cst_49 = arith.constant dense<0.000000e+00> : vector<16x32xf32>
    %101 = tpu.matmul %99, %100, %cst_49 {dimension_numbers = #tpu.dot_dimension_numbers<[1], [0], [0], [1], [0, 0, 1, 1], [], []>} : vector<16x32xf32>, vector<32x32xf32>, vector<16x32xf32> -> vector<16x32xf32>
    %102 = arith.addf %97, %101 : vector<16x32xf32>
    %103 = vector.extract_strided_slice %95 {offsets = [2, 0], sizes = [14, 32], strides = [1, 1]} : vector<16x32xf32> to vector<14x32xf32>
    %104 = tpu.concatenate %103, %8 in 0 : vector<14x32xf32>, vector<2x32xf32> -> vector<16x32xf32>
    %c608 = arith.constant 608 : index
    %c0_50 = arith.constant 0 : index
    %105 = vector.load %arg1[%c608, %c0_50] : memref<1464x128xf32, #tpu.memory_space<vmem>>, vector<32x32xf32>
    %cst_51 = arith.constant dense<0.000000e+00> : vector<16x32xf32>
    %106 = tpu.matmul %104, %105, %cst_51 {dimension_numbers = #tpu.dot_dimension_numbers<[1], [0], [0], [1], [0, 0, 1, 1], [], []>} : vector<16x32xf32>, vector<32x32xf32>, vector<16x32xf32> -> vector<16x32xf32>
    %107 = arith.addf %102, %106 : vector<16x32xf32>
    %c640 = arith.constant 640 : index
    %c0_52 = arith.constant 0 : index
    %108 = vector.load %arg1[%c640, %c0_52] : memref<1464x128xf32, #tpu.memory_space<vmem>>, vector<1x32xf32>
    %109 = vector.broadcast %108 : vector<1x32xf32> to vector<16x32xf32>
    %110 = arith.addf %107, %109 : vector<16x32xf32>
    %111 = arith.addf %110, %78 : vector<16x32xf32>
    %cst_53 = arith.constant 0.000000e+00 : f32
    %112 = vector.broadcast %cst_53 : f32 to vector<16x32xf32>
    %113 = arith.maximumf %111, %112 : vector<16x32xf32>
    %c648 = arith.constant 648 : index
    %c0_54 = arith.constant 0 : index
    %114 = vector.load %arg1[%c648, %c0_54] : memref<1464x128xf32, #tpu.memory_space<vmem>>, vector<16x32xf32>
    %115 = arith.addf %113, %114 : vector<16x32xf32>
    %116 = tpu.iota {dimensions = array<i32: 1>} : vector<1x128xi32>
    %c32_i32 = arith.constant 32 : i32
    %c0_i32 = arith.constant 0 : i32
    %117 = arith.cmpi eq, %c32_i32, %c0_i32 : i32
    %c1_i32 = arith.constant 1 : i32
    %118 = arith.select %117, %c1_i32, %c32_i32 : i32
    %119 = vector.broadcast %118 : i32 to vector<1x128xi32>
    %120 = arith.remsi %116, %119 : vector<1x128xi32>
    %c0_i32_55 = arith.constant 0 : i32
    %121 = vector.broadcast %c0_i32_55 : i32 to vector<1x128xi32>
    %122 = arith.cmpi ne, %120, %121 : vector<1x128xi32>
    %c0_i32_56 = arith.constant 0 : i32
    %123 = vector.broadcast %c0_i32_56 : i32 to vector<1x128xi32>
    %124 = arith.cmpi slt, %120, %123 : vector<1x128xi32>
    %c0_i32_57 = arith.constant 0 : i32
    %125 = arith.cmpi slt, %118, %c0_i32_57 : i32
    %126 = vector.broadcast %125 : i1 to vector<1x128xi1>
    %127 = vector.broadcast %126 : vector<1x128xi1> to vector<1x128xi1>
    %128 = arith.xori %124, %127 : vector<1x128xi1>
    %129 = arith.andi %128, %122 : vector<1x128xi1>
    %130 = vector.broadcast %118 : i32 to vector<1x128xi32>
    %131 = arith.addi %120, %130 : vector<1x128xi32>
    %132 = arith.select %129, %131, %120 : vector<1x128xi1>, vector<1x128xi32>
    %c16_i32 = arith.constant 16 : i32
    %133 = vector.broadcast %c16_i32 : i32 to vector<1x128xi32>
    %134 = arith.cmpi slt, %132, %133 : vector<1x128xi32>
    %135 = arith.extui %134 : vector<1x128xi1> to vector<1x128xi32>
    %136 = arith.sitofp %135 : vector<1x128xi32> to vector<1x128xf32>
    %cst_58 = arith.constant 1.000000e+00 : f32
    %137 = vector.broadcast %cst_58 : f32 to vector<1x128xf32>
    %138 = arith.subf %137, %136 : vector<1x128xf32>
    %139 = tpu.iota {dimensions = array<i32: 1>} : vector<1x32xi32>
    %c16_i32_59 = arith.constant 16 : i32
    %140 = vector.broadcast %c16_i32_59 : i32 to vector<1x32xi32>
    %141 = arith.cmpi slt, %139, %140 : vector<1x32xi32>
    %142 = arith.extui %141 : vector<1x32xi1> to vector<1x32xi32>
    %143 = arith.sitofp %142 : vector<1x32xi32> to vector<1x32xf32>
    %cst_60 = arith.constant 1.000000e+00 : f32
    %144 = vector.broadcast %cst_60 : f32 to vector<1x32xf32>
    %145 = arith.subf %144, %143 : vector<1x32xf32>
    %c664 = arith.constant 664 : index
    %c0_61 = arith.constant 0 : index
    %146 = vector.load %arg1[%c664, %c0_61] : memref<1464x128xf32, #tpu.memory_space<vmem>>, vector<32x128xf32>
    %c696 = arith.constant 696 : index
    %c0_62 = arith.constant 0 : index
    %147 = vector.load %arg1[%c696, %c0_62] : memref<1464x128xf32, #tpu.memory_space<vmem>>, vector<32x128xf32>
    %c728 = arith.constant 728 : index
    %c0_63 = arith.constant 0 : index
    %148 = vector.load %arg1[%c728, %c0_63] : memref<1464x128xf32, #tpu.memory_space<vmem>>, vector<1x128xf32>
    %cst_64 = arith.constant dense<0.000000e+00> : vector<16x128xf32>
    %149 = tpu.matmul %115, %146, %cst_64 {dimension_numbers = #tpu.dot_dimension_numbers<[1], [0], [0], [1], [0, 0, 1, 1], [], []>} : vector<16x32xf32>, vector<32x128xf32>, vector<16x128xf32> -> vector<16x128xf32>
    %150 = vector.broadcast %148 : vector<1x128xf32> to vector<16x128xf32>
    %151 = arith.addf %149, %150 : vector<16x128xf32>
    %152 = vector.extract_strided_slice %151 {offsets = [0, 0], sizes = [2, 128], strides = [1, 1]} : vector<16x128xf32> to vector<2x128xf32>
    %153 = vector.broadcast %136 : vector<1x128xf32> to vector<2x128xf32>
    %154 = arith.mulf %152, %153 : vector<2x128xf32>
    %155 = vector.extract_strided_slice %151 {offsets = [14, 0], sizes = [2, 128], strides = [1, 1]} : vector<16x128xf32> to vector<2x128xf32>
    %156 = vector.broadcast %138 : vector<1x128xf32> to vector<2x128xf32>
    %157 = arith.mulf %155, %156 : vector<2x128xf32>
    %158 = arith.addf %154, %157 : vector<2x128xf32>
    %159 = vector.extract_strided_slice %151 {offsets = [2, 0], sizes = [2, 128], strides = [1, 1]} : vector<16x128xf32> to vector<2x128xf32>
    %160 = vector.broadcast %136 : vector<1x128xf32> to vector<2x128xf32>
    %161 = arith.mulf %159, %160 : vector<2x128xf32>
    %162 = vector.extract_strided_slice %151 {offsets = [12, 0], sizes = [2, 128], strides = [1, 1]} : vector<16x128xf32> to vector<2x128xf32>
    %163 = vector.broadcast %138 : vector<1x128xf32> to vector<2x128xf32>
    %164 = arith.mulf %162, %163 : vector<2x128xf32>
    %165 = arith.addf %161, %164 : vector<2x128xf32>
    %166 = vector.extract_strided_slice %151 {offsets = [4, 0], sizes = [2, 128], strides = [1, 1]} : vector<16x128xf32> to vector<2x128xf32>
    %167 = vector.broadcast %136 : vector<1x128xf32> to vector<2x128xf32>
    %168 = arith.mulf %166, %167 : vector<2x128xf32>
    %169 = vector.extract_strided_slice %151 {offsets = [10, 0], sizes = [2, 128], strides = [1, 1]} : vector<16x128xf32> to vector<2x128xf32>
    %170 = vector.broadcast %138 : vector<1x128xf32> to vector<2x128xf32>
    %171 = arith.mulf %169, %170 : vector<2x128xf32>
    %172 = arith.addf %168, %171 : vector<2x128xf32>
    %173 = vector.extract_strided_slice %151 {offsets = [6, 0], sizes = [2, 128], strides = [1, 1]} : vector<16x128xf32> to vector<2x128xf32>
    %174 = vector.broadcast %136 : vector<1x128xf32> to vector<2x128xf32>
    %175 = arith.mulf %173, %174 : vector<2x128xf32>
    %176 = vector.extract_strided_slice %151 {offsets = [8, 0], sizes = [2, 128], strides = [1, 1]} : vector<16x128xf32> to vector<2x128xf32>
    %177 = vector.broadcast %138 : vector<1x128xf32> to vector<2x128xf32>
    %178 = arith.mulf %176, %177 : vector<2x128xf32>
    %179 = arith.addf %175, %178 : vector<2x128xf32>
    %180 = vector.extract_strided_slice %151 {offsets = [8, 0], sizes = [2, 128], strides = [1, 1]} : vector<16x128xf32> to vector<2x128xf32>
    %181 = vector.broadcast %136 : vector<1x128xf32> to vector<2x128xf32>
    %182 = arith.mulf %180, %181 : vector<2x128xf32>
    %183 = vector.extract_strided_slice %151 {offsets = [6, 0], sizes = [2, 128], strides = [1, 1]} : vector<16x128xf32> to vector<2x128xf32>
    %184 = vector.broadcast %138 : vector<1x128xf32> to vector<2x128xf32>
    %185 = arith.mulf %183, %184 : vector<2x128xf32>
    %186 = arith.addf %182, %185 : vector<2x128xf32>
    %187 = vector.extract_strided_slice %151 {offsets = [10, 0], sizes = [2, 128], strides = [1, 1]} : vector<16x128xf32> to vector<2x128xf32>
    %188 = vector.broadcast %136 : vector<1x128xf32> to vector<2x128xf32>
    %189 = arith.mulf %187, %188 : vector<2x128xf32>
    %190 = vector.extract_strided_slice %151 {offsets = [4, 0], sizes = [2, 128], strides = [1, 1]} : vector<16x128xf32> to vector<2x128xf32>
    %191 = vector.broadcast %138 : vector<1x128xf32> to vector<2x128xf32>
    %192 = arith.mulf %190, %191 : vector<2x128xf32>
    %193 = arith.addf %189, %192 : vector<2x128xf32>
    %194 = vector.extract_strided_slice %151 {offsets = [12, 0], sizes = [2, 128], strides = [1, 1]} : vector<16x128xf32> to vector<2x128xf32>
    %195 = vector.broadcast %136 : vector<1x128xf32> to vector<2x128xf32>
    %196 = arith.mulf %194, %195 : vector<2x128xf32>
    %197 = vector.extract_strided_slice %151 {offsets = [2, 0], sizes = [2, 128], strides = [1, 1]} : vector<16x128xf32> to vector<2x128xf32>
    %198 = vector.broadcast %138 : vector<1x128xf32> to vector<2x128xf32>
    %199 = arith.mulf %197, %198 : vector<2x128xf32>
    %200 = arith.addf %196, %199 : vector<2x128xf32>
    %201 = vector.extract_strided_slice %151 {offsets = [14, 0], sizes = [2, 128], strides = [1, 1]} : vector<16x128xf32> to vector<2x128xf32>
    %202 = vector.broadcast %136 : vector<1x128xf32> to vector<2x128xf32>
    %203 = arith.mulf %201, %202 : vector<2x128xf32>
    %204 = vector.extract_strided_slice %151 {offsets = [0, 0], sizes = [2, 128], strides = [1, 1]} : vector<16x128xf32> to vector<2x128xf32>
    %205 = vector.broadcast %138 : vector<1x128xf32> to vector<2x128xf32>
    %206 = arith.mulf %204, %205 : vector<2x128xf32>
    %207 = arith.addf %203, %206 : vector<2x128xf32>
    %cst_65 = arith.constant 0.000000e+00 : f32
    %208 = vector.broadcast %cst_65 : f32 to vector<2x32xf32>
    %cst_66 = arith.constant 0.000000e+00 : f32
    %209 = vector.broadcast %cst_66 : f32 to vector<2x32xf32>
    %cst_67 = arith.constant dense<0.000000e+00> : vector<2x128xf32>
    %210 = tpu.matmul %208, %147, %cst_67 {dimension_numbers = #tpu.dot_dimension_numbers<[1], [0], [0], [1], [0, 0, 1, 1], [], []>} : vector<2x32xf32>, vector<32x128xf32>, vector<2x128xf32> -> vector<2x128xf32>
    %211 = arith.addf %158, %210 : vector<2x128xf32>
    %cst_68 = arith.constant 0.000000e+00 : f32
    %212 = vector.broadcast %cst_68 : f32 to vector<2x128xf32>
    %213 = arith.subf %212, %211 : vector<2x128xf32>
    %214 = math.exp %213 : vector<2x128xf32>
    %cst_69 = arith.constant 1.000000e+00 : f32
    %215 = vector.broadcast %cst_69 : f32 to vector<2x128xf32>
    %216 = arith.addf %215, %214 : vector<2x128xf32>
    %cst_70 = arith.constant 1.000000e+00 : f32
    %217 = vector.broadcast %cst_70 : f32 to vector<2x128xf32>
    %218 = arith.divf %217, %216 : vector<2x128xf32>
    %219 = vector.extract_strided_slice %218 {offsets = [0, 0], sizes = [2, 32], strides = [1, 1]} : vector<2x128xf32> to vector<2x32xf32>
    %220 = vector.extract_strided_slice %218 {offsets = [0, 32], sizes = [2, 32], strides = [1, 1]} : vector<2x128xf32> to vector<2x32xf32>
    %221 = vector.extract_strided_slice %218 {offsets = [0, 96], sizes = [2, 32], strides = [1, 1]} : vector<2x128xf32> to vector<2x32xf32>
    %222 = vector.extract_strided_slice %211 {offsets = [0, 64], sizes = [2, 32], strides = [1, 1]} : vector<2x128xf32> to vector<2x32xf32>
    %223 = math.tanh %222 : vector<2x32xf32>
    %224 = arith.mulf %220, %209 : vector<2x32xf32>
    %225 = arith.mulf %219, %223 : vector<2x32xf32>
    %226 = arith.addf %224, %225 : vector<2x32xf32>
    %227 = math.tanh %226 : vector<2x32xf32>
    %228 = arith.mulf %221, %227 : vector<2x32xf32>
    %cst_71 = arith.constant dense<0.000000e+00> : vector<2x128xf32>
    %229 = tpu.matmul %228, %147, %cst_71 {dimension_numbers = #tpu.dot_dimension_numbers<[1], [0], [0], [1], [0, 0, 1, 1], [], []>} : vector<2x32xf32>, vector<32x128xf32>, vector<2x128xf32> -> vector<2x128xf32>
    %230 = arith.addf %165, %229 : vector<2x128xf32>
    %cst_72 = arith.constant 0.000000e+00 : f32
    %231 = vector.broadcast %cst_72 : f32 to vector<2x128xf32>
    %232 = arith.subf %231, %230 : vector<2x128xf32>
    %233 = math.exp %232 : vector<2x128xf32>
    %cst_73 = arith.constant 1.000000e+00 : f32
    %234 = vector.broadcast %cst_73 : f32 to vector<2x128xf32>
    %235 = arith.addf %234, %233 : vector<2x128xf32>
    %cst_74 = arith.constant 1.000000e+00 : f32
    %236 = vector.broadcast %cst_74 : f32 to vector<2x128xf32>
    %237 = arith.divf %236, %235 : vector<2x128xf32>
    %238 = vector.extract_strided_slice %237 {offsets = [0, 0], sizes = [2, 32], strides = [1, 1]} : vector<2x128xf32> to vector<2x32xf32>
    %239 = vector.extract_strided_slice %237 {offsets = [0, 32], sizes = [2, 32], strides = [1, 1]} : vector<2x128xf32> to vector<2x32xf32>
    %240 = vector.extract_strided_slice %237 {offsets = [0, 96], sizes = [2, 32], strides = [1, 1]} : vector<2x128xf32> to vector<2x32xf32>
    %241 = vector.extract_strided_slice %230 {offsets = [0, 64], sizes = [2, 32], strides = [1, 1]} : vector<2x128xf32> to vector<2x32xf32>
    %242 = math.tanh %241 : vector<2x32xf32>
    %243 = arith.mulf %239, %226 : vector<2x32xf32>
    %244 = arith.mulf %238, %242 : vector<2x32xf32>
    %245 = arith.addf %243, %244 : vector<2x32xf32>
    %246 = math.tanh %245 : vector<2x32xf32>
    %247 = arith.mulf %240, %246 : vector<2x32xf32>
    %cst_75 = arith.constant dense<0.000000e+00> : vector<2x128xf32>
    %248 = tpu.matmul %247, %147, %cst_75 {dimension_numbers = #tpu.dot_dimension_numbers<[1], [0], [0], [1], [0, 0, 1, 1], [], []>} : vector<2x32xf32>, vector<32x128xf32>, vector<2x128xf32> -> vector<2x128xf32>
    %249 = arith.addf %172, %248 : vector<2x128xf32>
    %cst_76 = arith.constant 0.000000e+00 : f32
    %250 = vector.broadcast %cst_76 : f32 to vector<2x128xf32>
    %251 = arith.subf %250, %249 : vector<2x128xf32>
    %252 = math.exp %251 : vector<2x128xf32>
    %cst_77 = arith.constant 1.000000e+00 : f32
    %253 = vector.broadcast %cst_77 : f32 to vector<2x128xf32>
    %254 = arith.addf %253, %252 : vector<2x128xf32>
    %cst_78 = arith.constant 1.000000e+00 : f32
    %255 = vector.broadcast %cst_78 : f32 to vector<2x128xf32>
    %256 = arith.divf %255, %254 : vector<2x128xf32>
    %257 = vector.extract_strided_slice %256 {offsets = [0, 0], sizes = [2, 32], strides = [1, 1]} : vector<2x128xf32> to vector<2x32xf32>
    %258 = vector.extract_strided_slice %256 {offsets = [0, 32], sizes = [2, 32], strides = [1, 1]} : vector<2x128xf32> to vector<2x32xf32>
    %259 = vector.extract_strided_slice %256 {offsets = [0, 96], sizes = [2, 32], strides = [1, 1]} : vector<2x128xf32> to vector<2x32xf32>
    %260 = vector.extract_strided_slice %249 {offsets = [0, 64], sizes = [2, 32], strides = [1, 1]} : vector<2x128xf32> to vector<2x32xf32>
    %261 = math.tanh %260 : vector<2x32xf32>
    %262 = arith.mulf %258, %245 : vector<2x32xf32>
    %263 = arith.mulf %257, %261 : vector<2x32xf32>
    %264 = arith.addf %262, %263 : vector<2x32xf32>
    %265 = math.tanh %264 : vector<2x32xf32>
    %266 = arith.mulf %259, %265 : vector<2x32xf32>
    %cst_79 = arith.constant dense<0.000000e+00> : vector<2x128xf32>
    %267 = tpu.matmul %266, %147, %cst_79 {dimension_numbers = #tpu.dot_dimension_numbers<[1], [0], [0], [1], [0, 0, 1, 1], [], []>} : vector<2x32xf32>, vector<32x128xf32>, vector<2x128xf32> -> vector<2x128xf32>
    %268 = arith.addf %179, %267 : vector<2x128xf32>
    %cst_80 = arith.constant 0.000000e+00 : f32
    %269 = vector.broadcast %cst_80 : f32 to vector<2x128xf32>
    %270 = arith.subf %269, %268 : vector<2x128xf32>
    %271 = math.exp %270 : vector<2x128xf32>
    %cst_81 = arith.constant 1.000000e+00 : f32
    %272 = vector.broadcast %cst_81 : f32 to vector<2x128xf32>
    %273 = arith.addf %272, %271 : vector<2x128xf32>
    %cst_82 = arith.constant 1.000000e+00 : f32
    %274 = vector.broadcast %cst_82 : f32 to vector<2x128xf32>
    %275 = arith.divf %274, %273 : vector<2x128xf32>
    %276 = vector.extract_strided_slice %275 {offsets = [0, 0], sizes = [2, 32], strides = [1, 1]} : vector<2x128xf32> to vector<2x32xf32>
    %277 = vector.extract_strided_slice %275 {offsets = [0, 32], sizes = [2, 32], strides = [1, 1]} : vector<2x128xf32> to vector<2x32xf32>
    %278 = vector.extract_strided_slice %275 {offsets = [0, 96], sizes = [2, 32], strides = [1, 1]} : vector<2x128xf32> to vector<2x32xf32>
    %279 = vector.extract_strided_slice %268 {offsets = [0, 64], sizes = [2, 32], strides = [1, 1]} : vector<2x128xf32> to vector<2x32xf32>
    %280 = math.tanh %279 : vector<2x32xf32>
    %281 = arith.mulf %277, %264 : vector<2x32xf32>
    %282 = arith.mulf %276, %280 : vector<2x32xf32>
    %283 = arith.addf %281, %282 : vector<2x32xf32>
    %284 = math.tanh %283 : vector<2x32xf32>
    %285 = arith.mulf %278, %284 : vector<2x32xf32>
    %cst_83 = arith.constant dense<0.000000e+00> : vector<2x128xf32>
    %286 = tpu.matmul %285, %147, %cst_83 {dimension_numbers = #tpu.dot_dimension_numbers<[1], [0], [0], [1], [0, 0, 1, 1], [], []>} : vector<2x32xf32>, vector<32x128xf32>, vector<2x128xf32> -> vector<2x128xf32>
    %287 = arith.addf %186, %286 : vector<2x128xf32>
    %cst_84 = arith.constant 0.000000e+00 : f32
    %288 = vector.broadcast %cst_84 : f32 to vector<2x128xf32>
    %289 = arith.subf %288, %287 : vector<2x128xf32>
    %290 = math.exp %289 : vector<2x128xf32>
    %cst_85 = arith.constant 1.000000e+00 : f32
    %291 = vector.broadcast %cst_85 : f32 to vector<2x128xf32>
    %292 = arith.addf %291, %290 : vector<2x128xf32>
    %cst_86 = arith.constant 1.000000e+00 : f32
    %293 = vector.broadcast %cst_86 : f32 to vector<2x128xf32>
    %294 = arith.divf %293, %292 : vector<2x128xf32>
    %295 = vector.extract_strided_slice %294 {offsets = [0, 0], sizes = [2, 32], strides = [1, 1]} : vector<2x128xf32> to vector<2x32xf32>
    %296 = vector.extract_strided_slice %294 {offsets = [0, 32], sizes = [2, 32], strides = [1, 1]} : vector<2x128xf32> to vector<2x32xf32>
    %297 = vector.extract_strided_slice %294 {offsets = [0, 96], sizes = [2, 32], strides = [1, 1]} : vector<2x128xf32> to vector<2x32xf32>
    %298 = vector.extract_strided_slice %287 {offsets = [0, 64], sizes = [2, 32], strides = [1, 1]} : vector<2x128xf32> to vector<2x32xf32>
    %299 = math.tanh %298 : vector<2x32xf32>
    %300 = arith.mulf %296, %283 : vector<2x32xf32>
    %301 = arith.mulf %295, %299 : vector<2x32xf32>
    %302 = arith.addf %300, %301 : vector<2x32xf32>
    %303 = math.tanh %302 : vector<2x32xf32>
    %304 = arith.mulf %297, %303 : vector<2x32xf32>
    %cst_87 = arith.constant dense<0.000000e+00> : vector<2x128xf32>
    %305 = tpu.matmul %304, %147, %cst_87 {dimension_numbers = #tpu.dot_dimension_numbers<[1], [0], [0], [1], [0, 0, 1, 1], [], []>} : vector<2x32xf32>, vector<32x128xf32>, vector<2x128xf32> -> vector<2x128xf32>
    %306 = arith.addf %193, %305 : vector<2x128xf32>
    %cst_88 = arith.constant 0.000000e+00 : f32
    %307 = vector.broadcast %cst_88 : f32 to vector<2x128xf32>
    %308 = arith.subf %307, %306 : vector<2x128xf32>
    %309 = math.exp %308 : vector<2x128xf32>
    %cst_89 = arith.constant 1.000000e+00 : f32
    %310 = vector.broadcast %cst_89 : f32 to vector<2x128xf32>
    %311 = arith.addf %310, %309 : vector<2x128xf32>
    %cst_90 = arith.constant 1.000000e+00 : f32
    %312 = vector.broadcast %cst_90 : f32 to vector<2x128xf32>
    %313 = arith.divf %312, %311 : vector<2x128xf32>
    %314 = vector.extract_strided_slice %313 {offsets = [0, 0], sizes = [2, 32], strides = [1, 1]} : vector<2x128xf32> to vector<2x32xf32>
    %315 = vector.extract_strided_slice %313 {offsets = [0, 32], sizes = [2, 32], strides = [1, 1]} : vector<2x128xf32> to vector<2x32xf32>
    %316 = vector.extract_strided_slice %313 {offsets = [0, 96], sizes = [2, 32], strides = [1, 1]} : vector<2x128xf32> to vector<2x32xf32>
    %317 = vector.extract_strided_slice %306 {offsets = [0, 64], sizes = [2, 32], strides = [1, 1]} : vector<2x128xf32> to vector<2x32xf32>
    %318 = math.tanh %317 : vector<2x32xf32>
    %319 = arith.mulf %315, %302 : vector<2x32xf32>
    %320 = arith.mulf %314, %318 : vector<2x32xf32>
    %321 = arith.addf %319, %320 : vector<2x32xf32>
    %322 = math.tanh %321 : vector<2x32xf32>
    %323 = arith.mulf %316, %322 : vector<2x32xf32>
    %cst_91 = arith.constant dense<0.000000e+00> : vector<2x128xf32>
    %324 = tpu.matmul %323, %147, %cst_91 {dimension_numbers = #tpu.dot_dimension_numbers<[1], [0], [0], [1], [0, 0, 1, 1], [], []>} : vector<2x32xf32>, vector<32x128xf32>, vector<2x128xf32> -> vector<2x128xf32>
    %325 = arith.addf %200, %324 : vector<2x128xf32>
    %cst_92 = arith.constant 0.000000e+00 : f32
    %326 = vector.broadcast %cst_92 : f32 to vector<2x128xf32>
    %327 = arith.subf %326, %325 : vector<2x128xf32>
    %328 = math.exp %327 : vector<2x128xf32>
    %cst_93 = arith.constant 1.000000e+00 : f32
    %329 = vector.broadcast %cst_93 : f32 to vector<2x128xf32>
    %330 = arith.addf %329, %328 : vector<2x128xf32>
    %cst_94 = arith.constant 1.000000e+00 : f32
    %331 = vector.broadcast %cst_94 : f32 to vector<2x128xf32>
    %332 = arith.divf %331, %330 : vector<2x128xf32>
    %333 = vector.extract_strided_slice %332 {offsets = [0, 0], sizes = [2, 32], strides = [1, 1]} : vector<2x128xf32> to vector<2x32xf32>
    %334 = vector.extract_strided_slice %332 {offsets = [0, 32], sizes = [2, 32], strides = [1, 1]} : vector<2x128xf32> to vector<2x32xf32>
    %335 = vector.extract_strided_slice %332 {offsets = [0, 96], sizes = [2, 32], strides = [1, 1]} : vector<2x128xf32> to vector<2x32xf32>
    %336 = vector.extract_strided_slice %325 {offsets = [0, 64], sizes = [2, 32], strides = [1, 1]} : vector<2x128xf32> to vector<2x32xf32>
    %337 = math.tanh %336 : vector<2x32xf32>
    %338 = arith.mulf %334, %321 : vector<2x32xf32>
    %339 = arith.mulf %333, %337 : vector<2x32xf32>
    %340 = arith.addf %338, %339 : vector<2x32xf32>
    %341 = math.tanh %340 : vector<2x32xf32>
    %342 = arith.mulf %335, %341 : vector<2x32xf32>
    %cst_95 = arith.constant dense<0.000000e+00> : vector<2x128xf32>
    %343 = tpu.matmul %342, %147, %cst_95 {dimension_numbers = #tpu.dot_dimension_numbers<[1], [0], [0], [1], [0, 0, 1, 1], [], []>} : vector<2x32xf32>, vector<32x128xf32>, vector<2x128xf32> -> vector<2x128xf32>
    %344 = arith.addf %207, %343 : vector<2x128xf32>
    %cst_96 = arith.constant 0.000000e+00 : f32
    %345 = vector.broadcast %cst_96 : f32 to vector<2x128xf32>
    %346 = arith.subf %345, %344 : vector<2x128xf32>
    %347 = math.exp %346 : vector<2x128xf32>
    %cst_97 = arith.constant 1.000000e+00 : f32
    %348 = vector.broadcast %cst_97 : f32 to vector<2x128xf32>
    %349 = arith.addf %348, %347 : vector<2x128xf32>
    %cst_98 = arith.constant 1.000000e+00 : f32
    %350 = vector.broadcast %cst_98 : f32 to vector<2x128xf32>
    %351 = arith.divf %350, %349 : vector<2x128xf32>
    %352 = vector.extract_strided_slice %351 {offsets = [0, 0], sizes = [2, 32], strides = [1, 1]} : vector<2x128xf32> to vector<2x32xf32>
    %353 = vector.extract_strided_slice %351 {offsets = [0, 32], sizes = [2, 32], strides = [1, 1]} : vector<2x128xf32> to vector<2x32xf32>
    %354 = vector.extract_strided_slice %351 {offsets = [0, 96], sizes = [2, 32], strides = [1, 1]} : vector<2x128xf32> to vector<2x32xf32>
    %355 = vector.extract_strided_slice %344 {offsets = [0, 64], sizes = [2, 32], strides = [1, 1]} : vector<2x128xf32> to vector<2x32xf32>
    %356 = math.tanh %355 : vector<2x32xf32>
    %357 = arith.mulf %353, %340 : vector<2x32xf32>
    %358 = arith.mulf %352, %356 : vector<2x32xf32>
    %359 = arith.addf %357, %358 : vector<2x32xf32>
    %360 = math.tanh %359 : vector<2x32xf32>
    %361 = arith.mulf %354, %360 : vector<2x32xf32>
    %362 = vector.broadcast %143 : vector<1x32xf32> to vector<2x32xf32>
    %363 = arith.mulf %228, %362 : vector<2x32xf32>
    %364 = vector.broadcast %145 : vector<1x32xf32> to vector<2x32xf32>
    %365 = arith.mulf %361, %364 : vector<2x32xf32>
    %366 = arith.addf %363, %365 : vector<2x32xf32>
    %367 = vector.broadcast %143 : vector<1x32xf32> to vector<2x32xf32>
    %368 = arith.mulf %247, %367 : vector<2x32xf32>
    %369 = vector.broadcast %145 : vector<1x32xf32> to vector<2x32xf32>
    %370 = arith.mulf %342, %369 : vector<2x32xf32>
    %371 = arith.addf %368, %370 : vector<2x32xf32>
    %372 = vector.broadcast %143 : vector<1x32xf32> to vector<2x32xf32>
    %373 = arith.mulf %266, %372 : vector<2x32xf32>
    %374 = vector.broadcast %145 : vector<1x32xf32> to vector<2x32xf32>
    %375 = arith.mulf %323, %374 : vector<2x32xf32>
    %376 = arith.addf %373, %375 : vector<2x32xf32>
    %377 = vector.broadcast %143 : vector<1x32xf32> to vector<2x32xf32>
    %378 = arith.mulf %285, %377 : vector<2x32xf32>
    %379 = vector.broadcast %145 : vector<1x32xf32> to vector<2x32xf32>
    %380 = arith.mulf %304, %379 : vector<2x32xf32>
    %381 = arith.addf %378, %380 : vector<2x32xf32>
    %382 = vector.broadcast %143 : vector<1x32xf32> to vector<2x32xf32>
    %383 = arith.mulf %304, %382 : vector<2x32xf32>
    %384 = vector.broadcast %145 : vector<1x32xf32> to vector<2x32xf32>
    %385 = arith.mulf %285, %384 : vector<2x32xf32>
    %386 = arith.addf %383, %385 : vector<2x32xf32>
    %387 = vector.broadcast %143 : vector<1x32xf32> to vector<2x32xf32>
    %388 = arith.mulf %323, %387 : vector<2x32xf32>
    %389 = vector.broadcast %145 : vector<1x32xf32> to vector<2x32xf32>
    %390 = arith.mulf %266, %389 : vector<2x32xf32>
    %391 = arith.addf %388, %390 : vector<2x32xf32>
    %392 = vector.broadcast %143 : vector<1x32xf32> to vector<2x32xf32>
    %393 = arith.mulf %342, %392 : vector<2x32xf32>
    %394 = vector.broadcast %145 : vector<1x32xf32> to vector<2x32xf32>
    %395 = arith.mulf %247, %394 : vector<2x32xf32>
    %396 = arith.addf %393, %395 : vector<2x32xf32>
    %397 = vector.broadcast %143 : vector<1x32xf32> to vector<2x32xf32>
    %398 = arith.mulf %361, %397 : vector<2x32xf32>
    %399 = vector.broadcast %145 : vector<1x32xf32> to vector<2x32xf32>
    %400 = arith.mulf %228, %399 : vector<2x32xf32>
    %401 = arith.addf %398, %400 : vector<2x32xf32>
    %402 = tpu.concatenate %366, %371, %376, %381, %386, %391, %396, %401 in 0 : vector<2x32xf32>, vector<2x32xf32>, vector<2x32xf32>, vector<2x32xf32>, vector<2x32xf32>, vector<2x32xf32>, vector<2x32xf32>, vector<2x32xf32> -> vector<16x32xf32>
    %c736 = arith.constant 736 : index
    %c0_99 = arith.constant 0 : index
    %403 = vector.load %arg1[%c736, %c0_99] : memref<1464x128xf32, #tpu.memory_space<vmem>>, vector<32x128xf32>
    %c768 = arith.constant 768 : index
    %c0_100 = arith.constant 0 : index
    %404 = vector.load %arg1[%c768, %c0_100] : memref<1464x128xf32, #tpu.memory_space<vmem>>, vector<32x128xf32>
    %c800 = arith.constant 800 : index
    %c0_101 = arith.constant 0 : index
    %405 = vector.load %arg1[%c800, %c0_101] : memref<1464x128xf32, #tpu.memory_space<vmem>>, vector<1x128xf32>
    %cst_102 = arith.constant dense<0.000000e+00> : vector<16x128xf32>
    %406 = tpu.matmul %402, %403, %cst_102 {dimension_numbers = #tpu.dot_dimension_numbers<[1], [0], [0], [1], [0, 0, 1, 1], [], []>} : vector<16x32xf32>, vector<32x128xf32>, vector<16x128xf32> -> vector<16x128xf32>
    %407 = vector.broadcast %405 : vector<1x128xf32> to vector<16x128xf32>
    %408 = arith.addf %406, %407 : vector<16x128xf32>
    %409 = vector.extract_strided_slice %408 {offsets = [0, 0], sizes = [2, 128], strides = [1, 1]} : vector<16x128xf32> to vector<2x128xf32>
    %410 = vector.broadcast %136 : vector<1x128xf32> to vector<2x128xf32>
    %411 = arith.mulf %409, %410 : vector<2x128xf32>
    %412 = vector.extract_strided_slice %408 {offsets = [14, 0], sizes = [2, 128], strides = [1, 1]} : vector<16x128xf32> to vector<2x128xf32>
    %413 = vector.broadcast %138 : vector<1x128xf32> to vector<2x128xf32>
    %414 = arith.mulf %412, %413 : vector<2x128xf32>
    %415 = arith.addf %411, %414 : vector<2x128xf32>
    %416 = vector.extract_strided_slice %408 {offsets = [2, 0], sizes = [2, 128], strides = [1, 1]} : vector<16x128xf32> to vector<2x128xf32>
    %417 = vector.broadcast %136 : vector<1x128xf32> to vector<2x128xf32>
    %418 = arith.mulf %416, %417 : vector<2x128xf32>
    %419 = vector.extract_strided_slice %408 {offsets = [12, 0], sizes = [2, 128], strides = [1, 1]} : vector<16x128xf32> to vector<2x128xf32>
    %420 = vector.broadcast %138 : vector<1x128xf32> to vector<2x128xf32>
    %421 = arith.mulf %419, %420 : vector<2x128xf32>
    %422 = arith.addf %418, %421 : vector<2x128xf32>
    %423 = vector.extract_strided_slice %408 {offsets = [4, 0], sizes = [2, 128], strides = [1, 1]} : vector<16x128xf32> to vector<2x128xf32>
    %424 = vector.broadcast %136 : vector<1x128xf32> to vector<2x128xf32>
    %425 = arith.mulf %423, %424 : vector<2x128xf32>
    %426 = vector.extract_strided_slice %408 {offsets = [10, 0], sizes = [2, 128], strides = [1, 1]} : vector<16x128xf32> to vector<2x128xf32>
    %427 = vector.broadcast %138 : vector<1x128xf32> to vector<2x128xf32>
    %428 = arith.mulf %426, %427 : vector<2x128xf32>
    %429 = arith.addf %425, %428 : vector<2x128xf32>
    %430 = vector.extract_strided_slice %408 {offsets = [6, 0], sizes = [2, 128], strides = [1, 1]} : vector<16x128xf32> to vector<2x128xf32>
    %431 = vector.broadcast %136 : vector<1x128xf32> to vector<2x128xf32>
    %432 = arith.mulf %430, %431 : vector<2x128xf32>
    %433 = vector.extract_strided_slice %408 {offsets = [8, 0], sizes = [2, 128], strides = [1, 1]} : vector<16x128xf32> to vector<2x128xf32>
    %434 = vector.broadcast %138 : vector<1x128xf32> to vector<2x128xf32>
    %435 = arith.mulf %433, %434 : vector<2x128xf32>
    %436 = arith.addf %432, %435 : vector<2x128xf32>
    %437 = vector.extract_strided_slice %408 {offsets = [8, 0], sizes = [2, 128], strides = [1, 1]} : vector<16x128xf32> to vector<2x128xf32>
    %438 = vector.broadcast %136 : vector<1x128xf32> to vector<2x128xf32>
    %439 = arith.mulf %437, %438 : vector<2x128xf32>
    %440 = vector.extract_strided_slice %408 {offsets = [6, 0], sizes = [2, 128], strides = [1, 1]} : vector<16x128xf32> to vector<2x128xf32>
    %441 = vector.broadcast %138 : vector<1x128xf32> to vector<2x128xf32>
    %442 = arith.mulf %440, %441 : vector<2x128xf32>
    %443 = arith.addf %439, %442 : vector<2x128xf32>
    %444 = vector.extract_strided_slice %408 {offsets = [10, 0], sizes = [2, 128], strides = [1, 1]} : vector<16x128xf32> to vector<2x128xf32>
    %445 = vector.broadcast %136 : vector<1x128xf32> to vector<2x128xf32>
    %446 = arith.mulf %444, %445 : vector<2x128xf32>
    %447 = vector.extract_strided_slice %408 {offsets = [4, 0], sizes = [2, 128], strides = [1, 1]} : vector<16x128xf32> to vector<2x128xf32>
    %448 = vector.broadcast %138 : vector<1x128xf32> to vector<2x128xf32>
    %449 = arith.mulf %447, %448 : vector<2x128xf32>
    %450 = arith.addf %446, %449 : vector<2x128xf32>
    %451 = vector.extract_strided_slice %408 {offsets = [12, 0], sizes = [2, 128], strides = [1, 1]} : vector<16x128xf32> to vector<2x128xf32>
    %452 = vector.broadcast %136 : vector<1x128xf32> to vector<2x128xf32>
    %453 = arith.mulf %451, %452 : vector<2x128xf32>
    %454 = vector.extract_strided_slice %408 {offsets = [2, 0], sizes = [2, 128], strides = [1, 1]} : vector<16x128xf32> to vector<2x128xf32>
    %455 = vector.broadcast %138 : vector<1x128xf32> to vector<2x128xf32>
    %456 = arith.mulf %454, %455 : vector<2x128xf32>
    %457 = arith.addf %453, %456 : vector<2x128xf32>
    %458 = vector.extract_strided_slice %408 {offsets = [14, 0], sizes = [2, 128], strides = [1, 1]} : vector<16x128xf32> to vector<2x128xf32>
    %459 = vector.broadcast %136 : vector<1x128xf32> to vector<2x128xf32>
    %460 = arith.mulf %458, %459 : vector<2x128xf32>
    %461 = vector.extract_strided_slice %408 {offsets = [0, 0], sizes = [2, 128], strides = [1, 1]} : vector<16x128xf32> to vector<2x128xf32>
    %462 = vector.broadcast %138 : vector<1x128xf32> to vector<2x128xf32>
    %463 = arith.mulf %461, %462 : vector<2x128xf32>
    %464 = arith.addf %460, %463 : vector<2x128xf32>
    %cst_103 = arith.constant 0.000000e+00 : f32
    %465 = vector.broadcast %cst_103 : f32 to vector<2x32xf32>
    %cst_104 = arith.constant 0.000000e+00 : f32
    %466 = vector.broadcast %cst_104 : f32 to vector<2x32xf32>
    %cst_105 = arith.constant dense<0.000000e+00> : vector<2x128xf32>
    %467 = tpu.matmul %465, %404, %cst_105 {dimension_numbers = #tpu.dot_dimension_numbers<[1], [0], [0], [1], [0, 0, 1, 1], [], []>} : vector<2x32xf32>, vector<32x128xf32>, vector<2x128xf32> -> vector<2x128xf32>
    %468 = arith.addf %415, %467 : vector<2x128xf32>
    %cst_106 = arith.constant 0.000000e+00 : f32
    %469 = vector.broadcast %cst_106 : f32 to vector<2x128xf32>
    %470 = arith.subf %469, %468 : vector<2x128xf32>
    %471 = math.exp %470 : vector<2x128xf32>
    %cst_107 = arith.constant 1.000000e+00 : f32
    %472 = vector.broadcast %cst_107 : f32 to vector<2x128xf32>
    %473 = arith.addf %472, %471 : vector<2x128xf32>
    %cst_108 = arith.constant 1.000000e+00 : f32
    %474 = vector.broadcast %cst_108 : f32 to vector<2x128xf32>
    %475 = arith.divf %474, %473 : vector<2x128xf32>
    %476 = vector.extract_strided_slice %475 {offsets = [0, 0], sizes = [2, 32], strides = [1, 1]} : vector<2x128xf32> to vector<2x32xf32>
    %477 = vector.extract_strided_slice %475 {offsets = [0, 32], sizes = [2, 32], strides = [1, 1]} : vector<2x128xf32> to vector<2x32xf32>
    %478 = vector.extract_strided_slice %475 {offsets = [0, 96], sizes = [2, 32], strides = [1, 1]} : vector<2x128xf32> to vector<2x32xf32>
    %479 = vector.extract_strided_slice %468 {offsets = [0, 64], sizes = [2, 32], strides = [1, 1]} : vector<2x128xf32> to vector<2x32xf32>
    %480 = math.tanh %479 : vector<2x32xf32>
    %481 = arith.mulf %477, %466 : vector<2x32xf32>
    %482 = arith.mulf %476, %480 : vector<2x32xf32>
    %483 = arith.addf %481, %482 : vector<2x32xf32>
    %484 = math.tanh %483 : vector<2x32xf32>
    %485 = arith.mulf %478, %484 : vector<2x32xf32>
    %cst_109 = arith.constant dense<0.000000e+00> : vector<2x128xf32>
    %486 = tpu.matmul %485, %404, %cst_109 {dimension_numbers = #tpu.dot_dimension_numbers<[1], [0], [0], [1], [0, 0, 1, 1], [], []>} : vector<2x32xf32>, vector<32x128xf32>, vector<2x128xf32> -> vector<2x128xf32>
    %487 = arith.addf %422, %486 : vector<2x128xf32>
    %cst_110 = arith.constant 0.000000e+00 : f32
    %488 = vector.broadcast %cst_110 : f32 to vector<2x128xf32>
    %489 = arith.subf %488, %487 : vector<2x128xf32>
    %490 = math.exp %489 : vector<2x128xf32>
    %cst_111 = arith.constant 1.000000e+00 : f32
    %491 = vector.broadcast %cst_111 : f32 to vector<2x128xf32>
    %492 = arith.addf %491, %490 : vector<2x128xf32>
    %cst_112 = arith.constant 1.000000e+00 : f32
    %493 = vector.broadcast %cst_112 : f32 to vector<2x128xf32>
    %494 = arith.divf %493, %492 : vector<2x128xf32>
    %495 = vector.extract_strided_slice %494 {offsets = [0, 0], sizes = [2, 32], strides = [1, 1]} : vector<2x128xf32> to vector<2x32xf32>
    %496 = vector.extract_strided_slice %494 {offsets = [0, 32], sizes = [2, 32], strides = [1, 1]} : vector<2x128xf32> to vector<2x32xf32>
    %497 = vector.extract_strided_slice %494 {offsets = [0, 96], sizes = [2, 32], strides = [1, 1]} : vector<2x128xf32> to vector<2x32xf32>
    %498 = vector.extract_strided_slice %487 {offsets = [0, 64], sizes = [2, 32], strides = [1, 1]} : vector<2x128xf32> to vector<2x32xf32>
    %499 = math.tanh %498 : vector<2x32xf32>
    %500 = arith.mulf %496, %483 : vector<2x32xf32>
    %501 = arith.mulf %495, %499 : vector<2x32xf32>
    %502 = arith.addf %500, %501 : vector<2x32xf32>
    %503 = math.tanh %502 : vector<2x32xf32>
    %504 = arith.mulf %497, %503 : vector<2x32xf32>
    %cst_113 = arith.constant dense<0.000000e+00> : vector<2x128xf32>
    %505 = tpu.matmul %504, %404, %cst_113 {dimension_numbers = #tpu.dot_dimension_numbers<[1], [0], [0], [1], [0, 0, 1, 1], [], []>} : vector<2x32xf32>, vector<32x128xf32>, vector<2x128xf32> -> vector<2x128xf32>
    %506 = arith.addf %429, %505 : vector<2x128xf32>
    %cst_114 = arith.constant 0.000000e+00 : f32
    %507 = vector.broadcast %cst_114 : f32 to vector<2x128xf32>
    %508 = arith.subf %507, %506 : vector<2x128xf32>
    %509 = math.exp %508 : vector<2x128xf32>
    %cst_115 = arith.constant 1.000000e+00 : f32
    %510 = vector.broadcast %cst_115 : f32 to vector<2x128xf32>
    %511 = arith.addf %510, %509 : vector<2x128xf32>
    %cst_116 = arith.constant 1.000000e+00 : f32
    %512 = vector.broadcast %cst_116 : f32 to vector<2x128xf32>
    %513 = arith.divf %512, %511 : vector<2x128xf32>
    %514 = vector.extract_strided_slice %513 {offsets = [0, 0], sizes = [2, 32], strides = [1, 1]} : vector<2x128xf32> to vector<2x32xf32>
    %515 = vector.extract_strided_slice %513 {offsets = [0, 32], sizes = [2, 32], strides = [1, 1]} : vector<2x128xf32> to vector<2x32xf32>
    %516 = vector.extract_strided_slice %513 {offsets = [0, 96], sizes = [2, 32], strides = [1, 1]} : vector<2x128xf32> to vector<2x32xf32>
    %517 = vector.extract_strided_slice %506 {offsets = [0, 64], sizes = [2, 32], strides = [1, 1]} : vector<2x128xf32> to vector<2x32xf32>
    %518 = math.tanh %517 : vector<2x32xf32>
    %519 = arith.mulf %515, %502 : vector<2x32xf32>
    %520 = arith.mulf %514, %518 : vector<2x32xf32>
    %521 = arith.addf %519, %520 : vector<2x32xf32>
    %522 = math.tanh %521 : vector<2x32xf32>
    %523 = arith.mulf %516, %522 : vector<2x32xf32>
    %cst_117 = arith.constant dense<0.000000e+00> : vector<2x128xf32>
    %524 = tpu.matmul %523, %404, %cst_117 {dimension_numbers = #tpu.dot_dimension_numbers<[1], [0], [0], [1], [0, 0, 1, 1], [], []>} : vector<2x32xf32>, vector<32x128xf32>, vector<2x128xf32> -> vector<2x128xf32>
    %525 = arith.addf %436, %524 : vector<2x128xf32>
    %cst_118 = arith.constant 0.000000e+00 : f32
    %526 = vector.broadcast %cst_118 : f32 to vector<2x128xf32>
    %527 = arith.subf %526, %525 : vector<2x128xf32>
    %528 = math.exp %527 : vector<2x128xf32>
    %cst_119 = arith.constant 1.000000e+00 : f32
    %529 = vector.broadcast %cst_119 : f32 to vector<2x128xf32>
    %530 = arith.addf %529, %528 : vector<2x128xf32>
    %cst_120 = arith.constant 1.000000e+00 : f32
    %531 = vector.broadcast %cst_120 : f32 to vector<2x128xf32>
    %532 = arith.divf %531, %530 : vector<2x128xf32>
    %533 = vector.extract_strided_slice %532 {offsets = [0, 0], sizes = [2, 32], strides = [1, 1]} : vector<2x128xf32> to vector<2x32xf32>
    %534 = vector.extract_strided_slice %532 {offsets = [0, 32], sizes = [2, 32], strides = [1, 1]} : vector<2x128xf32> to vector<2x32xf32>
    %535 = vector.extract_strided_slice %532 {offsets = [0, 96], sizes = [2, 32], strides = [1, 1]} : vector<2x128xf32> to vector<2x32xf32>
    %536 = vector.extract_strided_slice %525 {offsets = [0, 64], sizes = [2, 32], strides = [1, 1]} : vector<2x128xf32> to vector<2x32xf32>
    %537 = math.tanh %536 : vector<2x32xf32>
    %538 = arith.mulf %534, %521 : vector<2x32xf32>
    %539 = arith.mulf %533, %537 : vector<2x32xf32>
    %540 = arith.addf %538, %539 : vector<2x32xf32>
    %541 = math.tanh %540 : vector<2x32xf32>
    %542 = arith.mulf %535, %541 : vector<2x32xf32>
    %cst_121 = arith.constant dense<0.000000e+00> : vector<2x128xf32>
    %543 = tpu.matmul %542, %404, %cst_121 {dimension_numbers = #tpu.dot_dimension_numbers<[1], [0], [0], [1], [0, 0, 1, 1], [], []>} : vector<2x32xf32>, vector<32x128xf32>, vector<2x128xf32> -> vector<2x128xf32>
    %544 = arith.addf %443, %543 : vector<2x128xf32>
    %cst_122 = arith.constant 0.000000e+00 : f32
    %545 = vector.broadcast %cst_122 : f32 to vector<2x128xf32>
    %546 = arith.subf %545, %544 : vector<2x128xf32>
    %547 = math.exp %546 : vector<2x128xf32>
    %cst_123 = arith.constant 1.000000e+00 : f32
    %548 = vector.broadcast %cst_123 : f32 to vector<2x128xf32>
    %549 = arith.addf %548, %547 : vector<2x128xf32>
    %cst_124 = arith.constant 1.000000e+00 : f32
    %550 = vector.broadcast %cst_124 : f32 to vector<2x128xf32>
    %551 = arith.divf %550, %549 : vector<2x128xf32>
    %552 = vector.extract_strided_slice %551 {offsets = [0, 0], sizes = [2, 32], strides = [1, 1]} : vector<2x128xf32> to vector<2x32xf32>
    %553 = vector.extract_strided_slice %551 {offsets = [0, 32], sizes = [2, 32], strides = [1, 1]} : vector<2x128xf32> to vector<2x32xf32>
    %554 = vector.extract_strided_slice %551 {offsets = [0, 96], sizes = [2, 32], strides = [1, 1]} : vector<2x128xf32> to vector<2x32xf32>
    %555 = vector.extract_strided_slice %544 {offsets = [0, 64], sizes = [2, 32], strides = [1, 1]} : vector<2x128xf32> to vector<2x32xf32>
    %556 = math.tanh %555 : vector<2x32xf32>
    %557 = arith.mulf %553, %540 : vector<2x32xf32>
    %558 = arith.mulf %552, %556 : vector<2x32xf32>
    %559 = arith.addf %557, %558 : vector<2x32xf32>
    %560 = math.tanh %559 : vector<2x32xf32>
    %561 = arith.mulf %554, %560 : vector<2x32xf32>
    %cst_125 = arith.constant dense<0.000000e+00> : vector<2x128xf32>
    %562 = tpu.matmul %561, %404, %cst_125 {dimension_numbers = #tpu.dot_dimension_numbers<[1], [0], [0], [1], [0, 0, 1, 1], [], []>} : vector<2x32xf32>, vector<32x128xf32>, vector<2x128xf32> -> vector<2x128xf32>
    %563 = arith.addf %450, %562 : vector<2x128xf32>
    %cst_126 = arith.constant 0.000000e+00 : f32
    %564 = vector.broadcast %cst_126 : f32 to vector<2x128xf32>
    %565 = arith.subf %564, %563 : vector<2x128xf32>
    %566 = math.exp %565 : vector<2x128xf32>
    %cst_127 = arith.constant 1.000000e+00 : f32
    %567 = vector.broadcast %cst_127 : f32 to vector<2x128xf32>
    %568 = arith.addf %567, %566 : vector<2x128xf32>
    %cst_128 = arith.constant 1.000000e+00 : f32
    %569 = vector.broadcast %cst_128 : f32 to vector<2x128xf32>
    %570 = arith.divf %569, %568 : vector<2x128xf32>
    %571 = vector.extract_strided_slice %570 {offsets = [0, 0], sizes = [2, 32], strides = [1, 1]} : vector<2x128xf32> to vector<2x32xf32>
    %572 = vector.extract_strided_slice %570 {offsets = [0, 32], sizes = [2, 32], strides = [1, 1]} : vector<2x128xf32> to vector<2x32xf32>
    %573 = vector.extract_strided_slice %570 {offsets = [0, 96], sizes = [2, 32], strides = [1, 1]} : vector<2x128xf32> to vector<2x32xf32>
    %574 = vector.extract_strided_slice %563 {offsets = [0, 64], sizes = [2, 32], strides = [1, 1]} : vector<2x128xf32> to vector<2x32xf32>
    %575 = math.tanh %574 : vector<2x32xf32>
    %576 = arith.mulf %572, %559 : vector<2x32xf32>
    %577 = arith.mulf %571, %575 : vector<2x32xf32>
    %578 = arith.addf %576, %577 : vector<2x32xf32>
    %579 = math.tanh %578 : vector<2x32xf32>
    %580 = arith.mulf %573, %579 : vector<2x32xf32>
    %cst_129 = arith.constant dense<0.000000e+00> : vector<2x128xf32>
    %581 = tpu.matmul %580, %404, %cst_129 {dimension_numbers = #tpu.dot_dimension_numbers<[1], [0], [0], [1], [0, 0, 1, 1], [], []>} : vector<2x32xf32>, vector<32x128xf32>, vector<2x128xf32> -> vector<2x128xf32>
    %582 = arith.addf %457, %581 : vector<2x128xf32>
    %cst_130 = arith.constant 0.000000e+00 : f32
    %583 = vector.broadcast %cst_130 : f32 to vector<2x128xf32>
    %584 = arith.subf %583, %582 : vector<2x128xf32>
    %585 = math.exp %584 : vector<2x128xf32>
    %cst_131 = arith.constant 1.000000e+00 : f32
    %586 = vector.broadcast %cst_131 : f32 to vector<2x128xf32>
    %587 = arith.addf %586, %585 : vector<2x128xf32>
    %cst_132 = arith.constant 1.000000e+00 : f32
    %588 = vector.broadcast %cst_132 : f32 to vector<2x128xf32>
    %589 = arith.divf %588, %587 : vector<2x128xf32>
    %590 = vector.extract_strided_slice %589 {offsets = [0, 0], sizes = [2, 32], strides = [1, 1]} : vector<2x128xf32> to vector<2x32xf32>
    %591 = vector.extract_strided_slice %589 {offsets = [0, 32], sizes = [2, 32], strides = [1, 1]} : vector<2x128xf32> to vector<2x32xf32>
    %592 = vector.extract_strided_slice %589 {offsets = [0, 96], sizes = [2, 32], strides = [1, 1]} : vector<2x128xf32> to vector<2x32xf32>
    %593 = vector.extract_strided_slice %582 {offsets = [0, 64], sizes = [2, 32], strides = [1, 1]} : vector<2x128xf32> to vector<2x32xf32>
    %594 = math.tanh %593 : vector<2x32xf32>
    %595 = arith.mulf %591, %578 : vector<2x32xf32>
    %596 = arith.mulf %590, %594 : vector<2x32xf32>
    %597 = arith.addf %595, %596 : vector<2x32xf32>
    %598 = math.tanh %597 : vector<2x32xf32>
    %599 = arith.mulf %592, %598 : vector<2x32xf32>
    %cst_133 = arith.constant dense<0.000000e+00> : vector<2x128xf32>
    %600 = tpu.matmul %599, %404, %cst_133 {dimension_numbers = #tpu.dot_dimension_numbers<[1], [0], [0], [1], [0, 0, 1, 1], [], []>} : vector<2x32xf32>, vector<32x128xf32>, vector<2x128xf32> -> vector<2x128xf32>
    %601 = arith.addf %464, %600 : vector<2x128xf32>
    %cst_134 = arith.constant 0.000000e+00 : f32
    %602 = vector.broadcast %cst_134 : f32 to vector<2x128xf32>
    %603 = arith.subf %602, %601 : vector<2x128xf32>
    %604 = math.exp %603 : vector<2x128xf32>
    %cst_135 = arith.constant 1.000000e+00 : f32
    %605 = vector.broadcast %cst_135 : f32 to vector<2x128xf32>
    %606 = arith.addf %605, %604 : vector<2x128xf32>
    %cst_136 = arith.constant 1.000000e+00 : f32
    %607 = vector.broadcast %cst_136 : f32 to vector<2x128xf32>
    %608 = arith.divf %607, %606 : vector<2x128xf32>
    %609 = vector.extract_strided_slice %608 {offsets = [0, 0], sizes = [2, 32], strides = [1, 1]} : vector<2x128xf32> to vector<2x32xf32>
    %610 = vector.extract_strided_slice %608 {offsets = [0, 32], sizes = [2, 32], strides = [1, 1]} : vector<2x128xf32> to vector<2x32xf32>
    %611 = vector.extract_strided_slice %608 {offsets = [0, 96], sizes = [2, 32], strides = [1, 1]} : vector<2x128xf32> to vector<2x32xf32>
    %612 = vector.extract_strided_slice %601 {offsets = [0, 64], sizes = [2, 32], strides = [1, 1]} : vector<2x128xf32> to vector<2x32xf32>
    %613 = math.tanh %612 : vector<2x32xf32>
    %614 = arith.mulf %610, %597 : vector<2x32xf32>
    %615 = arith.mulf %609, %613 : vector<2x32xf32>
    %616 = arith.addf %614, %615 : vector<2x32xf32>
    %617 = math.tanh %616 : vector<2x32xf32>
    %618 = arith.mulf %611, %617 : vector<2x32xf32>
    %619 = vector.broadcast %143 : vector<1x32xf32> to vector<2x32xf32>
    %620 = arith.mulf %485, %619 : vector<2x32xf32>
    %621 = vector.broadcast %145 : vector<1x32xf32> to vector<2x32xf32>
    %622 = arith.mulf %618, %621 : vector<2x32xf32>
    %623 = arith.addf %620, %622 : vector<2x32xf32>
    %624 = vector.broadcast %143 : vector<1x32xf32> to vector<2x32xf32>
    %625 = arith.mulf %504, %624 : vector<2x32xf32>
    %626 = vector.broadcast %145 : vector<1x32xf32> to vector<2x32xf32>
    %627 = arith.mulf %599, %626 : vector<2x32xf32>
    %628 = arith.addf %625, %627 : vector<2x32xf32>
    %629 = vector.broadcast %143 : vector<1x32xf32> to vector<2x32xf32>
    %630 = arith.mulf %523, %629 : vector<2x32xf32>
    %631 = vector.broadcast %145 : vector<1x32xf32> to vector<2x32xf32>
    %632 = arith.mulf %580, %631 : vector<2x32xf32>
    %633 = arith.addf %630, %632 : vector<2x32xf32>
    %634 = vector.broadcast %143 : vector<1x32xf32> to vector<2x32xf32>
    %635 = arith.mulf %542, %634 : vector<2x32xf32>
    %636 = vector.broadcast %145 : vector<1x32xf32> to vector<2x32xf32>
    %637 = arith.mulf %561, %636 : vector<2x32xf32>
    %638 = arith.addf %635, %637 : vector<2x32xf32>
    %639 = vector.broadcast %143 : vector<1x32xf32> to vector<2x32xf32>
    %640 = arith.mulf %561, %639 : vector<2x32xf32>
    %641 = vector.broadcast %145 : vector<1x32xf32> to vector<2x32xf32>
    %642 = arith.mulf %542, %641 : vector<2x32xf32>
    %643 = arith.addf %640, %642 : vector<2x32xf32>
    %644 = vector.broadcast %143 : vector<1x32xf32> to vector<2x32xf32>
    %645 = arith.mulf %580, %644 : vector<2x32xf32>
    %646 = vector.broadcast %145 : vector<1x32xf32> to vector<2x32xf32>
    %647 = arith.mulf %523, %646 : vector<2x32xf32>
    %648 = arith.addf %645, %647 : vector<2x32xf32>
    %649 = vector.broadcast %143 : vector<1x32xf32> to vector<2x32xf32>
    %650 = arith.mulf %599, %649 : vector<2x32xf32>
    %651 = vector.broadcast %145 : vector<1x32xf32> to vector<2x32xf32>
    %652 = arith.mulf %504, %651 : vector<2x32xf32>
    %653 = arith.addf %650, %652 : vector<2x32xf32>
    %654 = vector.broadcast %143 : vector<1x32xf32> to vector<2x32xf32>
    %655 = arith.mulf %618, %654 : vector<2x32xf32>
    %656 = vector.broadcast %145 : vector<1x32xf32> to vector<2x32xf32>
    %657 = arith.mulf %485, %656 : vector<2x32xf32>
    %658 = arith.addf %655, %657 : vector<2x32xf32>
    %659 = tpu.concatenate %623, %628, %633, %638, %643, %648, %653, %658 in 0 : vector<2x32xf32>, vector<2x32xf32>, vector<2x32xf32>, vector<2x32xf32>, vector<2x32xf32>, vector<2x32xf32>, vector<2x32xf32>, vector<2x32xf32> -> vector<16x32xf32>
    %c1400 = arith.constant 1400 : index
    %c0_137 = arith.constant 0 : index
    %660 = vector.load %arg1[%c1400, %c0_137] : memref<1464x128xf32, #tpu.memory_space<vmem>>, vector<32x8xf32>
    %c1432 = arith.constant 1432 : index
    %c0_138 = arith.constant 0 : index
    %661 = vector.load %arg1[%c1432, %c0_138] : memref<1464x128xf32, #tpu.memory_space<vmem>>, vector<8x32xf32>
    %c1440 = arith.constant 1440 : index
    %c0_139 = arith.constant 0 : index
    %662 = vector.load %arg1[%c1440, %c0_139] : memref<1464x128xf32, #tpu.memory_space<vmem>>, vector<16x16xf32>
    %c808 = arith.constant 808 : index
    %c0_140 = arith.constant 0 : index
    %663 = vector.load %arg1[%c808, %c0_140] : memref<1464x128xf32, #tpu.memory_space<vmem>>, vector<32x32xf32>
    %cst_141 = arith.constant dense<0.000000e+00> : vector<16x32xf32>
    %664 = tpu.matmul %659, %663, %cst_141 {dimension_numbers = #tpu.dot_dimension_numbers<[1], [0], [0], [1], [0, 0, 1, 1], [], []>} : vector<16x32xf32>, vector<32x32xf32>, vector<16x32xf32> -> vector<16x32xf32>
    %c840 = arith.constant 840 : index
    %c0_142 = arith.constant 0 : index
    %665 = vector.load %arg1[%c840, %c0_142] : memref<1464x128xf32, #tpu.memory_space<vmem>>, vector<1x32xf32>
    %666 = vector.broadcast %665 : vector<1x32xf32> to vector<16x32xf32>
    %667 = arith.addf %664, %666 : vector<16x32xf32>
    %c848 = arith.constant 848 : index
    %c0_143 = arith.constant 0 : index
    %668 = vector.load %arg1[%c848, %c0_143] : memref<1464x128xf32, #tpu.memory_space<vmem>>, vector<32x32xf32>
    %cst_144 = arith.constant dense<0.000000e+00> : vector<16x32xf32>
    %669 = tpu.matmul %659, %668, %cst_144 {dimension_numbers = #tpu.dot_dimension_numbers<[1], [0], [0], [1], [0, 0, 1, 1], [], []>} : vector<16x32xf32>, vector<32x32xf32>, vector<16x32xf32> -> vector<16x32xf32>
    %c880 = arith.constant 880 : index
    %c0_145 = arith.constant 0 : index
    %670 = vector.load %arg1[%c880, %c0_145] : memref<1464x128xf32, #tpu.memory_space<vmem>>, vector<1x32xf32>
    %671 = vector.broadcast %670 : vector<1x32xf32> to vector<16x32xf32>
    %672 = arith.addf %669, %671 : vector<16x32xf32>
    %c888 = arith.constant 888 : index
    %c0_146 = arith.constant 0 : index
    %673 = vector.load %arg1[%c888, %c0_146] : memref<1464x128xf32, #tpu.memory_space<vmem>>, vector<32x32xf32>
    %cst_147 = arith.constant dense<0.000000e+00> : vector<16x32xf32>
    %674 = tpu.matmul %659, %673, %cst_147 {dimension_numbers = #tpu.dot_dimension_numbers<[1], [0], [0], [1], [0, 0, 1, 1], [], []>} : vector<16x32xf32>, vector<32x32xf32>, vector<16x32xf32> -> vector<16x32xf32>
    %c920 = arith.constant 920 : index
    %c0_148 = arith.constant 0 : index
    %675 = vector.load %arg1[%c920, %c0_148] : memref<1464x128xf32, #tpu.memory_space<vmem>>, vector<1x32xf32>
    %676 = vector.broadcast %675 : vector<1x32xf32> to vector<16x32xf32>
    %677 = arith.addf %674, %676 : vector<16x32xf32>
    %cst_149 = arith.constant dense<0.000000e+00> : vector<16x32xf32>
    %678 = tpu.matmul %662, %672, %cst_149 {dimension_numbers = #tpu.dot_dimension_numbers<[1], [0], [0], [1], [0, 0, 1, 1], [], []>} : vector<16x16xf32>, vector<16x32xf32>, vector<16x32xf32> -> vector<16x32xf32>
    %cst_150 = arith.constant dense<0.000000e+00> : vector<16x32xf32>
    %679 = tpu.matmul %662, %677, %cst_150 {dimension_numbers = #tpu.dot_dimension_numbers<[1], [0], [0], [1], [0, 0, 1, 1], [], []>} : vector<16x16xf32>, vector<16x32xf32>, vector<16x32xf32> -> vector<16x32xf32>
    %680 = arith.mulf %667, %672 : vector<16x32xf32>
    %cst_151 = arith.constant dense<0.000000e+00> : vector<16x8xf32>
    %681 = tpu.matmul %680, %660, %cst_151 {dimension_numbers = #tpu.dot_dimension_numbers<[1], [0], [0], [1], [0, 0, 1, 1], [], []>} : vector<16x32xf32>, vector<32x8xf32>, vector<16x8xf32> -> vector<16x8xf32>
    %682 = arith.mulf %667, %678 : vector<16x32xf32>
    %cst_152 = arith.constant dense<0.000000e+00> : vector<16x8xf32>
    %683 = tpu.matmul %682, %660, %cst_152 {dimension_numbers = #tpu.dot_dimension_numbers<[1], [0], [0], [1], [0, 0, 1, 1], [], []>} : vector<16x32xf32>, vector<32x8xf32>, vector<16x8xf32> -> vector<16x8xf32>
    %684 = arith.maximumf %681, %683 : vector<16x8xf32>
    %685 = arith.subf %681, %684 : vector<16x8xf32>
    %686 = math.exp %685 : vector<16x8xf32>
    %687 = arith.subf %683, %684 : vector<16x8xf32>
    %688 = math.exp %687 : vector<16x8xf32>
    %689 = arith.addf %686, %688 : vector<16x8xf32>
    %690 = arith.divf %686, %689 : vector<16x8xf32>
    %cst_153 = arith.constant dense<0.000000e+00> : vector<16x32xf32>
    %691 = tpu.matmul %690, %661, %cst_153 {dimension_numbers = #tpu.dot_dimension_numbers<[1], [0], [0], [1], [0, 0, 1, 1], [], []>} : vector<16x8xf32>, vector<8x32xf32>, vector<16x32xf32> -> vector<16x32xf32>
    %692 = arith.mulf %691, %677 : vector<16x32xf32>
    %693 = arith.divf %688, %689 : vector<16x8xf32>
    %cst_154 = arith.constant dense<0.000000e+00> : vector<16x32xf32>
    %694 = tpu.matmul %693, %661, %cst_154 {dimension_numbers = #tpu.dot_dimension_numbers<[1], [0], [0], [1], [0, 0, 1, 1], [], []>} : vector<16x8xf32>, vector<8x32xf32>, vector<16x32xf32> -> vector<16x32xf32>
    %695 = arith.mulf %694, %679 : vector<16x32xf32>
    %696 = arith.addf %692, %695 : vector<16x32xf32>
    %c928 = arith.constant 928 : index
    %c0_155 = arith.constant 0 : index
    %697 = vector.load %arg1[%c928, %c0_155] : memref<1464x128xf32, #tpu.memory_space<vmem>>, vector<32x32xf32>
    %cst_156 = arith.constant dense<0.000000e+00> : vector<16x32xf32>
    %698 = tpu.matmul %696, %697, %cst_156 {dimension_numbers = #tpu.dot_dimension_numbers<[1], [0], [0], [1], [0, 0, 1, 1], [], []>} : vector<16x32xf32>, vector<32x32xf32>, vector<16x32xf32> -> vector<16x32xf32>
    %c960 = arith.constant 960 : index
    %c0_157 = arith.constant 0 : index
    %699 = vector.load %arg1[%c960, %c0_157] : memref<1464x128xf32, #tpu.memory_space<vmem>>, vector<1x32xf32>
    %700 = vector.broadcast %699 : vector<1x32xf32> to vector<16x32xf32>
    %701 = arith.addf %698, %700 : vector<16x32xf32>
    %702 = arith.addf %659, %701 : vector<16x32xf32>
    %c968 = arith.constant 968 : index
    %c0_158 = arith.constant 0 : index
    %703 = vector.load %arg1[%c968, %c0_158] : memref<1464x128xf32, #tpu.memory_space<vmem>>, vector<1x32xf32>
    %c976 = arith.constant 976 : index
    %c0_159 = arith.constant 0 : index
    %704 = vector.load %arg1[%c976, %c0_159] : memref<1464x128xf32, #tpu.memory_space<vmem>>, vector<1x32xf32>
    %cst_160 = arith.constant dense<0.000000e+00> : vector<16xf32>
    %705 = vector.multi_reduction <add>, %702, %cst_160 [1] : vector<16x32xf32> to vector<16xf32>
    %706 = vector.shape_cast %705 : vector<16xf32> to vector<16x1xf32>
    %cst_161 = arith.constant 3.200000e+01 : f32
    %707 = vector.broadcast %cst_161 : f32 to vector<16x1xf32>
    %708 = arith.divf %706, %707 : vector<16x1xf32>
    %709 = vector.broadcast %708 : vector<16x1xf32> to vector<16x32xf32>
    %710 = arith.subf %702, %709 : vector<16x32xf32>
    %711 = arith.mulf %710, %710 : vector<16x32xf32>
    %cst_162 = arith.constant dense<0.000000e+00> : vector<16xf32>
    %712 = vector.multi_reduction <add>, %711, %cst_162 [1] : vector<16x32xf32> to vector<16xf32>
    %713 = vector.shape_cast %712 : vector<16xf32> to vector<16x1xf32>
    %cst_163 = arith.constant 3.200000e+01 : f32
    %714 = vector.broadcast %cst_163 : f32 to vector<16x1xf32>
    %715 = arith.divf %713, %714 : vector<16x1xf32>
    %cst_164 = arith.constant 9.99999974E-6 : f32
    %716 = vector.broadcast %cst_164 : f32 to vector<16x1xf32>
    %717 = arith.addf %715, %716 : vector<16x1xf32>
    %718 = math.rsqrt %717 : vector<16x1xf32>
    %719 = vector.broadcast %718 : vector<16x1xf32> to vector<16x32xf32>
    %720 = arith.mulf %710, %719 : vector<16x32xf32>
    %721 = vector.broadcast %703 : vector<1x32xf32> to vector<16x32xf32>
    %722 = arith.mulf %720, %721 : vector<16x32xf32>
    %723 = vector.broadcast %704 : vector<1x32xf32> to vector<16x32xf32>
    %724 = arith.addf %722, %723 : vector<16x32xf32>
    %c984 = arith.constant 984 : index
    %c0_165 = arith.constant 0 : index
    %725 = vector.load %arg1[%c984, %c0_165] : memref<1464x128xf32, #tpu.memory_space<vmem>>, vector<32x128xf32>
    %cst_166 = arith.constant dense<0.000000e+00> : vector<16x128xf32>
    %726 = tpu.matmul %724, %725, %cst_166 {dimension_numbers = #tpu.dot_dimension_numbers<[1], [0], [0], [1], [0, 0, 1, 1], [], []>} : vector<16x32xf32>, vector<32x128xf32>, vector<16x128xf32> -> vector<16x128xf32>
    %c1016 = arith.constant 1016 : index
    %c0_167 = arith.constant 0 : index
    %727 = vector.load %arg1[%c1016, %c0_167] : memref<1464x128xf32, #tpu.memory_space<vmem>>, vector<1x128xf32>
    %728 = vector.broadcast %727 : vector<1x128xf32> to vector<16x128xf32>
    %729 = arith.addf %726, %728 : vector<16x128xf32>
    %cst_168 = arith.constant 5.000000e-01 : f32
    %730 = vector.broadcast %cst_168 : f32 to vector<16x128xf32>
    %731 = arith.mulf %730, %729 : vector<16x128xf32>
    %cst_169 = arith.constant 0.707106769 : f32
    %732 = vector.broadcast %cst_169 : f32 to vector<16x128xf32>
    %733 = arith.mulf %729, %732 : vector<16x128xf32>
    %734 = math.absf %733 : vector<16x128xf32>
    %cst_170 = arith.constant 0.327591091 : f32
    %735 = vector.broadcast %cst_170 : f32 to vector<16x128xf32>
    %736 = arith.mulf %735, %734 : vector<16x128xf32>
    %cst_171 = arith.constant 1.000000e+00 : f32
    %737 = vector.broadcast %cst_171 : f32 to vector<16x128xf32>
    %738 = arith.addf %737, %736 : vector<16x128xf32>
    %cst_172 = arith.constant 1.000000e+00 : f32
    %739 = vector.broadcast %cst_172 : f32 to vector<16x128xf32>
    %740 = arith.divf %739, %738 : vector<16x128xf32>
    %cst_173 = arith.constant 1.06140542 : f32
    %741 = vector.broadcast %cst_173 : f32 to vector<16x128xf32>
    %742 = arith.mulf %741, %740 : vector<16x128xf32>
    %cst_174 = arith.constant -1.45315206 : f32
    %743 = vector.broadcast %cst_174 : f32 to vector<16x128xf32>
    %744 = arith.addf %742, %743 : vector<16x128xf32>
    %745 = arith.mulf %744, %740 : vector<16x128xf32>
    %cst_175 = arith.constant 1.42141378 : f32
    %746 = vector.broadcast %cst_175 : f32 to vector<16x128xf32>
    %747 = arith.addf %745, %746 : vector<16x128xf32>
    %748 = arith.mulf %747, %740 : vector<16x128xf32>
    %cst_176 = arith.constant -0.284496725 : f32
    %749 = vector.broadcast %cst_176 : f32 to vector<16x128xf32>
    %750 = arith.addf %748, %749 : vector<16x128xf32>
    %751 = arith.mulf %750, %740 : vector<16x128xf32>
    %cst_177 = arith.constant 0.254829586 : f32
    %752 = vector.broadcast %cst_177 : f32 to vector<16x128xf32>
    %753 = arith.addf %751, %752 : vector<16x128xf32>
    %754 = arith.mulf %753, %740 : vector<16x128xf32>
    %cst_178 = arith.constant 0.000000e+00 : f32
    %755 = vector.broadcast %cst_178 : f32 to vector<16x128xf32>
    %756 = arith.subf %755, %734 : vector<16x128xf32>
    %757 = arith.mulf %756, %734 : vector<16x128xf32>
    %758 = math.exp %757 : vector<16x128xf32>
    %759 = arith.mulf %754, %758 : vector<16x128xf32>
    %cst_179 = arith.constant 1.000000e+00 : f32
    %760 = vector.broadcast %cst_179 : f32 to vector<16x128xf32>
    %761 = arith.subf %760, %759 : vector<16x128xf32>
    %cst_180 = arith.constant 0.000000e+00 : f32
    %762 = vector.broadcast %cst_180 : f32 to vector<16x128xf32>
    %763 = arith.cmpf olt, %733, %762 : vector<16x128xf32>
    %cst_181 = arith.constant 0.000000e+00 : f32
    %764 = vector.broadcast %cst_181 : f32 to vector<16x128xf32>
    %765 = arith.subf %764, %761 : vector<16x128xf32>
    %766 = arith.select %763, %765, %761 : vector<16x128xi1>, vector<16x128xf32>
    %cst_182 = arith.constant 1.000000e+00 : f32
    %767 = vector.broadcast %cst_182 : f32 to vector<16x128xf32>
    %768 = arith.addf %767, %766 : vector<16x128xf32>
    %769 = arith.mulf %731, %768 : vector<16x128xf32>
    %c1024 = arith.constant 1024 : index
    %c0_183 = arith.constant 0 : index
    %770 = vector.load %arg1[%c1024, %c0_183] : memref<1464x128xf32, #tpu.memory_space<vmem>>, vector<128x32xf32>
    %cst_184 = arith.constant dense<0.000000e+00> : vector<16x32xf32>
    %771 = tpu.matmul %769, %770, %cst_184 {dimension_numbers = #tpu.dot_dimension_numbers<[1], [0], [0], [1], [0, 0, 1, 1], [], []>} : vector<16x128xf32>, vector<128x32xf32>, vector<16x32xf32> -> vector<16x32xf32>
    %c1152 = arith.constant 1152 : index
    %c0_185 = arith.constant 0 : index
    %772 = vector.load %arg1[%c1152, %c0_185] : memref<1464x128xf32, #tpu.memory_space<vmem>>, vector<1x32xf32>
    %773 = vector.broadcast %772 : vector<1x32xf32> to vector<16x32xf32>
    %774 = arith.addf %771, %773 : vector<16x32xf32>
    %775 = arith.addf %724, %774 : vector<16x32xf32>
    %c1160 = arith.constant 1160 : index
    %c0_186 = arith.constant 0 : index
    %776 = vector.load %arg1[%c1160, %c0_186] : memref<1464x128xf32, #tpu.memory_space<vmem>>, vector<1x32xf32>
    %c1168 = arith.constant 1168 : index
    %c0_187 = arith.constant 0 : index
    %777 = vector.load %arg1[%c1168, %c0_187] : memref<1464x128xf32, #tpu.memory_space<vmem>>, vector<1x32xf32>
    %cst_188 = arith.constant dense<0.000000e+00> : vector<16xf32>
    %778 = vector.multi_reduction <add>, %775, %cst_188 [1] : vector<16x32xf32> to vector<16xf32>
    %779 = vector.shape_cast %778 : vector<16xf32> to vector<16x1xf32>
    %cst_189 = arith.constant 3.200000e+01 : f32
    %780 = vector.broadcast %cst_189 : f32 to vector<16x1xf32>
    %781 = arith.divf %779, %780 : vector<16x1xf32>
    %782 = vector.broadcast %781 : vector<16x1xf32> to vector<16x32xf32>
    %783 = arith.subf %775, %782 : vector<16x32xf32>
    %784 = arith.mulf %783, %783 : vector<16x32xf32>
    %cst_190 = arith.constant dense<0.000000e+00> : vector<16xf32>
    %785 = vector.multi_reduction <add>, %784, %cst_190 [1] : vector<16x32xf32> to vector<16xf32>
    %786 = vector.shape_cast %785 : vector<16xf32> to vector<16x1xf32>
    %cst_191 = arith.constant 3.200000e+01 : f32
    %787 = vector.broadcast %cst_191 : f32 to vector<16x1xf32>
    %788 = arith.divf %786, %787 : vector<16x1xf32>
    %cst_192 = arith.constant 9.99999974E-6 : f32
    %789 = vector.broadcast %cst_192 : f32 to vector<16x1xf32>
    %790 = arith.addf %788, %789 : vector<16x1xf32>
    %791 = math.rsqrt %790 : vector<16x1xf32>
    %792 = vector.broadcast %791 : vector<16x1xf32> to vector<16x32xf32>
    %793 = arith.mulf %783, %792 : vector<16x32xf32>
    %794 = vector.broadcast %776 : vector<1x32xf32> to vector<16x32xf32>
    %795 = arith.mulf %793, %794 : vector<16x32xf32>
    %796 = vector.broadcast %777 : vector<1x32xf32> to vector<16x32xf32>
    %797 = arith.addf %795, %796 : vector<16x32xf32>
    %c1176 = arith.constant 1176 : index
    %c0_193 = arith.constant 0 : index
    %798 = vector.load %arg1[%c1176, %c0_193] : memref<1464x128xf32, #tpu.memory_space<vmem>>, vector<32x32xf32>
    %cst_194 = arith.constant dense<0.000000e+00> : vector<16x32xf32>
    %799 = tpu.matmul %797, %798, %cst_194 {dimension_numbers = #tpu.dot_dimension_numbers<[1], [0], [0], [1], [0, 0, 1, 1], [], []>} : vector<16x32xf32>, vector<32x32xf32>, vector<16x32xf32> -> vector<16x32xf32>
    %c1208 = arith.constant 1208 : index
    %c0_195 = arith.constant 0 : index
    %800 = vector.load %arg1[%c1208, %c0_195] : memref<1464x128xf32, #tpu.memory_space<vmem>>, vector<1x32xf32>
    %801 = vector.broadcast %800 : vector<1x32xf32> to vector<16x32xf32>
    %802 = arith.addf %799, %801 : vector<16x32xf32>
    %c1216 = arith.constant 1216 : index
    %c0_196 = arith.constant 0 : index
    %803 = vector.load %arg1[%c1216, %c0_196] : memref<1464x128xf32, #tpu.memory_space<vmem>>, vector<32x32xf32>
    %cst_197 = arith.constant dense<0.000000e+00> : vector<16x32xf32>
    %804 = tpu.matmul %797, %803, %cst_197 {dimension_numbers = #tpu.dot_dimension_numbers<[1], [0], [0], [1], [0, 0, 1, 1], [], []>} : vector<16x32xf32>, vector<32x32xf32>, vector<16x32xf32> -> vector<16x32xf32>
    %c1248 = arith.constant 1248 : index
    %c0_198 = arith.constant 0 : index
    %805 = vector.load %arg1[%c1248, %c0_198] : memref<1464x128xf32, #tpu.memory_space<vmem>>, vector<1x32xf32>
    %806 = vector.broadcast %805 : vector<1x32xf32> to vector<16x32xf32>
    %807 = arith.addf %804, %806 : vector<16x32xf32>
    %c1256 = arith.constant 1256 : index
    %c0_199 = arith.constant 0 : index
    %808 = vector.load %arg1[%c1256, %c0_199] : memref<1464x128xf32, #tpu.memory_space<vmem>>, vector<32x32xf32>
    %cst_200 = arith.constant dense<0.000000e+00> : vector<16x32xf32>
    %809 = tpu.matmul %797, %808, %cst_200 {dimension_numbers = #tpu.dot_dimension_numbers<[1], [0], [0], [1], [0, 0, 1, 1], [], []>} : vector<16x32xf32>, vector<32x32xf32>, vector<16x32xf32> -> vector<16x32xf32>
    %c1288 = arith.constant 1288 : index
    %c0_201 = arith.constant 0 : index
    %810 = vector.load %arg1[%c1288, %c0_201] : memref<1464x128xf32, #tpu.memory_space<vmem>>, vector<1x32xf32>
    %811 = vector.broadcast %810 : vector<1x32xf32> to vector<16x32xf32>
    %812 = arith.addf %809, %811 : vector<16x32xf32>
    %cst_202 = arith.constant dense<0.000000e+00> : vector<16x32xf32>
    %813 = tpu.matmul %662, %807, %cst_202 {dimension_numbers = #tpu.dot_dimension_numbers<[1], [0], [0], [1], [0, 0, 1, 1], [], []>} : vector<16x16xf32>, vector<16x32xf32>, vector<16x32xf32> -> vector<16x32xf32>
    %cst_203 = arith.constant dense<0.000000e+00> : vector<16x32xf32>
    %814 = tpu.matmul %662, %812, %cst_203 {dimension_numbers = #tpu.dot_dimension_numbers<[1], [0], [0], [1], [0, 0, 1, 1], [], []>} : vector<16x16xf32>, vector<16x32xf32>, vector<16x32xf32> -> vector<16x32xf32>
    %815 = arith.mulf %802, %807 : vector<16x32xf32>
    %cst_204 = arith.constant dense<0.000000e+00> : vector<16x8xf32>
    %816 = tpu.matmul %815, %660, %cst_204 {dimension_numbers = #tpu.dot_dimension_numbers<[1], [0], [0], [1], [0, 0, 1, 1], [], []>} : vector<16x32xf32>, vector<32x8xf32>, vector<16x8xf32> -> vector<16x8xf32>
    %817 = arith.mulf %802, %813 : vector<16x32xf32>
    %cst_205 = arith.constant dense<0.000000e+00> : vector<16x8xf32>
    %818 = tpu.matmul %817, %660, %cst_205 {dimension_numbers = #tpu.dot_dimension_numbers<[1], [0], [0], [1], [0, 0, 1, 1], [], []>} : vector<16x32xf32>, vector<32x8xf32>, vector<16x8xf32> -> vector<16x8xf32>
    %819 = arith.maximumf %816, %818 : vector<16x8xf32>
    %820 = arith.subf %816, %819 : vector<16x8xf32>
    %821 = math.exp %820 : vector<16x8xf32>
    %822 = arith.subf %818, %819 : vector<16x8xf32>
    %823 = math.exp %822 : vector<16x8xf32>
    %824 = arith.addf %821, %823 : vector<16x8xf32>
    %825 = arith.divf %821, %824 : vector<16x8xf32>
    %cst_206 = arith.constant dense<0.000000e+00> : vector<16x32xf32>
    %826 = tpu.matmul %825, %661, %cst_206 {dimension_numbers = #tpu.dot_dimension_numbers<[1], [0], [0], [1], [0, 0, 1, 1], [], []>} : vector<16x8xf32>, vector<8x32xf32>, vector<16x32xf32> -> vector<16x32xf32>
    %827 = arith.mulf %826, %812 : vector<16x32xf32>
    %828 = arith.divf %823, %824 : vector<16x8xf32>
    %cst_207 = arith.constant dense<0.000000e+00> : vector<16x32xf32>
    %829 = tpu.matmul %828, %661, %cst_207 {dimension_numbers = #tpu.dot_dimension_numbers<[1], [0], [0], [1], [0, 0, 1, 1], [], []>} : vector<16x8xf32>, vector<8x32xf32>, vector<16x32xf32> -> vector<16x32xf32>
    %830 = arith.mulf %829, %814 : vector<16x32xf32>
    %831 = arith.addf %827, %830 : vector<16x32xf32>
    %c1296 = arith.constant 1296 : index
    %c0_208 = arith.constant 0 : index
    %832 = vector.load %arg1[%c1296, %c0_208] : memref<1464x128xf32, #tpu.memory_space<vmem>>, vector<32x32xf32>
    %cst_209 = arith.constant dense<0.000000e+00> : vector<16x32xf32>
    %833 = tpu.matmul %831, %832, %cst_209 {dimension_numbers = #tpu.dot_dimension_numbers<[1], [0], [0], [1], [0, 0, 1, 1], [], []>} : vector<16x32xf32>, vector<32x32xf32>, vector<16x32xf32> -> vector<16x32xf32>
    %c1328 = arith.constant 1328 : index
    %c0_210 = arith.constant 0 : index
    %834 = vector.load %arg1[%c1328, %c0_210] : memref<1464x128xf32, #tpu.memory_space<vmem>>, vector<1x32xf32>
    %835 = vector.broadcast %834 : vector<1x32xf32> to vector<16x32xf32>
    %836 = arith.addf %833, %835 : vector<16x32xf32>
    %c1456 = arith.constant 1456 : index
    %c0_211 = arith.constant 0 : index
    %837 = vector.load %arg1[%c1456, %c0_211] : memref<1464x128xf32, #tpu.memory_space<vmem>>, vector<2x16xf32>
    %cst_212 = arith.constant dense<0.000000e+00> : vector<2x32xf32>
    %838 = tpu.matmul %837, %836, %cst_212 {dimension_numbers = #tpu.dot_dimension_numbers<[1], [0], [0], [1], [0, 0, 1, 1], [], []>} : vector<2x16xf32>, vector<16x32xf32>, vector<2x32xf32> -> vector<2x32xf32>
    %c1336 = arith.constant 1336 : index
    %c0_213 = arith.constant 0 : index
    %839 = vector.load %arg1[%c1336, %c0_213] : memref<1464x128xf32, #tpu.memory_space<vmem>>, vector<32x16xf32>
    %cst_214 = arith.constant dense<0.000000e+00> : vector<2x16xf32>
    %840 = tpu.matmul %838, %839, %cst_214 {dimension_numbers = #tpu.dot_dimension_numbers<[1], [0], [0], [1], [0, 0, 1, 1], [], []>} : vector<2x32xf32>, vector<32x16xf32>, vector<2x16xf32> -> vector<2x16xf32>
    %c1368 = arith.constant 1368 : index
    %c0_215 = arith.constant 0 : index
    %841 = vector.load %arg1[%c1368, %c0_215] : memref<1464x128xf32, #tpu.memory_space<vmem>>, vector<1x16xf32>
    %842 = vector.broadcast %841 : vector<1x16xf32> to vector<2x16xf32>
    %843 = arith.addf %840, %842 : vector<2x16xf32>
    %cst_216 = arith.constant 0.000000e+00 : f32
    %844 = vector.broadcast %cst_216 : f32 to vector<2x16xf32>
    %845 = arith.maximumf %843, %844 : vector<2x16xf32>
    %c1376 = arith.constant 1376 : index
    %c0_217 = arith.constant 0 : index
    %846 = vector.load %arg1[%c1376, %c0_217] : memref<1464x128xf32, #tpu.memory_space<vmem>>, vector<16x64xf32>
    %cst_218 = arith.constant dense<0.000000e+00> : vector<2x64xf32>
    %847 = tpu.matmul %845, %846, %cst_218 {dimension_numbers = #tpu.dot_dimension_numbers<[1], [0], [0], [1], [0, 0, 1, 1], [], []>} : vector<2x16xf32>, vector<16x64xf32>, vector<2x64xf32> -> vector<2x64xf32>
    %c1392 = arith.constant 1392 : index
    %c0_219 = arith.constant 0 : index
    %848 = vector.load %arg1[%c1392, %c0_219] : memref<1464x128xf32, #tpu.memory_space<vmem>>, vector<1x64xf32>
    %849 = vector.broadcast %848 : vector<1x64xf32> to vector<2x64xf32>
    %850 = arith.addf %847, %849 : vector<2x64xf32>
    %c0_220 = arith.constant 0 : index
    %c0_221 = arith.constant 0 : index
    %851 = vector.load %arg2[%c0_220, %c0_221] : memref<2x64xf32, #tpu.memory_space<vmem>>, vector<2x64xf32>
    tpu.vector_store %arg2[%c0_220, %c0_221], %850 {strides = array<i32>} : memref<2x64xf32, #tpu.memory_space<vmem>>, vector<2x64xf32>,
    return
  }
}

</mosaic_0001>

<llo_original>
// kernel: fwd.1
$region0: #{fwd.1}
  #allocation0 [shape = 'u32[]', space=smem, size = 0x4, offset = 0x4, fixed_abs, tag = 'smem constant byte address 0x4 - core index']
  #allocation1 [shape = 'u32[144,128]{1,0:T(1,128)}', space=vmem, size = 0x12000, scoped, tag = 'internal scratch']
  %s0 = inlined_call_operand.vmem [shape: f32[16,16], index: 0, kind: input, shape index: {}]
  %s1 = inlined_call_operand.hbm [shape: f32[1464,128], index: 1, kind: input, shape index: {}]
  %s2 = inlined_call_operand.hbm [shape: f32[2,64], index: 2, kind: output, shape index: {}]
  %s3 = sld [smem:[#allocation0]]
  $region22: #{fwd.1} parent=0
    _
  %s5 = ssub.s32 1, %s3
  %s6 = scalar_select 0, %s5, %s3
  $region1: #{fwd.1} parent=0
    #allocation2 [shape = 'u8[749568]{0}', space=vmem, size = 0xb7000, scoped, tag = 'input window, operand 1, single buffered']
    #allocation3 [shape = 's32[1]{0}', space=sflag, size = 0x4, scoped, tag = 'scoped memory for fwd.1']
    #allocation4 [shape = 's32[1]{0}', space=sflag, size = 0x4, scoped, tag = 'scoped memory for fwd.1']
    #allocation5 [shape = 'u8[1024]{0}', space=vmem, size = 0x400, scoped, tag = 'output window, operand 0, single buffered']
    %7 = vsyncpa [#allocation3], 0
    %8 = vsyncpa [#allocation4], 0
    // Predicated region
    $region2: #{fwd.1} parent=1 // pred_check
      _
    $region3: #{fwd.1} parent=1 // pred_check_branch
      %10 = sbr.rel (0) target = $region5
    $region4: #{fwd.1} parent=1 // pred_region
      _
    $region5: #{fwd.1} parent=1 // pred_fallthru
      _
    // Predicated region
    $region6: #{fwd.1} parent=1 // pred_check
      _
    $region7: #{fwd.1} parent=1 // pred_check_branch
      %12 = sbr.rel (0) target = $region9
    $region8: #{fwd.1} parent=1 // pred_region
      %s14 = ssub.s32 23424, 23424
      %15 = vsyncadd [#allocation3], %s14
      %s16 = sshll.u32 [#allocation2], 4
      %s17 = int_to_ptr.vmem [resolvable:$true] %s16
      %22 = dma.hbm_to_vmem [thread:$0]  %s1, 23424, %s17, [#allocation3], 128, 128, 8
    $region9: #{fwd.1} parent=1 // pred_fallthru
      _
    // Predicated region
    $region10: #{fwd.1} parent=1 // pred_check
      _
    $region11: #{fwd.1} parent=1 // pred_check_branch
      %24 = sbr.rel (0) target = $region13
    $region12: #{fwd.1} parent=1 // pred_region
      %25 = dma.done [#allocation3], 23424
    $region13: #{fwd.1} parent=1 // pred_fallthru
      _
    %v26 = vld [vmem:[%s0] sm:$0xff]
    %v27 = vld [vmem:[%s0 + $0x8] sm:$0xff]
    %v28 = vld [vmem:[#allocation2] sm:$0xff]
    %v29 = vld [vmem:[#allocation2 + $0x8] sm:$0xff]
    %v30 = vld [vmem:[#allocation2 + $0x10] sm:$0x1]
    %v31 = vlaneseq
    %v32 = vshrl.u32 %v31, 7
    %v33 = vsub.s32 0, %v32
    %v34 = vrot.slane %v30, %v33
    %vm35 = vcmask 130048
    %v37 = vsel %vm35, %v26, 0
    %v40 = vsel %vm35, %v27, 0
    %42 = vmatprep.subr.mxu0 0.0
    %43 = vmatpush1.msra.mxu0 %v28
    %44 = vmatprep.subr.mxu0 0.0
    %45 = vmatpush1.msra.mxu0 %v29
    %46 = vmatprep.subr.mxu0 0.0
    %47 = vmatpush1.msra.mxu0 0.0
    %48 = vmatprep.subr.mxu0 0.0
    %49 = vmatpush1.msra.mxu0 0.0
    %50 = vmatprep.subr.mxu0 0.0
    %51 = vmatpush1.msra.mxu0 0.0
    %52 = vmatprep.subr.mxu0 0.0
    %53 = vmatpush1.msra.mxu0 0.0
    %54 = vmatprep.subr.mxu0 0.0
    %55 = vmatpush1.msra.mxu0 0.0
    %56 = vmatprep.subr.mxu0 0.0
    %57 = vmatpush1.msra.mxu0 0.0
    %58 = vmatprep.subr.mxu0 0.0
    %59 = vmatpush1.msra.mxu0 0.0
    %60 = vmatprep.subr.mxu0 0.0
    %61 = vmatpush1.msra.mxu0 0.0
    %62 = vmatprep.subr.mxu0 0.0
    %63 = vmatpush1.msra.mxu0 0.0
    %64 = vmatprep.subr.mxu0 0.0
    %65 = vmatpush1.msra.mxu0 0.0
    %66 = vmatprep.subr.mxu0 0.0
    %67 = vmatpush1.msra.mxu0 0.0
    %68 = vmatprep.subr.mxu0 0.0
    %69 = vmatpush1.msra.mxu0 0.0
    %70 = vmatprep.subr.mxu0 0.0
    %71 = vmatpush1.msra.mxu0 0.0
    %72 = vmatprep.subr.mxu0 0.0
    %73 = vmatpush1.msra.mxu0 0.0
    %74 = vmatprep.subr.mxu0 0.0
    %75 = vmatpush1.msra.mxu0 0.0
    %76 = vmatprep.subr.mxu0 0.0
    %77 = vmatpush1.msra.mxu0 0.0
    %78 = vmatprep.subr.mxu0 0.0
    %79 = vmatpush1.msra.mxu0 0.0
    %80 = vmatprep.subr.mxu0 0.0
    %81 = vmatpush1.msra.mxu0 0.0
    %82 = vmatprep.subr.mxu0 0.0
    %83 = vmatpush1.msra.mxu0 0.0
    %84 = vmatprep.subr.mxu0 0.0
    %85 = vmatpush1.msra.mxu0 0.0
    %86 = vmatprep.subr.mxu0 0.0
    %87 = vmatpush1.msra.mxu0 0.0
    %88 = vmatprep.subr.mxu0 0.0
    %89 = vmatpush1.msra.mxu0 0.0
    %90 = vmatprep.subr.mxu0 0.0
    %91 = vmatpush1.msra.mxu0 0.0
    %92 = vmatprep.subr.mxu0 0.0
    %93 = vmatpush1.msra.mxu0 0.0
    %94 = vmatprep.subr.mxu0 0.0
    %95 = vmatpush1.msra.mxu0 0.0
    %96 = vmatprep.subr.mxu0 0.0
    %97 = vmatpush1.msra.mxu0 0.0
    %98 = vmatprep.subr.mxu0 0.0
    %99 = vmatpush1.msra.mxu0 0.0
    %100 = vmatprep.subr.mxu0 0.0
    %101 = vmatpush1.msra.mxu0 0.0
    %102 = vmatprep.subr.mxu0 0.0
    %103 = vmatpush1.msra.mxu0 0.0
    %104 = vmatprep.subr.mxu0 0.0
    %105 = vmatpush1.msra.mxu0 0.0
    %106 = vmatprep.mubr.f32.mxu0 0.0
    %107 = vmatmul.mubr.f32.gmra.mrb[0].mxu0 %v37
    %v108 = vpop.f32.mrb[0].mxu0
    %v109 = vadd.f32 %v34, %v108
    %v110 = vpop.f32.mrb[0].mxu0
    %111 = vmatprep.mubr.f32.mxu0 0.0
    %112 = vmatmul.mubr.f32.gmra.mrb[0].mxu0 %v40
    %v113 = vpop.f32.mrb[0].mxu0
    %v114 = vadd.f32 %v34, %v113
    %v115 = vpop.f32.mrb[0].mxu0
    %116 = vdwg.mxu0
    %v117 = vmax.f32 %v109, 0.0
    %v118 = vmax.f32 %v114, 0.0
    %v119 = vld [vmem:[#allocation2 + $0x38] sm:$0xff]
    %v120 = vld [vmem:[#allocation2 + $0x40] sm:$0xff]
    %v121 = vld [vmem:[#allocation2 + $0x48] sm:$0xff]
    %v122 = vld [vmem:[#allocation2 + $0x50] sm:$0xff]
    %vm125 = vcmask 1041408
    %v126 = vrot.slane %v117, 6
    %v127 = vrot.slane %v118, 6
    %v128 = vsel %vm125, %v126, %v127
    %v130 = vsel %vm125, 0.0, %v126
    %v131 = vld [vmem:[#allocation2 + $0x18] sm:$0xff]
    %v132 = vld [vmem:[#allocation2 + $0x20] sm:$0xff]
    %v133 = vld [vmem:[#allocation2 + $0x28] sm:$0xff]
    %v134 = vld [vmem:[#allocation2 + $0x30] sm:$0xff]
    %vm135 = vcmask 261120
    %v137 = vsel %vm135, %v130, 0
    %v139 = vsel %vm135, %v128, 0
    %141 = vmatprep.subr.mxu0 0.0
    %142 = vmatpush1.msra.mxu0 %v131
    %143 = vmatprep.subr.mxu0 0.0
    %144 = vmatpush1.msra.mxu0 %v132
    %145 = vmatprep.subr.mxu0 0.0
    %146 = vmatpush1.msra.mxu0 %v133
    %147 = vmatprep.subr.mxu0 0.0
    %148 = vmatpush1.msra.mxu0 %v134
    %149 = vmatprep.subr.mxu0 0.0
    %150 = vmatpush1.msra.mxu0 0.0
    %151 = vmatprep.subr.mxu0 0.0
    %152 = vmatpush1.msra.mxu0 0.0
    %153 = vmatprep.subr.mxu0 0.0
    %154 = vmatpush1.msra.mxu0 0.0
    %155 = vmatprep.subr.mxu0 0.0
    %156 = vmatpush1.msra.mxu0 0.0
    %157 = vmatprep.subr.mxu0 0.0
    %158 = vmatpush1.msra.mxu0 0.0
    %159 = vmatprep.subr.mxu0 0.0
    %160 = vmatpush1.msra.mxu0 0.0
    %161 = vmatprep.subr.mxu0 0.0
    %162 = vmatpush1.msra.mxu0 0.0
    %163 = vmatprep.subr.mxu0 0.0
    %164 = vmatpush1.msra.mxu0 0.0
    %165 = vmatprep.subr.mxu0 0.0
    %166 = vmatpush1.msra.mxu0 0.0
    %167 = vmatprep.subr.mxu0 0.0
    %168 = vmatpush1.msra.mxu0 0.0
    %169 = vmatprep.subr.mxu0 0.0
    %170 = vmatpush1.msra.mxu0 0.0
    %171 = vmatprep.subr.mxu0 0.0
    %172 = vmatpush1.msra.mxu0 0.0
    %173 = vmatprep.subr.mxu0 0.0
    %174 = vmatpush1.msra.mxu0 0.0
    %175 = vmatprep.subr.mxu0 0.0
    %176 = vmatpush1.msra.mxu0 0.0
    %177 = vmatprep.subr.mxu0 0.0
    %178 = vmatpush1.msra.mxu0 0.0
    %179 = vmatprep.subr.mxu0 0.0
    %180 = vmatpush1.msra.mxu0 0.0
    %181 = vmatprep.subr.mxu0 0.0
    %182 = vmatpush1.msra.mxu0 0.0
    %183 = vmatprep.subr.mxu0 0.0
    %184 = vmatpush1.msra.mxu0 0.0
    %185 = vmatprep.subr.mxu0 0.0
    %186 = vmatpush1.msra.mxu0 0.0
    %187 = vmatprep.subr.mxu0 0.0
    %188 = vmatpush1.msra.mxu0 0.0
    %189 = vmatprep.subr.mxu0 0.0
    %190 = vmatpush1.msra.mxu0 0.0
    %191 = vmatprep.subr.mxu0 0.0
    %192 = vmatpush1.msra.mxu0 0.0
    %193 = vmatprep.subr.mxu0 0.0
    %194 = vmatpush1.msra.mxu0 0.0
    %195 = vmatprep.subr.mxu0 0.0
    %196 = vmatpush1.msra.mxu0 0.0
    %197 = vmatprep.subr.mxu0 0.0
    %198 = vmatpush1.msra.mxu0 0.0
    %199 = vmatprep.subr.mxu0 0.0
    %200 = vmatpush1.msra.mxu0 0.0
    %201 = vmatprep.subr.mxu0 0.0
    %202 = vmatpush1.msra.mxu0 0.0
    %203 = vmatprep.subr.mxu0 0.0
    %204 = vmatpush1.msra.mxu0 0.0
    %205 = vmatprep.mubr.f32.mxu0 0.0
    %206 = vmatmul.mubr.f32.gmra.mrb[0].mxu0 %v137
    %v207 = vpop.f32.mrb[0].mxu0
    %v208 = vadd.f32 0.0, %v207
    %v209 = vpop.f32.mrb[0].mxu0
    %210 = vmatprep.mubr.f32.mxu0 0.0
    %211 = vmatmul.mubr.f32.gmra.mrb[0].mxu0 %v139
    %v212 = vpop.f32.mrb[0].mxu0
    %v213 = vadd.f32 0.0, %v212
    %v214 = vpop.f32.mrb[0].mxu0
    %215 = vdwg.mxu0
    %v216 = vsel %vm135, %v117, 0
    %v218 = vsel %vm135, %v118, 0
    %220 = vmatprep.subr.mxu0 0.0
    %221 = vmatpush1.msra.mxu0 %v119
    %222 = vmatprep.subr.mxu0 0.0
    %223 = vmatpush1.msra.mxu0 %v120
    %224 = vmatprep.subr.mxu0 0.0
    %225 = vmatpush1.msra.mxu0 %v121
    %226 = vmatprep.subr.mxu0 0.0
    %227 = vmatpush1.msra.mxu0 %v122
    %228 = vmatprep.subr.mxu0 0.0
    %229 = vmatpush1.msra.mxu0 0.0
    %230 = vmatprep.subr.mxu0 0.0
    %231 = vmatpush1.msra.mxu0 0.0
    %232 = vmatprep.subr.mxu0 0.0
    %233 = vmatpush1.msra.mxu0 0.0
    %234 = vmatprep.subr.mxu0 0.0
    %235 = vmatpush1.msra.mxu0 0.0
    %236 = vmatprep.subr.mxu0 0.0
    %237 = vmatpush1.msra.mxu0 0.0
    %238 = vmatprep.subr.mxu0 0.0
    %239 = vmatpush1.msra.mxu0 0.0
    %240 = vmatprep.subr.mxu0 0.0
    %241 = vmatpush1.msra.mxu0 0.0
    %242 = vmatprep.subr.mxu0 0.0
    %243 = vmatpush1.msra.mxu0 0.0
    %244 = vmatprep.subr.mxu0 0.0
    %245 = vmatpush1.msra.mxu0 0.0
    %246 = vmatprep.subr.mxu0 0.0
    %247 = vmatpush1.msra.mxu0 0.0
    %248 = vmatprep.subr.mxu0 0.0
    %249 = vmatpush1.msra.mxu0 0.0
    %250 = vmatprep.subr.mxu0 0.0
    %251 = vmatpush1.msra.mxu0 0.0
    %252 = vmatprep.subr.mxu0 0.0
    %253 = vmatpush1.msra.mxu0 0.0
    %254 = vmatprep.subr.mxu0 0.0
    %255 = vmatpush1.msra.mxu0 0.0
    %256 = vmatprep.subr.mxu0 0.0
    %257 = vmatpush1.msra.mxu0 0.0
    %258 = vmatprep.subr.mxu0 0.0
    %259 = vmatpush1.msra.mxu0 0.0
    %260 = vmatprep.subr.mxu0 0.0
    %261 = vmatpush1.msra.mxu0 0.0
    %262 = vmatprep.subr.mxu0 0.0
    %263 = vmatpush1.msra.mxu0 0.0
    %264 = vmatprep.subr.mxu0 0.0
    %265 = vmatpush1.msra.mxu0 0.0
    %266 = vmatprep.subr.mxu0 0.0
    %267 = vmatpush1.msra.mxu0 0.0
    %268 = vmatprep.subr.mxu0 0.0
    %269 = vmatpush1.msra.mxu0 0.0
    %270 = vmatprep.subr.mxu0 0.0
    %271 = vmatpush1.msra.mxu0 0.0
    %272 = vmatprep.subr.mxu0 0.0
    %273 = vmatpush1.msra.mxu0 0.0
    %274 = vmatprep.subr.mxu0 0.0
    %275 = vmatpush1.msra.mxu0 0.0
    %276 = vmatprep.subr.mxu0 0.0
    %277 = vmatpush1.msra.mxu0 0.0
    %278 = vmatprep.subr.mxu0 0.0
    %279 = vmatpush1.msra.mxu0 0.0
    %280 = vmatprep.subr.mxu0 0.0
    %281 = vmatpush1.msra.mxu0 0.0
    %282 = vmatprep.subr.mxu0 0.0
    %283 = vmatpush1.msra.mxu0 0.0
    %284 = vmatprep.mubr.f32.mxu0 0.0
    %285 = vmatmul.mubr.f32.gmra.mrb[0].mxu0 %v216
    %v286 = vpop.f32.mrb[0].mxu0
    %v287 = vadd.f32 %v208, %v286
    %v288 = vpop.f32.mrb[0].mxu0
    %289 = vmatprep.mubr.f32.mxu0 0.0
    %290 = vmatmul.mubr.f32.gmra.mrb[0].mxu0 %v218
    %v291 = vpop.f32.mrb[0].mxu0
    %v292 = vadd.f32 %v213, %v291
    %v293 = vpop.f32.mrb[0].mxu0
    %294 = vdwg.mxu0
    %vm295 = vcmask 1045504
    %v296 = vrot.slane %v117, 2
    %v297 = vrot.slane %v118, 2
    %v298 = vsel %vm295, %v296, %v297
    %v300 = vsel %vm295, %v297, 0.0
    %v301 = vld [vmem:[#allocation2 + $0x58] sm:$0xff]
    %v302 = vld [vmem:[#allocation2 + $0x60] sm:$0xff]
    %v303 = vld [vmem:[#allocation2 + $0x68] sm:$0xff]
    %v304 = vld [vmem:[#allocation2 + $0x70] sm:$0xff]
    %v305 = vsel %vm135, %v298, 0
    %v308 = vsel %vm135, %v300, 0
    %310 = vmatprep.subr.mxu0 0.0
    %311 = vmatpush1.msra.mxu0 %v301
    %312 = vmatprep.subr.mxu0 0.0
    %313 = vmatpush1.msra.mxu0 %v302
    %314 = vmatprep.subr.mxu0 0.0
    %315 = vmatpush1.msra.mxu0 %v303
    %316 = vmatprep.subr.mxu0 0.0
    %317 = vmatpush1.msra.mxu0 %v304
    %318 = vmatprep.subr.mxu0 0.0
    %319 = vmatpush1.msra.mxu0 0.0
    %320 = vmatprep.subr.mxu0 0.0
    %321 = vmatpush1.msra.mxu0 0.0
    %322 = vmatprep.subr.mxu0 0.0
    %323 = vmatpush1.msra.mxu0 0.0
    %324 = vmatprep.subr.mxu0 0.0
    %325 = vmatpush1.msra.mxu0 0.0
    %326 = vmatprep.subr.mxu0 0.0
    %327 = vmatpush1.msra.mxu0 0.0
    %328 = vmatprep.subr.mxu0 0.0
    %329 = vmatpush1.msra.mxu0 0.0
    %330 = vmatprep.subr.mxu0 0.0
    %331 = vmatpush1.msra.mxu0 0.0
    %332 = vmatprep.subr.mxu0 0.0
    %333 = vmatpush1.msra.mxu0 0.0
    %334 = vmatprep.subr.mxu0 0.0
    %335 = vmatpush1.msra.mxu0 0.0
    %336 = vmatprep.subr.mxu0 0.0
    %337 = vmatpush1.msra.mxu0 0.0
    %338 = vmatprep.subr.mxu0 0.0
    %339 = vmatpush1.msra.mxu0 0.0
    %340 = vmatprep.subr.mxu0 0.0
    %341 = vmatpush1.msra.mxu0 0.0
    %342 = vmatprep.subr.mxu0 0.0
    %343 = vmatpush1.msra.mxu0 0.0
    %344 = vmatprep.subr.mxu0 0.0
    %345 = vmatpush1.msra.mxu0 0.0
    %346 = vmatprep.subr.mxu0 0.0
    %347 = vmatpush1.msra.mxu0 0.0
    %348 = vmatprep.subr.mxu0 0.0
    %349 = vmatpush1.msra.mxu0 0.0
    %350 = vmatprep.subr.mxu0 0.0
    %351 = vmatpush1.msra.mxu0 0.0
    %352 = vmatprep.subr.mxu0 0.0
    %353 = vmatpush1.msra.mxu0 0.0
    %354 = vmatprep.subr.mxu0 0.0
    %355 = vmatpush1.msra.mxu0 0.0
    %356 = vmatprep.subr.mxu0 0.0
    %357 = vmatpush1.msra.mxu0 0.0
    %358 = vmatprep.subr.mxu0 0.0
    %359 = vmatpush1.msra.mxu0 0.0
    %360 = vmatprep.subr.mxu0 0.0
    %361 = vmatpush1.msra.mxu0 0.0
    %362 = vmatprep.subr.mxu0 0.0
    %363 = vmatpush1.msra.mxu0 0.0
    %364 = vmatprep.subr.mxu0 0.0
    %365 = vmatpush1.msra.mxu0 0.0
    %366 = vmatprep.subr.mxu0 0.0
    %367 = vmatpush1.msra.mxu0 0.0
    %368 = vmatprep.subr.mxu0 0.0
    %369 = vmatpush1.msra.mxu0 0.0
    %370 = vmatprep.subr.mxu0 0.0
    %371 = vmatpush1.msra.mxu0 0.0
    %372 = vmatprep.subr.mxu0 0.0
    %373 = vmatpush1.msra.mxu0 0.0
    %374 = vmatprep.mubr.f32.mxu0 0.0
    %375 = vmatmul.mubr.f32.gmra.mrb[0].mxu0 %v305
    %v376 = vpop.f32.mrb[0].mxu0
    %v377 = vadd.f32 0.0, %v376
    %v378 = vpop.f32.mrb[0].mxu0
    %379 = vmatprep.mubr.f32.mxu0 0.0
    %380 = vmatmul.mubr.f32.gmra.mrb[0].mxu0 %v308
    %v381 = vpop.f32.mrb[0].mxu0
    %v382 = vadd.f32 0.0, %v381
    %v383 = vpop.f32.mrb[0].mxu0
    %384 = vdwg.mxu0
    %v385 = vadd.f32 %v287, %v377
    %v386 = vadd.f32 %v292, %v382
    %v387 = vld [vmem:[#allocation2 + $0x78] sm:$0x1]
    %v388 = vlaneseq
    %v389 = vshrl.u32 %v388, 7
    %v390 = vsub.s32 0, %v389
    %v391 = vrot.slane %v387, %v390
    %v392 = vadd.f32 %v385, %v391
    %v393 = vadd.f32 %v386, %v391
    %v394 = vmax.f32 %v392, 0.0
    %v395 = vmax.f32 %v393, 0.0
    %v396 = vld [vmem:[#allocation2 + $0xa0] sm:$0xff]
    %v397 = vld [vmem:[#allocation2 + $0xa8] sm:$0xff]
    %v398 = vld [vmem:[#allocation2 + $0xb0] sm:$0xff]
    %v399 = vld [vmem:[#allocation2 + $0xb8] sm:$0xff]
    %v402 = vrot.slane %v394, 6
    %v403 = vrot.slane %v395, 6
    %v404 = vsel %vm125, %v402, %v403
    %v406 = vsel %vm125, 0.0, %v402
    %v407 = vld [vmem:[#allocation2 + $0x80] sm:$0xff]
    %v408 = vld [vmem:[#allocation2 + $0x88] sm:$0xff]
    %v409 = vld [vmem:[#allocation2 + $0x90] sm:$0xff]
    %v410 = vld [vmem:[#allocation2 + $0x98] sm:$0xff]
    %v412 = vsel %vm135, %v406, 0
    %v414 = vsel %vm135, %v404, 0
    %416 = vmatprep.subr.mxu0 0.0
    %417 = vmatpush1.msra.mxu0 %v407
    %418 = vmatprep.subr.mxu0 0.0
    %419 = vmatpush1.msra.mxu0 %v408
    %420 = vmatprep.subr.mxu0 0.0
    %421 = vmatpush1.msra.mxu0 %v409
    %422 = vmatprep.subr.mxu0 0.0
    %423 = vmatpush1.msra.mxu0 %v410
    %424 = vmatprep.subr.mxu0 0.0
    %425 = vmatpush1.msra.mxu0 0.0
    %426 = vmatprep.subr.mxu0 0.0
    %427 = vmatpush1.msra.mxu0 0.0
    %428 = vmatprep.subr.mxu0 0.0
    %429 = vmatpush1.msra.mxu0 0.0
    %430 = vmatprep.subr.mxu0 0.0
    %431 = vmatpush1.msra.mxu0 0.0
    %432 = vmatprep.subr.mxu0 0.0
    %433 = vmatpush1.msra.mxu0 0.0
    %434 = vmatprep.subr.mxu0 0.0
    %435 = vmatpush1.msra.mxu0 0.0
    %436 = vmatprep.subr.mxu0 0.0
    %437 = vmatpush1.msra.mxu0 0.0
    %438 = vmatprep.subr.mxu0 0.0
    %439 = vmatpush1.msra.mxu0 0.0
    %440 = vmatprep.subr.mxu0 0.0
    %441 = vmatpush1.msra.mxu0 0.0
    %442 = vmatprep.subr.mxu0 0.0
    %443 = vmatpush1.msra.mxu0 0.0
    %444 = vmatprep.subr.mxu0 0.0
    %445 = vmatpush1.msra.mxu0 0.0
    %446 = vmatprep.subr.mxu0 0.0
    %447 = vmatpush1.msra.mxu0 0.0
    %448 = vmatprep.subr.mxu0 0.0
    %449 = vmatpush1.msra.mxu0 0.0
    %450 = vmatprep.subr.mxu0 0.0
    %451 = vmatpush1.msra.mxu0 0.0
    %452 = vmatprep.subr.mxu0 0.0
    %453 = vmatpush1.msra.mxu0 0.0
    %454 = vmatprep.subr.mxu0 0.0
    %455 = vmatpush1.msra.mxu0 0.0
    %456 = vmatprep.subr.mxu0 0.0
    %457 = vmatpush1.msra.mxu0 0.0
    %458 = vmatprep.subr.mxu0 0.0
    %459 = vmatpush1.msra.mxu0 0.0
    %460 = vmatprep.subr.mxu0 0.0
    %461 = vmatpush1.msra.mxu0 0.0
    %462 = vmatprep.subr.mxu0 0.0
    %463 = vmatpush1.msra.mxu0 0.0
    %464 = vmatprep.subr.mxu0 0.0
    %465 = vmatpush1.msra.mxu0 0.0
    %466 = vmatprep.subr.mxu0 0.0
    %467 = vmatpush1.msra.mxu0 0.0
    %468 = vmatprep.subr.mxu0 0.0
    %469 = vmatpush1.msra.mxu0 0.0
    %470 = vmatprep.subr.mxu0 0.0
    %471 = vmatpush1.msra.mxu0 0.0
    %472 = vmatprep.subr.mxu0 0.0
    %473 = vmatpush1.msra.mxu0 0.0
    %474 = vmatprep.subr.mxu0 0.0
    %475 = vmatpush1.msra.mxu0 0.0
    %476 = vmatprep.subr.mxu0 0.0
    %477 = vmatpush1.msra.mxu0 0.0
    %478 = vmatprep.subr.mxu0 0.0
    %479 = vmatpush1.msra.mxu0 0.0
    %480 = vmatprep.mubr.f32.mxu0 0.0
    %481 = vmatmul.mubr.f32.gmra.mrb[0].mxu0 %v412
    %v482 = vpop.f32.mrb[0].mxu0
    %v483 = vadd.f32 0.0, %v482
    %v484 = vpop.f32.mrb[0].mxu0
    %485 = vmatprep.mubr.f32.mxu0 0.0
    %486 = vmatmul.mubr.f32.gmra.mrb[0].mxu0 %v414
    %v487 = vpop.f32.mrb[0].mxu0
    %v488 = vadd.f32 0.0, %v487
    %v489 = vpop.f32.mrb[0].mxu0
    %490 = vdwg.mxu0
    %v491 = vsel %vm135, %v394, 0
    %v493 = vsel %vm135, %v395, 0
    %495 = vmatprep.subr.mxu0 0.0
    %496 = vmatpush1.msra.mxu0 %v396
    %497 = vmatprep.subr.mxu0 0.0
    %498 = vmatpush1.msra.mxu0 %v397
    %499 = vmatprep.subr.mxu0 0.0
    %500 = vmatpush1.msra.mxu0 %v398
    %501 = vmatprep.subr.mxu0 0.0
    %502 = vmatpush1.msra.mxu0 %v399
    %503 = vmatprep.subr.mxu0 0.0
    %504 = vmatpush1.msra.mxu0 0.0
    %505 = vmatprep.subr.mxu0 0.0
    %506 = vmatpush1.msra.mxu0 0.0
    %507 = vmatprep.subr.mxu0 0.0
    %508 = vmatpush1.msra.mxu0 0.0
    %509 = vmatprep.subr.mxu0 0.0
    %510 = vmatpush1.msra.mxu0 0.0
    %511 = vmatprep.subr.mxu0 0.0
    %512 = vmatpush1.msra.mxu0 0.0
    %513 = vmatprep.subr.mxu0 0.0
    %514 = vmatpush1.msra.mxu0 0.0
    %515 = vmatprep.subr.mxu0 0.0
    %516 = vmatpush1.msra.mxu0 0.0
    %517 = vmatprep.subr.mxu0 0.0
    %518 = vmatpush1.msra.mxu0 0.0
    %519 = vmatprep.subr.mxu0 0.0
    %520 = vmatpush1.msra.mxu0 0.0
    %521 = vmatprep.subr.mxu0 0.0
    %522 = vmatpush1.msra.mxu0 0.0
    %523 = vmatprep.subr.mxu0 0.0
    %524 = vmatpush1.msra.mxu0 0.0
    %525 = vmatprep.subr.mxu0 0.0
    %526 = vmatpush1.msra.mxu0 0.0
    %527 = vmatprep.subr.mxu0 0.0
    %528 = vmatpush1.msra.mxu0 0.0
    %529 = vmatprep.subr.mxu0 0.0
    %530 = vmatpush1.msra.mxu0 0.0
    %531 = vmatprep.subr.mxu0 0.0
    %532 = vmatpush1.msra.mxu0 0.0
    %533 = vmatprep.subr.mxu0 0.0
    %534 = vmatpush1.msra.mxu0 0.0
    %535 = vmatprep.subr.mxu0 0.0
    %536 = vmatpush1.msra.mxu0 0.0
    %537 = vmatprep.subr.mxu0 0.0
    %538 = vmatpush1.msra.mxu0 0.0
    %539 = vmatprep.subr.mxu0 0.0
    %540 = vmatpush1.msra.mxu0 0.0
    %541 = vmatprep.subr.mxu0 0.0
    %542 = vmatpush1.msra.mxu0 0.0
    %543 = vmatprep.subr.mxu0 0.0
    %544 = vmatpush1.msra.mxu0 0.0
    %545 = vmatprep.subr.mxu0 0.0
    %546 = vmatpush1.msra.mxu0 0.0
    %547 = vmatprep.subr.mxu0 0.0
    %548 = vmatpush1.msra.mxu0 0.0
    %549 = vmatprep.subr.mxu0 0.0
    %550 = vmatpush1.msra.mxu0 0.0
    %551 = vmatprep.subr.mxu0 0.0
    %552 = vmatpush1.msra.mxu0 0.0
    %553 = vmatprep.subr.mxu0 0.0
    %554 = vmatpush1.msra.mxu0 0.0
    %555 = vmatprep.subr.mxu0 0.0
    %556 = vmatpush1.msra.mxu0 0.0
    %557 = vmatprep.subr.mxu0 0.0
    %558 = vmatpush1.msra.mxu0 0.0
    %559 = vmatprep.mubr.f32.mxu0 0.0
    %560 = vmatmul.mubr.f32.gmra.mrb[0].mxu0 %v491
    %v561 = vpop.f32.mrb[0].mxu0
    %v562 = vadd.f32 %v483, %v561
    %v563 = vpop.f32.mrb[0].mxu0
    %564 = vmatprep.mubr.f32.mxu0 0.0
    %565 = vmatmul.mubr.f32.gmra.mrb[0].mxu0 %v493
    %v566 = vpop.f32.mrb[0].mxu0
    %v567 = vadd.f32 %v488, %v566
    %v568 = vpop.f32.mrb[0].mxu0
    %569 = vdwg.mxu0
    %v570 = vrot.slane %v394, 2
    %v571 = vrot.slane %v395, 2
    %v572 = vsel %vm295, %v570, %v571
    %v574 = vsel %vm295, %v571, 0.0
    %v575 = vld [vmem:[#allocation2 + $0xc0] sm:$0xff]
    %v576 = vld [vmem:[#allocation2 + $0xc8] sm:$0xff]
    %v577 = vld [vmem:[#allocation2 + $0xd0] sm:$0xff]
    %v578 = vld [vmem:[#allocation2 + $0xd8] sm:$0xff]
    %v579 = vsel %vm135, %v572, 0
    %v582 = vsel %vm135, %v574, 0
    %584 = vmatprep.subr.mxu0 0.0
    %585 = vmatpush1.msra.mxu0 %v575
    %586 = vmatprep.subr.mxu0 0.0
    %587 = vmatpush1.msra.mxu0 %v576
    %588 = vmatprep.subr.mxu0 0.0
    %589 = vmatpush1.msra.mxu0 %v577
    %590 = vmatprep.subr.mxu0 0.0
    %591 = vmatpush1.msra.mxu0 %v578
    %592 = vmatprep.subr.mxu0 0.0
    %593 = vmatpush1.msra.mxu0 0.0
    %594 = vmatprep.subr.mxu0 0.0
    %595 = vmatpush1.msra.mxu0 0.0
    %596 = vmatprep.subr.mxu0 0.0
    %597 = vmatpush1.msra.mxu0 0.0
    %598 = vmatprep.subr.mxu0 0.0
    %599 = vmatpush1.msra.mxu0 0.0
    %600 = vmatprep.subr.mxu0 0.0
    %601 = vmatpush1.msra.mxu0 0.0
    %602 = vmatprep.subr.mxu0 0.0
    %603 = vmatpush1.msra.mxu0 0.0
    %604 = vmatprep.subr.mxu0 0.0
    %605 = vmatpush1.msra.mxu0 0.0
    %606 = vmatprep.subr.mxu0 0.0
    %607 = vmatpush1.msra.mxu0 0.0
    %608 = vmatprep.subr.mxu0 0.0
    %609 = vmatpush1.msra.mxu0 0.0
    %610 = vmatprep.subr.mxu0 0.0
    %611 = vmatpush1.msra.mxu0 0.0
    %612 = vmatprep.subr.mxu0 0.0
    %613 = vmatpush1.msra.mxu0 0.0
    %614 = vmatprep.subr.mxu0 0.0
    %615 = vmatpush1.msra.mxu0 0.0
    %616 = vmatprep.subr.mxu0 0.0
    %617 = vmatpush1.msra.mxu0 0.0
    %618 = vmatprep.subr.mxu0 0.0
    %619 = vmatpush1.msra.mxu0 0.0
    %620 = vmatprep.subr.mxu0 0.0
    %621 = vmatpush1.msra.mxu0 0.0
    %622 = vmatprep.subr.mxu0 0.0
    %623 = vmatpush1.msra.mxu0 0.0
    %624 = vmatprep.subr.mxu0 0.0
    %625 = vmatpush1.msra.mxu0 0.0
    %626 = vmatprep.subr.mxu0 0.0
    %627 = vmatpush1.msra.mxu0 0.0
    %628 = vmatprep.subr.mxu0 0.0
    %629 = vmatpush1.msra.mxu0 0.0
    %630 = vmatprep.subr.mxu0 0.0
    %631 = vmatpush1.msra.mxu0 0.0
    %632 = vmatprep.subr.mxu0 0.0
    %633 = vmatpush1.msra.mxu0 0.0
    %634 = vmatprep.subr.mxu0 0.0
    %635 = vmatpush1.msra.mxu0 0.0
    %636 = vmatprep.subr.mxu0 0.0
    %637 = vmatpush1.msra.mxu0 0.0
    %638 = vmatprep.subr.mxu0 0.0
    %639 = vmatpush1.msra.mxu0 0.0
    %640 = vmatprep.subr.mxu0 0.0
    %641 = vmatpush1.msra.mxu0 0.0
    %642 = vmatprep.subr.mxu0 0.0
    %643 = vmatpush1.msra.mxu0 0.0
    %644 = vmatprep.subr.mxu0 0.0
    %645 = vmatpush1.msra.mxu0 0.0
    %646 = vmatprep.subr.mxu0 0.0
    %647 = vmatpush1.msra.mxu0 0.0
    %648 = vmatprep.mubr.f32.mxu0 0.0
    %649 = vmatmul.mubr.f32.gmra.mrb[0].mxu0 %v579
    %v650 = vpop.f32.mrb[0].mxu0
    %v651 = vadd.f32 0.0, %v650
    %v652 = vpop.f32.mrb[0].mxu0
    %653 = vmatprep.mubr.f32.mxu0 0.0
    %654 = vmatmul.mubr.f32.gmra.mrb[0].mxu0 %v582
    %v655 = vpop.f32.mrb[0].mxu0
    %v656 = vadd.f32 0.0, %v655
    %v657 = vpop.f32.mrb[0].mxu0
    %658 = vdwg.mxu0
    %v659 = vadd.f32 %v562, %v651
    %v660 = vadd.f32 %v567, %v656
    %v661 = vld [vmem:[#allocation2 + $0xe0] sm:$0x1]
    %v662 = vlaneseq
    %v663 = vshrl.u32 %v662, 7
    %v664 = vsub.s32 0, %v663
    %v665 = vrot.slane %v661, %v664
    %v666 = vadd.f32 %v659, %v665
    %v667 = vadd.f32 %v660, %v665
    %v668 = vadd.f32 %v666, %v117
    %v669 = vadd.f32 %v667, %v118
    %v670 = vmax.f32 %v668, 0.0
    %v671 = vmax.f32 %v669, 0.0
    %v672 = vld [vmem:[#allocation2 + $0x108] sm:$0xff]
    %v673 = vld [vmem:[#allocation2 + $0x110] sm:$0xff]
    %v674 = vld [vmem:[#allocation2 + $0x118] sm:$0xff]
    %v675 = vld [vmem:[#allocation2 + $0x120] sm:$0xff]
    %v678 = vrot.slane %v670, 6
    %v679 = vrot.slane %v671, 6
    %v680 = vsel %vm125, %v678, %v679
    %v682 = vsel %vm125, 0.0, %v678
    %v683 = vld [vmem:[#allocation2 + $0xe8] sm:$0xff]
    %v684 = vld [vmem:[#allocation2 + $0xf0] sm:$0xff]
    %v685 = vld [vmem:[#allocation2 + $0xf8] sm:$0xff]
    %v686 = vld [vmem:[#allocation2 + $0x100] sm:$0xff]
    %v688 = vsel %vm135, %v682, 0
    %v690 = vsel %vm135, %v680, 0
    %692 = vmatprep.subr.mxu0 0.0
    %693 = vmatpush1.msra.mxu0 %v683
    %694 = vmatprep.subr.mxu0 0.0
    %695 = vmatpush1.msra.mxu0 %v684
    %696 = vmatprep.subr.mxu0 0.0
    %697 = vmatpush1.msra.mxu0 %v685
    %698 = vmatprep.subr.mxu0 0.0
    %699 = vmatpush1.msra.mxu0 %v686
    %700 = vmatprep.subr.mxu0 0.0
    %701 = vmatpush1.msra.mxu0 0.0
    %702 = vmatprep.subr.mxu0 0.0
    %703 = vmatpush1.msra.mxu0 0.0
    %704 = vmatprep.subr.mxu0 0.0
    %705 = vmatpush1.msra.mxu0 0.0
    %706 = vmatprep.subr.mxu0 0.0
    %707 = vmatpush1.msra.mxu0 0.0
    %708 = vmatprep.subr.mxu0 0.0
    %709 = vmatpush1.msra.mxu0 0.0
    %710 = vmatprep.subr.mxu0 0.0
    %711 = vmatpush1.msra.mxu0 0.0
    %712 = vmatprep.subr.mxu0 0.0
    %713 = vmatpush1.msra.mxu0 0.0
    %714 = vmatprep.subr.mxu0 0.0
    %715 = vmatpush1.msra.mxu0 0.0
    %716 = vmatprep.subr.mxu0 0.0
    %717 = vmatpush1.msra.mxu0 0.0
    %718 = vmatprep.subr.mxu0 0.0
    %719 = vmatpush1.msra.mxu0 0.0
    %720 = vmatprep.subr.mxu0 0.0
    %721 = vmatpush1.msra.mxu0 0.0
    %722 = vmatprep.subr.mxu0 0.0
    %723 = vmatpush1.msra.mxu0 0.0
    %724 = vmatprep.subr.mxu0 0.0
    %725 = vmatpush1.msra.mxu0 0.0
    %726 = vmatprep.subr.mxu0 0.0
    %727 = vmatpush1.msra.mxu0 0.0
    %728 = vmatprep.subr.mxu0 0.0
    %729 = vmatpush1.msra.mxu0 0.0
    %730 = vmatprep.subr.mxu0 0.0
    %731 = vmatpush1.msra.mxu0 0.0
    %732 = vmatprep.subr.mxu0 0.0
    %733 = vmatpush1.msra.mxu0 0.0
    %734 = vmatprep.subr.mxu0 0.0
    %735 = vmatpush1.msra.mxu0 0.0
    %736 = vmatprep.subr.mxu0 0.0
    %737 = vmatpush1.msra.mxu0 0.0
    %738 = vmatprep.subr.mxu0 0.0
    %739 = vmatpush1.msra.mxu0 0.0
    %740 = vmatprep.subr.mxu0 0.0
    %741 = vmatpush1.msra.mxu0 0.0
    %742 = vmatprep.subr.mxu0 0.0
    %743 = vmatpush1.msra.mxu0 0.0
    %744 = vmatprep.subr.mxu0 0.0
    %745 = vmatpush1.msra.mxu0 0.0
    %746 = vmatprep.subr.mxu0 0.0
    %747 = vmatpush1.msra.mxu0 0.0
    %748 = vmatprep.subr.mxu0 0.0
    %749 = vmatpush1.msra.mxu0 0.0
    %750 = vmatprep.subr.mxu0 0.0
    %751 = vmatpush1.msra.mxu0 0.0
    %752 = vmatprep.subr.mxu0 0.0
    %753 = vmatpush1.msra.mxu0 0.0
    %754 = vmatprep.subr.mxu0 0.0
    %755 = vmatpush1.msra.mxu0 0.0
    %756 = vmatprep.mubr.f32.mxu0 0.0
    %757 = vmatmul.mubr.f32.gmra.mrb[0].mxu0 %v688
    %v758 = vpop.f32.mrb[0].mxu0
    %v759 = vadd.f32 0.0, %v758
    %v760 = vpop.f32.mrb[0].mxu0
    %761 = vmatprep.mubr.f32.mxu0 0.0
    %762 = vmatmul.mubr.f32.gmra.mrb[0].mxu0 %v690
    %v763 = vpop.f32.mrb[0].mxu0
    %v764 = vadd.f32 0.0, %v763
    %v765 = vpop.f32.mrb[0].mxu0
    %766 = vdwg.mxu0
    %v767 = vsel %vm135, %v670, 0
    %v769 = vsel %vm135, %v671, 0
    %771 = vmatprep.subr.mxu0 0.0
    %772 = vmatpush1.msra.mxu0 %v672
    %773 = vmatprep.subr.mxu0 0.0
    %774 = vmatpush1.msra.mxu0 %v673
    %775 = vmatprep.subr.mxu0 0.0
    %776 = vmatpush1.msra.mxu0 %v674
    %777 = vmatprep.subr.mxu0 0.0
    %778 = vmatpush1.msra.mxu0 %v675
    %779 = vmatprep.subr.mxu0 0.0
    %780 = vmatpush1.msra.mxu0 0.0
    %781 = vmatprep.subr.mxu0 0.0
    %782 = vmatpush1.msra.mxu0 0.0
    %783 = vmatprep.subr.mxu0 0.0
    %784 = vmatpush1.msra.mxu0 0.0
    %785 = vmatprep.subr.mxu0 0.0
    %786 = vmatpush1.msra.mxu0 0.0
    %787 = vmatprep.subr.mxu0 0.0
    %788 = vmatpush1.msra.mxu0 0.0
    %789 = vmatprep.subr.mxu0 0.0
    %790 = vmatpush1.msra.mxu0 0.0
    %791 = vmatprep.subr.mxu0 0.0
    %792 = vmatpush1.msra.mxu0 0.0
    %793 = vmatprep.subr.mxu0 0.0
    %794 = vmatpush1.msra.mxu0 0.0
    %795 = vmatprep.subr.mxu0 0.0
    %796 = vmatpush1.msra.mxu0 0.0
    %797 = vmatprep.subr.mxu0 0.0
    %798 = vmatpush1.msra.mxu0 0.0
    %799 = vmatprep.subr.mxu0 0.0
    %800 = vmatpush1.msra.mxu0 0.0
    %801 = vmatprep.subr.mxu0 0.0
    %802 = vmatpush1.msra.mxu0 0.0
    %803 = vmatprep.subr.mxu0 0.0
    %804 = vmatpush1.msra.mxu0 0.0
    %805 = vmatprep.subr.mxu0 0.0
    %806 = vmatpush1.msra.mxu0 0.0
    %807 = vmatprep.subr.mxu0 0.0
    %808 = vmatpush1.msra.mxu0 0.0
    %809 = vmatprep.subr.mxu0 0.0
    %810 = vmatpush1.msra.mxu0 0.0
    %811 = vmatprep.subr.mxu0 0.0
    %812 = vmatpush1.msra.mxu0 0.0
    %813 = vmatprep.subr.mxu0 0.0
    %814 = vmatpush1.msra.mxu0 0.0
    %815 = vmatprep.subr.mxu0 0.0
    %816 = vmatpush1.msra.mxu0 0.0
    %817 = vmatprep.subr.mxu0 0.0
    %818 = vmatpush1.msra.mxu0 0.0
    %819 = vmatprep.subr.mxu0 0.0
    %820 = vmatpush1.msra.mxu0 0.0
    %821 = vmatprep.subr.mxu0 0.0
    %822 = vmatpush1.msra.mxu0 0.0
    %823 = vmatprep.subr.mxu0 0.0
    %824 = vmatpush1.msra.mxu0 0.0
    %825 = vmatprep.subr.mxu0 0.0
    %826 = vmatpush1.msra.mxu0 0.0
    %827 = vmatprep.subr.mxu0 0.0
    %828 = vmatpush1.msra.mxu0 0.0
    %829 = vmatprep.subr.mxu0 0.0
    %830 = vmatpush1.msra.mxu0 0.0
    %831 = vmatprep.subr.mxu0 0.0
    %832 = vmatpush1.msra.mxu0 0.0
    %833 = vmatprep.subr.mxu0 0.0
    %834 = vmatpush1.msra.mxu0 0.0
    %835 = vmatprep.mubr.f32.mxu0 0.0
    %836 = vmatmul.mubr.f32.gmra.mrb[0].mxu0 %v767
    %v837 = vpop.f32.mrb[0].mxu0
    %v838 = vadd.f32 %v759, %v837
    %v839 = vpop.f32.mrb[0].mxu0
    %840 = vmatprep.mubr.f32.mxu0 0.0
    %841 = vmatmul.mubr.f32.gmra.mrb[0].mxu0 %v769
    %v842 = vpop.f32.mrb[0].mxu0
    %v843 = vadd.f32 %v764, %v842
    %v844 = vpop.f32.mrb[0].mxu0
    %845 = vdwg.mxu0
    %v846 = vrot.slane %v670, 2
    %v847 = vrot.slane %v671, 2
    %v848 = vsel %vm295, %v846, %v847
    %v850 = vsel %vm295, %v847, 0.0
    %v851 = vld [vmem:[#allocation2 + $0x128] sm:$0xff]
    %v852 = vld [vmem:[#allocation2 + $0x130] sm:$0xff]
    %v853 = vld [vmem:[#allocation2 + $0x138] sm:$0xff]
    %v854 = vld [vmem:[#allocation2 + $0x140] sm:$0xff]
    %v855 = vsel %vm135, %v848, 0
    %v858 = vsel %vm135, %v850, 0
    %860 = vmatprep.subr.mxu0 0.0
    %861 = vmatpush1.msra.mxu0 %v851
    %862 = vmatprep.subr.mxu0 0.0
    %863 = vmatpush1.msra.mxu0 %v852
    %864 = vmatprep.subr.mxu0 0.0
    %865 = vmatpush1.msra.mxu0 %v853
    %866 = vmatprep.subr.mxu0 0.0
    %867 = vmatpush1.msra.mxu0 %v854
    %868 = vmatprep.subr.mxu0 0.0
    %869 = vmatpush1.msra.mxu0 0.0
    %870 = vmatprep.subr.mxu0 0.0
    %871 = vmatpush1.msra.mxu0 0.0
    %872 = vmatprep.subr.mxu0 0.0
    %873 = vmatpush1.msra.mxu0 0.0
    %874 = vmatprep.subr.mxu0 0.0
    %875 = vmatpush1.msra.mxu0 0.0
    %876 = vmatprep.subr.mxu0 0.0
    %877 = vmatpush1.msra.mxu0 0.0
    %878 = vmatprep.subr.mxu0 0.0
    %879 = vmatpush1.msra.mxu0 0.0
    %880 = vmatprep.subr.mxu0 0.0
    %881 = vmatpush1.msra.mxu0 0.0
    %882 = vmatprep.subr.mxu0 0.0
    %883 = vmatpush1.msra.mxu0 0.0
    %884 = vmatprep.subr.mxu0 0.0
    %885 = vmatpush1.msra.mxu0 0.0
    %886 = vmatprep.subr.mxu0 0.0
    %887 = vmatpush1.msra.mxu0 0.0
    %888 = vmatprep.subr.mxu0 0.0
    %889 = vmatpush1.msra.mxu0 0.0
    %890 = vmatprep.subr.mxu0 0.0
    %891 = vmatpush1.msra.mxu0 0.0
    %892 = vmatprep.subr.mxu0 0.0
    %893 = vmatpush1.msra.mxu0 0.0
    %894 = vmatprep.subr.mxu0 0.0
    %895 = vmatpush1.msra.mxu0 0.0
    %896 = vmatprep.subr.mxu0 0.0
    %897 = vmatpush1.msra.mxu0 0.0
    %898 = vmatprep.subr.mxu0 0.0
    %899 = vmatpush1.msra.mxu0 0.0
    %900 = vmatprep.subr.mxu0 0.0
    %901 = vmatpush1.msra.mxu0 0.0
    %902 = vmatprep.subr.mxu0 0.0
    %903 = vmatpush1.msra.mxu0 0.0
    %904 = vmatprep.subr.mxu0 0.0
    %905 = vmatpush1.msra.mxu0 0.0
    %906 = vmatprep.subr.mxu0 0.0
    %907 = vmatpush1.msra.mxu0 0.0
    %908 = vmatprep.subr.mxu0 0.0
    %909 = vmatpush1.msra.mxu0 0.0
    %910 = vmatprep.subr.mxu0 0.0
    %911 = vmatpush1.msra.mxu0 0.0
    %912 = vmatprep.subr.mxu0 0.0
    %913 = vmatpush1.msra.mxu0 0.0
    %914 = vmatprep.subr.mxu0 0.0
    %915 = vmatpush1.msra.mxu0 0.0
    %916 = vmatprep.subr.mxu0 0.0
    %917 = vmatpush1.msra.mxu0 0.0
    %918 = vmatprep.subr.mxu0 0.0
    %919 = vmatpush1.msra.mxu0 0.0
    %920 = vmatprep.subr.mxu0 0.0
    %921 = vmatpush1.msra.mxu0 0.0
    %922 = vmatprep.subr.mxu0 0.0
    %923 = vmatpush1.msra.mxu0 0.0
    %924 = vmatprep.mubr.f32.mxu0 0.0
    %925 = vmatmul.mubr.f32.gmra.mrb[0].mxu0 %v855
    %v926 = vpop.f32.mrb[0].mxu0
    %v927 = vadd.f32 0.0, %v926
    %v928 = vpop.f32.mrb[0].mxu0
    %929 = vmatprep.mubr.f32.mxu0 0.0
    %930 = vmatmul.mubr.f32.gmra.mrb[0].mxu0 %v858
    %v931 = vpop.f32.mrb[0].mxu0
    %v932 = vadd.f32 0.0, %v931
    %v933 = vpop.f32.mrb[0].mxu0
    %934 = vdwg.mxu0
    %v935 = vadd.f32 %v838, %v927
    %v936 = vadd.f32 %v843, %v932
    %v937 = vld [vmem:[#allocation2 + $0x148] sm:$0x1]
    %v938 = vlaneseq
    %v939 = vshrl.u32 %v938, 7
    %v940 = vsub.s32 0, %v939
    %v941 = vrot.slane %v937, %v940
    %v942 = vadd.f32 %v935, %v941
    %v943 = vadd.f32 %v936, %v941
    %v944 = vmax.f32 %v942, 0.0
    %v945 = vmax.f32 %v943, 0.0
    %v946 = vld [vmem:[#allocation2 + $0x170] sm:$0xff]
    %v947 = vld [vmem:[#allocation2 + $0x178] sm:$0xff]
    %v948 = vld [vmem:[#allocation2 + $0x180] sm:$0xff]
    %v949 = vld [vmem:[#allocation2 + $0x188] sm:$0xff]
    %v952 = vrot.slane %v944, 6
    %v953 = vrot.slane %v945, 6
    %v954 = vsel %vm125, %v952, %v953
    %v956 = vsel %vm125, 0.0, %v952
    %v957 = vld [vmem:[#allocation2 + $0x150] sm:$0xff]
    %v958 = vld [vmem:[#allocation2 + $0x158] sm:$0xff]
    %v959 = vld [vmem:[#allocation2 + $0x160] sm:$0xff]
    %v960 = vld [vmem:[#allocation2 + $0x168] sm:$0xff]
    %v962 = vsel %vm135, %v956, 0
    %v964 = vsel %vm135, %v954, 0
    %966 = vmatprep.subr.mxu0 0.0
    %967 = vmatpush1.msra.mxu0 %v957
    %968 = vmatprep.subr.mxu0 0.0
    %969 = vmatpush1.msra.mxu0 %v958
    %970 = vmatprep.subr.mxu0 0.0
    %971 = vmatpush1.msra.mxu0 %v959
    %972 = vmatprep.subr.mxu0 0.0
    %973 = vmatpush1.msra.mxu0 %v960
    %974 = vmatprep.subr.mxu0 0.0
    %975 = vmatpush1.msra.mxu0 0.0
    %976 = vmatprep.subr.mxu0 0.0
    %977 = vmatpush1.msra.mxu0 0.0
    %978 = vmatprep.subr.mxu0 0.0
    %979 = vmatpush1.msra.mxu0 0.0
    %980 = vmatprep.subr.mxu0 0.0
    %981 = vmatpush1.msra.mxu0 0.0
    %982 = vmatprep.subr.mxu0 0.0
    %983 = vmatpush1.msra.mxu0 0.0
    %984 = vmatprep.subr.mxu0 0.0
    %985 = vmatpush1.msra.mxu0 0.0
    %986 = vmatprep.subr.mxu0 0.0
    %987 = vmatpush1.msra.mxu0 0.0
    %988 = vmatprep.subr.mxu0 0.0
    %989 = vmatpush1.msra.mxu0 0.0
    %990 = vmatprep.subr.mxu0 0.0
    %991 = vmatpush1.msra.mxu0 0.0
    %992 = vmatprep.subr.mxu0 0.0
    %993 = vmatpush1.msra.mxu0 0.0
    %994 = vmatprep.subr.mxu0 0.0
    %995 = vmatpush1.msra.mxu0 0.0
    %996 = vmatprep.subr.mxu0 0.0
    %997 = vmatpush1.msra.mxu0 0.0
    %998 = vmatprep.subr.mxu0 0.0
    %999 = vmatpush1.msra.mxu0 0.0
    %1000 = vmatprep.subr.mxu0 0.0
    %1001 = vmatpush1.msra.mxu0 0.0
    %1002 = vmatprep.subr.mxu0 0.0
    %1003 = vmatpush1.msra.mxu0 0.0
    %1004 = vmatprep.subr.mxu0 0.0
    %1005 = vmatpush1.msra.mxu0 0.0
    %1006 = vmatprep.subr.mxu0 0.0
    %1007 = vmatpush1.msra.mxu0 0.0
    %1008 = vmatprep.subr.mxu0 0.0
    %1009 = vmatpush1.msra.mxu0 0.0
    %1010 = vmatprep.subr.mxu0 0.0
    %1011 = vmatpush1.msra.mxu0 0.0
    %1012 = vmatprep.subr.mxu0 0.0
    %1013 = vmatpush1.msra.mxu0 0.0
    %1014 = vmatprep.subr.mxu0 0.0
    %1015 = vmatpush1.msra.mxu0 0.0
    %1016 = vmatprep.subr.mxu0 0.0
    %1017 = vmatpush1.msra.mxu0 0.0
    %1018 = vmatprep.subr.mxu0 0.0
    %1019 = vmatpush1.msra.mxu0 0.0
    %1020 = vmatprep.subr.mxu0 0.0
    %1021 = vmatpush1.msra.mxu0 0.0
    %1022 = vmatprep.subr.mxu0 0.0
    %1023 = vmatpush1.msra.mxu0 0.0
    %1024 = vmatprep.subr.mxu0 0.0
    %1025 = vmatpush1.msra.mxu0 0.0
    %1026 = vmatprep.subr.mxu0 0.0
    %1027 = vmatpush1.msra.mxu0 0.0
    %1028 = vmatprep.subr.mxu0 0.0
    %1029 = vmatpush1.msra.mxu0 0.0
    %1030 = vmatprep.mubr.f32.mxu0 0.0
    %1031 = vmatmul.mubr.f32.gmra.mrb[0].mxu0 %v962
    %v1032 = vpop.f32.mrb[0].mxu0
    %v1033 = vadd.f32 0.0, %v1032
    %v1034 = vpop.f32.mrb[0].mxu0
    %1035 = vmatprep.mubr.f32.mxu0 0.0
    %1036 = vmatmul.mubr.f32.gmra.mrb[0].mxu0 %v964
    %v1037 = vpop.f32.mrb[0].mxu0
    %v1038 = vadd.f32 0.0, %v1037
    %v1039 = vpop.f32.mrb[0].mxu0
    %1040 = vdwg.mxu0
    %v1041 = vsel %vm135, %v944, 0
    %v1043 = vsel %vm135, %v945, 0
    %1045 = vmatprep.subr.mxu0 0.0
    %1046 = vmatpush1.msra.mxu0 %v946
    %1047 = vmatprep.subr.mxu0 0.0
    %1048 = vmatpush1.msra.mxu0 %v947
    %1049 = vmatprep.subr.mxu0 0.0
    %1050 = vmatpush1.msra.mxu0 %v948
    %1051 = vmatprep.subr.mxu0 0.0
    %1052 = vmatpush1.msra.mxu0 %v949
    %1053 = vmatprep.subr.mxu0 0.0
    %1054 = vmatpush1.msra.mxu0 0.0
    %1055 = vmatprep.subr.mxu0 0.0
    %1056 = vmatpush1.msra.mxu0 0.0
    %1057 = vmatprep.subr.mxu0 0.0
    %1058 = vmatpush1.msra.mxu0 0.0
    %1059 = vmatprep.subr.mxu0 0.0
    %1060 = vmatpush1.msra.mxu0 0.0
    %1061 = vmatprep.subr.mxu0 0.0
    %1062 = vmatpush1.msra.mxu0 0.0
    %1063 = vmatprep.subr.mxu0 0.0
    %1064 = vmatpush1.msra.mxu0 0.0
    %1065 = vmatprep.subr.mxu0 0.0
    %1066 = vmatpush1.msra.mxu0 0.0
    %1067 = vmatprep.subr.mxu0 0.0
    %1068 = vmatpush1.msra.mxu0 0.0
    %1069 = vmatprep.subr.mxu0 0.0
    %1070 = vmatpush1.msra.mxu0 0.0
    %1071 = vmatprep.subr.mxu0 0.0
    %1072 = vmatpush1.msra.mxu0 0.0
    %1073 = vmatprep.subr.mxu0 0.0
    %1074 = vmatpush1.msra.mxu0 0.0
    %1075 = vmatprep.subr.mxu0 0.0
    %1076 = vmatpush1.msra.mxu0 0.0
    %1077 = vmatprep.subr.mxu0 0.0
    %1078 = vmatpush1.msra.mxu0 0.0
    %1079 = vmatprep.subr.mxu0 0.0
    %1080 = vmatpush1.msra.mxu0 0.0
    %1081 = vmatprep.subr.mxu0 0.0
    %1082 = vmatpush1.msra.mxu0 0.0
    %1083 = vmatprep.subr.mxu0 0.0
    %1084 = vmatpush1.msra.mxu0 0.0
    %1085 = vmatprep.subr.mxu0 0.0
    %1086 = vmatpush1.msra.mxu0 0.0
    %1087 = vmatprep.subr.mxu0 0.0
    %1088 = vmatpush1.msra.mxu0 0.0
    %1089 = vmatprep.subr.mxu0 0.0
    %1090 = vmatpush1.msra.mxu0 0.0
    %1091 = vmatprep.subr.mxu0 0.0
    %1092 = vmatpush1.msra.mxu0 0.0
    %1093 = vmatprep.subr.mxu0 0.0
    %1094 = vmatpush1.msra.mxu0 0.0
    %1095 = vmatprep.subr.mxu0 0.0
    %1096 = vmatpush1.msra.mxu0 0.0
    %1097 = vmatprep.subr.mxu0 0.0
    %1098 = vmatpush1.msra.mxu0 0.0
    %1099 = vmatprep.subr.mxu0 0.0
    %1100 = vmatpush1.msra.mxu0 0.0
    %1101 = vmatprep.subr.mxu0 0.0
    %1102 = vmatpush1.msra.mxu0 0.0
    %1103 = vmatprep.subr.mxu0 0.0
    %1104 = vmatpush1.msra.mxu0 0.0
    %1105 = vmatprep.subr.mxu0 0.0
    %1106 = vmatpush1.msra.mxu0 0.0
    %1107 = vmatprep.subr.mxu0 0.0
    %1108 = vmatpush1.msra.mxu0 0.0
    %1109 = vmatprep.mubr.f32.mxu0 0.0
    %1110 = vmatmul.mubr.f32.gmra.mrb[0].mxu0 %v1041
    %v1111 = vpop.f32.mrb[0].mxu0
    %v1112 = vadd.f32 %v1033, %v1111
    %v1113 = vpop.f32.mrb[0].mxu0
    %1114 = vmatprep.mubr.f32.mxu0 0.0
    %1115 = vmatmul.mubr.f32.gmra.mrb[0].mxu0 %v1043
    %v1116 = vpop.f32.mrb[0].mxu0
    %v1117 = vadd.f32 %v1038, %v1116
    %v1118 = vpop.f32.mrb[0].mxu0
    %1119 = vdwg.mxu0
    %v1120 = vrot.slane %v944, 2
    %v1121 = vrot.slane %v945, 2
    %v1122 = vsel %vm295, %v1120, %v1121
    %v1124 = vsel %vm295, %v1121, 0.0
    %v1125 = vld [vmem:[#allocation2 + $0x190] sm:$0xff]
    %v1126 = vld [vmem:[#allocation2 + $0x198] sm:$0xff]
    %v1127 = vld [vmem:[#allocation2 + $0x1a0] sm:$0xff]
    %v1128 = vld [vmem:[#allocation2 + $0x1a8] sm:$0xff]
    %v1129 = vsel %vm135, %v1122, 0
    %v1132 = vsel %vm135, %v1124, 0
    %1134 = vmatprep.subr.mxu0 0.0
    %1135 = vmatpush1.msra.mxu0 %v1125
    %1136 = vmatprep.subr.mxu0 0.0
    %1137 = vmatpush1.msra.mxu0 %v1126
    %1138 = vmatprep.subr.mxu0 0.0
    %1139 = vmatpush1.msra.mxu0 %v1127
    %1140 = vmatprep.subr.mxu0 0.0
    %1141 = vmatpush1.msra.mxu0 %v1128
    %1142 = vmatprep.subr.mxu0 0.0
    %1143 = vmatpush1.msra.mxu0 0.0
    %1144 = vmatprep.subr.mxu0 0.0
    %1145 = vmatpush1.msra.mxu0 0.0
    %1146 = vmatprep.subr.mxu0 0.0
    %1147 = vmatpush1.msra.mxu0 0.0
    %1148 = vmatprep.subr.mxu0 0.0
    %1149 = vmatpush1.msra.mxu0 0.0
    %1150 = vmatprep.subr.mxu0 0.0
    %1151 = vmatpush1.msra.mxu0 0.0
    %1152 = vmatprep.subr.mxu0 0.0
    %1153 = vmatpush1.msra.mxu0 0.0
    %1154 = vmatprep.subr.mxu0 0.0
    %1155 = vmatpush1.msra.mxu0 0.0
    %1156 = vmatprep.subr.mxu0 0.0
    %1157 = vmatpush1.msra.mxu0 0.0
    %1158 = vmatprep.subr.mxu0 0.0
    %1159 = vmatpush1.msra.mxu0 0.0
    %1160 = vmatprep.subr.mxu0 0.0
    %1161 = vmatpush1.msra.mxu0 0.0
    %1162 = vmatprep.subr.mxu0 0.0
    %1163 = vmatpush1.msra.mxu0 0.0
    %1164 = vmatprep.subr.mxu0 0.0
    %1165 = vmatpush1.msra.mxu0 0.0
    %1166 = vmatprep.subr.mxu0 0.0
    %1167 = vmatpush1.msra.mxu0 0.0
    %1168 = vmatprep.subr.mxu0 0.0
    %1169 = vmatpush1.msra.mxu0 0.0
    %1170 = vmatprep.subr.mxu0 0.0
    %1171 = vmatpush1.msra.mxu0 0.0
    %1172 = vmatprep.subr.mxu0 0.0
    %1173 = vmatpush1.msra.mxu0 0.0
    %1174 = vmatprep.subr.mxu0 0.0
    %1175 = vmatpush1.msra.mxu0 0.0
    %1176 = vmatprep.subr.mxu0 0.0
    %1177 = vmatpush1.msra.mxu0 0.0
    %1178 = vmatprep.subr.mxu0 0.0
    %1179 = vmatpush1.msra.mxu0 0.0
    %1180 = vmatprep.subr.mxu0 0.0
    %1181 = vmatpush1.msra.mxu0 0.0
    %1182 = vmatprep.subr.mxu0 0.0
    %1183 = vmatpush1.msra.mxu0 0.0
    %1184 = vmatprep.subr.mxu0 0.0
    %1185 = vmatpush1.msra.mxu0 0.0
    %1186 = vmatprep.subr.mxu0 0.0
    %1187 = vmatpush1.msra.mxu0 0.0
    %1188 = vmatprep.subr.mxu0 0.0
    %1189 = vmatpush1.msra.mxu0 0.0
    %1190 = vmatprep.subr.mxu0 0.0
    %1191 = vmatpush1.msra.mxu0 0.0
    %1192 = vmatprep.subr.mxu0 0.0
    %1193 = vmatpush1.msra.mxu0 0.0
    %1194 = vmatprep.subr.mxu0 0.0
    %1195 = vmatpush1.msra.mxu0 0.0
    %1196 = vmatprep.subr.mxu0 0.0
    %1197 = vmatpush1.msra.mxu0 0.0
    %1198 = vmatprep.mubr.f32.mxu0 0.0
    %1199 = vmatmul.mubr.f32.gmra.mrb[0].mxu0 %v1129
    %v1200 = vpop.f32.mrb[0].mxu0
    %v1201 = vadd.f32 0.0, %v1200
    %v1202 = vpop.f32.mrb[0].mxu0
    %1203 = vmatprep.mubr.f32.mxu0 0.0
    %1204 = vmatmul.mubr.f32.gmra.mrb[0].mxu0 %v1132
    %v1205 = vpop.f32.mrb[0].mxu0
    %v1206 = vadd.f32 0.0, %v1205
    %v1207 = vpop.f32.mrb[0].mxu0
    %1208 = vdwg.mxu0
    %v1209 = vadd.f32 %v1112, %v1201
    %v1210 = vadd.f32 %v1117, %v1206
    %v1211 = vld [vmem:[#allocation2 + $0x1b0] sm:$0x1]
    %v1212 = vlaneseq
    %v1213 = vshrl.u32 %v1212, 7
    %v1214 = vsub.s32 0, %v1213
    %v1215 = vrot.slane %v1211, %v1214
    %v1216 = vadd.f32 %v1209, %v1215
    %v1217 = vadd.f32 %v1210, %v1215
    %v1218 = vadd.f32 %v1216, %v670
    %v1219 = vadd.f32 %v1217, %v671
    %v1220 = vmax.f32 %v1218, 0.0
    %v1221 = vmax.f32 %v1219, 0.0
    %v1222 = vld [vmem:[#allocation2 + $0x1d8] sm:$0xff]
    %v1223 = vld [vmem:[#allocation2 + $0x1e0] sm:$0xff]
    %v1224 = vld [vmem:[#allocation2 + $0x1e8] sm:$0xff]
    %v1225 = vld [vmem:[#allocation2 + $0x1f0] sm:$0xff]
    %v1228 = vrot.slane %v1220, 6
    %v1229 = vrot.slane %v1221, 6
    %v1230 = vsel %vm125, %v1228, %v1229
    %v1232 = vsel %vm125, 0.0, %v1228
    %v1233 = vld [vmem:[#allocation2 + $0x1b8] sm:$0xff]
    %v1234 = vld [vmem:[#allocation2 + $0x1c0] sm:$0xff]
    %v1235 = vld [vmem:[#allocation2 + $0x1c8] sm:$0xff]
    %v1236 = vld [vmem:[#allocation2 + $0x1d0] sm:$0xff]
    %v1238 = vsel %vm135, %v1232, 0
    %v1240 = vsel %vm135, %v1230, 0
    %1242 = vmatprep.subr.mxu0 0.0
    %1243 = vmatpush1.msra.mxu0 %v1233
    %1244 = vmatprep.subr.mxu0 0.0
    %1245 = vmatpush1.msra.mxu0 %v1234
    %1246 = vmatprep.subr.mxu0 0.0
    %1247 = vmatpush1.msra.mxu0 %v1235
    %1248 = vmatprep.subr.mxu0 0.0
    %1249 = vmatpush1.msra.mxu0 %v1236
    %1250 = vmatprep.subr.mxu0 0.0
    %1251 = vmatpush1.msra.mxu0 0.0
    %1252 = vmatprep.subr.mxu0 0.0
    %1253 = vmatpush1.msra.mxu0 0.0
    %1254 = vmatprep.subr.mxu0 0.0
    %1255 = vmatpush1.msra.mxu0 0.0
    %1256 = vmatprep.subr.mxu0 0.0
    %1257 = vmatpush1.msra.mxu0 0.0
    %1258 = vmatprep.subr.mxu0 0.0
    %1259 = vmatpush1.msra.mxu0 0.0
    %1260 = vmatprep.subr.mxu0 0.0
    %1261 = vmatpush1.msra.mxu0 0.0
    %1262 = vmatprep.subr.mxu0 0.0
    %1263 = vmatpush1.msra.mxu0 0.0
    %1264 = vmatprep.subr.mxu0 0.0
    %1265 = vmatpush1.msra.mxu0 0.0
    %1266 = vmatprep.subr.mxu0 0.0
    %1267 = vmatpush1.msra.mxu0 0.0
    %1268 = vmatprep.subr.mxu0 0.0
    %1269 = vmatpush1.msra.mxu0 0.0
    %1270 = vmatprep.subr.mxu0 0.0
    %1271 = vmatpush1.msra.mxu0 0.0
    %1272 = vmatprep.subr.mxu0 0.0
    %1273 = vmatpush1.msra.mxu0 0.0
    %1274 = vmatprep.subr.mxu0 0.0
    %1275 = vmatpush1.msra.mxu0 0.0
    %1276 = vmatprep.subr.mxu0 0.0
    %1277 = vmatpush1.msra.mxu0 0.0
    %1278 = vmatprep.subr.mxu0 0.0
    %1279 = vmatpush1.msra.mxu0 0.0
    %1280 = vmatprep.subr.mxu0 0.0
    %1281 = vmatpush1.msra.mxu0 0.0
    %1282 = vmatprep.subr.mxu0 0.0
    %1283 = vmatpush1.msra.mxu0 0.0
    %1284 = vmatprep.subr.mxu0 0.0
    %1285 = vmatpush1.msra.mxu0 0.0
    %1286 = vmatprep.subr.mxu0 0.0
    %1287 = vmatpush1.msra.mxu0 0.0
    %1288 = vmatprep.subr.mxu0 0.0
    %1289 = vmatpush1.msra.mxu0 0.0
    %1290 = vmatprep.subr.mxu0 0.0
    %1291 = vmatpush1.msra.mxu0 0.0
    %1292 = vmatprep.subr.mxu0 0.0
    %1293 = vmatpush1.msra.mxu0 0.0
    %1294 = vmatprep.subr.mxu0 0.0
    %1295 = vmatpush1.msra.mxu0 0.0
    %1296 = vmatprep.subr.mxu0 0.0
    %1297 = vmatpush1.msra.mxu0 0.0
    %1298 = vmatprep.subr.mxu0 0.0
    %1299 = vmatpush1.msra.mxu0 0.0
    %1300 = vmatprep.subr.mxu0 0.0
    %1301 = vmatpush1.msra.mxu0 0.0
    %1302 = vmatprep.subr.mxu0 0.0
    %1303 = vmatpush1.msra.mxu0 0.0
    %1304 = vmatprep.subr.mxu0 0.0
    %1305 = vmatpush1.msra.mxu0 0.0
    %1306 = vmatprep.mubr.f32.mxu0 0.0
    %1307 = vmatmul.mubr.f32.gmra.mrb[0].mxu0 %v1238
    %v1308 = vpop.f32.mrb[0].mxu0
    %v1309 = vadd.f32 0.0, %v1308
    %v1310 = vpop.f32.mrb[0].mxu0
    %1311 = vmatprep.mubr.f32.mxu0 0.0
    %1312 = vmatmul.mubr.f32.gmra.mrb[0].mxu0 %v1240
    %v1313 = vpop.f32.mrb[0].mxu0
    %v1314 = vadd.f32 0.0, %v1313
    %v1315 = vpop.f32.mrb[0].mxu0
    %1316 = vdwg.mxu0
    %v1317 = vsel %vm135, %v1220, 0
    %v1319 = vsel %vm135, %v1221, 0
    %1321 = vmatprep.subr.mxu0 0.0
    %1322 = vmatpush1.msra.mxu0 %v1222
    %1323 = vmatprep.subr.mxu0 0.0
    %1324 = vmatpush1.msra.mxu0 %v1223
    %1325 = vmatprep.subr.mxu0 0.0
    %1326 = vmatpush1.msra.mxu0 %v1224
    %1327 = vmatprep.subr.mxu0 0.0
    %1328 = vmatpush1.msra.mxu0 %v1225
    %1329 = vmatprep.subr.mxu0 0.0
    %1330 = vmatpush1.msra.mxu0 0.0
    %1331 = vmatprep.subr.mxu0 0.0
    %1332 = vmatpush1.msra.mxu0 0.0
    %1333 = vmatprep.subr.mxu0 0.0
    %1334 = vmatpush1.msra.mxu0 0.0
    %1335 = vmatprep.subr.mxu0 0.0
    %1336 = vmatpush1.msra.mxu0 0.0
    %1337 = vmatprep.subr.mxu0 0.0
    %1338 = vmatpush1.msra.mxu0 0.0
    %1339 = vmatprep.subr.mxu0 0.0
    %1340 = vmatpush1.msra.mxu0 0.0
    %1341 = vmatprep.subr.mxu0 0.0
    %1342 = vmatpush1.msra.mxu0 0.0
    %1343 = vmatprep.subr.mxu0 0.0
    %1344 = vmatpush1.msra.mxu0 0.0
    %1345 = vmatprep.subr.mxu0 0.0
    %1346 = vmatpush1.msra.mxu0 0.0
    %1347 = vmatprep.subr.mxu0 0.0
    %1348 = vmatpush1.msra.mxu0 0.0
    %1349 = vmatprep.subr.mxu0 0.0
    %1350 = vmatpush1.msra.mxu0 0.0
    %1351 = vmatprep.subr.mxu0 0.0
    %1352 = vmatpush1.msra.mxu0 0.0
    %1353 = vmatprep.subr.mxu0 0.0
    %1354 = vmatpush1.msra.mxu0 0.0
    %1355 = vmatprep.subr.mxu0 0.0
    %1356 = vmatpush1.msra.mxu0 0.0
    %1357 = vmatprep.subr.mxu0 0.0
    %1358 = vmatpush1.msra.mxu0 0.0
    %1359 = vmatprep.subr.mxu0 0.0
    %1360 = vmatpush1.msra.mxu0 0.0
    %1361 = vmatprep.subr.mxu0 0.0
    %1362 = vmatpush1.msra.mxu0 0.0
    %1363 = vmatprep.subr.mxu0 0.0
    %1364 = vmatpush1.msra.mxu0 0.0
    %1365 = vmatprep.subr.mxu0 0.0
    %1366 = vmatpush1.msra.mxu0 0.0
    %1367 = vmatprep.subr.mxu0 0.0
    %1368 = vmatpush1.msra.mxu0 0.0
    %1369 = vmatprep.subr.mxu0 0.0
    %1370 = vmatpush1.msra.mxu0 0.0
    %1371 = vmatprep.subr.mxu0 0.0
    %1372 = vmatpush1.msra.mxu0 0.0
    %1373 = vmatprep.subr.mxu0 0.0
    %1374 = vmatpush1.msra.mxu0 0.0
    %1375 = vmatprep.subr.mxu0 0.0
    %1376 = vmatpush1.msra.mxu0 0.0
    %1377 = vmatprep.subr.mxu0 0.0
    %1378 = vmatpush1.msra.mxu0 0.0
    %1379 = vmatprep.subr.mxu0 0.0
    %1380 = vmatpush1.msra.mxu0 0.0
    %1381 = vmatprep.subr.mxu0 0.0
    %1382 = vmatpush1.msra.mxu0 0.0
    %1383 = vmatprep.subr.mxu0 0.0
    %1384 = vmatpush1.msra.mxu0 0.0
    %1385 = vmatprep.mubr.f32.mxu0 0.0
    %1386 = vmatmul.mubr.f32.gmra.mrb[0].mxu0 %v1317
    %v1387 = vpop.f32.mrb[0].mxu0
    %v1388 = vadd.f32 %v1309, %v1387
    %v1389 = vpop.f32.mrb[0].mxu0
    %1390 = vmatprep.mubr.f32.mxu0 0.0
    %1391 = vmatmul.mubr.f32.gmra.mrb[0].mxu0 %v1319
    %v1392 = vpop.f32.mrb[0].mxu0
    %v1393 = vadd.f32 %v1314, %v1392
    %v1394 = vpop.f32.mrb[0].mxu0
    %1395 = vdwg.mxu0
    %v1396 = vrot.slane %v1220, 2
    %v1397 = vrot.slane %v1221, 2
    %v1398 = vsel %vm295, %v1396, %v1397
    %v1400 = vsel %vm295, %v1397, 0.0
    %v1401 = vld [vmem:[#allocation2 + $0x1f8] sm:$0xff]
    %v1402 = vld [vmem:[#allocation2 + $0x200] sm:$0xff]
    %v1403 = vld [vmem:[#allocation2 + $0x208] sm:$0xff]
    %v1404 = vld [vmem:[#allocation2 + $0x210] sm:$0xff]
    %v1405 = vsel %vm135, %v1398, 0
    %v1408 = vsel %vm135, %v1400, 0
    %1410 = vmatprep.subr.mxu0 0.0
    %1411 = vmatpush1.msra.mxu0 %v1401
    %1412 = vmatprep.subr.mxu0 0.0
    %1413 = vmatpush1.msra.mxu0 %v1402
    %1414 = vmatprep.subr.mxu0 0.0
    %1415 = vmatpush1.msra.mxu0 %v1403
    %1416 = vmatprep.subr.mxu0 0.0
    %1417 = vmatpush1.msra.mxu0 %v1404
    %1418 = vmatprep.subr.mxu0 0.0
    %1419 = vmatpush1.msra.mxu0 0.0
    %1420 = vmatprep.subr.mxu0 0.0
    %1421 = vmatpush1.msra.mxu0 0.0
    %1422 = vmatprep.subr.mxu0 0.0
    %1423 = vmatpush1.msra.mxu0 0.0
    %1424 = vmatprep.subr.mxu0 0.0
    %1425 = vmatpush1.msra.mxu0 0.0
    %1426 = vmatprep.subr.mxu0 0.0
    %1427 = vmatpush1.msra.mxu0 0.0
    %1428 = vmatprep.subr.mxu0 0.0
    %1429 = vmatpush1.msra.mxu0 0.0
    %1430 = vmatprep.subr.mxu0 0.0
    %1431 = vmatpush1.msra.mxu0 0.0
    %1432 = vmatprep.subr.mxu0 0.0
    %1433 = vmatpush1.msra.mxu0 0.0
    %1434 = vmatprep.subr.mxu0 0.0
    %1435 = vmatpush1.msra.mxu0 0.0
    %1436 = vmatprep.subr.mxu0 0.0
    %1437 = vmatpush1.msra.mxu0 0.0
    %1438 = vmatprep.subr.mxu0 0.0
    %1439 = vmatpush1.msra.mxu0 0.0
    %1440 = vmatprep.subr.mxu0 0.0
    %1441 = vmatpush1.msra.mxu0 0.0
    %1442 = vmatprep.subr.mxu0 0.0
    %1443 = vmatpush1.msra.mxu0 0.0
    %1444 = vmatprep.subr.mxu0 0.0
    %1445 = vmatpush1.msra.mxu0 0.0
    %1446 = vmatprep.subr.mxu0 0.0
    %1447 = vmatpush1.msra.mxu0 0.0
    %1448 = vmatprep.subr.mxu0 0.0
    %1449 = vmatpush1.msra.mxu0 0.0
    %1450 = vmatprep.subr.mxu0 0.0
    %1451 = vmatpush1.msra.mxu0 0.0
    %1452 = vmatprep.subr.mxu0 0.0
    %1453 = vmatpush1.msra.mxu0 0.0
    %1454 = vmatprep.subr.mxu0 0.0
    %1455 = vmatpush1.msra.mxu0 0.0
    %1456 = vmatprep.subr.mxu0 0.0
    %1457 = vmatpush1.msra.mxu0 0.0
    %1458 = vmatprep.subr.mxu0 0.0
    %1459 = vmatpush1.msra.mxu0 0.0
    %1460 = vmatprep.subr.mxu0 0.0
    %1461 = vmatpush1.msra.mxu0 0.0
    %1462 = vmatprep.subr.mxu0 0.0
    %1463 = vmatpush1.msra.mxu0 0.0
    %1464 = vmatprep.subr.mxu0 0.0
    %1465 = vmatpush1.msra.mxu0 0.0
    %1466 = vmatprep.subr.mxu0 0.0
    %1467 = vmatpush1.msra.mxu0 0.0
    %1468 = vmatprep.subr.mxu0 0.0
    %1469 = vmatpush1.msra.mxu0 0.0
    %1470 = vmatprep.subr.mxu0 0.0
    %1471 = vmatpush1.msra.mxu0 0.0
    %1472 = vmatprep.subr.mxu0 0.0
    %1473 = vmatpush1.msra.mxu0 0.0
    %1474 = vmatprep.mubr.f32.mxu0 0.0
    %1475 = vmatmul.mubr.f32.gmra.mrb[0].mxu0 %v1405
    %v1476 = vpop.f32.mrb[0].mxu0
    %v1477 = vadd.f32 0.0, %v1476
    %v1478 = vpop.f32.mrb[0].mxu0
    %1479 = vmatprep.mubr.f32.mxu0 0.0
    %1480 = vmatmul.mubr.f32.gmra.mrb[0].mxu0 %v1408
    %v1481 = vpop.f32.mrb[0].mxu0
    %v1482 = vadd.f32 0.0, %v1481
    %v1483 = vpop.f32.mrb[0].mxu0
    %1484 = vdwg.mxu0
    %v1485 = vadd.f32 %v1388, %v1477
    %v1486 = vadd.f32 %v1393, %v1482
    %v1487 = vld [vmem:[#allocation2 + $0x218] sm:$0x1]
    %v1488 = vlaneseq
    %v1489 = vshrl.u32 %v1488, 7
    %v1490 = vsub.s32 0, %v1489
    %v1491 = vrot.slane %v1487, %v1490
    %v1492 = vadd.f32 %v1485, %v1491
    %v1493 = vadd.f32 %v1486, %v1491
    %v1494 = vmax.f32 %v1492, 0.0
    %v1495 = vmax.f32 %v1493, 0.0
    %v1496 = vld [vmem:[#allocation2 + $0x240] sm:$0xff]
    %v1497 = vld [vmem:[#allocation2 + $0x248] sm:$0xff]
    %v1498 = vld [vmem:[#allocation2 + $0x250] sm:$0xff]
    %v1499 = vld [vmem:[#allocation2 + $0x258] sm:$0xff]
    %v1502 = vrot.slane %v1494, 6
    %v1503 = vrot.slane %v1495, 6
    %v1504 = vsel %vm125, %v1502, %v1503
    %v1506 = vsel %vm125, 0.0, %v1502
    %v1507 = vld [vmem:[#allocation2 + $0x220] sm:$0xff]
    %v1508 = vld [vmem:[#allocation2 + $0x228] sm:$0xff]
    %v1509 = vld [vmem:[#allocation2 + $0x230] sm:$0xff]
    %v1510 = vld [vmem:[#allocation2 + $0x238] sm:$0xff]
    %v1512 = vsel %vm135, %v1506, 0
    %v1514 = vsel %vm135, %v1504, 0
    %1516 = vmatprep.subr.mxu0 0.0
    %1517 = vmatpush1.msra.mxu0 %v1507
    %1518 = vmatprep.subr.mxu0 0.0
    %1519 = vmatpush1.msra.mxu0 %v1508
    %1520 = vmatprep.subr.mxu0 0.0
    %1521 = vmatpush1.msra.mxu0 %v1509
    %1522 = vmatprep.subr.mxu0 0.0
    %1523 = vmatpush1.msra.mxu0 %v1510
    %1524 = vmatprep.subr.mxu0 0.0
    %1525 = vmatpush1.msra.mxu0 0.0
    %1526 = vmatprep.subr.mxu0 0.0
    %1527 = vmatpush1.msra.mxu0 0.0
    %1528 = vmatprep.subr.mxu0 0.0
    %1529 = vmatpush1.msra.mxu0 0.0
    %1530 = vmatprep.subr.mxu0 0.0
    %1531 = vmatpush1.msra.mxu0 0.0
    %1532 = vmatprep.subr.mxu0 0.0
    %1533 = vmatpush1.msra.mxu0 0.0
    %1534 = vmatprep.subr.mxu0 0.0
    %1535 = vmatpush1.msra.mxu0 0.0
    %1536 = vmatprep.subr.mxu0 0.0
    %1537 = vmatpush1.msra.mxu0 0.0
    %1538 = vmatprep.subr.mxu0 0.0
    %1539 = vmatpush1.msra.mxu0 0.0
    %1540 = vmatprep.subr.mxu0 0.0
    %1541 = vmatpush1.msra.mxu0 0.0
    %1542 = vmatprep.subr.mxu0 0.0
    %1543 = vmatpush1.msra.mxu0 0.0
    %1544 = vmatprep.subr.mxu0 0.0
    %1545 = vmatpush1.msra.mxu0 0.0
    %1546 = vmatprep.subr.mxu0 0.0
    %1547 = vmatpush1.msra.mxu0 0.0
    %1548 = vmatprep.subr.mxu0 0.0
    %1549 = vmatpush1.msra.mxu0 0.0
    %1550 = vmatprep.subr.mxu0 0.0
    %1551 = vmatpush1.msra.mxu0 0.0
    %1552 = vmatprep.subr.mxu0 0.0
    %1553 = vmatpush1.msra.mxu0 0.0
    %1554 = vmatprep.subr.mxu0 0.0
    %1555 = vmatpush1.msra.mxu0 0.0
    %1556 = vmatprep.subr.mxu0 0.0
    %1557 = vmatpush1.msra.mxu0 0.0
    %1558 = vmatprep.subr.mxu0 0.0
    %1559 = vmatpush1.msra.mxu0 0.0
    %1560 = vmatprep.subr.mxu0 0.0
    %1561 = vmatpush1.msra.mxu0 0.0
    %1562 = vmatprep.subr.mxu0 0.0
    %1563 = vmatpush1.msra.mxu0 0.0
    %1564 = vmatprep.subr.mxu0 0.0
    %1565 = vmatpush1.msra.mxu0 0.0
    %1566 = vmatprep.subr.mxu0 0.0
    %1567 = vmatpush1.msra.mxu0 0.0
    %1568 = vmatprep.subr.mxu0 0.0
    %1569 = vmatpush1.msra.mxu0 0.0
    %1570 = vmatprep.subr.mxu0 0.0
    %1571 = vmatpush1.msra.mxu0 0.0
    %1572 = vmatprep.subr.mxu0 0.0
    %1573 = vmatpush1.msra.mxu0 0.0
    %1574 = vmatprep.subr.mxu0 0.0
    %1575 = vmatpush1.msra.mxu0 0.0
    %1576 = vmatprep.subr.mxu0 0.0
    %1577 = vmatpush1.msra.mxu0 0.0
    %1578 = vmatprep.subr.mxu0 0.0
    %1579 = vmatpush1.msra.mxu0 0.0
    %1580 = vmatprep.mubr.f32.mxu0 0.0
    %1581 = vmatmul.mubr.f32.gmra.mrb[0].mxu0 %v1512
    %v1582 = vpop.f32.mrb[0].mxu0
    %v1583 = vadd.f32 0.0, %v1582
    %v1584 = vpop.f32.mrb[0].mxu0
    %1585 = vmatprep.mubr.f32.mxu0 0.0
    %1586 = vmatmul.mubr.f32.gmra.mrb[0].mxu0 %v1514
    %v1587 = vpop.f32.mrb[0].mxu0
    %v1588 = vadd.f32 0.0, %v1587
    %v1589 = vpop.f32.mrb[0].mxu0
    %1590 = vdwg.mxu0
    %v1591 = vsel %vm135, %v1494, 0
    %v1593 = vsel %vm135, %v1495, 0
    %1595 = vmatprep.subr.mxu0 0.0
    %1596 = vmatpush1.msra.mxu0 %v1496
    %1597 = vmatprep.subr.mxu0 0.0
    %1598 = vmatpush1.msra.mxu0 %v1497
    %1599 = vmatprep.subr.mxu0 0.0
    %1600 = vmatpush1.msra.mxu0 %v1498
    %1601 = vmatprep.subr.mxu0 0.0
    %1602 = vmatpush1.msra.mxu0 %v1499
    %1603 = vmatprep.subr.mxu0 0.0
    %1604 = vmatpush1.msra.mxu0 0.0
    %1605 = vmatprep.subr.mxu0 0.0
    %1606 = vmatpush1.msra.mxu0 0.0
    %1607 = vmatprep.subr.mxu0 0.0
    %1608 = vmatpush1.msra.mxu0 0.0
    %1609 = vmatprep.subr.mxu0 0.0
    %1610 = vmatpush1.msra.mxu0 0.0
    %1611 = vmatprep.subr.mxu0 0.0
    %1612 = vmatpush1.msra.mxu0 0.0
    %1613 = vmatprep.subr.mxu0 0.0
    %1614 = vmatpush1.msra.mxu0 0.0
    %1615 = vmatprep.subr.mxu0 0.0
    %1616 = vmatpush1.msra.mxu0 0.0
    %1617 = vmatprep.subr.mxu0 0.0
    %1618 = vmatpush1.msra.mxu0 0.0
    %1619 = vmatprep.subr.mxu0 0.0
    %1620 = vmatpush1.msra.mxu0 0.0
    %1621 = vmatprep.subr.mxu0 0.0
    %1622 = vmatpush1.msra.mxu0 0.0
    %1623 = vmatprep.subr.mxu0 0.0
    %1624 = vmatpush1.msra.mxu0 0.0
    %1625 = vmatprep.subr.mxu0 0.0
    %1626 = vmatpush1.msra.mxu0 0.0
    %1627 = vmatprep.subr.mxu0 0.0
    %1628 = vmatpush1.msra.mxu0 0.0
    %1629 = vmatprep.subr.mxu0 0.0
    %1630 = vmatpush1.msra.mxu0 0.0
    %1631 = vmatprep.subr.mxu0 0.0
    %1632 = vmatpush1.msra.mxu0 0.0
    %1633 = vmatprep.subr.mxu0 0.0
    %1634 = vmatpush1.msra.mxu0 0.0
    %1635 = vmatprep.subr.mxu0 0.0
    %1636 = vmatpush1.msra.mxu0 0.0
    %1637 = vmatprep.subr.mxu0 0.0
    %1638 = vmatpush1.msra.mxu0 0.0
    %1639 = vmatprep.subr.mxu0 0.0
    %1640 = vmatpush1.msra.mxu0 0.0
    %1641 = vmatprep.subr.mxu0 0.0
    %1642 = vmatpush1.msra.mxu0 0.0
    %1643 = vmatprep.subr.mxu0 0.0
    %1644 = vmatpush1.msra.mxu0 0.0
    %1645 = vmatprep.subr.mxu0 0.0
    %1646 = vmatpush1.msra.mxu0 0.0
    %1647 = vmatprep.subr.mxu0 0.0
    %1648 = vmatpush1.msra.mxu0 0.0
    %1649 = vmatprep.subr.mxu0 0.0
    %1650 = vmatpush1.msra.mxu0 0.0
    %1651 = vmatprep.subr.mxu0 0.0
    %1652 = vmatpush1.msra.mxu0 0.0
    %1653 = vmatprep.subr.mxu0 0.0
    %1654 = vmatpush1.msra.mxu0 0.0
    %1655 = vmatprep.subr.mxu0 0.0
    %1656 = vmatpush1.msra.mxu0 0.0
    %1657 = vmatprep.subr.mxu0 0.0
    %1658 = vmatpush1.msra.mxu0 0.0
    %1659 = vmatprep.mubr.f32.mxu0 0.0
    %1660 = vmatmul.mubr.f32.gmra.mrb[0].mxu0 %v1591
    %v1661 = vpop.f32.mrb[0].mxu0
    %v1662 = vadd.f32 %v1583, %v1661
    %v1663 = vpop.f32.mrb[0].mxu0
    %1664 = vmatprep.mubr.f32.mxu0 0.0
    %1665 = vmatmul.mubr.f32.gmra.mrb[0].mxu0 %v1593
    %v1666 = vpop.f32.mrb[0].mxu0
    %v1667 = vadd.f32 %v1588, %v1666
    %v1668 = vpop.f32.mrb[0].mxu0
    %1669 = vdwg.mxu0
    %v1670 = vrot.slane %v1494, 2
    %v1671 = vrot.slane %v1495, 2
    %v1672 = vsel %vm295, %v1670, %v1671
    %v1674 = vsel %vm295, %v1671, 0.0
    %v1675 = vld [vmem:[#allocation2 + $0x260] sm:$0xff]
    %v1676 = vld [vmem:[#allocation2 + $0x268] sm:$0xff]
    %v1677 = vld [vmem:[#allocation2 + $0x270] sm:$0xff]
    %v1678 = vld [vmem:[#allocation2 + $0x278] sm:$0xff]
    %v1679 = vsel %vm135, %v1672, 0
    %v1682 = vsel %vm135, %v1674, 0
    %1684 = vmatprep.subr.mxu0 0.0
    %1685 = vmatpush1.msra.mxu0 %v1675
    %1686 = vmatprep.subr.mxu0 0.0
    %1687 = vmatpush1.msra.mxu0 %v1676
    %1688 = vmatprep.subr.mxu0 0.0
    %1689 = vmatpush1.msra.mxu0 %v1677
    %1690 = vmatprep.subr.mxu0 0.0
    %1691 = vmatpush1.msra.mxu0 %v1678
    %1692 = vmatprep.subr.mxu0 0.0
    %1693 = vmatpush1.msra.mxu0 0.0
    %1694 = vmatprep.subr.mxu0 0.0
    %1695 = vmatpush1.msra.mxu0 0.0
    %1696 = vmatprep.subr.mxu0 0.0
    %1697 = vmatpush1.msra.mxu0 0.0
    %1698 = vmatprep.subr.mxu0 0.0
    %1699 = vmatpush1.msra.mxu0 0.0
    %1700 = vmatprep.subr.mxu0 0.0
    %1701 = vmatpush1.msra.mxu0 0.0
    %1702 = vmatprep.subr.mxu0 0.0
    %1703 = vmatpush1.msra.mxu0 0.0
    %1704 = vmatprep.subr.mxu0 0.0
    %1705 = vmatpush1.msra.mxu0 0.0
    %1706 = vmatprep.subr.mxu0 0.0
    %1707 = vmatpush1.msra.mxu0 0.0
    %1708 = vmatprep.subr.mxu0 0.0
    %1709 = vmatpush1.msra.mxu0 0.0
    %1710 = vmatprep.subr.mxu0 0.0
    %1711 = vmatpush1.msra.mxu0 0.0
    %1712 = vmatprep.subr.mxu0 0.0
    %1713 = vmatpush1.msra.mxu0 0.0
    %1714 = vmatprep.subr.mxu0 0.0
    %1715 = vmatpush1.msra.mxu0 0.0
    %1716 = vmatprep.subr.mxu0 0.0
    %1717 = vmatpush1.msra.mxu0 0.0
    %1718 = vmatprep.subr.mxu0 0.0
    %1719 = vmatpush1.msra.mxu0 0.0
    %1720 = vmatprep.subr.mxu0 0.0
    %1721 = vmatpush1.msra.mxu0 0.0
    %1722 = vmatprep.subr.mxu0 0.0
    %1723 = vmatpush1.msra.mxu0 0.0
    %1724 = vmatprep.subr.mxu0 0.0
    %1725 = vmatpush1.msra.mxu0 0.0
    %1726 = vmatprep.subr.mxu0 0.0
    %1727 = vmatpush1.msra.mxu0 0.0
    %1728 = vmatprep.subr.mxu0 0.0
    %1729 = vmatpush1.msra.mxu0 0.0
    %1730 = vmatprep.subr.mxu0 0.0
    %1731 = vmatpush1.msra.mxu0 0.0
    %1732 = vmatprep.subr.mxu0 0.0
    %1733 = vmatpush1.msra.mxu0 0.0
    %1734 = vmatprep.subr.mxu0 0.0
    %1735 = vmatpush1.msra.mxu0 0.0
    %1736 = vmatprep.subr.mxu0 0.0
    %1737 = vmatpush1.msra.mxu0 0.0
    %1738 = vmatprep.subr.mxu0 0.0
    %1739 = vmatpush1.msra.mxu0 0.0
    %1740 = vmatprep.subr.mxu0 0.0
    %1741 = vmatpush1.msra.mxu0 0.0
    %1742 = vmatprep.subr.mxu0 0.0
    %1743 = vmatpush1.msra.mxu0 0.0
    %1744 = vmatprep.subr.mxu0 0.0
    %1745 = vmatpush1.msra.mxu0 0.0
    %1746 = vmatprep.subr.mxu0 0.0
    %1747 = vmatpush1.msra.mxu0 0.0
    %1748 = vmatprep.mubr.f32.mxu0 0.0
    %1749 = vmatmul.mubr.f32.gmra.mrb[0].mxu0 %v1679
    %v1750 = vpop.f32.mrb[0].mxu0
    %v1751 = vadd.f32 0.0, %v1750
    %v1752 = vpop.f32.mrb[0].mxu0
    %1753 = vmatprep.mubr.f32.mxu0 0.0
    %1754 = vmatmul.mubr.f32.gmra.mrb[0].mxu0 %v1682
    %v1755 = vpop.f32.mrb[0].mxu0
    %v1756 = vadd.f32 0.0, %v1755
    %v1757 = vpop.f32.mrb[0].mxu0
    %1758 = vdwg.mxu0
    %v1759 = vadd.f32 %v1662, %v1751
    %v1760 = vadd.f32 %v1667, %v1756
    %v1761 = vld [vmem:[#allocation2 + $0x280] sm:$0x1]
    %v1762 = vlaneseq
    %v1763 = vshrl.u32 %v1762, 7
    %v1764 = vsub.s32 0, %v1763
    %v1765 = vrot.slane %v1761, %v1764
    %v1766 = vadd.f32 %v1759, %v1765
    %v1767 = vadd.f32 %v1760, %v1765
    %v1768 = vadd.f32 %v1766, %v1220
    %v1769 = vadd.f32 %v1767, %v1221
    %v1770 = vmax.f32 %v1768, 0.0
    %v1771 = vmax.f32 %v1769, 0.0
    %v1772 = vld [vmem:[#allocation2 + $0x288] sm:$0xff]
    %v1773 = vld [vmem:[#allocation2 + $0x290] sm:$0xff]
    %v1774 = vadd.f32 %v1770, %v1772
    %v1775 = vadd.f32 %v1771, %v1773
    %v1776 = vlaneseq
    %v1777 = vand.u32 %v1776, 127
    %vm1778 = vcmp.lt.s32.totalorder %v1777, 0
    %v1779 = vsub.s32 0, %v1777
    %v1780 = vsel %vm1778, %v1779, %v1777
    %v1781 = vshrl.u32 %v1780, 5
    %v1782 = vand.u32 %v1780, 31
    %v1783 = vsub.s32 0, %v1782
    %v1784 = vsel %vm1778, %v1783, %v1782
    %vm1785 = vcmp.ne.s32.totalorder %v1784, 0
    %vm1786 = vcmp.lt.s32.totalorder %v1784, 0
    %vm1787 = vmand %vm1786, %vm1785
    %v1788 = vadd.s32 %v1784, 32
    %v1789 = vsel %vm1787, %v1788, %v1784
    %vm1790 = vcmp.lt.s32.totalorder %v1789, 16
    %v1791 = vsel %vm1790, 1, 0
    %v1792 = vcvt.s32.f32 %v1791
    %v1793 = vsub.f32 1.0, %v1792
    %vm1794 = vcmp.lt.s32.totalorder %v1777, 16
    %v1795 = vsel %vm1794, 1, 0
    %v1796 = vcvt.s32.f32 %v1795
    %v1797 = vsub.f32 1.0, %v1796
    %v1798 = vld [vmem:[#allocation2 + $0x298] sm:$0xff]
    %v1799 = vld [vmem:[#allocation2 + $0x2a0] sm:$0xff]
    %v1800 = vld [vmem:[#allocation2 + $0x2a8] sm:$0xff]
    %v1801 = vld [vmem:[#allocation2 + $0x2b0] sm:$0xff]
    %v1802 = vld [vmem:[#allocation2 + $0x2b8] sm:$0xff]
    %v1803 = vld [vmem:[#allocation2 + $0x2c0] sm:$0xff]
    %v1804 = vld [vmem:[#allocation2 + $0x2c8] sm:$0xff]
    %v1805 = vld [vmem:[#allocation2 + $0x2d0] sm:$0xff]
    %v1806 = vld [vmem:[#allocation2 + $0x2d8] sm:$0x1]
    %v1807 = vlaneseq
    %v1808 = vshrl.u32 %v1807, 7
    %v1809 = vsub.s32 0, %v1808
    %v1810 = vrot.slane %v1806, %v1809
    %v1812 = vsel %vm135, %v1774, 0
    %v1815 = vsel %vm135, %v1775, 0
    %1817 = vmatprep.subr.mxu0 0.0
    %1818 = vmatpush1.msra.mxu0 %v1798
    %1819 = vmatprep.subr.mxu0 0.0
    %1820 = vmatpush1.msra.mxu0 %v1799
    %1821 = vmatprep.subr.mxu0 0.0
    %1822 = vmatpush1.msra.mxu0 %v1800
    %1823 = vmatprep.subr.mxu0 0.0
    %1824 = vmatpush1.msra.mxu0 %v1801
    %1825 = vmatprep.subr.mxu0 0.0
    %1826 = vmatpush1.msra.mxu0 0.0
    %1827 = vmatprep.subr.mxu0 0.0
    %1828 = vmatpush1.msra.mxu0 0.0
    %1829 = vmatprep.subr.mxu0 0.0
    %1830 = vmatpush1.msra.mxu0 0.0
    %1831 = vmatprep.subr.mxu0 0.0
    %1832 = vmatpush1.msra.mxu0 0.0
    %1833 = vmatprep.subr.mxu0 0.0
    %1834 = vmatpush1.msra.mxu0 0.0
    %1835 = vmatprep.subr.mxu0 0.0
    %1836 = vmatpush1.msra.mxu0 0.0
    %1837 = vmatprep.subr.mxu0 0.0
    %1838 = vmatpush1.msra.mxu0 0.0
    %1839 = vmatprep.subr.mxu0 0.0
    %1840 = vmatpush1.msra.mxu0 0.0
    %1841 = vmatprep.subr.mxu0 0.0
    %1842 = vmatpush1.msra.mxu0 0.0
    %1843 = vmatprep.subr.mxu0 0.0
    %1844 = vmatpush1.msra.mxu0 0.0
    %1845 = vmatprep.subr.mxu0 0.0
    %1846 = vmatpush1.msra.mxu0 0.0
    %1847 = vmatprep.subr.mxu0 0.0
    %1848 = vmatpush1.msra.mxu0 0.0
    %1849 = vmatprep.subr.mxu0 0.0
    %1850 = vmatpush1.msra.mxu0 0.0
    %1851 = vmatprep.subr.mxu0 0.0
    %1852 = vmatpush1.msra.mxu0 0.0
    %1853 = vmatprep.subr.mxu0 0.0
    %1854 = vmatpush1.msra.mxu0 0.0
    %1855 = vmatprep.subr.mxu0 0.0
    %1856 = vmatpush1.msra.mxu0 0.0
    %1857 = vmatprep.subr.mxu0 0.0
    %1858 = vmatpush1.msra.mxu0 0.0
    %1859 = vmatprep.subr.mxu0 0.0
    %1860 = vmatpush1.msra.mxu0 0.0
    %1861 = vmatprep.subr.mxu0 0.0
    %1862 = vmatpush1.msra.mxu0 0.0
    %1863 = vmatprep.subr.mxu0 0.0
    %1864 = vmatpush1.msra.mxu0 0.0
    %1865 = vmatprep.subr.mxu0 0.0
    %1866 = vmatpush1.msra.mxu0 0.0
    %1867 = vmatprep.subr.mxu0 0.0
    %1868 = vmatpush1.msra.mxu0 0.0
    %1869 = vmatprep.subr.mxu0 0.0
    %1870 = vmatpush1.msra.mxu0 0.0
    %1871 = vmatprep.subr.mxu0 0.0
    %1872 = vmatpush1.msra.mxu0 0.0
    %1873 = vmatprep.subr.mxu0 0.0
    %1874 = vmatpush1.msra.mxu0 0.0
    %1875 = vmatprep.subr.mxu0 0.0
    %1876 = vmatpush1.msra.mxu0 0.0
    %1877 = vmatprep.subr.mxu0 0.0
    %1878 = vmatpush1.msra.mxu0 0.0
    %1879 = vmatprep.subr.mxu0 0.0
    %1880 = vmatpush1.msra.mxu0 0.0
    %1881 = vmatprep.mubr.f32.mxu0 0.0
    %1882 = vmatmul.mubr.f32.gmra.mrb[0].mxu0 %v1812
    %v1883 = vpop.f32.mrb[0].mxu0
    %v1884 = vadd.f32 %v1810, %v1883
    %v1885 = vpop.f32.mrb[0].mxu0
    %1886 = vmatprep.mubr.f32.mxu0 0.0
    %1887 = vmatmul.mubr.f32.gmra.mrb[0].mxu0 %v1815
    %v1888 = vpop.f32.mrb[0].mxu0
    %v1889 = vadd.f32 %v1810, %v1888
    %v1890 = vpop.f32.mrb[0].mxu0
    %1891 = vdwg.mxu0
    %v1892 = vmul.f32 %v1884, %v1792
    %v1893 = vmul.f32 %v1889, %v1793
    %v1895 = vrot.slane %v1893, 6
    %v1897 = vadd.f32 %v1892, %v1895
    %v1898 = vrot.slane %v1893, 2
    %v1900 = vadd.f32 %v1892, %v1898
    %v1901 = vmul.f32 %v1889, %v1792
    %v1902 = vmul.f32 %v1884, %v1793
    %v1904 = vrot.slane %v1902, 6
    %v1906 = vadd.f32 %v1901, %v1904
    %v1907 = vrot.slane %v1902, 2
    %v1909 = vadd.f32 %v1901, %v1907
    %v1911 = vsel %vm135, 0.0, 0
    %1913 = vmatprep.subr.mxu0 0.0
    %1914 = vmatpush1.msra.mxu0 %v1802
    %1915 = vmatprep.subr.mxu0 0.0
    %1916 = vmatpush1.msra.mxu0 %v1803
    %1917 = vmatprep.subr.mxu0 0.0
    %1918 = vmatpush1.msra.mxu0 %v1804
    %1919 = vmatprep.subr.mxu0 0.0
    %1920 = vmatpush1.msra.mxu0 %v1805
    %1921 = vmatprep.subr.mxu0 0.0
    %1922 = vmatpush1.msra.mxu0 0.0
    %1923 = vmatprep.subr.mxu0 0.0
    %1924 = vmatpush1.msra.mxu0 0.0
    %1925 = vmatprep.subr.mxu0 0.0
    %1926 = vmatpush1.msra.mxu0 0.0
    %1927 = vmatprep.subr.mxu0 0.0
    %1928 = vmatpush1.msra.mxu0 0.0
    %1929 = vmatprep.subr.mxu0 0.0
    %1930 = vmatpush1.msra.mxu0 0.0
    %1931 = vmatprep.subr.mxu0 0.0
    %1932 = vmatpush1.msra.mxu0 0.0
    %1933 = vmatprep.subr.mxu0 0.0
    %1934 = vmatpush1.msra.mxu0 0.0
    %1935 = vmatprep.subr.mxu0 0.0
    %1936 = vmatpush1.msra.mxu0 0.0
    %1937 = vmatprep.subr.mxu0 0.0
    %1938 = vmatpush1.msra.mxu0 0.0
    %1939 = vmatprep.subr.mxu0 0.0
    %1940 = vmatpush1.msra.mxu0 0.0
    %1941 = vmatprep.subr.mxu0 0.0
    %1942 = vmatpush1.msra.mxu0 0.0
    %1943 = vmatprep.subr.mxu0 0.0
    %1944 = vmatpush1.msra.mxu0 0.0
    %1945 = vmatprep.subr.mxu0 0.0
    %1946 = vmatpush1.msra.mxu0 0.0
    %1947 = vmatprep.subr.mxu0 0.0
    %1948 = vmatpush1.msra.mxu0 0.0
    %1949 = vmatprep.subr.mxu0 0.0
    %1950 = vmatpush1.msra.mxu0 0.0
    %1951 = vmatprep.subr.mxu0 0.0
    %1952 = vmatpush1.msra.mxu0 0.0
    %1953 = vmatprep.subr.mxu0 0.0
    %1954 = vmatpush1.msra.mxu0 0.0
    %1955 = vmatprep.subr.mxu0 0.0
    %1956 = vmatpush1.msra.mxu0 0.0
    %1957 = vmatprep.subr.mxu0 0.0
    %1958 = vmatpush1.msra.mxu0 0.0
    %1959 = vmatprep.subr.mxu0 0.0
    %1960 = vmatpush1.msra.mxu0 0.0
    %1961 = vmatprep.subr.mxu0 0.0
    %1962 = vmatpush1.msra.mxu0 0.0
    %1963 = vmatprep.subr.mxu0 0.0
    %1964 = vmatpush1.msra.mxu0 0.0
    %1965 = vmatprep.subr.mxu0 0.0
    %1966 = vmatpush1.msra.mxu0 0.0
    %1967 = vmatprep.subr.mxu0 0.0
    %1968 = vmatpush1.msra.mxu0 0.0
    %1969 = vmatprep.subr.mxu0 0.0
    %1970 = vmatpush1.msra.mxu0 0.0
    %1971 = vmatprep.subr.mxu0 0.0
    %1972 = vmatpush1.msra.mxu0 0.0
    %1973 = vmatprep.subr.mxu0 0.0
    %1974 = vmatpush1.msra.mxu0 0.0
    %1975 = vmatprep.subr.mxu0 0.0
    %1976 = vmatpush1.msra.mxu0 0.0
    %1977 = vmatprep.mubr.f32.mxu0 0.0
    %1978 = vmatmul.mubr.f32.gmra.mrb[0].mxu0 %v1911
    %v1979 = vpop.f32.mrb[0].mxu0
    %v1980 = vadd.f32 0.0, %v1979
    %v1981 = vpop.f32.mrb[0].mxu0
    %1982 = vdwg.mxu0
    %v1983 = vadd.f32 %v1897, %v1980
    %v1984 = vsub.f32 0.0, %v1983
    %v1985 = vmul.f32 %v1984, 1.442695
    %v1986 = vpow.pop %v1985
    %v1987 = vadd.f32 %v1986, 1.0
    %v1988 = vrcp.pop %v1987
    %v1989 = vmul.f32 1.0, %v1988
    %v1990 = vtanh.pop %v1983
    %v1991 = vmul.f32 %v1989, 0.0
    %1993 = vrot.lane.b32.xlu0 %v1990, 64
    %v1994 = vpop.permute.xlu0 %1993
    %v1996 = vmul.f32 %v1989, %v1994
    %1998 = vrot.lane.b32.xlu0 %v1996, 32
    %v1999 = vpop.permute.xlu0 %1998
    %v2001 = vadd.f32 %v1991, %v1999
    %v2002 = vtanh.pop %v2001
    %2004 = vrot.lane.b32.xlu0 %v2002, 64
    %v2005 = vpop.permute.xlu0 %2004
    %v2007 = vmul.f32 %v1989, %v2005
    %2009 = vrot.lane.b32.xlu0 %v2007, 32
    %v2010 = vpop.permute.xlu0 %2009
    %v2011 = vsel %vm135, %v2010, 0
    %2013 = vmatprep.subr.mxu0 0.0
    %2014 = vmatpush1.msra.mxu0 %v1802
    %2015 = vmatprep.subr.mxu0 0.0
    %2016 = vmatpush1.msra.mxu0 %v1803
    %2017 = vmatprep.subr.mxu0 0.0
    %2018 = vmatpush1.msra.mxu0 %v1804
    %2019 = vmatprep.subr.mxu0 0.0
    %2020 = vmatpush1.msra.mxu0 %v1805
    %2021 = vmatprep.subr.mxu0 0.0
    %2022 = vmatpush1.msra.mxu0 0.0
    %2023 = vmatprep.subr.mxu0 0.0
    %2024 = vmatpush1.msra.mxu0 0.0
    %2025 = vmatprep.subr.mxu0 0.0
    %2026 = vmatpush1.msra.mxu0 0.0
    %2027 = vmatprep.subr.mxu0 0.0
    %2028 = vmatpush1.msra.mxu0 0.0
    %2029 = vmatprep.subr.mxu0 0.0
    %2030 = vmatpush1.msra.mxu0 0.0
    %2031 = vmatprep.subr.mxu0 0.0
    %2032 = vmatpush1.msra.mxu0 0.0
    %2033 = vmatprep.subr.mxu0 0.0
    %2034 = vmatpush1.msra.mxu0 0.0
    %2035 = vmatprep.subr.mxu0 0.0
    %2036 = vmatpush1.msra.mxu0 0.0
    %2037 = vmatprep.subr.mxu0 0.0
    %2038 = vmatpush1.msra.mxu0 0.0
    %2039 = vmatprep.subr.mxu0 0.0
    %2040 = vmatpush1.msra.mxu0 0.0
    %2041 = vmatprep.subr.mxu0 0.0
    %2042 = vmatpush1.msra.mxu0 0.0
    %2043 = vmatprep.subr.mxu0 0.0
    %2044 = vmatpush1.msra.mxu0 0.0
    %2045 = vmatprep.subr.mxu0 0.0
    %2046 = vmatpush1.msra.mxu0 0.0
    %2047 = vmatprep.subr.mxu0 0.0
    %2048 = vmatpush1.msra.mxu0 0.0
    %2049 = vmatprep.subr.mxu0 0.0
    %2050 = vmatpush1.msra.mxu0 0.0
    %2051 = vmatprep.subr.mxu0 0.0
    %2052 = vmatpush1.msra.mxu0 0.0
    %2053 = vmatprep.subr.mxu0 0.0
    %2054 = vmatpush1.msra.mxu0 0.0
    %2055 = vmatprep.subr.mxu0 0.0
    %2056 = vmatpush1.msra.mxu0 0.0
    %2057 = vmatprep.subr.mxu0 0.0
    %2058 = vmatpush1.msra.mxu0 0.0
    %2059 = vmatprep.subr.mxu0 0.0
    %2060 = vmatpush1.msra.mxu0 0.0
    %2061 = vmatprep.subr.mxu0 0.0
    %2062 = vmatpush1.msra.mxu0 0.0
    %2063 = vmatprep.subr.mxu0 0.0
    %2064 = vmatpush1.msra.mxu0 0.0
    %2065 = vmatprep.subr.mxu0 0.0
    %2066 = vmatpush1.msra.mxu0 0.0
    %2067 = vmatprep.subr.mxu0 0.0
    %2068 = vmatpush1.msra.mxu0 0.0
    %2069 = vmatprep.subr.mxu0 0.0
    %2070 = vmatpush1.msra.mxu0 0.0
    %2071 = vmatprep.subr.mxu0 0.0
    %2072 = vmatpush1.msra.mxu0 0.0
    %2073 = vmatprep.subr.mxu0 0.0
    %2074 = vmatpush1.msra.mxu0 0.0
    %2075 = vmatprep.subr.mxu0 0.0
    %2076 = vmatpush1.msra.mxu0 0.0
    %2077 = vmatprep.mubr.f32.mxu0 0.0
    %2078 = vmatmul.mubr.f32.gmra.mrb[0].mxu0 %v2011
    %v2079 = vpop.f32.mrb[0].mxu0
    %v2080 = vadd.f32 0.0, %v2079
    %v2081 = vpop.f32.mrb[0].mxu0
    %2082 = vdwg.mxu0
    %v2084 = vrot.slane %v2080, 6
    %v2086 = vadd.f32 %v1900, %v2084
    %v2087 = vsub.f32 0.0, %v2086
    %v2088 = vmul.f32 %v2087, 1.442695
    %v2089 = vpow.pop %v2088
    %v2090 = vadd.f32 %v2089, 1.0
    %v2091 = vrcp.pop %v2090
    %v2092 = vmul.f32 1.0, %v2091
    %v2093 = vtanh.pop %v2086
    %v2095 = vrot.slane %v2001, 6
    %v2097 = vmul.f32 %v2092, %v2095
    %2099 = vrot.lane.b32.xlu0 %v2093, 64
    %v2100 = vpop.permute.xlu0 %2099
    %v2102 = vmul.f32 %v2092, %v2100
    %2104 = vrot.lane.b32.xlu0 %v2102, 32
    %v2105 = vpop.permute.xlu0 %2104
    %v2107 = vadd.f32 %v2097, %v2105
    %v2108 = vtanh.pop %v2107
    %2110 = vrot.lane.b32.xlu0 %v2108, 64
    %v2111 = vpop.permute.xlu0 %2110
    %v2113 = vmul.f32 %v2092, %v2111
    %v2115 = vrot.slane %v2113, 2
    %2116 = vrot.lane.b32.xlu0 %v2115, 32
    %v2117 = vpop.permute.xlu0 %2116
    %v2118 = vsel %vm135, %v2117, 0
    %2120 = vmatprep.subr.mxu0 0.0
    %2121 = vmatpush1.msra.mxu0 %v1802
    %2122 = vmatprep.subr.mxu0 0.0
    %2123 = vmatpush1.msra.mxu0 %v1803
    %2124 = vmatprep.subr.mxu0 0.0
    %2125 = vmatpush1.msra.mxu0 %v1804
    %2126 = vmatprep.subr.mxu0 0.0
    %2127 = vmatpush1.msra.mxu0 %v1805
    %2128 = vmatprep.subr.mxu0 0.0
    %2129 = vmatpush1.msra.mxu0 0.0
    %2130 = vmatprep.subr.mxu0 0.0
    %2131 = vmatpush1.msra.mxu0 0.0
    %2132 = vmatprep.subr.mxu0 0.0
    %2133 = vmatpush1.msra.mxu0 0.0
    %2134 = vmatprep.subr.mxu0 0.0
    %2135 = vmatpush1.msra.mxu0 0.0
    %2136 = vmatprep.subr.mxu0 0.0
    %2137 = vmatpush1.msra.mxu0 0.0
    %2138 = vmatprep.subr.mxu0 0.0
    %2139 = vmatpush1.msra.mxu0 0.0
    %2140 = vmatprep.subr.mxu0 0.0
    %2141 = vmatpush1.msra.mxu0 0.0
    %2142 = vmatprep.subr.mxu0 0.0
    %2143 = vmatpush1.msra.mxu0 0.0
    %2144 = vmatprep.subr.mxu0 0.0
    %2145 = vmatpush1.msra.mxu0 0.0
    %2146 = vmatprep.subr.mxu0 0.0
    %2147 = vmatpush1.msra.mxu0 0.0
    %2148 = vmatprep.subr.mxu0 0.0
    %2149 = vmatpush1.msra.mxu0 0.0
    %2150 = vmatprep.subr.mxu0 0.0
    %2151 = vmatpush1.msra.mxu0 0.0
    %2152 = vmatprep.subr.mxu0 0.0
    %2153 = vmatpush1.msra.mxu0 0.0
    %2154 = vmatprep.subr.mxu0 0.0
    %2155 = vmatpush1.msra.mxu0 0.0
    %2156 = vmatprep.subr.mxu0 0.0
    %2157 = vmatpush1.msra.mxu0 0.0
    %2158 = vmatprep.subr.mxu0 0.0
    %2159 = vmatpush1.msra.mxu0 0.0
    %2160 = vmatprep.subr.mxu0 0.0
    %2161 = vmatpush1.msra.mxu0 0.0
    %2162 = vmatprep.subr.mxu0 0.0
    %2163 = vmatpush1.msra.mxu0 0.0
    %2164 = vmatprep.subr.mxu0 0.0
    %2165 = vmatpush1.msra.mxu0 0.0
    %2166 = vmatprep.subr.mxu0 0.0
    %2167 = vmatpush1.msra.mxu0 0.0
    %2168 = vmatprep.subr.mxu0 0.0
    %2169 = vmatpush1.msra.mxu0 0.0
    %2170 = vmatprep.subr.mxu0 0.0
    %2171 = vmatpush1.msra.mxu0 0.0
    %2172 = vmatprep.subr.mxu0 0.0
    %2173 = vmatpush1.msra.mxu0 0.0
    %2174 = vmatprep.subr.mxu0 0.0
    %2175 = vmatpush1.msra.mxu0 0.0
    %2176 = vmatprep.subr.mxu0 0.0
    %2177 = vmatpush1.msra.mxu0 0.0
    %2178 = vmatprep.subr.mxu0 0.0
    %2179 = vmatpush1.msra.mxu0 0.0
    %2180 = vmatprep.subr.mxu0 0.0
    %2181 = vmatpush1.msra.mxu0 0.0
    %2182 = vmatprep.subr.mxu0 0.0
    %2183 = vmatpush1.msra.mxu0 0.0
    %2184 = vmatprep.mubr.f32.mxu0 0.0
    %2185 = vmatmul.mubr.f32.gmra.mrb[0].mxu0 %v2118
    %v2186 = vpop.f32.mrb[0].mxu0
    %v2187 = vadd.f32 0.0, %v2186
    %v2188 = vpop.f32.mrb[0].mxu0
    %2189 = vdwg.mxu0
    %v2191 = vrot.slane %v2187, 4
    %v2193 = vadd.f32 %v1897, %v2191
    %v2194 = vsub.f32 0.0, %v2193
    %v2195 = vmul.f32 %v2194, 1.442695
    %v2196 = vpow.pop %v2195
    %v2197 = vadd.f32 %v2196, 1.0
    %v2198 = vrcp.pop %v2197
    %v2199 = vmul.f32 1.0, %v2198
    %v2200 = vtanh.pop %v2193
    %v2202 = vrot.slane %v2107, 6
    %v2204 = vmul.f32 %v2199, %v2202
    %2206 = vrot.lane.b32.xlu0 %v2200, 64
    %v2207 = vpop.permute.xlu0 %2206
    %v2209 = vmul.f32 %v2199, %v2207
    %2211 = vrot.lane.b32.xlu0 %v2209, 32
    %v2212 = vpop.permute.xlu0 %2211
    %v2214 = vadd.f32 %v2204, %v2212
    %v2215 = vtanh.pop %v2214
    %2217 = vrot.lane.b32.xlu0 %v2215, 64
    %v2218 = vpop.permute.xlu0 %2217
    %v2220 = vmul.f32 %v2199, %v2218
    %v2222 = vrot.slane %v2220, 4
    %2223 = vrot.lane.b32.xlu0 %v2222, 32
    %v2224 = vpop.permute.xlu0 %2223
    %v2225 = vsel %vm135, %v2224, 0
    %2227 = vmatprep.subr.mxu0 0.0
    %2228 = vmatpush1.msra.mxu0 %v1802
    %2229 = vmatprep.subr.mxu0 0.0
    %2230 = vmatpush1.msra.mxu0 %v1803
    %2231 = vmatprep.subr.mxu0 0.0
    %2232 = vmatpush1.msra.mxu0 %v1804
    %2233 = vmatprep.subr.mxu0 0.0
    %2234 = vmatpush1.msra.mxu0 %v1805
    %2235 = vmatprep.subr.mxu0 0.0
    %2236 = vmatpush1.msra.mxu0 0.0
    %2237 = vmatprep.subr.mxu0 0.0
    %2238 = vmatpush1.msra.mxu0 0.0
    %2239 = vmatprep.subr.mxu0 0.0
    %2240 = vmatpush1.msra.mxu0 0.0
    %2241 = vmatprep.subr.mxu0 0.0
    %2242 = vmatpush1.msra.mxu0 0.0
    %2243 = vmatprep.subr.mxu0 0.0
    %2244 = vmatpush1.msra.mxu0 0.0
    %2245 = vmatprep.subr.mxu0 0.0
    %2246 = vmatpush1.msra.mxu0 0.0
    %2247 = vmatprep.subr.mxu0 0.0
    %2248 = vmatpush1.msra.mxu0 0.0
    %2249 = vmatprep.subr.mxu0 0.0
    %2250 = vmatpush1.msra.mxu0 0.0
    %2251 = vmatprep.subr.mxu0 0.0
    %2252 = vmatpush1.msra.mxu0 0.0
    %2253 = vmatprep.subr.mxu0 0.0
    %2254 = vmatpush1.msra.mxu0 0.0
    %2255 = vmatprep.subr.mxu0 0.0
    %2256 = vmatpush1.msra.mxu0 0.0
    %2257 = vmatprep.subr.mxu0 0.0
    %2258 = vmatpush1.msra.mxu0 0.0
    %2259 = vmatprep.subr.mxu0 0.0
    %2260 = vmatpush1.msra.mxu0 0.0
    %2261 = vmatprep.subr.mxu0 0.0
    %2262 = vmatpush1.msra.mxu0 0.0
    %2263 = vmatprep.subr.mxu0 0.0
    %2264 = vmatpush1.msra.mxu0 0.0
    %2265 = vmatprep.subr.mxu0 0.0
    %2266 = vmatpush1.msra.mxu0 0.0
    %2267 = vmatprep.subr.mxu0 0.0
    %2268 = vmatpush1.msra.mxu0 0.0
    %2269 = vmatprep.subr.mxu0 0.0
    %2270 = vmatpush1.msra.mxu0 0.0
    %2271 = vmatprep.subr.mxu0 0.0
    %2272 = vmatpush1.msra.mxu0 0.0
    %2273 = vmatprep.subr.mxu0 0.0
    %2274 = vmatpush1.msra.mxu0 0.0
    %2275 = vmatprep.subr.mxu0 0.0
    %2276 = vmatpush1.msra.mxu0 0.0
    %2277 = vmatprep.subr.mxu0 0.0
    %2278 = vmatpush1.msra.mxu0 0.0
    %2279 = vmatprep.subr.mxu0 0.0
    %2280 = vmatpush1.msra.mxu0 0.0
    %2281 = vmatprep.subr.mxu0 0.0
    %2282 = vmatpush1.msra.mxu0 0.0
    %2283 = vmatprep.subr.mxu0 0.0
    %2284 = vmatpush1.msra.mxu0 0.0
    %2285 = vmatprep.subr.mxu0 0.0
    %2286 = vmatpush1.msra.mxu0 0.0
    %2287 = vmatprep.subr.mxu0 0.0
    %2288 = vmatpush1.msra.mxu0 0.0
    %2289 = vmatprep.subr.mxu0 0.0
    %2290 = vmatpush1.msra.mxu0 0.0
    %2291 = vmatprep.mubr.f32.mxu0 0.0
    %2292 = vmatmul.mubr.f32.gmra.mrb[0].mxu0 %v2225
    %v2293 = vpop.f32.mrb[0].mxu0
    %v2294 = vadd.f32 0.0, %v2293
    %v2295 = vpop.f32.mrb[0].mxu0
    %2296 = vdwg.mxu0
    %v2298 = vrot.slane %v2294, 2
    %v2300 = vadd.f32 %v1900, %v2298
    %v2301 = vsub.f32 0.0, %v2300
    %v2302 = vmul.f32 %v2301, 1.442695
    %v2303 = vpow.pop %v2302
    %v2304 = vadd.f32 %v2303, 1.0
    %v2305 = vrcp.pop %v2304
    %v2306 = vmul.f32 1.0, %v2305
    %v2307 = vtanh.pop %v2300
    %v2309 = vrot.slane %v2214, 6
    %v2311 = vmul.f32 %v2306, %v2309
    %2313 = vrot.lane.b32.xlu0 %v2307, 64
    %v2314 = vpop.permute.xlu0 %2313
    %v2316 = vmul.f32 %v2306, %v2314
    %2318 = vrot.lane.b32.xlu0 %v2316, 32
    %v2319 = vpop.permute.xlu0 %2318
    %v2321 = vadd.f32 %v2311, %v2319
    %v2322 = vtanh.pop %v2321
    %2324 = vrot.lane.b32.xlu0 %v2322, 64
    %v2325 = vpop.permute.xlu0 %2324
    %v2327 = vmul.f32 %v2306, %v2325
    %v2329 = vrot.slane %v2327, 6
    %2330 = vrot.lane.b32.xlu0 %v2329, 32
    %v2331 = vpop.permute.xlu0 %2330
    %v2332 = vsel %vm135, %v2331, 0
    %2334 = vmatprep.subr.mxu0 0.0
    %2335 = vmatpush1.msra.mxu0 %v1802
    %2336 = vmatprep.subr.mxu0 0.0
    %2337 = vmatpush1.msra.mxu0 %v1803
    %2338 = vmatprep.subr.mxu0 0.0
    %2339 = vmatpush1.msra.mxu0 %v1804
    %2340 = vmatprep.subr.mxu0 0.0
    %2341 = vmatpush1.msra.mxu0 %v1805
    %2342 = vmatprep.subr.mxu0 0.0
    %2343 = vmatpush1.msra.mxu0 0.0
    %2344 = vmatprep.subr.mxu0 0.0
    %2345 = vmatpush1.msra.mxu0 0.0
    %2346 = vmatprep.subr.mxu0 0.0
    %2347 = vmatpush1.msra.mxu0 0.0
    %2348 = vmatprep.subr.mxu0 0.0
    %2349 = vmatpush1.msra.mxu0 0.0
    %2350 = vmatprep.subr.mxu0 0.0
    %2351 = vmatpush1.msra.mxu0 0.0
    %2352 = vmatprep.subr.mxu0 0.0
    %2353 = vmatpush1.msra.mxu0 0.0
    %2354 = vmatprep.subr.mxu0 0.0
    %2355 = vmatpush1.msra.mxu0 0.0
    %2356 = vmatprep.subr.mxu0 0.0
    %2357 = vmatpush1.msra.mxu0 0.0
    %2358 = vmatprep.subr.mxu0 0.0
    %2359 = vmatpush1.msra.mxu0 0.0
    %2360 = vmatprep.subr.mxu0 0.0
    %2361 = vmatpush1.msra.mxu0 0.0
    %2362 = vmatprep.subr.mxu0 0.0
    %2363 = vmatpush1.msra.mxu0 0.0
    %2364 = vmatprep.subr.mxu0 0.0
    %2365 = vmatpush1.msra.mxu0 0.0
    %2366 = vmatprep.subr.mxu0 0.0
    %2367 = vmatpush1.msra.mxu0 0.0
    %2368 = vmatprep.subr.mxu0 0.0
    %2369 = vmatpush1.msra.mxu0 0.0
    %2370 = vmatprep.subr.mxu0 0.0
    %2371 = vmatpush1.msra.mxu0 0.0
    %2372 = vmatprep.subr.mxu0 0.0
    %2373 = vmatpush1.msra.mxu0 0.0
    %2374 = vmatprep.subr.mxu0 0.0
    %2375 = vmatpush1.msra.mxu0 0.0
    %2376 = vmatprep.subr.mxu0 0.0
    %2377 = vmatpush1.msra.mxu0 0.0
    %2378 = vmatprep.subr.mxu0 0.0
    %2379 = vmatpush1.msra.mxu0 0.0
    %2380 = vmatprep.subr.mxu0 0.0
    %2381 = vmatpush1.msra.mxu0 0.0
    %2382 = vmatprep.subr.mxu0 0.0
    %2383 = vmatpush1.msra.mxu0 0.0
    %2384 = vmatprep.subr.mxu0 0.0
    %2385 = vmatpush1.msra.mxu0 0.0
    %2386 = vmatprep.subr.mxu0 0.0
    %2387 = vmatpush1.msra.mxu0 0.0
    %2388 = vmatprep.subr.mxu0 0.0
    %2389 = vmatpush1.msra.mxu0 0.0
    %2390 = vmatprep.subr.mxu0 0.0
    %2391 = vmatpush1.msra.mxu0 0.0
    %2392 = vmatprep.subr.mxu0 0.0
    %2393 = vmatpush1.msra.mxu0 0.0
    %2394 = vmatprep.subr.mxu0 0.0
    %2395 = vmatpush1.msra.mxu0 0.0
    %2396 = vmatprep.subr.mxu0 0.0
    %2397 = vmatpush1.msra.mxu0 0.0
    %2398 = vmatprep.mubr.f32.mxu0 0.0
    %2399 = vmatmul.mubr.f32.gmra.mrb[0].mxu0 %v2332
    %v2400 = vpop.f32.mrb[0].mxu0
    %v2401 = vadd.f32 0.0, %v2400
    %v2402 = vpop.f32.mrb[0].mxu0
    %2403 = vdwg.mxu0
    %v2404 = vadd.f32 %v1906, %v2401
    %v2405 = vsub.f32 0.0, %v2404
    %v2406 = vmul.f32 %v2405, 1.442695
    %v2407 = vpow.pop %v2406
    %v2408 = vadd.f32 %v2407, 1.0
    %v2409 = vrcp.pop %v2408
    %v2410 = vmul.f32 1.0, %v2409
    %v2411 = vtanh.pop %v2404
    %v2413 = vrot.slane %v2321, 6
    %v2415 = vmul.f32 %v2410, %v2413
    %2417 = vrot.lane.b32.xlu0 %v2411, 64
    %v2418 = vpop.permute.xlu0 %2417
    %v2420 = vmul.f32 %v2410, %v2418
    %2422 = vrot.lane.b32.xlu0 %v2420, 32
    %v2423 = vpop.permute.xlu0 %2422
    %v2425 = vadd.f32 %v2415, %v2423
    %v2426 = vtanh.pop %v2425
    %2428 = vrot.lane.b32.xlu0 %v2426, 64
    %v2429 = vpop.permute.xlu0 %2428
    %v2431 = vmul.f32 %v2410, %v2429
    %2433 = vrot.lane.b32.xlu0 %v2431, 32
    %v2434 = vpop.permute.xlu0 %2433
    %v2435 = vsel %vm135, %v2434, 0
    %2437 = vmatprep.subr.mxu0 0.0
    %2438 = vmatpush1.msra.mxu0 %v1802
    %2439 = vmatprep.subr.mxu0 0.0
    %2440 = vmatpush1.msra.mxu0 %v1803
    %2441 = vmatprep.subr.mxu0 0.0
    %2442 = vmatpush1.msra.mxu0 %v1804
    %2443 = vmatprep.subr.mxu0 0.0
    %2444 = vmatpush1.msra.mxu0 %v1805
    %2445 = vmatprep.subr.mxu0 0.0
    %2446 = vmatpush1.msra.mxu0 0.0
    %2447 = vmatprep.subr.mxu0 0.0
    %2448 = vmatpush1.msra.mxu0 0.0
    %2449 = vmatprep.subr.mxu0 0.0
    %2450 = vmatpush1.msra.mxu0 0.0
    %2451 = vmatprep.subr.mxu0 0.0
    %2452 = vmatpush1.msra.mxu0 0.0
    %2453 = vmatprep.subr.mxu0 0.0
    %2454 = vmatpush1.msra.mxu0 0.0
    %2455 = vmatprep.subr.mxu0 0.0
    %2456 = vmatpush1.msra.mxu0 0.0
    %2457 = vmatprep.subr.mxu0 0.0
    %2458 = vmatpush1.msra.mxu0 0.0
    %2459 = vmatprep.subr.mxu0 0.0
    %2460 = vmatpush1.msra.mxu0 0.0
    %2461 = vmatprep.subr.mxu0 0.0
    %2462 = vmatpush1.msra.mxu0 0.0
    %2463 = vmatprep.subr.mxu0 0.0
    %2464 = vmatpush1.msra.mxu0 0.0
    %2465 = vmatprep.subr.mxu0 0.0
    %2466 = vmatpush1.msra.mxu0 0.0
    %2467 = vmatprep.subr.mxu0 0.0
    %2468 = vmatpush1.msra.mxu0 0.0
    %2469 = vmatprep.subr.mxu0 0.0
    %2470 = vmatpush1.msra.mxu0 0.0
    %2471 = vmatprep.subr.mxu0 0.0
    %2472 = vmatpush1.msra.mxu0 0.0
    %2473 = vmatprep.subr.mxu0 0.0
    %2474 = vmatpush1.msra.mxu0 0.0
    %2475 = vmatprep.subr.mxu0 0.0
    %2476 = vmatpush1.msra.mxu0 0.0
    %2477 = vmatprep.subr.mxu0 0.0
    %2478 = vmatpush1.msra.mxu0 0.0
    %2479 = vmatprep.subr.mxu0 0.0
    %2480 = vmatpush1.msra.mxu0 0.0
    %2481 = vmatprep.subr.mxu0 0.0
    %2482 = vmatpush1.msra.mxu0 0.0
    %2483 = vmatprep.subr.mxu0 0.0
    %2484 = vmatpush1.msra.mxu0 0.0
    %2485 = vmatprep.subr.mxu0 0.0
    %2486 = vmatpush1.msra.mxu0 0.0
    %2487 = vmatprep.subr.mxu0 0.0
    %2488 = vmatpush1.msra.mxu0 0.0
    %2489 = vmatprep.subr.mxu0 0.0
    %2490 = vmatpush1.msra.mxu0 0.0
    %2491 = vmatprep.subr.mxu0 0.0
    %2492 = vmatpush1.msra.mxu0 0.0
    %2493 = vmatprep.subr.mxu0 0.0
    %2494 = vmatpush1.msra.mxu0 0.0
    %2495 = vmatprep.subr.mxu0 0.0
    %2496 = vmatpush1.msra.mxu0 0.0
    %2497 = vmatprep.subr.mxu0 0.0
    %2498 = vmatpush1.msra.mxu0 0.0
    %2499 = vmatprep.subr.mxu0 0.0
    %2500 = vmatpush1.msra.mxu0 0.0
    %2501 = vmatprep.mubr.f32.mxu0 0.0
    %2502 = vmatmul.mubr.f32.gmra.mrb[0].mxu0 %v2435
    %v2503 = vpop.f32.mrb[0].mxu0
    %v2504 = vadd.f32 0.0, %v2503
    %v2505 = vpop.f32.mrb[0].mxu0
    %2506 = vdwg.mxu0
    %v2508 = vrot.slane %v2504, 6
    %v2510 = vadd.f32 %v1909, %v2508
    %v2511 = vsub.f32 0.0, %v2510
    %v2512 = vmul.f32 %v2511, 1.442695
    %v2513 = vpow.pop %v2512
    %v2514 = vadd.f32 %v2513, 1.0
    %v2515 = vrcp.pop %v2514
    %v2516 = vmul.f32 1.0, %v2515
    %v2517 = vtanh.pop %v2510
    %v2519 = vrot.slane %v2425, 6
    %v2521 = vmul.f32 %v2516, %v2519
    %2523 = vrot.lane.b32.xlu0 %v2517, 64
    %v2524 = vpop.permute.xlu0 %2523
    %v2526 = vmul.f32 %v2516, %v2524
    %2528 = vrot.lane.b32.xlu0 %v2526, 32
    %v2529 = vpop.permute.xlu0 %2528
    %v2531 = vadd.f32 %v2521, %v2529
    %v2532 = vtanh.pop %v2531
    %2534 = vrot.lane.b32.xlu0 %v2532, 64
    %v2535 = vpop.permute.xlu0 %2534
    %v2537 = vmul.f32 %v2516, %v2535
    %v2539 = vrot.slane %v2537, 2
    %2540 = vrot.lane.b32.xlu0 %v2539, 32
    %v2541 = vpop.permute.xlu0 %2540
    %v2542 = vsel %vm135, %v2541, 0
    %2544 = vmatprep.subr.mxu0 0.0
    %2545 = vmatpush1.msra.mxu0 %v1802
    %2546 = vmatprep.subr.mxu0 0.0
    %2547 = vmatpush1.msra.mxu0 %v1803
    %2548 = vmatprep.subr.mxu0 0.0
    %2549 = vmatpush1.msra.mxu0 %v1804
    %2550 = vmatprep.subr.mxu0 0.0
    %2551 = vmatpush1.msra.mxu0 %v1805
    %2552 = vmatprep.subr.mxu0 0.0
    %2553 = vmatpush1.msra.mxu0 0.0
    %2554 = vmatprep.subr.mxu0 0.0
    %2555 = vmatpush1.msra.mxu0 0.0
    %2556 = vmatprep.subr.mxu0 0.0
    %2557 = vmatpush1.msra.mxu0 0.0
    %2558 = vmatprep.subr.mxu0 0.0
    %2559 = vmatpush1.msra.mxu0 0.0
    %2560 = vmatprep.subr.mxu0 0.0
    %2561 = vmatpush1.msra.mxu0 0.0
    %2562 = vmatprep.subr.mxu0 0.0
    %2563 = vmatpush1.msra.mxu0 0.0
    %2564 = vmatprep.subr.mxu0 0.0
    %2565 = vmatpush1.msra.mxu0 0.0
    %2566 = vmatprep.subr.mxu0 0.0
    %2567 = vmatpush1.msra.mxu0 0.0
    %2568 = vmatprep.subr.mxu0 0.0
    %2569 = vmatpush1.msra.mxu0 0.0
    %2570 = vmatprep.subr.mxu0 0.0
    %2571 = vmatpush1.msra.mxu0 0.0
    %2572 = vmatprep.subr.mxu0 0.0
    %2573 = vmatpush1.msra.mxu0 0.0
    %2574 = vmatprep.subr.mxu0 0.0
    %2575 = vmatpush1.msra.mxu0 0.0
    %2576 = vmatprep.subr.mxu0 0.0
    %2577 = vmatpush1.msra.mxu0 0.0
    %2578 = vmatprep.subr.mxu0 0.0
    %2579 = vmatpush1.msra.mxu0 0.0
    %2580 = vmatprep.subr.mxu0 0.0
    %2581 = vmatpush1.msra.mxu0 0.0
    %2582 = vmatprep.subr.mxu0 0.0
    %2583 = vmatpush1.msra.mxu0 0.0
    %2584 = vmatprep.subr.mxu0 0.0
    %2585 = vmatpush1.msra.mxu0 0.0
    %2586 = vmatprep.subr.mxu0 0.0
    %2587 = vmatpush1.msra.mxu0 0.0
    %2588 = vmatprep.subr.mxu0 0.0
    %2589 = vmatpush1.msra.mxu0 0.0
    %2590 = vmatprep.subr.mxu0 0.0
    %2591 = vmatpush1.msra.mxu0 0.0
    %2592 = vmatprep.subr.mxu0 0.0
    %2593 = vmatpush1.msra.mxu0 0.0
    %2594 = vmatprep.subr.mxu0 0.0
    %2595 = vmatpush1.msra.mxu0 0.0
    %2596 = vmatprep.subr.mxu0 0.0
    %2597 = vmatpush1.msra.mxu0 0.0
    %2598 = vmatprep.subr.mxu0 0.0
    %2599 = vmatpush1.msra.mxu0 0.0
    %2600 = vmatprep.subr.mxu0 0.0
    %2601 = vmatpush1.msra.mxu0 0.0
    %2602 = vmatprep.subr.mxu0 0.0
    %2603 = vmatpush1.msra.mxu0 0.0
    %2604 = vmatprep.subr.mxu0 0.0
    %2605 = vmatpush1.msra.mxu0 0.0
    %2606 = vmatprep.subr.mxu0 0.0
    %2607 = vmatpush1.msra.mxu0 0.0
    %2608 = vmatprep.mubr.f32.mxu0 0.0
    %2609 = vmatmul.mubr.f32.gmra.mrb[0].mxu0 %v2542
    %v2610 = vpop.f32.mrb[0].mxu0
    %v2611 = vadd.f32 0.0, %v2610
    %v2612 = vpop.f32.mrb[0].mxu0
    %2613 = vdwg.mxu0
    %v2615 = vrot.slane %v2611, 4
    %v2617 = vadd.f32 %v1906, %v2615
    %v2618 = vsub.f32 0.0, %v2617
    %v2619 = vmul.f32 %v2618, 1.442695
    %v2620 = vpow.pop %v2619
    %v2621 = vadd.f32 %v2620, 1.0
    %v2622 = vrcp.pop %v2621
    %v2623 = vmul.f32 1.0, %v2622
    %v2624 = vtanh.pop %v2617
    %v2626 = vrot.slane %v2531, 6
    %v2628 = vmul.f32 %v2623, %v2626
    %2630 = vrot.lane.b32.xlu0 %v2624, 64
    %v2631 = vpop.permute.xlu0 %2630
    %v2633 = vmul.f32 %v2623, %v2631
    %2635 = vrot.lane.b32.xlu0 %v2633, 32
    %v2636 = vpop.permute.xlu0 %2635
    %v2638 = vadd.f32 %v2628, %v2636
    %v2639 = vtanh.pop %v2638
    %2641 = vrot.lane.b32.xlu0 %v2639, 64
    %v2642 = vpop.permute.xlu0 %2641
    %v2644 = vmul.f32 %v2623, %v2642
    %v2646 = vrot.slane %v2644, 4
    %2647 = vrot.lane.b32.xlu0 %v2646, 32
    %v2648 = vpop.permute.xlu0 %2647
    %v2649 = vsel %vm135, %v2648, 0
    %2651 = vmatprep.subr.mxu0 0.0
    %2652 = vmatpush1.msra.mxu0 %v1802
    %2653 = vmatprep.subr.mxu0 0.0
    %2654 = vmatpush1.msra.mxu0 %v1803
    %2655 = vmatprep.subr.mxu0 0.0
    %2656 = vmatpush1.msra.mxu0 %v1804
    %2657 = vmatprep.subr.mxu0 0.0
    %2658 = vmatpush1.msra.mxu0 %v1805
    %2659 = vmatprep.subr.mxu0 0.0
    %2660 = vmatpush1.msra.mxu0 0.0
    %2661 = vmatprep.subr.mxu0 0.0
    %2662 = vmatpush1.msra.mxu0 0.0
    %2663 = vmatprep.subr.mxu0 0.0
    %2664 = vmatpush1.msra.mxu0 0.0
    %2665 = vmatprep.subr.mxu0 0.0
    %2666 = vmatpush1.msra.mxu0 0.0
    %2667 = vmatprep.subr.mxu0 0.0
    %2668 = vmatpush1.msra.mxu0 0.0
    %2669 = vmatprep.subr.mxu0 0.0
    %2670 = vmatpush1.msra.mxu0 0.0
    %2671 = vmatprep.subr.mxu0 0.0
    %2672 = vmatpush1.msra.mxu0 0.0
    %2673 = vmatprep.subr.mxu0 0.0
    %2674 = vmatpush1.msra.mxu0 0.0
    %2675 = vmatprep.subr.mxu0 0.0
    %2676 = vmatpush1.msra.mxu0 0.0
    %2677 = vmatprep.subr.mxu0 0.0
    %2678 = vmatpush1.msra.mxu0 0.0
    %2679 = vmatprep.subr.mxu0 0.0
    %2680 = vmatpush1.msra.mxu0 0.0
    %2681 = vmatprep.subr.mxu0 0.0
    %2682 = vmatpush1.msra.mxu0 0.0
    %2683 = vmatprep.subr.mxu0 0.0
    %2684 = vmatpush1.msra.mxu0 0.0
    %2685 = vmatprep.subr.mxu0 0.0
    %2686 = vmatpush1.msra.mxu0 0.0
    %2687 = vmatprep.subr.mxu0 0.0
    %2688 = vmatpush1.msra.mxu0 0.0
    %2689 = vmatprep.subr.mxu0 0.0
    %2690 = vmatpush1.msra.mxu0 0.0
    %2691 = vmatprep.subr.mxu0 0.0
    %2692 = vmatpush1.msra.mxu0 0.0
    %2693 = vmatprep.subr.mxu0 0.0
    %2694 = vmatpush1.msra.mxu0 0.0
    %2695 = vmatprep.subr.mxu0 0.0
    %2696 = vmatpush1.msra.mxu0 0.0
    %2697 = vmatprep.subr.mxu0 0.0
    %2698 = vmatpush1.msra.mxu0 0.0
    %2699 = vmatprep.subr.mxu0 0.0
    %2700 = vmatpush1.msra.mxu0 0.0
    %2701 = vmatprep.subr.mxu0 0.0
    %2702 = vmatpush1.msra.mxu0 0.0
    %2703 = vmatprep.subr.mxu0 0.0
    %2704 = vmatpush1.msra.mxu0 0.0
    %2705 = vmatprep.subr.mxu0 0.0
    %2706 = vmatpush1.msra.mxu0 0.0
    %2707 = vmatprep.subr.mxu0 0.0
    %2708 = vmatpush1.msra.mxu0 0.0
    %2709 = vmatprep.subr.mxu0 0.0
    %2710 = vmatpush1.msra.mxu0 0.0
    %2711 = vmatprep.subr.mxu0 0.0
    %2712 = vmatpush1.msra.mxu0 0.0
    %2713 = vmatprep.subr.mxu0 0.0
    %2714 = vmatpush1.msra.mxu0 0.0
    %2715 = vmatprep.mubr.f32.mxu0 0.0
    %2716 = vmatmul.mubr.f32.gmra.mrb[0].mxu0 %v2649
    %v2717 = vpop.f32.mrb[0].mxu0
    %v2718 = vadd.f32 0.0, %v2717
    %v2719 = vpop.f32.mrb[0].mxu0
    %2720 = vdwg.mxu0
    %v2722 = vrot.slane %v2718, 2
    %v2724 = vadd.f32 %v1909, %v2722
    %v2725 = vsub.f32 0.0, %v2724
    %v2726 = vmul.f32 %v2725, 1.442695
    %v2727 = vpow.pop %v2726
    %v2728 = vadd.f32 %v2727, 1.0
    %v2729 = vrcp.pop %v2728
    %v2730 = vmul.f32 1.0, %v2729
    %v2731 = vtanh.pop %v2724
    %v2733 = vrot.slane %v2638, 6
    %v2735 = vmul.f32 %v2730, %v2733
    %2737 = vrot.lane.b32.xlu0 %v2731, 64
    %v2738 = vpop.permute.xlu0 %2737
    %v2740 = vmul.f32 %v2730, %v2738
    %2742 = vrot.lane.b32.xlu0 %v2740, 32
    %v2743 = vpop.permute.xlu0 %2742
    %v2745 = vadd.f32 %v2735, %v2743
    %v2746 = vtanh.pop %v2745
    %2748 = vrot.lane.b32.xlu0 %v2746, 64
    %v2749 = vpop.permute.xlu0 %2748
    %v2751 = vmul.f32 %v2730, %v2749
    %2753 = vrot.lane.b32.xlu0 %v1796, 96
    %v2754 = vpop.permute.xlu0 %2753
    %v2756 = vmul.f32 %v2007, %v2754
    %2758 = vrot.lane.b32.xlu0 %v1797, 96
    %v2759 = vpop.permute.xlu0 %2758
    %v2761 = vmul.f32 %v2751, %v2759
    %v2763 = vrot.slane %v2761, 6
    %v2765 = vadd.f32 %v2756, %v2763
    %v2766 = vmul.f32 %v2113, %v2754
    %v2767 = vmul.f32 %v2644, %v2759
    %v2769 = vrot.slane %v2767, 2
    %v2771 = vadd.f32 %v2766, %v2769
    %v2772 = vmul.f32 %v2220, %v2754
    %v2773 = vmul.f32 %v2537, %v2759
    %v2775 = vrot.slane %v2773, 6
    %v2777 = vadd.f32 %v2772, %v2775
    %v2778 = vmul.f32 %v2327, %v2754
    %v2779 = vmul.f32 %v2431, %v2759
    %v2781 = vrot.slane %v2779, 2
    %v2783 = vadd.f32 %v2778, %v2781
    %v2784 = vmul.f32 %v2431, %v2754
    %v2785 = vmul.f32 %v2327, %v2759
    %v2787 = vrot.slane %v2785, 6
    %v2789 = vadd.f32 %v2784, %v2787
    %v2790 = vmul.f32 %v2537, %v2754
    %v2791 = vmul.f32 %v2220, %v2759
    %v2793 = vrot.slane %v2791, 2
    %v2795 = vadd.f32 %v2790, %v2793
    %v2796 = vmul.f32 %v2644, %v2754
    %v2797 = vmul.f32 %v2113, %v2759
    %v2799 = vrot.slane %v2797, 6
    %v2801 = vadd.f32 %v2796, %v2799
    %v2802 = vmul.f32 %v2751, %v2754
    %v2803 = vmul.f32 %v2007, %v2759
    %v2805 = vrot.slane %v2803, 2
    %v2807 = vadd.f32 %v2802, %v2805
    %v2808 = vsel %vm125, %v2765, %v2771
    %vm2809 = vcmask 1043456
    %v2810 = vsel %vm2809, %v2808, %v2777
    %v2811 = vsel %vm295, %v2810, %v2783
    %v2812 = vsel %vm125, %v2789, %v2795
    %v2813 = vsel %vm2809, %v2812, %v2801
    %v2814 = vsel %vm295, %v2813, %v2807
    %v2815 = vld [vmem:[#allocation2 + $0x2e0] sm:$0xff]
    %v2816 = vld [vmem:[#allocation2 + $0x2e8] sm:$0xff]
    %v2817 = vld [vmem:[#allocation2 + $0x2f0] sm:$0xff]
    %v2818 = vld [vmem:[#allocation2 + $0x2f8] sm:$0xff]
    %v2819 = vld [vmem:[#allocation2 + $0x300] sm:$0xff]
    %v2820 = vld [vmem:[#allocation2 + $0x308] sm:$0xff]
    %v2821 = vld [vmem:[#allocation2 + $0x310] sm:$0xff]
    %v2822 = vld [vmem:[#allocation2 + $0x318] sm:$0xff]
    %v2823 = vld [vmem:[#allocation2 + $0x320] sm:$0x1]
    %v2824 = vlaneseq
    %v2825 = vshrl.u32 %v2824, 7
    %v2826 = vsub.s32 0, %v2825
    %v2827 = vrot.slane %v2823, %v2826
    %2830 = vrot.lane.b32.xlu0 %v2811, 32
    %v2831 = vpop.permute.xlu0 %2830
    %2832 = vrot.lane.b32.xlu0 %v2814, 32
    %v2833 = vpop.permute.xlu0 %2832
    %v2834 = vsel %vm135, %v2831, 0
    %v2836 = vsel %vm135, %v2833, 0
    %2838 = vmatprep.subr.mxu0 0.0
    %2839 = vmatpush1.msra.mxu0 %v2815
    %2840 = vmatprep.subr.mxu0 0.0
    %2841 = vmatpush1.msra.mxu0 %v2816
    %2842 = vmatprep.subr.mxu0 0.0
    %2843 = vmatpush1.msra.mxu0 %v2817
    %2844 = vmatprep.subr.mxu0 0.0
    %2845 = vmatpush1.msra.mxu0 %v2818
    %2846 = vmatprep.subr.mxu0 0.0
    %2847 = vmatpush1.msra.mxu0 0.0
    %2848 = vmatprep.subr.mxu0 0.0
    %2849 = vmatpush1.msra.mxu0 0.0
    %2850 = vmatprep.subr.mxu0 0.0
    %2851 = vmatpush1.msra.mxu0 0.0
    %2852 = vmatprep.subr.mxu0 0.0
    %2853 = vmatpush1.msra.mxu0 0.0
    %2854 = vmatprep.subr.mxu0 0.0
    %2855 = vmatpush1.msra.mxu0 0.0
    %2856 = vmatprep.subr.mxu0 0.0
    %2857 = vmatpush1.msra.mxu0 0.0
    %2858 = vmatprep.subr.mxu0 0.0
    %2859 = vmatpush1.msra.mxu0 0.0
    %2860 = vmatprep.subr.mxu0 0.0
    %2861 = vmatpush1.msra.mxu0 0.0
    %2862 = vmatprep.subr.mxu0 0.0
    %2863 = vmatpush1.msra.mxu0 0.0
    %2864 = vmatprep.subr.mxu0 0.0
    %2865 = vmatpush1.msra.mxu0 0.0
    %2866 = vmatprep.subr.mxu0 0.0
    %2867 = vmatpush1.msra.mxu0 0.0
    %2868 = vmatprep.subr.mxu0 0.0
    %2869 = vmatpush1.msra.mxu0 0.0
    %2870 = vmatprep.subr.mxu0 0.0
    %2871 = vmatpush1.msra.mxu0 0.0
    %2872 = vmatprep.subr.mxu0 0.0
    %2873 = vmatpush1.msra.mxu0 0.0
    %2874 = vmatprep.subr.mxu0 0.0
    %2875 = vmatpush1.msra.mxu0 0.0
    %2876 = vmatprep.subr.mxu0 0.0
    %2877 = vmatpush1.msra.mxu0 0.0
    %2878 = vmatprep.subr.mxu0 0.0
    %2879 = vmatpush1.msra.mxu0 0.0
    %2880 = vmatprep.subr.mxu0 0.0
    %2881 = vmatpush1.msra.mxu0 0.0
    %2882 = vmatprep.subr.mxu0 0.0
    %2883 = vmatpush1.msra.mxu0 0.0
    %2884 = vmatprep.subr.mxu0 0.0
    %2885 = vmatpush1.msra.mxu0 0.0
    %2886 = vmatprep.subr.mxu0 0.0
    %2887 = vmatpush1.msra.mxu0 0.0
    %2888 = vmatprep.subr.mxu0 0.0
    %2889 = vmatpush1.msra.mxu0 0.0
    %2890 = vmatprep.subr.mxu0 0.0
    %2891 = vmatpush1.msra.mxu0 0.0
    %2892 = vmatprep.subr.mxu0 0.0
    %2893 = vmatpush1.msra.mxu0 0.0
    %2894 = vmatprep.subr.mxu0 0.0
    %2895 = vmatpush1.msra.mxu0 0.0
    %2896 = vmatprep.subr.mxu0 0.0
    %2897 = vmatpush1.msra.mxu0 0.0
    %2898 = vmatprep.subr.mxu0 0.0
    %2899 = vmatpush1.msra.mxu0 0.0
    %2900 = vmatprep.subr.mxu0 0.0
    %2901 = vmatpush1.msra.mxu0 0.0
    %2902 = vmatprep.mubr.f32.mxu0 0.0
    %2903 = vmatmul.mubr.f32.gmra.mrb[0].mxu0 %v2834
    %v2904 = vpop.f32.mrb[0].mxu0
    %v2905 = vadd.f32 %v2827, %v2904
    %v2906 = vpop.f32.mrb[0].mxu0
    %2907 = vmatprep.mubr.f32.mxu0 0.0
    %2908 = vmatmul.mubr.f32.gmra.mrb[0].mxu0 %v2836
    %v2909 = vpop.f32.mrb[0].mxu0
    %v2910 = vadd.f32 %v2827, %v2909
    %v2911 = vpop.f32.mrb[0].mxu0
    %2912 = vdwg.mxu0
    %v2913 = vmul.f32 %v2905, %v1792
    %v2914 = vmul.f32 %v2910, %v1793
    %v2916 = vrot.slane %v2914, 6
    %v2918 = vadd.f32 %v2913, %v2916
    %v2919 = vrot.slane %v2914, 2
    %v2921 = vadd.f32 %v2913, %v2919
    %v2922 = vmul.f32 %v2910, %v1792
    %v2923 = vmul.f32 %v2905, %v1793
    %v2925 = vrot.slane %v2923, 6
    %v2927 = vadd.f32 %v2922, %v2925
    %v2928 = vrot.slane %v2923, 2
    %v2930 = vadd.f32 %v2922, %v2928
    %2931 = vmatprep.subr.mxu0 0.0
    %2932 = vmatpush1.msra.mxu0 %v2819
    %2933 = vmatprep.subr.mxu0 0.0
    %2934 = vmatpush1.msra.mxu0 %v2820
    %2935 = vmatprep.subr.mxu0 0.0
    %2936 = vmatpush1.msra.mxu0 %v2821
    %2937 = vmatprep.subr.mxu0 0.0
    %2938 = vmatpush1.msra.mxu0 %v2822
    %2939 = vmatprep.subr.mxu0 0.0
    %2940 = vmatpush1.msra.mxu0 0.0
    %2941 = vmatprep.subr.mxu0 0.0
    %2942 = vmatpush1.msra.mxu0 0.0
    %2943 = vmatprep.subr.mxu0 0.0
    %2944 = vmatpush1.msra.mxu0 0.0
    %2945 = vmatprep.subr.mxu0 0.0
    %2946 = vmatpush1.msra.mxu0 0.0
    %2947 = vmatprep.subr.mxu0 0.0
    %2948 = vmatpush1.msra.mxu0 0.0
    %2949 = vmatprep.subr.mxu0 0.0
    %2950 = vmatpush1.msra.mxu0 0.0
    %2951 = vmatprep.subr.mxu0 0.0
    %2952 = vmatpush1.msra.mxu0 0.0
    %2953 = vmatprep.subr.mxu0 0.0
    %2954 = vmatpush1.msra.mxu0 0.0
    %2955 = vmatprep.subr.mxu0 0.0
    %2956 = vmatpush1.msra.mxu0 0.0
    %2957 = vmatprep.subr.mxu0 0.0
    %2958 = vmatpush1.msra.mxu0 0.0
    %2959 = vmatprep.subr.mxu0 0.0
    %2960 = vmatpush1.msra.mxu0 0.0
    %2961 = vmatprep.subr.mxu0 0.0
    %2962 = vmatpush1.msra.mxu0 0.0
    %2963 = vmatprep.subr.mxu0 0.0
    %2964 = vmatpush1.msra.mxu0 0.0
    %2965 = vmatprep.subr.mxu0 0.0
    %2966 = vmatpush1.msra.mxu0 0.0
    %2967 = vmatprep.subr.mxu0 0.0
    %2968 = vmatpush1.msra.mxu0 0.0
    %2969 = vmatprep.subr.mxu0 0.0
    %2970 = vmatpush1.msra.mxu0 0.0
    %2971 = vmatprep.subr.mxu0 0.0
    %2972 = vmatpush1.msra.mxu0 0.0
    %2973 = vmatprep.subr.mxu0 0.0
    %2974 = vmatpush1.msra.mxu0 0.0
    %2975 = vmatprep.subr.mxu0 0.0
    %2976 = vmatpush1.msra.mxu0 0.0
    %2977 = vmatprep.subr.mxu0 0.0
    %2978 = vmatpush1.msra.mxu0 0.0
    %2979 = vmatprep.subr.mxu0 0.0
    %2980 = vmatpush1.msra.mxu0 0.0
    %2981 = vmatprep.subr.mxu0 0.0
    %2982 = vmatpush1.msra.mxu0 0.0
    %2983 = vmatprep.subr.mxu0 0.0
    %2984 = vmatpush1.msra.mxu0 0.0
    %2985 = vmatprep.subr.mxu0 0.0
    %2986 = vmatpush1.msra.mxu0 0.0
    %2987 = vmatprep.subr.mxu0 0.0
    %2988 = vmatpush1.msra.mxu0 0.0
    %2989 = vmatprep.subr.mxu0 0.0
    %2990 = vmatpush1.msra.mxu0 0.0
    %2991 = vmatprep.subr.mxu0 0.0
    %2992 = vmatpush1.msra.mxu0 0.0
    %2993 = vmatprep.subr.mxu0 0.0
    %2994 = vmatpush1.msra.mxu0 0.0
    %2995 = vmatprep.mubr.f32.mxu0 0.0
    %2996 = vmatmul.mubr.f32.gmra.mrb[0].mxu0 %v1911
    %v2997 = vpop.f32.mrb[0].mxu0
    %v2998 = vadd.f32 0.0, %v2997
    %v2999 = vpop.f32.mrb[0].mxu0
    %3000 = vdwg.mxu0
    %v3001 = vadd.f32 %v2918, %v2998
    %v3002 = vsub.f32 0.0, %v3001
    %v3003 = vmul.f32 %v3002, 1.442695
    %v3004 = vpow.pop %v3003
    %v3005 = vadd.f32 %v3004, 1.0
    %v3006 = vrcp.pop %v3005
    %v3007 = vmul.f32 1.0, %v3006
    %v3008 = vtanh.pop %v3001
    %v3009 = vmul.f32 %v3007, 0.0
    %3011 = vrot.lane.b32.xlu0 %v3008, 64
    %v3012 = vpop.permute.xlu0 %3011
    %v3014 = vmul.f32 %v3007, %v3012
    %3016 = vrot.lane.b32.xlu0 %v3014, 32
    %v3017 = vpop.permute.xlu0 %3016
    %v3019 = vadd.f32 %v3009, %v3017
    %v3020 = vtanh.pop %v3019
    %3022 = vrot.lane.b32.xlu0 %v3020, 64
    %v3023 = vpop.permute.xlu0 %3022
    %v3025 = vmul.f32 %v3007, %v3023
    %3027 = vrot.lane.b32.xlu0 %v3025, 32
    %v3028 = vpop.permute.xlu0 %3027
    %v3029 = vsel %vm135, %v3028, 0
    %3031 = vmatprep.subr.mxu0 0.0
    %3032 = vmatpush1.msra.mxu0 %v2819
    %3033 = vmatprep.subr.mxu0 0.0
    %3034 = vmatpush1.msra.mxu0 %v2820
    %3035 = vmatprep.subr.mxu0 0.0
    %3036 = vmatpush1.msra.mxu0 %v2821
    %3037 = vmatprep.subr.mxu0 0.0
    %3038 = vmatpush1.msra.mxu0 %v2822
    %3039 = vmatprep.subr.mxu0 0.0
    %3040 = vmatpush1.msra.mxu0 0.0
    %3041 = vmatprep.subr.mxu0 0.0
    %3042 = vmatpush1.msra.mxu0 0.0
    %3043 = vmatprep.subr.mxu0 0.0
    %3044 = vmatpush1.msra.mxu0 0.0
    %3045 = vmatprep.subr.mxu0 0.0
    %3046 = vmatpush1.msra.mxu0 0.0
    %3047 = vmatprep.subr.mxu0 0.0
    %3048 = vmatpush1.msra.mxu0 0.0
    %3049 = vmatprep.subr.mxu0 0.0
    %3050 = vmatpush1.msra.mxu0 0.0
    %3051 = vmatprep.subr.mxu0 0.0
    %3052 = vmatpush1.msra.mxu0 0.0
    %3053 = vmatprep.subr.mxu0 0.0
    %3054 = vmatpush1.msra.mxu0 0.0
    %3055 = vmatprep.subr.mxu0 0.0
    %3056 = vmatpush1.msra.mxu0 0.0
    %3057 = vmatprep.subr.mxu0 0.0
    %3058 = vmatpush1.msra.mxu0 0.0
    %3059 = vmatprep.subr.mxu0 0.0
    %3060 = vmatpush1.msra.mxu0 0.0
    %3061 = vmatprep.subr.mxu0 0.0
    %3062 = vmatpush1.msra.mxu0 0.0
    %3063 = vmatprep.subr.mxu0 0.0
    %3064 = vmatpush1.msra.mxu0 0.0
    %3065 = vmatprep.subr.mxu0 0.0
    %3066 = vmatpush1.msra.mxu0 0.0
    %3067 = vmatprep.subr.mxu0 0.0
    %3068 = vmatpush1.msra.mxu0 0.0
    %3069 = vmatprep.subr.mxu0 0.0
    %3070 = vmatpush1.msra.mxu0 0.0
    %3071 = vmatprep.subr.mxu0 0.0
    %3072 = vmatpush1.msra.mxu0 0.0
    %3073 = vmatprep.subr.mxu0 0.0
    %3074 = vmatpush1.msra.mxu0 0.0
    %3075 = vmatprep.subr.mxu0 0.0
    %3076 = vmatpush1.msra.mxu0 0.0
    %3077 = vmatprep.subr.mxu0 0.0
    %3078 = vmatpush1.msra.mxu0 0.0
    %3079 = vmatprep.subr.mxu0 0.0
    %3080 = vmatpush1.msra.mxu0 0.0
    %3081 = vmatprep.subr.mxu0 0.0
    %3082 = vmatpush1.msra.mxu0 0.0
    %3083 = vmatprep.subr.mxu0 0.0
    %3084 = vmatpush1.msra.mxu0 0.0
    %3085 = vmatprep.subr.mxu0 0.0
    %3086 = vmatpush1.msra.mxu0 0.0
    %3087 = vmatprep.subr.mxu0 0.0
    %3088 = vmatpush1.msra.mxu0 0.0
    %3089 = vmatprep.subr.mxu0 0.0
    %3090 = vmatpush1.msra.mxu0 0.0
    %3091 = vmatprep.subr.mxu0 0.0
    %3092 = vmatpush1.msra.mxu0 0.0
    %3093 = vmatprep.subr.mxu0 0.0
    %3094 = vmatpush1.msra.mxu0 0.0
    %3095 = vmatprep.mubr.f32.mxu0 0.0
    %3096 = vmatmul.mubr.f32.gmra.mrb[0].mxu0 %v3029
    %v3097 = vpop.f32.mrb[0].mxu0
    %v3098 = vadd.f32 0.0, %v3097
    %v3099 = vpop.f32.mrb[0].mxu0
    %3100 = vdwg.mxu0
    %v3102 = vrot.slane %v3098, 6
    %v3104 = vadd.f32 %v2921, %v3102
    %v3105 = vsub.f32 0.0, %v3104
    %v3106 = vmul.f32 %v3105, 1.442695
    %v3107 = vpow.pop %v3106
    %v3108 = vadd.f32 %v3107, 1.0
    %v3109 = vrcp.pop %v3108
    %v3110 = vmul.f32 1.0, %v3109
    %v3111 = vtanh.pop %v3104
    %v3113 = vrot.slane %v3019, 6
    %v3115 = vmul.f32 %v3110, %v3113
    %3117 = vrot.lane.b32.xlu0 %v3111, 64
    %v3118 = vpop.permute.xlu0 %3117
    %v3120 = vmul.f32 %v3110, %v3118
    %3122 = vrot.lane.b32.xlu0 %v3120, 32
    %v3123 = vpop.permute.xlu0 %3122
    %v3125 = vadd.f32 %v3115, %v3123
    %v3126 = vtanh.pop %v3125
    %3128 = vrot.lane.b32.xlu0 %v3126, 64
    %v3129 = vpop.permute.xlu0 %3128
    %v3131 = vmul.f32 %v3110, %v3129
    %v3133 = vrot.slane %v3131, 2
    %3134 = vrot.lane.b32.xlu0 %v3133, 32
    %v3135 = vpop.permute.xlu0 %3134
    %v3136 = vsel %vm135, %v3135, 0
    %3138 = vmatprep.subr.mxu0 0.0
    %3139 = vmatpush1.msra.mxu0 %v2819
    %3140 = vmatprep.subr.mxu0 0.0
    %3141 = vmatpush1.msra.mxu0 %v2820
    %3142 = vmatprep.subr.mxu0 0.0
    %3143 = vmatpush1.msra.mxu0 %v2821
    %3144 = vmatprep.subr.mxu0 0.0
    %3145 = vmatpush1.msra.mxu0 %v2822
    %3146 = vmatprep.subr.mxu0 0.0
    %3147 = vmatpush1.msra.mxu0 0.0
    %3148 = vmatprep.subr.mxu0 0.0
    %3149 = vmatpush1.msra.mxu0 0.0
    %3150 = vmatprep.subr.mxu0 0.0
    %3151 = vmatpush1.msra.mxu0 0.0
    %3152 = vmatprep.subr.mxu0 0.0
    %3153 = vmatpush1.msra.mxu0 0.0
    %3154 = vmatprep.subr.mxu0 0.0
    %3155 = vmatpush1.msra.mxu0 0.0
    %3156 = vmatprep.subr.mxu0 0.0
    %3157 = vmatpush1.msra.mxu0 0.0
    %3158 = vmatprep.subr.mxu0 0.0
    %3159 = vmatpush1.msra.mxu0 0.0
    %3160 = vmatprep.subr.mxu0 0.0
    %3161 = vmatpush1.msra.mxu0 0.0
    %3162 = vmatprep.subr.mxu0 0.0
    %3163 = vmatpush1.msra.mxu0 0.0
    %3164 = vmatprep.subr.mxu0 0.0
    %3165 = vmatpush1.msra.mxu0 0.0
    %3166 = vmatprep.subr.mxu0 0.0
    %3167 = vmatpush1.msra.mxu0 0.0
    %3168 = vmatprep.subr.mxu0 0.0
    %3169 = vmatpush1.msra.mxu0 0.0
    %3170 = vmatprep.subr.mxu0 0.0
    %3171 = vmatpush1.msra.mxu0 0.0
    %3172 = vmatprep.subr.mxu0 0.0
    %3173 = vmatpush1.msra.mxu0 0.0
    %3174 = vmatprep.subr.mxu0 0.0
    %3175 = vmatpush1.msra.mxu0 0.0
    %3176 = vmatprep.subr.mxu0 0.0
    %3177 = vmatpush1.msra.mxu0 0.0
    %3178 = vmatprep.subr.mxu0 0.0
    %3179 = vmatpush1.msra.mxu0 0.0
    %3180 = vmatprep.subr.mxu0 0.0
    %3181 = vmatpush1.msra.mxu0 0.0
    %3182 = vmatprep.subr.mxu0 0.0
    %3183 = vmatpush1.msra.mxu0 0.0
    %3184 = vmatprep.subr.mxu0 0.0
    %3185 = vmatpush1.msra.mxu0 0.0
    %3186 = vmatprep.subr.mxu0 0.0
    %3187 = vmatpush1.msra.mxu0 0.0
    %3188 = vmatprep.subr.mxu0 0.0
    %3189 = vmatpush1.msra.mxu0 0.0
    %3190 = vmatprep.subr.mxu0 0.0
    %3191 = vmatpush1.msra.mxu0 0.0
    %3192 = vmatprep.subr.mxu0 0.0
    %3193 = vmatpush1.msra.mxu0 0.0
    %3194 = vmatprep.subr.mxu0 0.0
    %3195 = vmatpush1.msra.mxu0 0.0
    %3196 = vmatprep.subr.mxu0 0.0
    %3197 = vmatpush1.msra.mxu0 0.0
    %3198 = vmatprep.subr.mxu0 0.0
    %3199 = vmatpush1.msra.mxu0 0.0
    %3200 = vmatprep.subr.mxu0 0.0
    %3201 = vmatpush1.msra.mxu0 0.0
    %3202 = vmatprep.mubr.f32.mxu0 0.0
    %3203 = vmatmul.mubr.f32.gmra.mrb[0].mxu0 %v3136
    %v3204 = vpop.f32.mrb[0].mxu0
    %v3205 = vadd.f32 0.0, %v3204
    %v3206 = vpop.f32.mrb[0].mxu0
    %3207 = vdwg.mxu0
    %v3209 = vrot.slane %v3205, 4
    %v3211 = vadd.f32 %v2918, %v3209
    %v3212 = vsub.f32 0.0, %v3211
    %v3213 = vmul.f32 %v3212, 1.442695
    %v3214 = vpow.pop %v3213
    %v3215 = vadd.f32 %v3214, 1.0
    %v3216 = vrcp.pop %v3215
    %v3217 = vmul.f32 1.0, %v3216
    %v3218 = vtanh.pop %v3211
    %v3220 = vrot.slane %v3125, 6
    %v3222 = vmul.f32 %v3217, %v3220
    %3224 = vrot.lane.b32.xlu0 %v3218, 64
    %v3225 = vpop.permute.xlu0 %3224
    %v3227 = vmul.f32 %v3217, %v3225
    %3229 = vrot.lane.b32.xlu0 %v3227, 32
    %v3230 = vpop.permute.xlu0 %3229
    %v3232 = vadd.f32 %v3222, %v3230
    %v3233 = vtanh.pop %v3232
    %3235 = vrot.lane.b32.xlu0 %v3233, 64
    %v3236 = vpop.permute.xlu0 %3235
    %v3238 = vmul.f32 %v3217, %v3236
    %v3240 = vrot.slane %v3238, 4
    %3241 = vrot.lane.b32.xlu0 %v3240, 32
    %v3242 = vpop.permute.xlu0 %3241
    %v3243 = vsel %vm135, %v3242, 0
    %3245 = vmatprep.subr.mxu0 0.0
    %3246 = vmatpush1.msra.mxu0 %v2819
    %3247 = vmatprep.subr.mxu0 0.0
    %3248 = vmatpush1.msra.mxu0 %v2820
    %3249 = vmatprep.subr.mxu0 0.0
    %3250 = vmatpush1.msra.mxu0 %v2821
    %3251 = vmatprep.subr.mxu0 0.0
    %3252 = vmatpush1.msra.mxu0 %v2822
    %3253 = vmatprep.subr.mxu0 0.0
    %3254 = vmatpush1.msra.mxu0 0.0
    %3255 = vmatprep.subr.mxu0 0.0
    %3256 = vmatpush1.msra.mxu0 0.0
    %3257 = vmatprep.subr.mxu0 0.0
    %3258 = vmatpush1.msra.mxu0 0.0
    %3259 = vmatprep.subr.mxu0 0.0
    %3260 = vmatpush1.msra.mxu0 0.0
    %3261 = vmatprep.subr.mxu0 0.0
    %3262 = vmatpush1.msra.mxu0 0.0
    %3263 = vmatprep.subr.mxu0 0.0
    %3264 = vmatpush1.msra.mxu0 0.0
    %3265 = vmatprep.subr.mxu0 0.0
    %3266 = vmatpush1.msra.mxu0 0.0
    %3267 = vmatprep.subr.mxu0 0.0
    %3268 = vmatpush1.msra.mxu0 0.0
    %3269 = vmatprep.subr.mxu0 0.0
    %3270 = vmatpush1.msra.mxu0 0.0
    %3271 = vmatprep.subr.mxu0 0.0
    %3272 = vmatpush1.msra.mxu0 0.0
    %3273 = vmatprep.subr.mxu0 0.0
    %3274 = vmatpush1.msra.mxu0 0.0
    %3275 = vmatprep.subr.mxu0 0.0
    %3276 = vmatpush1.msra.mxu0 0.0
    %3277 = vmatprep.subr.mxu0 0.0
    %3278 = vmatpush1.msra.mxu0 0.0
    %3279 = vmatprep.subr.mxu0 0.0
    %3280 = vmatpush1.msra.mxu0 0.0
    %3281 = vmatprep.subr.mxu0 0.0
    %3282 = vmatpush1.msra.mxu0 0.0
    %3283 = vmatprep.subr.mxu0 0.0
    %3284 = vmatpush1.msra.mxu0 0.0
    %3285 = vmatprep.subr.mxu0 0.0
    %3286 = vmatpush1.msra.mxu0 0.0
    %3287 = vmatprep.subr.mxu0 0.0
    %3288 = vmatpush1.msra.mxu0 0.0
    %3289 = vmatprep.subr.mxu0 0.0
    %3290 = vmatpush1.msra.mxu0 0.0
    %3291 = vmatprep.subr.mxu0 0.0
    %3292 = vmatpush1.msra.mxu0 0.0
    %3293 = vmatprep.subr.mxu0 0.0
    %3294 = vmatpush1.msra.mxu0 0.0
    %3295 = vmatprep.subr.mxu0 0.0
    %3296 = vmatpush1.msra.mxu0 0.0
    %3297 = vmatprep.subr.mxu0 0.0
    %3298 = vmatpush1.msra.mxu0 0.0
    %3299 = vmatprep.subr.mxu0 0.0
    %3300 = vmatpush1.msra.mxu0 0.0
    %3301 = vmatprep.subr.mxu0 0.0
    %3302 = vmatpush1.msra.mxu0 0.0
    %3303 = vmatprep.subr.mxu0 0.0
    %3304 = vmatpush1.msra.mxu0 0.0
    %3305 = vmatprep.subr.mxu0 0.0
    %3306 = vmatpush1.msra.mxu0 0.0
    %3307 = vmatprep.subr.mxu0 0.0
    %3308 = vmatpush1.msra.mxu0 0.0
    %3309 = vmatprep.mubr.f32.mxu0 0.0
    %3310 = vmatmul.mubr.f32.gmra.mrb[0].mxu0 %v3243
    %v3311 = vpop.f32.mrb[0].mxu0
    %v3312 = vadd.f32 0.0, %v3311
    %v3313 = vpop.f32.mrb[0].mxu0
    %3314 = vdwg.mxu0
    %v3316 = vrot.slane %v3312, 2
    %v3318 = vadd.f32 %v2921, %v3316
    %v3319 = vsub.f32 0.0, %v3318
    %v3320 = vmul.f32 %v3319, 1.442695
    %v3321 = vpow.pop %v3320
    %v3322 = vadd.f32 %v3321, 1.0
    %v3323 = vrcp.pop %v3322
    %v3324 = vmul.f32 1.0, %v3323
    %v3325 = vtanh.pop %v3318
    %v3327 = vrot.slane %v3232, 6
    %v3329 = vmul.f32 %v3324, %v3327
    %3331 = vrot.lane.b32.xlu0 %v3325, 64
    %v3332 = vpop.permute.xlu0 %3331
    %v3334 = vmul.f32 %v3324, %v3332
    %3336 = vrot.lane.b32.xlu0 %v3334, 32
    %v3337 = vpop.permute.xlu0 %3336
    %v3339 = vadd.f32 %v3329, %v3337
    %v3340 = vtanh.pop %v3339
    %3342 = vrot.lane.b32.xlu0 %v3340, 64
    %v3343 = vpop.permute.xlu0 %3342
    %v3345 = vmul.f32 %v3324, %v3343
    %v3347 = vrot.slane %v3345, 6
    %3348 = vrot.lane.b32.xlu0 %v3347, 32
    %v3349 = vpop.permute.xlu0 %3348
    %v3350 = vsel %vm135, %v3349, 0
    %3352 = vmatprep.subr.mxu0 0.0
    %3353 = vmatpush1.msra.mxu0 %v2819
    %3354 = vmatprep.subr.mxu0 0.0
    %3355 = vmatpush1.msra.mxu0 %v2820
    %3356 = vmatprep.subr.mxu0 0.0
    %3357 = vmatpush1.msra.mxu0 %v2821
    %3358 = vmatprep.subr.mxu0 0.0
    %3359 = vmatpush1.msra.mxu0 %v2822
    %3360 = vmatprep.subr.mxu0 0.0
    %3361 = vmatpush1.msra.mxu0 0.0
    %3362 = vmatprep.subr.mxu0 0.0
    %3363 = vmatpush1.msra.mxu0 0.0
    %3364 = vmatprep.subr.mxu0 0.0
    %3365 = vmatpush1.msra.mxu0 0.0
    %3366 = vmatprep.subr.mxu0 0.0
    %3367 = vmatpush1.msra.mxu0 0.0
    %3368 = vmatprep.subr.mxu0 0.0
    %3369 = vmatpush1.msra.mxu0 0.0
    %3370 = vmatprep.subr.mxu0 0.0
    %3371 = vmatpush1.msra.mxu0 0.0
    %3372 = vmatprep.subr.mxu0 0.0
    %3373 = vmatpush1.msra.mxu0 0.0
    %3374 = vmatprep.subr.mxu0 0.0
    %3375 = vmatpush1.msra.mxu0 0.0
    %3376 = vmatprep.subr.mxu0 0.0
    %3377 = vmatpush1.msra.mxu0 0.0
    %3378 = vmatprep.subr.mxu0 0.0
    %3379 = vmatpush1.msra.mxu0 0.0
    %3380 = vmatprep.subr.mxu0 0.0
    %3381 = vmatpush1.msra.mxu0 0.0
    %3382 = vmatprep.subr.mxu0 0.0
    %3383 = vmatpush1.msra.mxu0 0.0
    %3384 = vmatprep.subr.mxu0 0.0
    %3385 = vmatpush1.msra.mxu0 0.0
    %3386 = vmatprep.subr.mxu0 0.0
    %3387 = vmatpush1.msra.mxu0 0.0
    %3388 = vmatprep.subr.mxu0 0.0
    %3389 = vmatpush1.msra.mxu0 0.0
    %3390 = vmatprep.subr.mxu0 0.0
    %3391 = vmatpush1.msra.mxu0 0.0
    %3392 = vmatprep.subr.mxu0 0.0
    %3393 = vmatpush1.msra.mxu0 0.0
    %3394 = vmatprep.subr.mxu0 0.0
    %3395 = vmatpush1.msra.mxu0 0.0
    %3396 = vmatprep.subr.mxu0 0.0
    %3397 = vmatpush1.msra.mxu0 0.0
    %3398 = vmatprep.subr.mxu0 0.0
    %3399 = vmatpush1.msra.mxu0 0.0
    %3400 = vmatprep.subr.mxu0 0.0
    %3401 = vmatpush1.msra.mxu0 0.0
    %3402 = vmatprep.subr.mxu0 0.0
    %3403 = vmatpush1.msra.mxu0 0.0
    %3404 = vmatprep.subr.mxu0 0.0
    %3405 = vmatpush1.msra.mxu0 0.0
    %3406 = vmatprep.subr.mxu0 0.0
    %3407 = vmatpush1.msra.mxu0 0.0
    %3408 = vmatprep.subr.mxu0 0.0
    %3409 = vmatpush1.msra.mxu0 0.0
    %3410 = vmatprep.subr.mxu0 0.0
    %3411 = vmatpush1.msra.mxu0 0.0
    %3412 = vmatprep.subr.mxu0 0.0
    %3413 = vmatpush1.msra.mxu0 0.0
    %3414 = vmatprep.subr.mxu0 0.0
    %3415 = vmatpush1.msra.mxu0 0.0
    %3416 = vmatprep.mubr.f32.mxu0 0.0
    %3417 = vmatmul.mubr.f32.gmra.mrb[0].mxu0 %v3350
    %v3418 = vpop.f32.mrb[0].mxu0
    %v3419 = vadd.f32 0.0, %v3418
    %v3420 = vpop.f32.mrb[0].mxu0
    %3421 = vdwg.mxu0
    %v3422 = vadd.f32 %v2927, %v3419
    %v3423 = vsub.f32 0.0, %v3422
    %v3424 = vmul.f32 %v3423, 1.442695
    %v3425 = vpow.pop %v3424
    %v3426 = vadd.f32 %v3425, 1.0
    %v3427 = vrcp.pop %v3426
    %v3428 = vmul.f32 1.0, %v3427
    %v3429 = vtanh.pop %v3422
    %v3431 = vrot.slane %v3339, 6
    %v3433 = vmul.f32 %v3428, %v3431
    %3435 = vrot.lane.b32.xlu0 %v3429, 64
    %v3436 = vpop.permute.xlu0 %3435
    %v3438 = vmul.f32 %v3428, %v3436
    %3440 = vrot.lane.b32.xlu0 %v3438, 32
    %v3441 = vpop.permute.xlu0 %3440
    %v3443 = vadd.f32 %v3433, %v3441
    %v3444 = vtanh.pop %v3443
    %3446 = vrot.lane.b32.xlu0 %v3444, 64
    %v3447 = vpop.permute.xlu0 %3446
    %v3449 = vmul.f32 %v3428, %v3447
    %3451 = vrot.lane.b32.xlu0 %v3449, 32
    %v3452 = vpop.permute.xlu0 %3451
    %v3453 = vsel %vm135, %v3452, 0
    %3455 = vmatprep.subr.mxu0 0.0
    %3456 = vmatpush1.msra.mxu0 %v2819
    %3457 = vmatprep.subr.mxu0 0.0
    %3458 = vmatpush1.msra.mxu0 %v2820
    %3459 = vmatprep.subr.mxu0 0.0
    %3460 = vmatpush1.msra.mxu0 %v2821
    %3461 = vmatprep.subr.mxu0 0.0
    %3462 = vmatpush1.msra.mxu0 %v2822
    %3463 = vmatprep.subr.mxu0 0.0
    %3464 = vmatpush1.msra.mxu0 0.0
    %3465 = vmatprep.subr.mxu0 0.0
    %3466 = vmatpush1.msra.mxu0 0.0
    %3467 = vmatprep.subr.mxu0 0.0
    %3468 = vmatpush1.msra.mxu0 0.0
    %3469 = vmatprep.subr.mxu0 0.0
    %3470 = vmatpush1.msra.mxu0 0.0
    %3471 = vmatprep.subr.mxu0 0.0
    %3472 = vmatpush1.msra.mxu0 0.0
    %3473 = vmatprep.subr.mxu0 0.0
    %3474 = vmatpush1.msra.mxu0 0.0
    %3475 = vmatprep.subr.mxu0 0.0
    %3476 = vmatpush1.msra.mxu0 0.0
    %3477 = vmatprep.subr.mxu0 0.0
    %3478 = vmatpush1.msra.mxu0 0.0
    %3479 = vmatprep.subr.mxu0 0.0
    %3480 = vmatpush1.msra.mxu0 0.0
    %3481 = vmatprep.subr.mxu0 0.0
    %3482 = vmatpush1.msra.mxu0 0.0
    %3483 = vmatprep.subr.mxu0 0.0
    %3484 = vmatpush1.msra.mxu0 0.0
    %3485 = vmatprep.subr.mxu0 0.0
    %3486 = vmatpush1.msra.mxu0 0.0
    %3487 = vmatprep.subr.mxu0 0.0
    %3488 = vmatpush1.msra.mxu0 0.0
    %3489 = vmatprep.subr.mxu0 0.0
    %3490 = vmatpush1.msra.mxu0 0.0
    %3491 = vmatprep.subr.mxu0 0.0
    %3492 = vmatpush1.msra.mxu0 0.0
    %3493 = vmatprep.subr.mxu0 0.0
    %3494 = vmatpush1.msra.mxu0 0.0
    %3495 = vmatprep.subr.mxu0 0.0
    %3496 = vmatpush1.msra.mxu0 0.0
    %3497 = vmatprep.subr.mxu0 0.0
    %3498 = vmatpush1.msra.mxu0 0.0
    %3499 = vmatprep.subr.mxu0 0.0
    %3500 = vmatpush1.msra.mxu0 0.0
    %3501 = vmatprep.subr.mxu0 0.0
    %3502 = vmatpush1.msra.mxu0 0.0
    %3503 = vmatprep.subr.mxu0 0.0
    %3504 = vmatpush1.msra.mxu0 0.0
    %3505 = vmatprep.subr.mxu0 0.0
    %3506 = vmatpush1.msra.mxu0 0.0
    %3507 = vmatprep.subr.mxu0 0.0
    %3508 = vmatpush1.msra.mxu0 0.0
    %3509 = vmatprep.subr.mxu0 0.0
    %3510 = vmatpush1.msra.mxu0 0.0
    %3511 = vmatprep.subr.mxu0 0.0
    %3512 = vmatpush1.msra.mxu0 0.0
    %3513 = vmatprep.subr.mxu0 0.0
    %3514 = vmatpush1.msra.mxu0 0.0
    %3515 = vmatprep.subr.mxu0 0.0
    %3516 = vmatpush1.msra.mxu0 0.0
    %3517 = vmatprep.subr.mxu0 0.0
    %3518 = vmatpush1.msra.mxu0 0.0
    %3519 = vmatprep.mubr.f32.mxu0 0.0
    %3520 = vmatmul.mubr.f32.gmra.mrb[0].mxu0 %v3453
    %v3521 = vpop.f32.mrb[0].mxu0
    %v3522 = vadd.f32 0.0, %v3521
    %v3523 = vpop.f32.mrb[0].mxu0
    %3524 = vdwg.mxu0
    %v3526 = vrot.slane %v3522, 6
    %v3528 = vadd.f32 %v2930, %v3526
    %v3529 = vsub.f32 0.0, %v3528
    %v3530 = vmul.f32 %v3529, 1.442695
    %v3531 = vpow.pop %v3530
    %v3532 = vadd.f32 %v3531, 1.0
    %v3533 = vrcp.pop %v3532
    %v3534 = vmul.f32 1.0, %v3533
    %v3535 = vtanh.pop %v3528
    %v3537 = vrot.slane %v3443, 6
    %v3539 = vmul.f32 %v3534, %v3537
    %3541 = vrot.lane.b32.xlu0 %v3535, 64
    %v3542 = vpop.permute.xlu0 %3541
    %v3544 = vmul.f32 %v3534, %v3542
    %3546 = vrot.lane.b32.xlu0 %v3544, 32
    %v3547 = vpop.permute.xlu0 %3546
    %v3549 = vadd.f32 %v3539, %v3547
    %v3550 = vtanh.pop %v3549
    %3552 = vrot.lane.b32.xlu0 %v3550, 64
    %v3553 = vpop.permute.xlu0 %3552
    %v3555 = vmul.f32 %v3534, %v3553
    %v3557 = vrot.slane %v3555, 2
    %3558 = vrot.lane.b32.xlu0 %v3557, 32
    %v3559 = vpop.permute.xlu0 %3558
    %v3560 = vsel %vm135, %v3559, 0
    %3562 = vmatprep.subr.mxu0 0.0
    %3563 = vmatpush1.msra.mxu0 %v2819
    %3564 = vmatprep.subr.mxu0 0.0
    %3565 = vmatpush1.msra.mxu0 %v2820
    %3566 = vmatprep.subr.mxu0 0.0
    %3567 = vmatpush1.msra.mxu0 %v2821
    %3568 = vmatprep.subr.mxu0 0.0
    %3569 = vmatpush1.msra.mxu0 %v2822
    %3570 = vmatprep.subr.mxu0 0.0
    %3571 = vmatpush1.msra.mxu0 0.0
    %3572 = vmatprep.subr.mxu0 0.0
    %3573 = vmatpush1.msra.mxu0 0.0
    %3574 = vmatprep.subr.mxu0 0.0
    %3575 = vmatpush1.msra.mxu0 0.0
    %3576 = vmatprep.subr.mxu0 0.0
    %3577 = vmatpush1.msra.mxu0 0.0
    %3578 = vmatprep.subr.mxu0 0.0
    %3579 = vmatpush1.msra.mxu0 0.0
    %3580 = vmatprep.subr.mxu0 0.0
    %3581 = vmatpush1.msra.mxu0 0.0
    %3582 = vmatprep.subr.mxu0 0.0
    %3583 = vmatpush1.msra.mxu0 0.0
    %3584 = vmatprep.subr.mxu0 0.0
    %3585 = vmatpush1.msra.mxu0 0.0
    %3586 = vmatprep.subr.mxu0 0.0
    %3587 = vmatpush1.msra.mxu0 0.0
    %3588 = vmatprep.subr.mxu0 0.0
    %3589 = vmatpush1.msra.mxu0 0.0
    %3590 = vmatprep.subr.mxu0 0.0
    %3591 = vmatpush1.msra.mxu0 0.0
    %3592 = vmatprep.subr.mxu0 0.0
    %3593 = vmatpush1.msra.mxu0 0.0
    %3594 = vmatprep.subr.mxu0 0.0
    %3595 = vmatpush1.msra.mxu0 0.0
    %3596 = vmatprep.subr.mxu0 0.0
    %3597 = vmatpush1.msra.mxu0 0.0
    %3598 = vmatprep.subr.mxu0 0.0
    %3599 = vmatpush1.msra.mxu0 0.0
    %3600 = vmatprep.subr.mxu0 0.0
    %3601 = vmatpush1.msra.mxu0 0.0
    %3602 = vmatprep.subr.mxu0 0.0
    %3603 = vmatpush1.msra.mxu0 0.0
    %3604 = vmatprep.subr.mxu0 0.0
    %3605 = vmatpush1.msra.mxu0 0.0
    %3606 = vmatprep.subr.mxu0 0.0
    %3607 = vmatpush1.msra.mxu0 0.0
    %3608 = vmatprep.subr.mxu0 0.0
    %3609 = vmatpush1.msra.mxu0 0.0
    %3610 = vmatprep.subr.mxu0 0.0
    %3611 = vmatpush1.msra.mxu0 0.0
    %3612 = vmatprep.subr.mxu0 0.0
    %3613 = vmatpush1.msra.mxu0 0.0
    %3614 = vmatprep.subr.mxu0 0.0
    %3615 = vmatpush1.msra.mxu0 0.0
    %3616 = vmatprep.subr.mxu0 0.0
    %3617 = vmatpush1.msra.mxu0 0.0
    %3618 = vmatprep.subr.mxu0 0.0
    %3619 = vmatpush1.msra.mxu0 0.0
    %3620 = vmatprep.subr.mxu0 0.0
    %3621 = vmatpush1.msra.mxu0 0.0
    %3622 = vmatprep.subr.mxu0 0.0
    %3623 = vmatpush1.msra.mxu0 0.0
    %3624 = vmatprep.subr.mxu0 0.0
    %3625 = vmatpush1.msra.mxu0 0.0
    %3626 = vmatprep.mubr.f32.mxu0 0.0
    %3627 = vmatmul.mubr.f32.gmra.mrb[0].mxu0 %v3560
    %v3628 = vpop.f32.mrb[0].mxu0
    %v3629 = vadd.f32 0.0, %v3628
    %v3630 = vpop.f32.mrb[0].mxu0
    %3631 = vdwg.mxu0
    %v3633 = vrot.slane %v3629, 4
    %v3635 = vadd.f32 %v2927, %v3633
    %v3636 = vsub.f32 0.0, %v3635
    %v3637 = vmul.f32 %v3636, 1.442695
    %v3638 = vpow.pop %v3637
    %v3639 = vadd.f32 %v3638, 1.0
    %v3640 = vrcp.pop %v3639
    %v3641 = vmul.f32 1.0, %v3640
    %v3642 = vtanh.pop %v3635
    %v3644 = vrot.slane %v3549, 6
    %v3646 = vmul.f32 %v3641, %v3644
    %3648 = vrot.lane.b32.xlu0 %v3642, 64
    %v3649 = vpop.permute.xlu0 %3648
    %v3651 = vmul.f32 %v3641, %v3649
    %3653 = vrot.lane.b32.xlu0 %v3651, 32
    %v3654 = vpop.permute.xlu0 %3653
    %v3656 = vadd.f32 %v3646, %v3654
    %v3657 = vtanh.pop %v3656
    %3659 = vrot.lane.b32.xlu0 %v3657, 64
    %v3660 = vpop.permute.xlu0 %3659
    %v3662 = vmul.f32 %v3641, %v3660
    %v3664 = vrot.slane %v3662, 4
    %3665 = vrot.lane.b32.xlu0 %v3664, 32
    %v3666 = vpop.permute.xlu0 %3665
    %v3667 = vsel %vm135, %v3666, 0
    %3669 = vmatprep.subr.mxu0 0.0
    %3670 = vmatpush1.msra.mxu0 %v2819
    %3671 = vmatprep.subr.mxu0 0.0
    %3672 = vmatpush1.msra.mxu0 %v2820
    %3673 = vmatprep.subr.mxu0 0.0
    %3674 = vmatpush1.msra.mxu0 %v2821
    %3675 = vmatprep.subr.mxu0 0.0
    %3676 = vmatpush1.msra.mxu0 %v2822
    %3677 = vmatprep.subr.mxu0 0.0
    %3678 = vmatpush1.msra.mxu0 0.0
    %3679 = vmatprep.subr.mxu0 0.0
    %3680 = vmatpush1.msra.mxu0 0.0
    %3681 = vmatprep.subr.mxu0 0.0
    %3682 = vmatpush1.msra.mxu0 0.0
    %3683 = vmatprep.subr.mxu0 0.0
    %3684 = vmatpush1.msra.mxu0 0.0
    %3685 = vmatprep.subr.mxu0 0.0
    %3686 = vmatpush1.msra.mxu0 0.0
    %3687 = vmatprep.subr.mxu0 0.0
    %3688 = vmatpush1.msra.mxu0 0.0
    %3689 = vmatprep.subr.mxu0 0.0
    %3690 = vmatpush1.msra.mxu0 0.0
    %3691 = vmatprep.subr.mxu0 0.0
    %3692 = vmatpush1.msra.mxu0 0.0
    %3693 = vmatprep.subr.mxu0 0.0
    %3694 = vmatpush1.msra.mxu0 0.0
    %3695 = vmatprep.subr.mxu0 0.0
    %3696 = vmatpush1.msra.mxu0 0.0
    %3697 = vmatprep.subr.mxu0 0.0
    %3698 = vmatpush1.msra.mxu0 0.0
    %3699 = vmatprep.subr.mxu0 0.0
    %3700 = vmatpush1.msra.mxu0 0.0
    %3701 = vmatprep.subr.mxu0 0.0
    %3702 = vmatpush1.msra.mxu0 0.0
    %3703 = vmatprep.subr.mxu0 0.0
    %3704 = vmatpush1.msra.mxu0 0.0
    %3705 = vmatprep.subr.mxu0 0.0
    %3706 = vmatpush1.msra.mxu0 0.0
    %3707 = vmatprep.subr.mxu0 0.0
    %3708 = vmatpush1.msra.mxu0 0.0
    %3709 = vmatprep.subr.mxu0 0.0
    %3710 = vmatpush1.msra.mxu0 0.0
    %3711 = vmatprep.subr.mxu0 0.0
    %3712 = vmatpush1.msra.mxu0 0.0
    %3713 = vmatprep.subr.mxu0 0.0
    %3714 = vmatpush1.msra.mxu0 0.0
    %3715 = vmatprep.subr.mxu0 0.0
    %3716 = vmatpush1.msra.mxu0 0.0
    %3717 = vmatprep.subr.mxu0 0.0
    %3718 = vmatpush1.msra.mxu0 0.0
    %3719 = vmatprep.subr.mxu0 0.0
    %3720 = vmatpush1.msra.mxu0 0.0
    %3721 = vmatprep.subr.mxu0 0.0
    %3722 = vmatpush1.msra.mxu0 0.0
    %3723 = vmatprep.subr.mxu0 0.0
    %3724 = vmatpush1.msra.mxu0 0.0
    %3725 = vmatprep.subr.mxu0 0.0
    %3726 = vmatpush1.msra.mxu0 0.0
    %3727 = vmatprep.subr.mxu0 0.0
    %3728 = vmatpush1.msra.mxu0 0.0
    %3729 = vmatprep.subr.mxu0 0.0
    %3730 = vmatpush1.msra.mxu0 0.0
    %3731 = vmatprep.subr.mxu0 0.0
    %3732 = vmatpush1.msra.mxu0 0.0
    %3733 = vmatprep.mubr.f32.mxu0 0.0
    %3734 = vmatmul.mubr.f32.gmra.mrb[0].mxu0 %v3667
    %v3735 = vpop.f32.mrb[0].mxu0
    %v3736 = vadd.f32 0.0, %v3735
    %v3737 = vpop.f32.mrb[0].mxu0
    %3738 = vdwg.mxu0
    %v3740 = vrot.slane %v3736, 2
    %v3742 = vadd.f32 %v2930, %v3740
    %v3743 = vsub.f32 0.0, %v3742
    %v3744 = vmul.f32 %v3743, 1.442695
    %v3745 = vpow.pop %v3744
    %v3746 = vadd.f32 %v3745, 1.0
    %v3747 = vrcp.pop %v3746
    %v3748 = vmul.f32 1.0, %v3747
    %v3749 = vtanh.pop %v3742
    %v3751 = vrot.slane %v3656, 6
    %v3753 = vmul.f32 %v3748, %v3751
    %3755 = vrot.lane.b32.xlu0 %v3749, 64
    %v3756 = vpop.permute.xlu0 %3755
    %v3758 = vmul.f32 %v3748, %v3756
    %3760 = vrot.lane.b32.xlu0 %v3758, 32
    %v3761 = vpop.permute.xlu0 %3760
    %v3763 = vadd.f32 %v3753, %v3761
    %v3764 = vtanh.pop %v3763
    %3766 = vrot.lane.b32.xlu0 %v3764, 64
    %v3767 = vpop.permute.xlu0 %3766
    %v3769 = vmul.f32 %v3748, %v3767
    %v3770 = vmul.f32 %v3025, %v2754
    %v3771 = vmul.f32 %v3769, %v2759
    %v3773 = vrot.slane %v3771, 6
    %v3775 = vadd.f32 %v3770, %v3773
    %v3776 = vmul.f32 %v3131, %v2754
    %v3777 = vmul.f32 %v3662, %v2759
    %v3779 = vrot.slane %v3777, 2
    %v3781 = vadd.f32 %v3776, %v3779
    %v3782 = vmul.f32 %v3238, %v2754
    %v3783 = vmul.f32 %v3555, %v2759
    %v3785 = vrot.slane %v3783, 6
    %v3787 = vadd.f32 %v3782, %v3785
    %v3788 = vmul.f32 %v3345, %v2754
    %v3789 = vmul.f32 %v3449, %v2759
    %v3791 = vrot.slane %v3789, 2
    %v3793 = vadd.f32 %v3788, %v3791
    %v3794 = vmul.f32 %v3449, %v2754
    %v3795 = vmul.f32 %v3345, %v2759
    %v3797 = vrot.slane %v3795, 6
    %v3799 = vadd.f32 %v3794, %v3797
    %v3800 = vmul.f32 %v3555, %v2754
    %v3801 = vmul.f32 %v3238, %v2759
    %v3803 = vrot.slane %v3801, 2
    %v3805 = vadd.f32 %v3800, %v3803
    %v3806 = vmul.f32 %v3662, %v2754
    %v3807 = vmul.f32 %v3131, %v2759
    %v3809 = vrot.slane %v3807, 6
    %v3811 = vadd.f32 %v3806, %v3809
    %v3812 = vmul.f32 %v3769, %v2754
    %v3813 = vmul.f32 %v3025, %v2759
    %v3815 = vrot.slane %v3813, 2
    %v3817 = vadd.f32 %v3812, %v3815
    %v3818 = vsel %vm125, %v3775, %v3781
    %v3819 = vsel %vm2809, %v3818, %v3787
    %v3820 = vsel %vm295, %v3819, %v3793
    %v3821 = vsel %vm125, %v3799, %v3805
    %v3822 = vsel %vm2809, %v3821, %v3811
    %v3823 = vsel %vm295, %v3822, %v3817
    %v3824 = vld [vmem:[#allocation2 + $0x578] sm:$0xff]
    %v3825 = vld [vmem:[#allocation2 + $0x580] sm:$0xff]
    %v3826 = vld [vmem:[#allocation2 + $0x588] sm:$0xff]
    %v3827 = vld [vmem:[#allocation2 + $0x590] sm:$0xff]
    %v3828 = vld [vmem:[#allocation2 + $0x598] sm:$0xff]
    %v3829 = vld [vmem:[#allocation2 + $0x5a0] sm:$0xff]
    %v3830 = vld [vmem:[#allocation2 + $0x5a8] sm:$0xff]
    %v3831 = vld [vmem:[#allocation2 + $0x328] sm:$0xff]
    %v3832 = vld [vmem:[#allocation2 + $0x330] sm:$0xff]
    %v3833 = vld [vmem:[#allocation2 + $0x338] sm:$0xff]
    %v3834 = vld [vmem:[#allocation2 + $0x340] sm:$0xff]
    %v3835 = vld [vmem:[#allocation2 + $0x348] sm:$0x1]
    %v3836 = vlaneseq
    %v3837 = vshrl.u32 %v3836, 7
    %v3838 = vsub.s32 0, %v3837
    %v3839 = vrot.slane %v3835, %v3838
    %3842 = vrot.lane.b32.xlu0 %v3820, 32
    %v3843 = vpop.permute.xlu0 %3842
    %3844 = vrot.lane.b32.xlu0 %v3823, 32
    %v3845 = vpop.permute.xlu0 %3844
    %v3846 = vsel %vm135, %v3843, 0
    %v3848 = vsel %vm135, %v3845, 0
    %3850 = vmatprep.subr.mxu0 0.0
    %3851 = vmatpush1.msra.mxu0 %v3831
    %3852 = vmatprep.subr.mxu0 0.0
    %3853 = vmatpush1.msra.mxu0 %v3832
    %3854 = vmatprep.subr.mxu0 0.0
    %3855 = vmatpush1.msra.mxu0 %v3833
    %3856 = vmatprep.subr.mxu0 0.0
    %3857 = vmatpush1.msra.mxu0 %v3834
    %3858 = vmatprep.subr.mxu0 0.0
    %3859 = vmatpush1.msra.mxu0 0.0
    %3860 = vmatprep.subr.mxu0 0.0
    %3861 = vmatpush1.msra.mxu0 0.0
    %3862 = vmatprep.subr.mxu0 0.0
    %3863 = vmatpush1.msra.mxu0 0.0
    %3864 = vmatprep.subr.mxu0 0.0
    %3865 = vmatpush1.msra.mxu0 0.0
    %3866 = vmatprep.subr.mxu0 0.0
    %3867 = vmatpush1.msra.mxu0 0.0
    %3868 = vmatprep.subr.mxu0 0.0
    %3869 = vmatpush1.msra.mxu0 0.0
    %3870 = vmatprep.subr.mxu0 0.0
    %3871 = vmatpush1.msra.mxu0 0.0
    %3872 = vmatprep.subr.mxu0 0.0
    %3873 = vmatpush1.msra.mxu0 0.0
    %3874 = vmatprep.subr.mxu0 0.0
    %3875 = vmatpush1.msra.mxu0 0.0
    %3876 = vmatprep.subr.mxu0 0.0
    %3877 = vmatpush1.msra.mxu0 0.0
    %3878 = vmatprep.subr.mxu0 0.0
    %3879 = vmatpush1.msra.mxu0 0.0
    %3880 = vmatprep.subr.mxu0 0.0
    %3881 = vmatpush1.msra.mxu0 0.0
    %3882 = vmatprep.subr.mxu0 0.0
    %3883 = vmatpush1.msra.mxu0 0.0
    %3884 = vmatprep.subr.mxu0 0.0
    %3885 = vmatpush1.msra.mxu0 0.0
    %3886 = vmatprep.subr.mxu0 0.0
    %3887 = vmatpush1.msra.mxu0 0.0
    %3888 = vmatprep.subr.mxu0 0.0
    %3889 = vmatpush1.msra.mxu0 0.0
    %3890 = vmatprep.subr.mxu0 0.0
    %3891 = vmatpush1.msra.mxu0 0.0
    %3892 = vmatprep.subr.mxu0 0.0
    %3893 = vmatpush1.msra.mxu0 0.0
    %3894 = vmatprep.subr.mxu0 0.0
    %3895 = vmatpush1.msra.mxu0 0.0
    %3896 = vmatprep.subr.mxu0 0.0
    %3897 = vmatpush1.msra.mxu0 0.0
    %3898 = vmatprep.subr.mxu0 0.0
    %3899 = vmatpush1.msra.mxu0 0.0
    %3900 = vmatprep.subr.mxu0 0.0
    %3901 = vmatpush1.msra.mxu0 0.0
    %3902 = vmatprep.subr.mxu0 0.0
    %3903 = vmatpush1.msra.mxu0 0.0
    %3904 = vmatprep.subr.mxu0 0.0
    %3905 = vmatpush1.msra.mxu0 0.0
    %3906 = vmatprep.subr.mxu0 0.0
    %3907 = vmatpush1.msra.mxu0 0.0
    %3908 = vmatprep.subr.mxu0 0.0
    %3909 = vmatpush1.msra.mxu0 0.0
    %3910 = vmatprep.subr.mxu0 0.0
    %3911 = vmatpush1.msra.mxu0 0.0
    %3912 = vmatprep.subr.mxu0 0.0
    %3913 = vmatpush1.msra.mxu0 0.0
    %3914 = vmatprep.mubr.f32.mxu0 0.0
    %3915 = vmatmul.mubr.f32.gmra.mrb[0].mxu0 %v3846
    %v3916 = vpop.f32.mrb[0].mxu0
    %v3917 = vadd.f32 %v3839, %v3916
    %v3918 = vpop.f32.mrb[0].mxu0
    %3919 = vmatprep.mubr.f32.mxu0 0.0
    %3920 = vmatmul.mubr.f32.gmra.mrb[0].mxu0 %v3848
    %v3921 = vpop.f32.mrb[0].mxu0
    %v3922 = vadd.f32 %v3839, %v3921
    %v3923 = vpop.f32.mrb[0].mxu0
    %3924 = vdwg.mxu0
    %v3925 = vld [vmem:[#allocation2 + $0x350] sm:$0xff]
    %v3926 = vld [vmem:[#allocation2 + $0x358] sm:$0xff]
    %v3927 = vld [vmem:[#allocation2 + $0x360] sm:$0xff]
    %v3928 = vld [vmem:[#allocation2 + $0x368] sm:$0xff]
    %v3929 = vld [vmem:[#allocation2 + $0x370] sm:$0x1]
    %v3930 = vlaneseq
    %v3931 = vshrl.u32 %v3930, 7
    %v3932 = vsub.s32 0, %v3931
    %v3933 = vrot.slane %v3929, %v3932
    %3934 = vmatprep.subr.mxu0 0.0
    %3935 = vmatpush1.msra.mxu0 %v3925
    %3936 = vmatprep.subr.mxu0 0.0
    %3937 = vmatpush1.msra.mxu0 %v3926
    %3938 = vmatprep.subr.mxu0 0.0
    %3939 = vmatpush1.msra.mxu0 %v3927
    %3940 = vmatprep.subr.mxu0 0.0
    %3941 = vmatpush1.msra.mxu0 %v3928
    %3942 = vmatprep.subr.mxu0 0.0
    %3943 = vmatpush1.msra.mxu0 0.0
    %3944 = vmatprep.subr.mxu0 0.0
    %3945 = vmatpush1.msra.mxu0 0.0
    %3946 = vmatprep.subr.mxu0 0.0
    %3947 = vmatpush1.msra.mxu0 0.0
    %3948 = vmatprep.subr.mxu0 0.0
    %3949 = vmatpush1.msra.mxu0 0.0
    %3950 = vmatprep.subr.mxu0 0.0
    %3951 = vmatpush1.msra.mxu0 0.0
    %3952 = vmatprep.subr.mxu0 0.0
    %3953 = vmatpush1.msra.mxu0 0.0
    %3954 = vmatprep.subr.mxu0 0.0
    %3955 = vmatpush1.msra.mxu0 0.0
    %3956 = vmatprep.subr.mxu0 0.0
    %3957 = vmatpush1.msra.mxu0 0.0
    %3958 = vmatprep.subr.mxu0 0.0
    %3959 = vmatpush1.msra.mxu0 0.0
    %3960 = vmatprep.subr.mxu0 0.0
    %3961 = vmatpush1.msra.mxu0 0.0
    %3962 = vmatprep.subr.mxu0 0.0
    %3963 = vmatpush1.msra.mxu0 0.0
    %3964 = vmatprep.subr.mxu0 0.0
    %3965 = vmatpush1.msra.mxu0 0.0
    %3966 = vmatprep.subr.mxu0 0.0
    %3967 = vmatpush1.msra.mxu0 0.0
    %3968 = vmatprep.subr.mxu0 0.0
    %3969 = vmatpush1.msra.mxu0 0.0
    %3970 = vmatprep.subr.mxu0 0.0
    %3971 = vmatpush1.msra.mxu0 0.0
    %3972 = vmatprep.subr.mxu0 0.0
    %3973 = vmatpush1.msra.mxu0 0.0
    %3974 = vmatprep.subr.mxu0 0.0
    %3975 = vmatpush1.msra.mxu0 0.0
    %3976 = vmatprep.subr.mxu0 0.0
    %3977 = vmatpush1.msra.mxu0 0.0
    %3978 = vmatprep.subr.mxu0 0.0
    %3979 = vmatpush1.msra.mxu0 0.0
    %3980 = vmatprep.subr.mxu0 0.0
    %3981 = vmatpush1.msra.mxu0 0.0
    %3982 = vmatprep.subr.mxu0 0.0
    %3983 = vmatpush1.msra.mxu0 0.0
    %3984 = vmatprep.subr.mxu0 0.0
    %3985 = vmatpush1.msra.mxu0 0.0
    %3986 = vmatprep.subr.mxu0 0.0
    %3987 = vmatpush1.msra.mxu0 0.0
    %3988 = vmatprep.subr.mxu0 0.0
    %3989 = vmatpush1.msra.mxu0 0.0
    %3990 = vmatprep.subr.mxu0 0.0
    %3991 = vmatpush1.msra.mxu0 0.0
    %3992 = vmatprep.subr.mxu0 0.0
    %3993 = vmatpush1.msra.mxu0 0.0
    %3994 = vmatprep.subr.mxu0 0.0
    %3995 = vmatpush1.msra.mxu0 0.0
    %3996 = vmatprep.subr.mxu0 0.0
    %3997 = vmatpush1.msra.mxu0 0.0
    %3998 = vmatprep.mubr.f32.mxu0 0.0
    %3999 = vmatmul.mubr.f32.gmra.mrb[0].mxu0 %v3846
    %v4000 = vpop.f32.mrb[0].mxu0
    %v4001 = vadd.f32 %v3933, %v4000
    %v4002 = vpop.f32.mrb[0].mxu0
    %4003 = vmatprep.mubr.f32.mxu0 0.0
    %4004 = vmatmul.mubr.f32.gmra.mrb[0].mxu0 %v3848
    %v4005 = vpop.f32.mrb[0].mxu0
    %v4006 = vadd.f32 %v3933, %v4005
    %v4007 = vpop.f32.mrb[0].mxu0
    %4008 = vdwg.mxu0
    %v4009 = vld [vmem:[#allocation2 + $0x378] sm:$0xff]
    %v4010 = vld [vmem:[#allocation2 + $0x380] sm:$0xff]
    %v4011 = vld [vmem:[#allocation2 + $0x388] sm:$0xff]
    %v4012 = vld [vmem:[#allocation2 + $0x390] sm:$0xff]
    %v4013 = vld [vmem:[#allocation2 + $0x398] sm:$0x1]
    %v4014 = vlaneseq
    %v4015 = vshrl.u32 %v4014, 7
    %v4016 = vsub.s32 0, %v4015
    %v4017 = vrot.slane %v4013, %v4016
    %4018 = vmatprep.subr.mxu0 0.0
    %4019 = vmatpush1.msra.mxu0 %v4009
    %4020 = vmatprep.subr.mxu0 0.0
    %4021 = vmatpush1.msra.mxu0 %v4010
    %4022 = vmatprep.subr.mxu0 0.0
    %4023 = vmatpush1.msra.mxu0 %v4011
    %4024 = vmatprep.subr.mxu0 0.0
    %4025 = vmatpush1.msra.mxu0 %v4012
    %4026 = vmatprep.subr.mxu0 0.0
    %4027 = vmatpush1.msra.mxu0 0.0
    %4028 = vmatprep.subr.mxu0 0.0
    %4029 = vmatpush1.msra.mxu0 0.0
    %4030 = vmatprep.subr.mxu0 0.0
    %4031 = vmatpush1.msra.mxu0 0.0
    %4032 = vmatprep.subr.mxu0 0.0
    %4033 = vmatpush1.msra.mxu0 0.0
    %4034 = vmatprep.subr.mxu0 0.0
    %4035 = vmatpush1.msra.mxu0 0.0
    %4036 = vmatprep.subr.mxu0 0.0
    %4037 = vmatpush1.msra.mxu0 0.0
    %4038 = vmatprep.subr.mxu0 0.0
    %4039 = vmatpush1.msra.mxu0 0.0
    %4040 = vmatprep.subr.mxu0 0.0
    %4041 = vmatpush1.msra.mxu0 0.0
    %4042 = vmatprep.subr.mxu0 0.0
    %4043 = vmatpush1.msra.mxu0 0.0
    %4044 = vmatprep.subr.mxu0 0.0
    %4045 = vmatpush1.msra.mxu0 0.0
    %4046 = vmatprep.subr.mxu0 0.0
    %4047 = vmatpush1.msra.mxu0 0.0
    %4048 = vmatprep.subr.mxu0 0.0
    %4049 = vmatpush1.msra.mxu0 0.0
    %4050 = vmatprep.subr.mxu0 0.0
    %4051 = vmatpush1.msra.mxu0 0.0
    %4052 = vmatprep.subr.mxu0 0.0
    %4053 = vmatpush1.msra.mxu0 0.0
    %4054 = vmatprep.subr.mxu0 0.0
    %4055 = vmatpush1.msra.mxu0 0.0
    %4056 = vmatprep.subr.mxu0 0.0
    %4057 = vmatpush1.msra.mxu0 0.0
    %4058 = vmatprep.subr.mxu0 0.0
    %4059 = vmatpush1.msra.mxu0 0.0
    %4060 = vmatprep.subr.mxu0 0.0
    %4061 = vmatpush1.msra.mxu0 0.0
    %4062 = vmatprep.subr.mxu0 0.0
    %4063 = vmatpush1.msra.mxu0 0.0
    %4064 = vmatprep.subr.mxu0 0.0
    %4065 = vmatpush1.msra.mxu0 0.0
    %4066 = vmatprep.subr.mxu0 0.0
    %4067 = vmatpush1.msra.mxu0 0.0
    %4068 = vmatprep.subr.mxu0 0.0
    %4069 = vmatpush1.msra.mxu0 0.0
    %4070 = vmatprep.subr.mxu0 0.0
    %4071 = vmatpush1.msra.mxu0 0.0
    %4072 = vmatprep.subr.mxu0 0.0
    %4073 = vmatpush1.msra.mxu0 0.0
    %4074 = vmatprep.subr.mxu0 0.0
    %4075 = vmatpush1.msra.mxu0 0.0
    %4076 = vmatprep.subr.mxu0 0.0
    %4077 = vmatpush1.msra.mxu0 0.0
    %4078 = vmatprep.subr.mxu0 0.0
    %4079 = vmatpush1.msra.mxu0 0.0
    %4080 = vmatprep.subr.mxu0 0.0
    %4081 = vmatpush1.msra.mxu0 0.0
    %4082 = vmatprep.mubr.f32.mxu0 0.0
    %4083 = vmatmul.mubr.f32.gmra.mrb[0].mxu0 %v3846
    %v4084 = vpop.f32.mrb[0].mxu0
    %v4085 = vadd.f32 %v4017, %v4084
    %v4086 = vpop.f32.mrb[0].mxu0
    %4087 = vmatprep.mubr.f32.mxu0 0.0
    %4088 = vmatmul.mubr.f32.gmra.mrb[0].mxu0 %v3848
    %v4089 = vpop.f32.mrb[0].mxu0
    %v4090 = vadd.f32 %v4017, %v4089
    %v4091 = vpop.f32.mrb[0].mxu0
    %4092 = vdwg.mxu0
    %v4094 = vsel %vm35, %v3829, 0
    %v4097 = vsel %vm35, %v3830, 0
    %4099 = vmatprep.subr.mxu0 0.0
    %4100 = vmatpush1.msra.mxu0 %v4001
    %4101 = vmatprep.subr.mxu0 0.0
    %4102 = vmatpush1.msra.mxu0 %v4006
    %4103 = vmatprep.subr.mxu0 0.0
    %4104 = vmatpush1.msra.mxu0 0.0
    %4105 = vmatprep.subr.mxu0 0.0
    %4106 = vmatpush1.msra.mxu0 0.0
    %4107 = vmatprep.subr.mxu0 0.0
    %4108 = vmatpush1.msra.mxu0 0.0
    %4109 = vmatprep.subr.mxu0 0.0
    %4110 = vmatpush1.msra.mxu0 0.0
    %4111 = vmatprep.subr.mxu0 0.0
    %4112 = vmatpush1.msra.mxu0 0.0
    %4113 = vmatprep.subr.mxu0 0.0
    %4114 = vmatpush1.msra.mxu0 0.0
    %4115 = vmatprep.subr.mxu0 0.0
    %4116 = vmatpush1.msra.mxu0 0.0
    %4117 = vmatprep.subr.mxu0 0.0
    %4118 = vmatpush1.msra.mxu0 0.0
    %4119 = vmatprep.subr.mxu0 0.0
    %4120 = vmatpush1.msra.mxu0 0.0
    %4121 = vmatprep.subr.mxu0 0.0
    %4122 = vmatpush1.msra.mxu0 0.0
    %4123 = vmatprep.subr.mxu0 0.0
    %4124 = vmatpush1.msra.mxu0 0.0
    %4125 = vmatprep.subr.mxu0 0.0
    %4126 = vmatpush1.msra.mxu0 0.0
    %4127 = vmatprep.subr.mxu0 0.0
    %4128 = vmatpush1.msra.mxu0 0.0
    %4129 = vmatprep.subr.mxu0 0.0
    %4130 = vmatpush1.msra.mxu0 0.0
    %4131 = vmatprep.subr.mxu0 0.0
    %4132 = vmatpush1.msra.mxu0 0.0
    %4133 = vmatprep.subr.mxu0 0.0
    %4134 = vmatpush1.msra.mxu0 0.0
    %4135 = vmatprep.subr.mxu0 0.0
    %4136 = vmatpush1.msra.mxu0 0.0
    %4137 = vmatprep.subr.mxu0 0.0
    %4138 = vmatpush1.msra.mxu0 0.0
    %4139 = vmatprep.subr.mxu0 0.0
    %4140 = vmatpush1.msra.mxu0 0.0
    %4141 = vmatprep.subr.mxu0 0.0
    %4142 = vmatpush1.msra.mxu0 0.0
    %4143 = vmatprep.subr.mxu0 0.0
    %4144 = vmatpush1.msra.mxu0 0.0
    %4145 = vmatprep.subr.mxu0 0.0
    %4146 = vmatpush1.msra.mxu0 0.0
    %4147 = vmatprep.subr.mxu0 0.0
    %4148 = vmatpush1.msra.mxu0 0.0
    %4149 = vmatprep.subr.mxu0 0.0
    %4150 = vmatpush1.msra.mxu0 0.0
    %4151 = vmatprep.subr.mxu0 0.0
    %4152 = vmatpush1.msra.mxu0 0.0
    %4153 = vmatprep.subr.mxu0 0.0
    %4154 = vmatpush1.msra.mxu0 0.0
    %4155 = vmatprep.subr.mxu0 0.0
    %4156 = vmatpush1.msra.mxu0 0.0
    %4157 = vmatprep.subr.mxu0 0.0
    %4158 = vmatpush1.msra.mxu0 0.0
    %4159 = vmatprep.subr.mxu0 0.0
    %4160 = vmatpush1.msra.mxu0 0.0
    %4161 = vmatprep.subr.mxu0 0.0
    %4162 = vmatpush1.msra.mxu0 0.0
    %4163 = vmatprep.mubr.f32.mxu0 0.0
    %4164 = vmatmul.mubr.f32.gmra.mrb[0].mxu0 %v4094
    %v4165 = vpop.f32.mrb[0].mxu0
    %v4166 = vadd.f32 0.0, %v4165
    %v4167 = vpop.f32.mrb[0].mxu0
    %4168 = vmatprep.mubr.f32.mxu0 0.0
    %4169 = vmatmul.mubr.f32.gmra.mrb[0].mxu0 %v4097
    %v4170 = vpop.f32.mrb[0].mxu0
    %v4171 = vadd.f32 0.0, %v4170
    %v4172 = vpop.f32.mrb[0].mxu0
    %4173 = vdwg.mxu0
    %4174 = vmatprep.subr.mxu0 0.0
    %4175 = vmatpush1.msra.mxu0 %v4085
    %4176 = vmatprep.subr.mxu0 0.0
    %4177 = vmatpush1.msra.mxu0 %v4090
    %4178 = vmatprep.subr.mxu0 0.0
    %4179 = vmatpush1.msra.mxu0 0.0
    %4180 = vmatprep.subr.mxu0 0.0
    %4181 = vmatpush1.msra.mxu0 0.0
    %4182 = vmatprep.subr.mxu0 0.0
    %4183 = vmatpush1.msra.mxu0 0.0
    %4184 = vmatprep.subr.mxu0 0.0
    %4185 = vmatpush1.msra.mxu0 0.0
    %4186 = vmatprep.subr.mxu0 0.0
    %4187 = vmatpush1.msra.mxu0 0.0
    %4188 = vmatprep.subr.mxu0 0.0
    %4189 = vmatpush1.msra.mxu0 0.0
    %4190 = vmatprep.subr.mxu0 0.0
    %4191 = vmatpush1.msra.mxu0 0.0
    %4192 = vmatprep.subr.mxu0 0.0
    %4193 = vmatpush1.msra.mxu0 0.0
    %4194 = vmatprep.subr.mxu0 0.0
    %4195 = vmatpush1.msra.mxu0 0.0
    %4196 = vmatprep.subr.mxu0 0.0
    %4197 = vmatpush1.msra.mxu0 0.0
    %4198 = vmatprep.subr.mxu0 0.0
    %4199 = vmatpush1.msra.mxu0 0.0
    %4200 = vmatprep.subr.mxu0 0.0
    %4201 = vmatpush1.msra.mxu0 0.0
    %4202 = vmatprep.subr.mxu0 0.0
    %4203 = vmatpush1.msra.mxu0 0.0
    %4204 = vmatprep.subr.mxu0 0.0
    %4205 = vmatpush1.msra.mxu0 0.0
    %4206 = vmatprep.subr.mxu0 0.0
    %4207 = vmatpush1.msra.mxu0 0.0
    %4208 = vmatprep.subr.mxu0 0.0
    %4209 = vmatpush1.msra.mxu0 0.0
    %4210 = vmatprep.subr.mxu0 0.0
    %4211 = vmatpush1.msra.mxu0 0.0
    %4212 = vmatprep.subr.mxu0 0.0
    %4213 = vmatpush1.msra.mxu0 0.0
    %4214 = vmatprep.subr.mxu0 0.0
    %4215 = vmatpush1.msra.mxu0 0.0
    %4216 = vmatprep.subr.mxu0 0.0
    %4217 = vmatpush1.msra.mxu0 0.0
    %4218 = vmatprep.subr.mxu0 0.0
    %4219 = vmatpush1.msra.mxu0 0.0
    %4220 = vmatprep.subr.mxu0 0.0
    %4221 = vmatpush1.msra.mxu0 0.0
    %4222 = vmatprep.subr.mxu0 0.0
    %4223 = vmatpush1.msra.mxu0 0.0
    %4224 = vmatprep.subr.mxu0 0.0
    %4225 = vmatpush1.msra.mxu0 0.0
    %4226 = vmatprep.subr.mxu0 0.0
    %4227 = vmatpush1.msra.mxu0 0.0
    %4228 = vmatprep.subr.mxu0 0.0
    %4229 = vmatpush1.msra.mxu0 0.0
    %4230 = vmatprep.subr.mxu0 0.0
    %4231 = vmatpush1.msra.mxu0 0.0
    %4232 = vmatprep.subr.mxu0 0.0
    %4233 = vmatpush1.msra.mxu0 0.0
    %4234 = vmatprep.subr.mxu0 0.0
    %4235 = vmatpush1.msra.mxu0 0.0
    %4236 = vmatprep.subr.mxu0 0.0
    %4237 = vmatpush1.msra.mxu0 0.0
    %4238 = vmatprep.mubr.f32.mxu0 0.0
    %4239 = vmatmul.mubr.f32.gmra.mrb[0].mxu0 %v4094
    %v4240 = vpop.f32.mrb[0].mxu0
    %v4241 = vadd.f32 0.0, %v4240
    %v4242 = vpop.f32.mrb[0].mxu0
    %4243 = vmatprep.mubr.f32.mxu0 0.0
    %4244 = vmatmul.mubr.f32.gmra.mrb[0].mxu0 %v4097
    %v4245 = vpop.f32.mrb[0].mxu0
    %v4246 = vadd.f32 0.0, %v4245
    %v4247 = vpop.f32.mrb[0].mxu0
    %4248 = vdwg.mxu0
    %v4249 = vmul.f32 %v3917, %v4001
    %v4250 = vmul.f32 %v3922, %v4006
    %v4252 = vsel %vm135, %v4249, 0
    %v4255 = vsel %vm135, %v4250, 0
    %4257 = vmatprep.subr.mxu0 0.0
    %4258 = vmatpush1.msra.mxu0 %v3824
    %4259 = vmatprep.subr.mxu0 0.0
    %4260 = vmatpush1.msra.mxu0 %v3825
    %4261 = vmatprep.subr.mxu0 0.0
    %4262 = vmatpush1.msra.mxu0 %v3826
    %4263 = vmatprep.subr.mxu0 0.0
    %4264 = vmatpush1.msra.mxu0 %v3827
    %4265 = vmatprep.subr.mxu0 0.0
    %4266 = vmatpush1.msra.mxu0 0.0
    %4267 = vmatprep.subr.mxu0 0.0
    %4268 = vmatpush1.msra.mxu0 0.0
    %4269 = vmatprep.subr.mxu0 0.0
    %4270 = vmatpush1.msra.mxu0 0.0
    %4271 = vmatprep.subr.mxu0 0.0
    %4272 = vmatpush1.msra.mxu0 0.0
    %4273 = vmatprep.subr.mxu0 0.0
    %4274 = vmatpush1.msra.mxu0 0.0
    %4275 = vmatprep.subr.mxu0 0.0
    %4276 = vmatpush1.msra.mxu0 0.0
    %4277 = vmatprep.subr.mxu0 0.0
    %4278 = vmatpush1.msra.mxu0 0.0
    %4279 = vmatprep.subr.mxu0 0.0
    %4280 = vmatpush1.msra.mxu0 0.0
    %4281 = vmatprep.subr.mxu0 0.0
    %4282 = vmatpush1.msra.mxu0 0.0
    %4283 = vmatprep.subr.mxu0 0.0
    %4284 = vmatpush1.msra.mxu0 0.0
    %4285 = vmatprep.subr.mxu0 0.0
    %4286 = vmatpush1.msra.mxu0 0.0
    %4287 = vmatprep.subr.mxu0 0.0
    %4288 = vmatpush1.msra.mxu0 0.0
    %4289 = vmatprep.subr.mxu0 0.0
    %4290 = vmatpush1.msra.mxu0 0.0
    %4291 = vmatprep.subr.mxu0 0.0
    %4292 = vmatpush1.msra.mxu0 0.0
    %4293 = vmatprep.subr.mxu0 0.0
    %4294 = vmatpush1.msra.mxu0 0.0
    %4295 = vmatprep.subr.mxu0 0.0
    %4296 = vmatpush1.msra.mxu0 0.0
    %4297 = vmatprep.subr.mxu0 0.0
    %4298 = vmatpush1.msra.mxu0 0.0
    %4299 = vmatprep.subr.mxu0 0.0
    %4300 = vmatpush1.msra.mxu0 0.0
    %4301 = vmatprep.subr.mxu0 0.0
    %4302 = vmatpush1.msra.mxu0 0.0
    %4303 = vmatprep.subr.mxu0 0.0
    %4304 = vmatpush1.msra.mxu0 0.0
    %4305 = vmatprep.subr.mxu0 0.0
    %4306 = vmatpush1.msra.mxu0 0.0
    %4307 = vmatprep.subr.mxu0 0.0
    %4308 = vmatpush1.msra.mxu0 0.0
    %4309 = vmatprep.subr.mxu0 0.0
    %4310 = vmatpush1.msra.mxu0 0.0
    %4311 = vmatprep.subr.mxu0 0.0
    %4312 = vmatpush1.msra.mxu0 0.0
    %4313 = vmatprep.subr.mxu0 0.0
    %4314 = vmatpush1.msra.mxu0 0.0
    %4315 = vmatprep.subr.mxu0 0.0
    %4316 = vmatpush1.msra.mxu0 0.0
    %4317 = vmatprep.subr.mxu0 0.0
    %4318 = vmatpush1.msra.mxu0 0.0
    %4319 = vmatprep.subr.mxu0 0.0
    %4320 = vmatpush1.msra.mxu0 0.0
    %4321 = vmatprep.mubr.f32.mxu0 0.0
    %4322 = vmatmul.mubr.f32.gmra.mrb[0].mxu0 %v4252
    %v4323 = vpop.f32.mrb[0].mxu0
    %v4324 = vadd.f32 0.0, %v4323
    %v4325 = vpop.f32.mrb[0].mxu0
    %4326 = vmatprep.mubr.f32.mxu0 0.0
    %4327 = vmatmul.mubr.f32.gmra.mrb[0].mxu0 %v4255
    %v4328 = vpop.f32.mrb[0].mxu0
    %v4329 = vadd.f32 0.0, %v4328
    %v4330 = vpop.f32.mrb[0].mxu0
    %4331 = vdwg.mxu0
    %v4332 = vmul.f32 %v3917, %v4166
    %v4333 = vmul.f32 %v3922, %v4171
    %v4335 = vsel %vm135, %v4332, 0
    %v4338 = vsel %vm135, %v4333, 0
    %4340 = vmatprep.subr.mxu0 0.0
    %4341 = vmatpush1.msra.mxu0 %v3824
    %4342 = vmatprep.subr.mxu0 0.0
    %4343 = vmatpush1.msra.mxu0 %v3825
    %4344 = vmatprep.subr.mxu0 0.0
    %4345 = vmatpush1.msra.mxu0 %v3826
    %4346 = vmatprep.subr.mxu0 0.0
    %4347 = vmatpush1.msra.mxu0 %v3827
    %4348 = vmatprep.subr.mxu0 0.0
    %4349 = vmatpush1.msra.mxu0 0.0
    %4350 = vmatprep.subr.mxu0 0.0
    %4351 = vmatpush1.msra.mxu0 0.0
    %4352 = vmatprep.subr.mxu0 0.0
    %4353 = vmatpush1.msra.mxu0 0.0
    %4354 = vmatprep.subr.mxu0 0.0
    %4355 = vmatpush1.msra.mxu0 0.0
    %4356 = vmatprep.subr.mxu0 0.0
    %4357 = vmatpush1.msra.mxu0 0.0
    %4358 = vmatprep.subr.mxu0 0.0
    %4359 = vmatpush1.msra.mxu0 0.0
    %4360 = vmatprep.subr.mxu0 0.0
    %4361 = vmatpush1.msra.mxu0 0.0
    %4362 = vmatprep.subr.mxu0 0.0
    %4363 = vmatpush1.msra.mxu0 0.0
    %4364 = vmatprep.subr.mxu0 0.0
    %4365 = vmatpush1.msra.mxu0 0.0
    %4366 = vmatprep.subr.mxu0 0.0
    %4367 = vmatpush1.msra.mxu0 0.0
    %4368 = vmatprep.subr.mxu0 0.0
    %4369 = vmatpush1.msra.mxu0 0.0
    %4370 = vmatprep.subr.mxu0 0.0
    %4371 = vmatpush1.msra.mxu0 0.0
    %4372 = vmatprep.subr.mxu0 0.0
    %4373 = vmatpush1.msra.mxu0 0.0
    %4374 = vmatprep.subr.mxu0 0.0
    %4375 = vmatpush1.msra.mxu0 0.0
    %4376 = vmatprep.subr.mxu0 0.0
    %4377 = vmatpush1.msra.mxu0 0.0
    %4378 = vmatprep.subr.mxu0 0.0
    %4379 = vmatpush1.msra.mxu0 0.0
    %4380 = vmatprep.subr.mxu0 0.0
    %4381 = vmatpush1.msra.mxu0 0.0
    %4382 = vmatprep.subr.mxu0 0.0
    %4383 = vmatpush1.msra.mxu0 0.0
    %4384 = vmatprep.subr.mxu0 0.0
    %4385 = vmatpush1.msra.mxu0 0.0
    %4386 = vmatprep.subr.mxu0 0.0
    %4387 = vmatpush1.msra.mxu0 0.0
    %4388 = vmatprep.subr.mxu0 0.0
    %4389 = vmatpush1.msra.mxu0 0.0
    %4390 = vmatprep.subr.mxu0 0.0
    %4391 = vmatpush1.msra.mxu0 0.0
    %4392 = vmatprep.subr.mxu0 0.0
    %4393 = vmatpush1.msra.mxu0 0.0
    %4394 = vmatprep.subr.mxu0 0.0
    %4395 = vmatpush1.msra.mxu0 0.0
    %4396 = vmatprep.subr.mxu0 0.0
    %4397 = vmatpush1.msra.mxu0 0.0
    %4398 = vmatprep.subr.mxu0 0.0
    %4399 = vmatpush1.msra.mxu0 0.0
    %4400 = vmatprep.subr.mxu0 0.0
    %4401 = vmatpush1.msra.mxu0 0.0
    %4402 = vmatprep.subr.mxu0 0.0
    %4403 = vmatpush1.msra.mxu0 0.0
    %4404 = vmatprep.mubr.f32.mxu0 0.0
    %4405 = vmatmul.mubr.f32.gmra.mrb[0].mxu0 %v4335
    %v4406 = vpop.f32.mrb[0].mxu0
    %v4407 = vadd.f32 0.0, %v4406
    %v4408 = vpop.f32.mrb[0].mxu0
    %4409 = vmatprep.mubr.f32.mxu0 0.0
    %4410 = vmatmul.mubr.f32.gmra.mrb[0].mxu0 %v4338
    %v4411 = vpop.f32.mrb[0].mxu0
    %v4412 = vadd.f32 0.0, %v4411
    %v4413 = vpop.f32.mrb[0].mxu0
    %4414 = vdwg.mxu0
    %v4415 = vmax.f32 %v4324, %v4407
    %v4416 = vmax.f32 %v4329, %v4412
    %v4417 = vsub.f32 %v4324, %v4415
    %v4418 = vsub.f32 %v4329, %v4416
    %v4419 = vmul.f32 %v4417, 1.442695
    %v4420 = vpow.pop %v4419
    %v4421 = vmul.f32 %v4418, 1.442695
    %v4422 = vpow.pop %v4421
    %v4423 = vsub.f32 %v4407, %v4415
    %v4424 = vsub.f32 %v4412, %v4416
    %v4425 = vmul.f32 %v4423, 1.442695
    %v4426 = vpow.pop %v4425
    %v4427 = vmul.f32 %v4424, 1.442695
    %v4428 = vpow.pop %v4427
    %v4429 = vadd.f32 %v4420, %v4426
    %v4430 = vadd.f32 %v4422, %v4428
    %v4431 = vrcp.pop %v4429
    %v4432 = vmul.f32 %v4420, %v4431
    %v4433 = vrcp.pop %v4430
    %v4434 = vmul.f32 %v4422, %v4433
    %vm4435 = vcmask 64512
    %v4437 = vsel %vm4435, %v4432, 0
    %v4440 = vsel %vm4435, %v4434, 0
    %4442 = vmatprep.subr.mxu0 0.0
    %4443 = vmatpush1.msra.mxu0 %v3828
    %4444 = vmatprep.subr.mxu0 0.0
    %4445 = vmatpush1.msra.mxu0 0.0
    %4446 = vmatprep.subr.mxu0 0.0
    %4447 = vmatpush1.msra.mxu0 0.0
    %4448 = vmatprep.subr.mxu0 0.0
    %4449 = vmatpush1.msra.mxu0 0.0
    %4450 = vmatprep.subr.mxu0 0.0
    %4451 = vmatpush1.msra.mxu0 0.0
    %4452 = vmatprep.subr.mxu0 0.0
    %4453 = vmatpush1.msra.mxu0 0.0
    %4454 = vmatprep.subr.mxu0 0.0
    %4455 = vmatpush1.msra.mxu0 0.0
    %4456 = vmatprep.subr.mxu0 0.0
    %4457 = vmatpush1.msra.mxu0 0.0
    %4458 = vmatprep.subr.mxu0 0.0
    %4459 = vmatpush1.msra.mxu0 0.0
    %4460 = vmatprep.subr.mxu0 0.0
    %4461 = vmatpush1.msra.mxu0 0.0
    %4462 = vmatprep.subr.mxu0 0.0
    %4463 = vmatpush1.msra.mxu0 0.0
    %4464 = vmatprep.subr.mxu0 0.0
    %4465 = vmatpush1.msra.mxu0 0.0
    %4466 = vmatprep.subr.mxu0 0.0
    %4467 = vmatpush1.msra.mxu0 0.0
    %4468 = vmatprep.subr.mxu0 0.0
    %4469 = vmatpush1.msra.mxu0 0.0
    %4470 = vmatprep.subr.mxu0 0.0
    %4471 = vmatpush1.msra.mxu0 0.0
    %4472 = vmatprep.subr.mxu0 0.0
    %4473 = vmatpush1.msra.mxu0 0.0
    %4474 = vmatprep.subr.mxu0 0.0
    %4475 = vmatpush1.msra.mxu0 0.0
    %4476 = vmatprep.subr.mxu0 0.0
    %4477 = vmatpush1.msra.mxu0 0.0
    %4478 = vmatprep.subr.mxu0 0.0
    %4479 = vmatpush1.msra.mxu0 0.0
    %4480 = vmatprep.subr.mxu0 0.0
    %4481 = vmatpush1.msra.mxu0 0.0
    %4482 = vmatprep.subr.mxu0 0.0
    %4483 = vmatpush1.msra.mxu0 0.0
    %4484 = vmatprep.subr.mxu0 0.0
    %4485 = vmatpush1.msra.mxu0 0.0
    %4486 = vmatprep.subr.mxu0 0.0
    %4487 = vmatpush1.msra.mxu0 0.0
    %4488 = vmatprep.subr.mxu0 0.0
    %4489 = vmatpush1.msra.mxu0 0.0
    %4490 = vmatprep.subr.mxu0 0.0
    %4491 = vmatpush1.msra.mxu0 0.0
    %4492 = vmatprep.subr.mxu0 0.0
    %4493 = vmatpush1.msra.mxu0 0.0
    %4494 = vmatprep.subr.mxu0 0.0
    %4495 = vmatpush1.msra.mxu0 0.0
    %4496 = vmatprep.subr.mxu0 0.0
    %4497 = vmatpush1.msra.mxu0 0.0
    %4498 = vmatprep.subr.mxu0 0.0
    %4499 = vmatpush1.msra.mxu0 0.0
    %4500 = vmatprep.subr.mxu0 0.0
    %4501 = vmatpush1.msra.mxu0 0.0
    %4502 = vmatprep.subr.mxu0 0.0
    %4503 = vmatpush1.msra.mxu0 0.0
    %4504 = vmatprep.subr.mxu0 0.0
    %4505 = vmatpush1.msra.mxu0 0.0
    %4506 = vmatprep.mubr.f32.mxu0 0.0
    %4507 = vmatmul.mubr.f32.gmra.mrb[0].mxu0 %v4437
    %v4508 = vpop.f32.mrb[0].mxu0
    %v4509 = vadd.f32 0.0, %v4508
    %v4510 = vpop.f32.mrb[0].mxu0
    %4511 = vmatprep.mubr.f32.mxu0 0.0
    %4512 = vmatmul.mubr.f32.gmra.mrb[0].mxu0 %v4440
    %v4513 = vpop.f32.mrb[0].mxu0
    %v4514 = vadd.f32 0.0, %v4513
    %v4515 = vpop.f32.mrb[0].mxu0
    %4516 = vdwg.mxu0
    %v4517 = vmul.f32 %v4509, %v4085
    %v4518 = vmul.f32 %v4514, %v4090
    %v4519 = vmul.f32 %v4426, %v4431
    %v4520 = vmul.f32 %v4428, %v4433
    %v4522 = vsel %vm4435, %v4519, 0
    %v4525 = vsel %vm4435, %v4520, 0
    %4527 = vmatprep.subr.mxu0 0.0
    %4528 = vmatpush1.msra.mxu0 %v3828
    %4529 = vmatprep.subr.mxu0 0.0
    %4530 = vmatpush1.msra.mxu0 0.0
    %4531 = vmatprep.subr.mxu0 0.0
    %4532 = vmatpush1.msra.mxu0 0.0
    %4533 = vmatprep.subr.mxu0 0.0
    %4534 = vmatpush1.msra.mxu0 0.0
    %4535 = vmatprep.subr.mxu0 0.0
    %4536 = vmatpush1.msra.mxu0 0.0
    %4537 = vmatprep.subr.mxu0 0.0
    %4538 = vmatpush1.msra.mxu0 0.0
    %4539 = vmatprep.subr.mxu0 0.0
    %4540 = vmatpush1.msra.mxu0 0.0
    %4541 = vmatprep.subr.mxu0 0.0
    %4542 = vmatpush1.msra.mxu0 0.0
    %4543 = vmatprep.subr.mxu0 0.0
    %4544 = vmatpush1.msra.mxu0 0.0
    %4545 = vmatprep.subr.mxu0 0.0
    %4546 = vmatpush1.msra.mxu0 0.0
    %4547 = vmatprep.subr.mxu0 0.0
    %4548 = vmatpush1.msra.mxu0 0.0
    %4549 = vmatprep.subr.mxu0 0.0
    %4550 = vmatpush1.msra.mxu0 0.0
    %4551 = vmatprep.subr.mxu0 0.0
    %4552 = vmatpush1.msra.mxu0 0.0
    %4553 = vmatprep.subr.mxu0 0.0
    %4554 = vmatpush1.msra.mxu0 0.0
    %4555 = vmatprep.subr.mxu0 0.0
    %4556 = vmatpush1.msra.mxu0 0.0
    %4557 = vmatprep.subr.mxu0 0.0
    %4558 = vmatpush1.msra.mxu0 0.0
    %4559 = vmatprep.subr.mxu0 0.0
    %4560 = vmatpush1.msra.mxu0 0.0
    %4561 = vmatprep.subr.mxu0 0.0
    %4562 = vmatpush1.msra.mxu0 0.0
    %4563 = vmatprep.subr.mxu0 0.0
    %4564 = vmatpush1.msra.mxu0 0.0
    %4565 = vmatprep.subr.mxu0 0.0
    %4566 = vmatpush1.msra.mxu0 0.0
    %4567 = vmatprep.subr.mxu0 0.0
    %4568 = vmatpush1.msra.mxu0 0.0
    %4569 = vmatprep.subr.mxu0 0.0
    %4570 = vmatpush1.msra.mxu0 0.0
    %4571 = vmatprep.subr.mxu0 0.0
    %4572 = vmatpush1.msra.mxu0 0.0
    %4573 = vmatprep.subr.mxu0 0.0
    %4574 = vmatpush1.msra.mxu0 0.0
    %4575 = vmatprep.subr.mxu0 0.0
    %4576 = vmatpush1.msra.mxu0 0.0
    %4577 = vmatprep.subr.mxu0 0.0
    %4578 = vmatpush1.msra.mxu0 0.0
    %4579 = vmatprep.subr.mxu0 0.0
    %4580 = vmatpush1.msra.mxu0 0.0
    %4581 = vmatprep.subr.mxu0 0.0
    %4582 = vmatpush1.msra.mxu0 0.0
    %4583 = vmatprep.subr.mxu0 0.0
    %4584 = vmatpush1.msra.mxu0 0.0
    %4585 = vmatprep.subr.mxu0 0.0
    %4586 = vmatpush1.msra.mxu0 0.0
    %4587 = vmatprep.subr.mxu0 0.0
    %4588 = vmatpush1.msra.mxu0 0.0
    %4589 = vmatprep.subr.mxu0 0.0
    %4590 = vmatpush1.msra.mxu0 0.0
    %4591 = vmatprep.mubr.f32.mxu0 0.0
    %4592 = vmatmul.mubr.f32.gmra.mrb[0].mxu0 %v4522
    %v4593 = vpop.f32.mrb[0].mxu0
    %v4594 = vadd.f32 0.0, %v4593
    %v4595 = vpop.f32.mrb[0].mxu0
    %4596 = vmatprep.mubr.f32.mxu0 0.0
    %4597 = vmatmul.mubr.f32.gmra.mrb[0].mxu0 %v4525
    %v4598 = vpop.f32.mrb[0].mxu0
    %v4599 = vadd.f32 0.0, %v4598
    %v4600 = vpop.f32.mrb[0].mxu0
    %4601 = vdwg.mxu0
    %v4602 = vmul.f32 %v4594, %v4241
    %v4603 = vmul.f32 %v4599, %v4246
    %v4604 = vadd.f32 %v4517, %v4602
    %v4605 = vadd.f32 %v4518, %v4603
    %v4606 = vld [vmem:[#allocation2 + $0x3a0] sm:$0xff]
    %v4607 = vld [vmem:[#allocation2 + $0x3a8] sm:$0xff]
    %v4608 = vld [vmem:[#allocation2 + $0x3b0] sm:$0xff]
    %v4609 = vld [vmem:[#allocation2 + $0x3b8] sm:$0xff]
    %v4610 = vld [vmem:[#allocation2 + $0x3c0] sm:$0x1]
    %v4611 = vlaneseq
    %v4612 = vshrl.u32 %v4611, 7
    %v4613 = vsub.s32 0, %v4612
    %v4614 = vrot.slane %v4610, %v4613
    %v4616 = vsel %vm135, %v4604, 0
    %v4619 = vsel %vm135, %v4605, 0
    %4621 = vmatprep.subr.mxu0 0.0
    %4622 = vmatpush1.msra.mxu0 %v4606
    %4623 = vmatprep.subr.mxu0 0.0
    %4624 = vmatpush1.msra.mxu0 %v4607
    %4625 = vmatprep.subr.mxu0 0.0
    %4626 = vmatpush1.msra.mxu0 %v4608
    %4627 = vmatprep.subr.mxu0 0.0
    %4628 = vmatpush1.msra.mxu0 %v4609
    %4629 = vmatprep.subr.mxu0 0.0
    %4630 = vmatpush1.msra.mxu0 0.0
    %4631 = vmatprep.subr.mxu0 0.0
    %4632 = vmatpush1.msra.mxu0 0.0
    %4633 = vmatprep.subr.mxu0 0.0
    %4634 = vmatpush1.msra.mxu0 0.0
    %4635 = vmatprep.subr.mxu0 0.0
    %4636 = vmatpush1.msra.mxu0 0.0
    %4637 = vmatprep.subr.mxu0 0.0
    %4638 = vmatpush1.msra.mxu0 0.0
    %4639 = vmatprep.subr.mxu0 0.0
    %4640 = vmatpush1.msra.mxu0 0.0
    %4641 = vmatprep.subr.mxu0 0.0
    %4642 = vmatpush1.msra.mxu0 0.0
    %4643 = vmatprep.subr.mxu0 0.0
    %4644 = vmatpush1.msra.mxu0 0.0
    %4645 = vmatprep.subr.mxu0 0.0
    %4646 = vmatpush1.msra.mxu0 0.0
    %4647 = vmatprep.subr.mxu0 0.0
    %4648 = vmatpush1.msra.mxu0 0.0
    %4649 = vmatprep.subr.mxu0 0.0
    %4650 = vmatpush1.msra.mxu0 0.0
    %4651 = vmatprep.subr.mxu0 0.0
    %4652 = vmatpush1.msra.mxu0 0.0
    %4653 = vmatprep.subr.mxu0 0.0
    %4654 = vmatpush1.msra.mxu0 0.0
    %4655 = vmatprep.subr.mxu0 0.0
    %4656 = vmatpush1.msra.mxu0 0.0
    %4657 = vmatprep.subr.mxu0 0.0
    %4658 = vmatpush1.msra.mxu0 0.0
    %4659 = vmatprep.subr.mxu0 0.0
    %4660 = vmatpush1.msra.mxu0 0.0
    %4661 = vmatprep.subr.mxu0 0.0
    %4662 = vmatpush1.msra.mxu0 0.0
    %4663 = vmatprep.subr.mxu0 0.0
    %4664 = vmatpush1.msra.mxu0 0.0
    %4665 = vmatprep.subr.mxu0 0.0
    %4666 = vmatpush1.msra.mxu0 0.0
    %4667 = vmatprep.subr.mxu0 0.0
    %4668 = vmatpush1.msra.mxu0 0.0
    %4669 = vmatprep.subr.mxu0 0.0
    %4670 = vmatpush1.msra.mxu0 0.0
    %4671 = vmatprep.subr.mxu0 0.0
    %4672 = vmatpush1.msra.mxu0 0.0
    %4673 = vmatprep.subr.mxu0 0.0
    %4674 = vmatpush1.msra.mxu0 0.0
    %4675 = vmatprep.subr.mxu0 0.0
    %4676 = vmatpush1.msra.mxu0 0.0
    %4677 = vmatprep.subr.mxu0 0.0
    %4678 = vmatpush1.msra.mxu0 0.0
    %4679 = vmatprep.subr.mxu0 0.0
    %4680 = vmatpush1.msra.mxu0 0.0
    %4681 = vmatprep.subr.mxu0 0.0
    %4682 = vmatpush1.msra.mxu0 0.0
    %4683 = vmatprep.subr.mxu0 0.0
    %4684 = vmatpush1.msra.mxu0 0.0
    %4685 = vmatprep.mubr.f32.mxu0 0.0
    %4686 = vmatmul.mubr.f32.gmra.mrb[0].mxu0 %v4616
    %v4687 = vpop.f32.mrb[0].mxu0
    %v4688 = vadd.f32 %v4614, %v4687
    %v4689 = vpop.f32.mrb[0].mxu0
    %4690 = vmatprep.mubr.f32.mxu0 0.0
    %4691 = vmatmul.mubr.f32.gmra.mrb[0].mxu0 %v4619
    %v4692 = vpop.f32.mrb[0].mxu0
    %v4693 = vadd.f32 %v4614, %v4692
    %v4694 = vpop.f32.mrb[0].mxu0
    %4695 = vdwg.mxu0
    %4698 = vrot.lane.b32.xlu0 %v4688, 96
    %v4699 = vpop.permute.xlu0 %4698
    %4700 = vrot.lane.b32.xlu0 %v4693, 96
    %v4701 = vpop.permute.xlu0 %4700
    %v4704 = vadd.f32 %v3820, %v4699
    %v4705 = vadd.f32 %v3823, %v4701
    %v4706 = vld [vmem:[#allocation2 + $0x3c8] sm:$0x1]
    %v4707 = vld [vmem:[#allocation2 + $0x3d0] sm:$0x1]
    %4710 = vrot.lane.b32.xlu0 %v4704, 32
    %v4711 = vpop.permute.xlu0 %4710
    %4712 = vrot.lane.b32.xlu0 %v4705, 32
    %v4713 = vpop.permute.xlu0 %4712
    %v4716 = vsel %vm135, %v4711, 0.0
    %4717 = vadd.xlane.f32.xlu0 %v4716
    %v4718 = vpop.xlane.xlu0 %4717
    %v4719 = vsel %vm135, %v4713, 0.0
    %4720 = vadd.xlane.f32.xlu0 %v4719
    %v4721 = vpop.xlane.xlu0 %4720
    %v4722 = vrcp.pop 32.0
    %v4723 = vmul.f32 %v4718, %v4722
    %v4724 = vmul.f32 %v4721, %v4722
    %v4725 = vsub.f32 %v4704, %v4723
    %v4726 = vsub.f32 %v4705, %v4724
    %v4727 = vmul.f32 %v4725, %v4725
    %v4728 = vmul.f32 %v4726, %v4726
    %4731 = vrot.lane.b32.xlu0 %v4727, 32
    %v4732 = vpop.permute.xlu0 %4731
    %4733 = vrot.lane.b32.xlu0 %v4728, 32
    %v4734 = vpop.permute.xlu0 %4733
    %v4737 = vsel %vm135, %v4732, 0.0
    %4738 = vadd.xlane.f32.xlu0 %v4737
    %v4739 = vpop.xlane.xlu0 %4738
    %v4740 = vsel %vm135, %v4734, 0.0
    %4741 = vadd.xlane.f32.xlu0 %v4740
    %v4742 = vpop.xlane.xlu0 %4741
    %v4743 = vmul.f32 %v4739, %v4722
    %v4744 = vmul.f32 %v4742, %v4722
    %v4745 = vadd.f32 %v4743, 1e-05
    %v4746 = vadd.f32 %v4744, 1e-05
    %v4747 = vrsqrt.pop %v4745
    %v4748 = vrsqrt.pop %v4746
    %v4749 = vmul.f32 %v4725, %v4747
    %v4750 = vmul.f32 %v4726, %v4748
    %v4751 = vlaneseq
    %v4752 = vshrl.u32 %v4751, 7
    %v4753 = vsub.s32 0, %v4752
    %v4754 = vrot.slane %v4706, %v4753
    %4756 = vrot.lane.b32.xlu0 %v4754, 96
    %v4757 = vpop.permute.xlu0 %4756
    %v4759 = vmul.f32 %v4749, %v4757
    %v4760 = vmul.f32 %v4750, %v4757
    %v4761 = vlaneseq
    %v4762 = vshrl.u32 %v4761, 7
    %v4763 = vsub.s32 0, %v4762
    %v4764 = vrot.slane %v4707, %v4763
    %4766 = vrot.lane.b32.xlu0 %v4764, 96
    %v4767 = vpop.permute.xlu0 %4766
    %v4769 = vadd.f32 %v4759, %v4767
    %v4770 = vadd.f32 %v4760, %v4767
    %v4771 = vld [vmem:[#allocation2 + $0x3d8] sm:$0xff]
    %v4772 = vld [vmem:[#allocation2 + $0x3e0] sm:$0xff]
    %v4773 = vld [vmem:[#allocation2 + $0x3e8] sm:$0xff]
    %v4774 = vld [vmem:[#allocation2 + $0x3f0] sm:$0xff]
    %v4775 = vld [vmem:[#allocation2 + $0x3f8] sm:$0x1]
    %v4776 = vlaneseq
    %v4777 = vshrl.u32 %v4776, 7
    %v4778 = vsub.s32 0, %v4777
    %v4779 = vrot.slane %v4775, %v4778
    %4782 = vrot.lane.b32.xlu0 %v4769, 32
    %v4783 = vpop.permute.xlu0 %4782
    %4784 = vrot.lane.b32.xlu0 %v4770, 32
    %v4785 = vpop.permute.xlu0 %4784
    %v4786 = vsel %vm135, %v4783, 0
    %v4788 = vsel %vm135, %v4785, 0
    %4790 = vmatprep.subr.mxu0 0.0
    %4791 = vmatpush1.msra.mxu0 %v4771
    %4792 = vmatprep.subr.mxu0 0.0
    %4793 = vmatpush1.msra.mxu0 %v4772
    %4794 = vmatprep.subr.mxu0 0.0
    %4795 = vmatpush1.msra.mxu0 %v4773
    %4796 = vmatprep.subr.mxu0 0.0
    %4797 = vmatpush1.msra.mxu0 %v4774
    %4798 = vmatprep.subr.mxu0 0.0
    %4799 = vmatpush1.msra.mxu0 0.0
    %4800 = vmatprep.subr.mxu0 0.0
    %4801 = vmatpush1.msra.mxu0 0.0
    %4802 = vmatprep.subr.mxu0 0.0
    %4803 = vmatpush1.msra.mxu0 0.0
    %4804 = vmatprep.subr.mxu0 0.0
    %4805 = vmatpush1.msra.mxu0 0.0
    %4806 = vmatprep.subr.mxu0 0.0
    %4807 = vmatpush1.msra.mxu0 0.0
    %4808 = vmatprep.subr.mxu0 0.0
    %4809 = vmatpush1.msra.mxu0 0.0
    %4810 = vmatprep.subr.mxu0 0.0
    %4811 = vmatpush1.msra.mxu0 0.0
    %4812 = vmatprep.subr.mxu0 0.0
    %4813 = vmatpush1.msra.mxu0 0.0
    %4814 = vmatprep.subr.mxu0 0.0
    %4815 = vmatpush1.msra.mxu0 0.0
    %4816 = vmatprep.subr.mxu0 0.0
    %4817 = vmatpush1.msra.mxu0 0.0
    %4818 = vmatprep.subr.mxu0 0.0
    %4819 = vmatpush1.msra.mxu0 0.0
    %4820 = vmatprep.subr.mxu0 0.0
    %4821 = vmatpush1.msra.mxu0 0.0
    %4822 = vmatprep.subr.mxu0 0.0
    %4823 = vmatpush1.msra.mxu0 0.0
    %4824 = vmatprep.subr.mxu0 0.0
    %4825 = vmatpush1.msra.mxu0 0.0
    %4826 = vmatprep.subr.mxu0 0.0
    %4827 = vmatpush1.msra.mxu0 0.0
    %4828 = vmatprep.subr.mxu0 0.0
    %4829 = vmatpush1.msra.mxu0 0.0
    %4830 = vmatprep.subr.mxu0 0.0
    %4831 = vmatpush1.msra.mxu0 0.0
    %4832 = vmatprep.subr.mxu0 0.0
    %4833 = vmatpush1.msra.mxu0 0.0
    %4834 = vmatprep.subr.mxu0 0.0
    %4835 = vmatpush1.msra.mxu0 0.0
    %4836 = vmatprep.subr.mxu0 0.0
    %4837 = vmatpush1.msra.mxu0 0.0
    %4838 = vmatprep.subr.mxu0 0.0
    %4839 = vmatpush1.msra.mxu0 0.0
    %4840 = vmatprep.subr.mxu0 0.0
    %4841 = vmatpush1.msra.mxu0 0.0
    %4842 = vmatprep.subr.mxu0 0.0
    %4843 = vmatpush1.msra.mxu0 0.0
    %4844 = vmatprep.subr.mxu0 0.0
    %4845 = vmatpush1.msra.mxu0 0.0
    %4846 = vmatprep.subr.mxu0 0.0
    %4847 = vmatpush1.msra.mxu0 0.0
    %4848 = vmatprep.subr.mxu0 0.0
    %4849 = vmatpush1.msra.mxu0 0.0
    %4850 = vmatprep.subr.mxu0 0.0
    %4851 = vmatpush1.msra.mxu0 0.0
    %4852 = vmatprep.subr.mxu0 0.0
    %4853 = vmatpush1.msra.mxu0 0.0
    %4854 = vmatprep.mubr.f32.mxu0 0.0
    %4855 = vmatmul.mubr.f32.gmra.mrb[0].mxu0 %v4786
    %v4856 = vpop.f32.mrb[0].mxu0
    %v4857 = vadd.f32 %v4779, %v4856
    %v4858 = vpop.f32.mrb[0].mxu0
    %4859 = vmatprep.mubr.f32.mxu0 0.0
    %4860 = vmatmul.mubr.f32.gmra.mrb[0].mxu0 %v4788
    %v4861 = vpop.f32.mrb[0].mxu0
    %v4862 = vadd.f32 %v4779, %v4861
    %v4863 = vpop.f32.mrb[0].mxu0
    %4864 = vdwg.mxu0
    %v4865 = vmul.f32 %v4857, 0.5
    %v4866 = vmul.f32 %v4862, 0.5
    %v4867 = vmul.f32 %v4857, 0.70710677
    %v4868 = vmul.f32 %v4862, 0.70710677
    %v4869 = vand.u32 2147483647, %v4867
    %v4870 = vand.u32 2147483647, %v4868
    %v4871 = vmul.f32 %v4869, 0.3275911
    %v4872 = vmul.f32 %v4870, 0.3275911
    %v4873 = vadd.f32 %v4871, 1.0
    %v4874 = vadd.f32 %v4872, 1.0
    %v4875 = vrcp.pop %v4873
    %v4876 = vmul.f32 1.0, %v4875
    %v4877 = vrcp.pop %v4874
    %v4878 = vmul.f32 1.0, %v4877
    %v4879 = vmul.f32 %v4876, 1.0614054
    %v4880 = vmul.f32 %v4878, 1.0614054
    %v4881 = vadd.f32 %v4879, -1.4531521
    %v4882 = vadd.f32 %v4880, -1.4531521
    %v4883 = vmul.f32 %v4881, %v4876
    %v4884 = vmul.f32 %v4882, %v4878
    %v4885 = vadd.f32 %v4883, 1.4214138
    %v4886 = vadd.f32 %v4884, 1.4214138
    %v4887 = vmul.f32 %v4885, %v4876
    %v4888 = vmul.f32 %v4886, %v4878
    %v4889 = vadd.f32 %v4887, -0.28449672
    %v4890 = vadd.f32 %v4888, -0.28449672
    %v4891 = vmul.f32 %v4889, %v4876
    %v4892 = vmul.f32 %v4890, %v4878
    %v4893 = vadd.f32 %v4891, 0.2548296
    %v4894 = vadd.f32 %v4892, 0.2548296
    %v4895 = vmul.f32 %v4893, %v4876
    %v4896 = vmul.f32 %v4894, %v4878
    %v4897 = vsub.f32 0.0, %v4869
    %v4898 = vsub.f32 0.0, %v4870
    %v4899 = vmul.f32 %v4897, %v4869
    %v4900 = vmul.f32 %v4898, %v4870
    %v4901 = vmul.f32 %v4899, 1.442695
    %v4902 = vpow.pop %v4901
    %v4903 = vmul.f32 %v4900, 1.442695
    %v4904 = vpow.pop %v4903
    %v4905 = vmul.f32 %v4895, %v4902
    %v4906 = vmul.f32 %v4896, %v4904
    %v4907 = vsub.f32 1.0, %v4905
    %v4908 = vsub.f32 1.0, %v4906
    %vm4909 = vcmp.lt.f32.partialorder %v4867, 0.0
    %vm4910 = vcmp.lt.f32.partialorder %v4868, 0.0
    %v4911 = vsub.f32 0.0, %v4907
    %v4912 = vsub.f32 0.0, %v4908
    %v4913 = vsel %vm4909, %v4911, %v4907
    %v4914 = vsel %vm4910, %v4912, %v4908
    %v4915 = vadd.f32 %v4913, 1.0
    %v4916 = vadd.f32 %v4914, 1.0
    %v4917 = vmul.f32 %v4865, %v4915
    %v4918 = vmul.f32 %v4866, %v4916
    %v4919 = vld [vmem:[#allocation2 + $0x400] sm:$0xff]
    %v4920 = vld [vmem:[#allocation2 + $0x408] sm:$0xff]
    %v4921 = vld [vmem:[#allocation2 + $0x410] sm:$0xff]
    %v4922 = vld [vmem:[#allocation2 + $0x418] sm:$0xff]
    %v4923 = vld [vmem:[#allocation2 + $0x420] sm:$0xff]
    %v4924 = vld [vmem:[#allocation2 + $0x428] sm:$0xff]
    %v4925 = vld [vmem:[#allocation2 + $0x430] sm:$0xff]
    %v4926 = vld [vmem:[#allocation2 + $0x438] sm:$0xff]
    %v4927 = vld [vmem:[#allocation2 + $0x440] sm:$0xff]
    %v4928 = vld [vmem:[#allocation2 + $0x448] sm:$0xff]
    %v4929 = vld [vmem:[#allocation2 + $0x450] sm:$0xff]
    %v4930 = vld [vmem:[#allocation2 + $0x458] sm:$0xff]
    %v4931 = vld [vmem:[#allocation2 + $0x460] sm:$0xff]
    %v4932 = vld [vmem:[#allocation2 + $0x468] sm:$0xff]
    %v4933 = vld [vmem:[#allocation2 + $0x470] sm:$0xff]
    %v4934 = vld [vmem:[#allocation2 + $0x478] sm:$0xff]
    %v4935 = vld [vmem:[#allocation2 + $0x480] sm:$0x1]
    %v4936 = vlaneseq
    %v4937 = vshrl.u32 %v4936, 7
    %v4938 = vsub.s32 0, %v4937
    %v4939 = vrot.slane %v4935, %v4938
    %4940 = vmatprep.subr.mxu0 0.0
    %4941 = vmatpush1.msra.mxu0 %v4919
    %4942 = vmatprep.subr.mxu0 0.0
    %4943 = vmatpush1.msra.mxu0 %v4920
    %4944 = vmatprep.subr.mxu0 0.0
    %4945 = vmatpush1.msra.mxu0 %v4921
    %4946 = vmatprep.subr.mxu0 0.0
    %4947 = vmatpush1.msra.mxu0 %v4922
    %4948 = vmatprep.subr.mxu0 0.0
    %4949 = vmatpush1.msra.mxu0 %v4923
    %4950 = vmatprep.subr.mxu0 0.0
    %4951 = vmatpush1.msra.mxu0 %v4924
    %4952 = vmatprep.subr.mxu0 0.0
    %4953 = vmatpush1.msra.mxu0 %v4925
    %4954 = vmatprep.subr.mxu0 0.0
    %4955 = vmatpush1.msra.mxu0 %v4926
    %4956 = vmatprep.subr.mxu0 0.0
    %4957 = vmatpush1.msra.mxu0 %v4927
    %4958 = vmatprep.subr.mxu0 0.0
    %4959 = vmatpush1.msra.mxu0 %v4928
    %4960 = vmatprep.subr.mxu0 0.0
    %4961 = vmatpush1.msra.mxu0 %v4929
    %4962 = vmatprep.subr.mxu0 0.0
    %4963 = vmatpush1.msra.mxu0 %v4930
    %4964 = vmatprep.subr.mxu0 0.0
    %4965 = vmatpush1.msra.mxu0 %v4931
    %4966 = vmatprep.subr.mxu0 0.0
    %4967 = vmatpush1.msra.mxu0 %v4932
    %4968 = vmatprep.subr.mxu0 0.0
    %4969 = vmatpush1.msra.mxu0 %v4933
    %4970 = vmatprep.subr.mxu0 0.0
    %4971 = vmatpush1.msra.mxu0 %v4934
    %4972 = vmatprep.subr.mxu0 0.0
    %4973 = vmatpush1.msra.mxu0 0.0
    %4974 = vmatprep.subr.mxu0 0.0
    %4975 = vmatpush1.msra.mxu0 0.0
    %4976 = vmatprep.subr.mxu0 0.0
    %4977 = vmatpush1.msra.mxu0 0.0
    %4978 = vmatprep.subr.mxu0 0.0
    %4979 = vmatpush1.msra.mxu0 0.0
    %4980 = vmatprep.subr.mxu0 0.0
    %4981 = vmatpush1.msra.mxu0 0.0
    %4982 = vmatprep.subr.mxu0 0.0
    %4983 = vmatpush1.msra.mxu0 0.0
    %4984 = vmatprep.subr.mxu0 0.0
    %4985 = vmatpush1.msra.mxu0 0.0
    %4986 = vmatprep.subr.mxu0 0.0
    %4987 = vmatpush1.msra.mxu0 0.0
    %4988 = vmatprep.subr.mxu0 0.0
    %4989 = vmatpush1.msra.mxu0 0.0
    %4990 = vmatprep.subr.mxu0 0.0
    %4991 = vmatpush1.msra.mxu0 0.0
    %4992 = vmatprep.subr.mxu0 0.0
    %4993 = vmatpush1.msra.mxu0 0.0
    %4994 = vmatprep.subr.mxu0 0.0
    %4995 = vmatpush1.msra.mxu0 0.0
    %4996 = vmatprep.subr.mxu0 0.0
    %4997 = vmatpush1.msra.mxu0 0.0
    %4998 = vmatprep.subr.mxu0 0.0
    %4999 = vmatpush1.msra.mxu0 0.0
    %5000 = vmatprep.subr.mxu0 0.0
    %5001 = vmatpush1.msra.mxu0 0.0
    %5002 = vmatprep.subr.mxu0 0.0
    %5003 = vmatpush1.msra.mxu0 0.0
    %5004 = vmatprep.mubr.f32.mxu0 0.0
    %5005 = vmatmul.mubr.f32.gmra.mrb[0].mxu0 %v4917
    %v5006 = vpop.f32.mrb[0].mxu0
    %v5007 = vadd.f32 %v4939, %v5006
    %v5008 = vpop.f32.mrb[0].mxu0
    %5009 = vmatprep.mubr.f32.mxu0 0.0
    %5010 = vmatmul.mubr.f32.gmra.mrb[0].mxu0 %v4918
    %v5011 = vpop.f32.mrb[0].mxu0
    %v5012 = vadd.f32 %v4939, %v5011
    %v5013 = vpop.f32.mrb[0].mxu0
    %5014 = vdwg.mxu0
    %5017 = vrot.lane.b32.xlu0 %v5007, 96
    %v5018 = vpop.permute.xlu0 %5017
    %5019 = vrot.lane.b32.xlu0 %v5012, 96
    %v5020 = vpop.permute.xlu0 %5019
    %v5023 = vadd.f32 %v4769, %v5018
    %v5024 = vadd.f32 %v4770, %v5020
    %v5025 = vld [vmem:[#allocation2 + $0x488] sm:$0x1]
    %v5026 = vld [vmem:[#allocation2 + $0x490] sm:$0x1]
    %5029 = vrot.lane.b32.xlu0 %v5023, 32
    %v5030 = vpop.permute.xlu0 %5029
    %5031 = vrot.lane.b32.xlu0 %v5024, 32
    %v5032 = vpop.permute.xlu0 %5031
    %v5035 = vsel %vm135, %v5030, 0.0
    %5036 = vadd.xlane.f32.xlu0 %v5035
    %v5037 = vpop.xlane.xlu0 %5036
    %v5038 = vsel %vm135, %v5032, 0.0
    %5039 = vadd.xlane.f32.xlu0 %v5038
    %v5040 = vpop.xlane.xlu0 %5039
    %v5041 = vmul.f32 %v5037, %v4722
    %v5042 = vmul.f32 %v5040, %v4722
    %v5043 = vsub.f32 %v5023, %v5041
    %v5044 = vsub.f32 %v5024, %v5042
    %v5045 = vmul.f32 %v5043, %v5043
    %v5046 = vmul.f32 %v5044, %v5044
    %5049 = vrot.lane.b32.xlu0 %v5045, 32
    %v5050 = vpop.permute.xlu0 %5049
    %5051 = vrot.lane.b32.xlu0 %v5046, 32
    %v5052 = vpop.permute.xlu0 %5051
    %v5055 = vsel %vm135, %v5050, 0.0
    %5056 = vadd.xlane.f32.xlu0 %v5055
    %v5057 = vpop.xlane.xlu0 %5056
    %v5058 = vsel %vm135, %v5052, 0.0
    %5059 = vadd.xlane.f32.xlu0 %v5058
    %v5060 = vpop.xlane.xlu0 %5059
    %v5061 = vmul.f32 %v5057, %v4722
    %v5062 = vmul.f32 %v5060, %v4722
    %v5063 = vadd.f32 %v5061, 1e-05
    %v5064 = vadd.f32 %v5062, 1e-05
    %v5065 = vrsqrt.pop %v5063
    %v5066 = vrsqrt.pop %v5064
    %v5067 = vmul.f32 %v5043, %v5065
    %v5068 = vmul.f32 %v5044, %v5066
    %v5069 = vlaneseq
    %v5070 = vshrl.u32 %v5069, 7
    %v5071 = vsub.s32 0, %v5070
    %v5072 = vrot.slane %v5025, %v5071
    %5074 = vrot.lane.b32.xlu0 %v5072, 96
    %v5075 = vpop.permute.xlu0 %5074
    %v5077 = vmul.f32 %v5067, %v5075
    %v5078 = vmul.f32 %v5068, %v5075
    %v5079 = vlaneseq
    %v5080 = vshrl.u32 %v5079, 7
    %v5081 = vsub.s32 0, %v5080
    %v5082 = vrot.slane %v5026, %v5081
    %5084 = vrot.lane.b32.xlu0 %v5082, 96
    %v5085 = vpop.permute.xlu0 %5084
    %v5087 = vadd.f32 %v5077, %v5085
    %v5088 = vadd.f32 %v5078, %v5085
    %v5089 = vld [vmem:[#allocation2 + $0x498] sm:$0xff]
    %v5090 = vld [vmem:[#allocation2 + $0x4a0] sm:$0xff]
    %v5091 = vld [vmem:[#allocation2 + $0x4a8] sm:$0xff]
    %v5092 = vld [vmem:[#allocation2 + $0x4b0] sm:$0xff]
    %v5093 = vld [vmem:[#allocation2 + $0x4b8] sm:$0x1]
    %v5094 = vlaneseq
    %v5095 = vshrl.u32 %v5094, 7
    %v5096 = vsub.s32 0, %v5095
    %v5097 = vrot.slane %v5093, %v5096
    %5100 = vrot.lane.b32.xlu0 %v5087, 32
    %v5101 = vpop.permute.xlu0 %5100
    %5102 = vrot.lane.b32.xlu0 %v5088, 32
    %v5103 = vpop.permute.xlu0 %5102
    %v5104 = vsel %vm135, %v5101, 0
    %v5106 = vsel %vm135, %v5103, 0
    %5108 = vmatprep.subr.mxu0 0.0
    %5109 = vmatpush1.msra.mxu0 %v5089
    %5110 = vmatprep.subr.mxu0 0.0
    %5111 = vmatpush1.msra.mxu0 %v5090
    %5112 = vmatprep.subr.mxu0 0.0
    %5113 = vmatpush1.msra.mxu0 %v5091
    %5114 = vmatprep.subr.mxu0 0.0
    %5115 = vmatpush1.msra.mxu0 %v5092
    %5116 = vmatprep.subr.mxu0 0.0
    %5117 = vmatpush1.msra.mxu0 0.0
    %5118 = vmatprep.subr.mxu0 0.0
    %5119 = vmatpush1.msra.mxu0 0.0
    %5120 = vmatprep.subr.mxu0 0.0
    %5121 = vmatpush1.msra.mxu0 0.0
    %5122 = vmatprep.subr.mxu0 0.0
    %5123 = vmatpush1.msra.mxu0 0.0
    %5124 = vmatprep.subr.mxu0 0.0
    %5125 = vmatpush1.msra.mxu0 0.0
    %5126 = vmatprep.subr.mxu0 0.0
    %5127 = vmatpush1.msra.mxu0 0.0
    %5128 = vmatprep.subr.mxu0 0.0
    %5129 = vmatpush1.msra.mxu0 0.0
    %5130 = vmatprep.subr.mxu0 0.0
    %5131 = vmatpush1.msra.mxu0 0.0
    %5132 = vmatprep.subr.mxu0 0.0
    %5133 = vmatpush1.msra.mxu0 0.0
    %5134 = vmatprep.subr.mxu0 0.0
    %5135 = vmatpush1.msra.mxu0 0.0
    %5136 = vmatprep.subr.mxu0 0.0
    %5137 = vmatpush1.msra.mxu0 0.0
    %5138 = vmatprep.subr.mxu0 0.0
    %5139 = vmatpush1.msra.mxu0 0.0
    %5140 = vmatprep.subr.mxu0 0.0
    %5141 = vmatpush1.msra.mxu0 0.0
    %5142 = vmatprep.subr.mxu0 0.0
    %5143 = vmatpush1.msra.mxu0 0.0
    %5144 = vmatprep.subr.mxu0 0.0
    %5145 = vmatpush1.msra.mxu0 0.0
    %5146 = vmatprep.subr.mxu0 0.0
    %5147 = vmatpush1.msra.mxu0 0.0
    %5148 = vmatprep.subr.mxu0 0.0
    %5149 = vmatpush1.msra.mxu0 0.0
    %5150 = vmatprep.subr.mxu0 0.0
    %5151 = vmatpush1.msra.mxu0 0.0
    %5152 = vmatprep.subr.mxu0 0.0
    %5153 = vmatpush1.msra.mxu0 0.0
    %5154 = vmatprep.subr.mxu0 0.0
    %5155 = vmatpush1.msra.mxu0 0.0
    %5156 = vmatprep.subr.mxu0 0.0
    %5157 = vmatpush1.msra.mxu0 0.0
    %5158 = vmatprep.subr.mxu0 0.0
    %5159 = vmatpush1.msra.mxu0 0.0
    %5160 = vmatprep.subr.mxu0 0.0
    %5161 = vmatpush1.msra.mxu0 0.0
    %5162 = vmatprep.subr.mxu0 0.0
    %5163 = vmatpush1.msra.mxu0 0.0
    %5164 = vmatprep.subr.mxu0 0.0
    %5165 = vmatpush1.msra.mxu0 0.0
    %5166 = vmatprep.subr.mxu0 0.0
    %5167 = vmatpush1.msra.mxu0 0.0
    %5168 = vmatprep.subr.mxu0 0.0
    %5169 = vmatpush1.msra.mxu0 0.0
    %5170 = vmatprep.subr.mxu0 0.0
    %5171 = vmatpush1.msra.mxu0 0.0
    %5172 = vmatprep.mubr.f32.mxu0 0.0
    %5173 = vmatmul.mubr.f32.gmra.mrb[0].mxu0 %v5104
    %v5174 = vpop.f32.mrb[0].mxu0
    %v5175 = vadd.f32 %v5097, %v5174
    %v5176 = vpop.f32.mrb[0].mxu0
    %5177 = vmatprep.mubr.f32.mxu0 0.0
    %5178 = vmatmul.mubr.f32.gmra.mrb[0].mxu0 %v5106
    %v5179 = vpop.f32.mrb[0].mxu0
    %v5180 = vadd.f32 %v5097, %v5179
    %v5181 = vpop.f32.mrb[0].mxu0
    %5182 = vdwg.mxu0
    %v5183 = vld [vmem:[#allocation2 + $0x4c0] sm:$0xff]
    %v5184 = vld [vmem:[#allocation2 + $0x4c8] sm:$0xff]
    %v5185 = vld [vmem:[#allocation2 + $0x4d0] sm:$0xff]
    %v5186 = vld [vmem:[#allocation2 + $0x4d8] sm:$0xff]
    %v5187 = vld [vmem:[#allocation2 + $0x4e0] sm:$0x1]
    %v5188 = vlaneseq
    %v5189 = vshrl.u32 %v5188, 7
    %v5190 = vsub.s32 0, %v5189
    %v5191 = vrot.slane %v5187, %v5190
    %5192 = vmatprep.subr.mxu0 0.0
    %5193 = vmatpush1.msra.mxu0 %v5183
    %5194 = vmatprep.subr.mxu0 0.0
    %5195 = vmatpush1.msra.mxu0 %v5184
    %5196 = vmatprep.subr.mxu0 0.0
    %5197 = vmatpush1.msra.mxu0 %v5185
    %5198 = vmatprep.subr.mxu0 0.0
    %5199 = vmatpush1.msra.mxu0 %v5186
    %5200 = vmatprep.subr.mxu0 0.0
    %5201 = vmatpush1.msra.mxu0 0.0
    %5202 = vmatprep.subr.mxu0 0.0
    %5203 = vmatpush1.msra.mxu0 0.0
    %5204 = vmatprep.subr.mxu0 0.0
    %5205 = vmatpush1.msra.mxu0 0.0
    %5206 = vmatprep.subr.mxu0 0.0
    %5207 = vmatpush1.msra.mxu0 0.0
    %5208 = vmatprep.subr.mxu0 0.0
    %5209 = vmatpush1.msra.mxu0 0.0
    %5210 = vmatprep.subr.mxu0 0.0
    %5211 = vmatpush1.msra.mxu0 0.0
    %5212 = vmatprep.subr.mxu0 0.0
    %5213 = vmatpush1.msra.mxu0 0.0
    %5214 = vmatprep.subr.mxu0 0.0
    %5215 = vmatpush1.msra.mxu0 0.0
    %5216 = vmatprep.subr.mxu0 0.0
    %5217 = vmatpush1.msra.mxu0 0.0
    %5218 = vmatprep.subr.mxu0 0.0
    %5219 = vmatpush1.msra.mxu0 0.0
    %5220 = vmatprep.subr.mxu0 0.0
    %5221 = vmatpush1.msra.mxu0 0.0
    %5222 = vmatprep.subr.mxu0 0.0
    %5223 = vmatpush1.msra.mxu0 0.0
    %5224 = vmatprep.subr.mxu0 0.0
    %5225 = vmatpush1.msra.mxu0 0.0
    %5226 = vmatprep.subr.mxu0 0.0
    %5227 = vmatpush1.msra.mxu0 0.0
    %5228 = vmatprep.subr.mxu0 0.0
    %5229 = vmatpush1.msra.mxu0 0.0
    %5230 = vmatprep.subr.mxu0 0.0
    %5231 = vmatpush1.msra.mxu0 0.0
    %5232 = vmatprep.subr.mxu0 0.0
    %5233 = vmatpush1.msra.mxu0 0.0
    %5234 = vmatprep.subr.mxu0 0.0
    %5235 = vmatpush1.msra.mxu0 0.0
    %5236 = vmatprep.subr.mxu0 0.0
    %5237 = vmatpush1.msra.mxu0 0.0
    %5238 = vmatprep.subr.mxu0 0.0
    %5239 = vmatpush1.msra.mxu0 0.0
    %5240 = vmatprep.subr.mxu0 0.0
    %5241 = vmatpush1.msra.mxu0 0.0
    %5242 = vmatprep.subr.mxu0 0.0
    %5243 = vmatpush1.msra.mxu0 0.0
    %5244 = vmatprep.subr.mxu0 0.0
    %5245 = vmatpush1.msra.mxu0 0.0
    %5246 = vmatprep.subr.mxu0 0.0
    %5247 = vmatpush1.msra.mxu0 0.0
    %5248 = vmatprep.subr.mxu0 0.0
    %5249 = vmatpush1.msra.mxu0 0.0
    %5250 = vmatprep.subr.mxu0 0.0
    %5251 = vmatpush1.msra.mxu0 0.0
    %5252 = vmatprep.subr.mxu0 0.0
    %5253 = vmatpush1.msra.mxu0 0.0
    %5254 = vmatprep.subr.mxu0 0.0
    %5255 = vmatpush1.msra.mxu0 0.0
    %5256 = vmatprep.mubr.f32.mxu0 0.0
    %5257 = vmatmul.mubr.f32.gmra.mrb[0].mxu0 %v5104
    %v5258 = vpop.f32.mrb[0].mxu0
    %v5259 = vadd.f32 %v5191, %v5258
    %v5260 = vpop.f32.mrb[0].mxu0
    %5261 = vmatprep.mubr.f32.mxu0 0.0
    %5262 = vmatmul.mubr.f32.gmra.mrb[0].mxu0 %v5106
    %v5263 = vpop.f32.mrb[0].mxu0
    %v5264 = vadd.f32 %v5191, %v5263
    %v5265 = vpop.f32.mrb[0].mxu0
    %5266 = vdwg.mxu0
    %v5267 = vld [vmem:[#allocation2 + $0x4e8] sm:$0xff]
    %v5268 = vld [vmem:[#allocation2 + $0x4f0] sm:$0xff]
    %v5269 = vld [vmem:[#allocation2 + $0x4f8] sm:$0xff]
    %v5270 = vld [vmem:[#allocation2 + $0x500] sm:$0xff]
    %v5271 = vld [vmem:[#allocation2 + $0x508] sm:$0x1]
    %v5272 = vlaneseq
    %v5273 = vshrl.u32 %v5272, 7
    %v5274 = vsub.s32 0, %v5273
    %v5275 = vrot.slane %v5271, %v5274
    %5276 = vmatprep.subr.mxu0 0.0
    %5277 = vmatpush1.msra.mxu0 %v5267
    %5278 = vmatprep.subr.mxu0 0.0
    %5279 = vmatpush1.msra.mxu0 %v5268
    %5280 = vmatprep.subr.mxu0 0.0
    %5281 = vmatpush1.msra.mxu0 %v5269
    %5282 = vmatprep.subr.mxu0 0.0
    %5283 = vmatpush1.msra.mxu0 %v5270
    %5284 = vmatprep.subr.mxu0 0.0
    %5285 = vmatpush1.msra.mxu0 0.0
    %5286 = vmatprep.subr.mxu0 0.0
    %5287 = vmatpush1.msra.mxu0 0.0
    %5288 = vmatprep.subr.mxu0 0.0
    %5289 = vmatpush1.msra.mxu0 0.0
    %5290 = vmatprep.subr.mxu0 0.0
    %5291 = vmatpush1.msra.mxu0 0.0
    %5292 = vmatprep.subr.mxu0 0.0
    %5293 = vmatpush1.msra.mxu0 0.0
    %5294 = vmatprep.subr.mxu0 0.0
    %5295 = vmatpush1.msra.mxu0 0.0
    %5296 = vmatprep.subr.mxu0 0.0
    %5297 = vmatpush1.msra.mxu0 0.0
    %5298 = vmatprep.subr.mxu0 0.0
    %5299 = vmatpush1.msra.mxu0 0.0
    %5300 = vmatprep.subr.mxu0 0.0
    %5301 = vmatpush1.msra.mxu0 0.0
    %5302 = vmatprep.subr.mxu0 0.0
    %5303 = vmatpush1.msra.mxu0 0.0
    %5304 = vmatprep.subr.mxu0 0.0
    %5305 = vmatpush1.msra.mxu0 0.0
    %5306 = vmatprep.subr.mxu0 0.0
    %5307 = vmatpush1.msra.mxu0 0.0
    %5308 = vmatprep.subr.mxu0 0.0
    %5309 = vmatpush1.msra.mxu0 0.0
    %5310 = vmatprep.subr.mxu0 0.0
    %5311 = vmatpush1.msra.mxu0 0.0
    %5312 = vmatprep.subr.mxu0 0.0
    %5313 = vmatpush1.msra.mxu0 0.0
    %5314 = vmatprep.subr.mxu0 0.0
    %5315 = vmatpush1.msra.mxu0 0.0
    %5316 = vmatprep.subr.mxu0 0.0
    %5317 = vmatpush1.msra.mxu0 0.0
    %5318 = vmatprep.subr.mxu0 0.0
    %5319 = vmatpush1.msra.mxu0 0.0
    %5320 = vmatprep.subr.mxu0 0.0
    %5321 = vmatpush1.msra.mxu0 0.0
    %5322 = vmatprep.subr.mxu0 0.0
    %5323 = vmatpush1.msra.mxu0 0.0
    %5324 = vmatprep.subr.mxu0 0.0
    %5325 = vmatpush1.msra.mxu0 0.0
    %5326 = vmatprep.subr.mxu0 0.0
    %5327 = vmatpush1.msra.mxu0 0.0
    %5328 = vmatprep.subr.mxu0 0.0
    %5329 = vmatpush1.msra.mxu0 0.0
    %5330 = vmatprep.subr.mxu0 0.0
    %5331 = vmatpush1.msra.mxu0 0.0
    %5332 = vmatprep.subr.mxu0 0.0
    %5333 = vmatpush1.msra.mxu0 0.0
    %5334 = vmatprep.subr.mxu0 0.0
    %5335 = vmatpush1.msra.mxu0 0.0
    %5336 = vmatprep.subr.mxu0 0.0
    %5337 = vmatpush1.msra.mxu0 0.0
    %5338 = vmatprep.subr.mxu0 0.0
    %5339 = vmatpush1.msra.mxu0 0.0
    %5340 = vmatprep.mubr.f32.mxu0 0.0
    %5341 = vmatmul.mubr.f32.gmra.mrb[0].mxu0 %v5104
    %v5342 = vpop.f32.mrb[0].mxu0
    %v5343 = vadd.f32 %v5275, %v5342
    %v5344 = vpop.f32.mrb[0].mxu0
    %5345 = vmatprep.mubr.f32.mxu0 0.0
    %5346 = vmatmul.mubr.f32.gmra.mrb[0].mxu0 %v5106
    %v5347 = vpop.f32.mrb[0].mxu0
    %v5348 = vadd.f32 %v5275, %v5347
    %v5349 = vpop.f32.mrb[0].mxu0
    %5350 = vdwg.mxu0
    %5351 = vmatprep.subr.mxu0 0.0
    %5352 = vmatpush1.msra.mxu0 %v5259
    %5353 = vmatprep.subr.mxu0 0.0
    %5354 = vmatpush1.msra.mxu0 %v5264
    %5355 = vmatprep.subr.mxu0 0.0
    %5356 = vmatpush1.msra.mxu0 0.0
    %5357 = vmatprep.subr.mxu0 0.0
    %5358 = vmatpush1.msra.mxu0 0.0
    %5359 = vmatprep.subr.mxu0 0.0
    %5360 = vmatpush1.msra.mxu0 0.0
    %5361 = vmatprep.subr.mxu0 0.0
    %5362 = vmatpush1.msra.mxu0 0.0
    %5363 = vmatprep.subr.mxu0 0.0
    %5364 = vmatpush1.msra.mxu0 0.0
    %5365 = vmatprep.subr.mxu0 0.0
    %5366 = vmatpush1.msra.mxu0 0.0
    %5367 = vmatprep.subr.mxu0 0.0
    %5368 = vmatpush1.msra.mxu0 0.0
    %5369 = vmatprep.subr.mxu0 0.0
    %5370 = vmatpush1.msra.mxu0 0.0
    %5371 = vmatprep.subr.mxu0 0.0
    %5372 = vmatpush1.msra.mxu0 0.0
    %5373 = vmatprep.subr.mxu0 0.0
    %5374 = vmatpush1.msra.mxu0 0.0
    %5375 = vmatprep.subr.mxu0 0.0
    %5376 = vmatpush1.msra.mxu0 0.0
    %5377 = vmatprep.subr.mxu0 0.0
    %5378 = vmatpush1.msra.mxu0 0.0
    %5379 = vmatprep.subr.mxu0 0.0
    %5380 = vmatpush1.msra.mxu0 0.0
    %5381 = vmatprep.subr.mxu0 0.0
    %5382 = vmatpush1.msra.mxu0 0.0
    %5383 = vmatprep.subr.mxu0 0.0
    %5384 = vmatpush1.msra.mxu0 0.0
    %5385 = vmatprep.subr.mxu0 0.0
    %5386 = vmatpush1.msra.mxu0 0.0
    %5387 = vmatprep.subr.mxu0 0.0
    %5388 = vmatpush1.msra.mxu0 0.0
    %5389 = vmatprep.subr.mxu0 0.0
    %5390 = vmatpush1.msra.mxu0 0.0
    %5391 = vmatprep.subr.mxu0 0.0
    %5392 = vmatpush1.msra.mxu0 0.0
    %5393 = vmatprep.subr.mxu0 0.0
    %5394 = vmatpush1.msra.mxu0 0.0
    %5395 = vmatprep.subr.mxu0 0.0
    %5396 = vmatpush1.msra.mxu0 0.0
    %5397 = vmatprep.subr.mxu0 0.0
    %5398 = vmatpush1.msra.mxu0 0.0
    %5399 = vmatprep.subr.mxu0 0.0
    %5400 = vmatpush1.msra.mxu0 0.0
    %5401 = vmatprep.subr.mxu0 0.0
    %5402 = vmatpush1.msra.mxu0 0.0
    %5403 = vmatprep.subr.mxu0 0.0
    %5404 = vmatpush1.msra.mxu0 0.0
    %5405 = vmatprep.subr.mxu0 0.0
    %5406 = vmatpush1.msra.mxu0 0.0
    %5407 = vmatprep.subr.mxu0 0.0
    %5408 = vmatpush1.msra.mxu0 0.0
    %5409 = vmatprep.subr.mxu0 0.0
    %5410 = vmatpush1.msra.mxu0 0.0
    %5411 = vmatprep.subr.mxu0 0.0
    %5412 = vmatpush1.msra.mxu0 0.0
    %5413 = vmatprep.subr.mxu0 0.0
    %5414 = vmatpush1.msra.mxu0 0.0
    %5415 = vmatprep.mubr.f32.mxu0 0.0
    %5416 = vmatmul.mubr.f32.gmra.mrb[0].mxu0 %v4094
    %v5417 = vpop.f32.mrb[0].mxu0
    %v5418 = vadd.f32 0.0, %v5417
    %v5419 = vpop.f32.mrb[0].mxu0
    %5420 = vmatprep.mubr.f32.mxu0 0.0
    %5421 = vmatmul.mubr.f32.gmra.mrb[0].mxu0 %v4097
    %v5422 = vpop.f32.mrb[0].mxu0
    %v5423 = vadd.f32 0.0, %v5422
    %v5424 = vpop.f32.mrb[0].mxu0
    %5425 = vdwg.mxu0
    %5426 = vmatprep.subr.mxu0 0.0
    %5427 = vmatpush1.msra.mxu0 %v5343
    %5428 = vmatprep.subr.mxu0 0.0
    %5429 = vmatpush1.msra.mxu0 %v5348
    %5430 = vmatprep.subr.mxu0 0.0
    %5431 = vmatpush1.msra.mxu0 0.0
    %5432 = vmatprep.subr.mxu0 0.0
    %5433 = vmatpush1.msra.mxu0 0.0
    %5434 = vmatprep.subr.mxu0 0.0
    %5435 = vmatpush1.msra.mxu0 0.0
    %5436 = vmatprep.subr.mxu0 0.0
    %5437 = vmatpush1.msra.mxu0 0.0
    %5438 = vmatprep.subr.mxu0 0.0
    %5439 = vmatpush1.msra.mxu0 0.0
    %5440 = vmatprep.subr.mxu0 0.0
    %5441 = vmatpush1.msra.mxu0 0.0
    %5442 = vmatprep.subr.mxu0 0.0
    %5443 = vmatpush1.msra.mxu0 0.0
    %5444 = vmatprep.subr.mxu0 0.0
    %5445 = vmatpush1.msra.mxu0 0.0
    %5446 = vmatprep.subr.mxu0 0.0
    %5447 = vmatpush1.msra.mxu0 0.0
    %5448 = vmatprep.subr.mxu0 0.0
    %5449 = vmatpush1.msra.mxu0 0.0
    %5450 = vmatprep.subr.mxu0 0.0
    %5451 = vmatpush1.msra.mxu0 0.0
    %5452 = vmatprep.subr.mxu0 0.0
    %5453 = vmatpush1.msra.mxu0 0.0
    %5454 = vmatprep.subr.mxu0 0.0
    %5455 = vmatpush1.msra.mxu0 0.0
    %5456 = vmatprep.subr.mxu0 0.0
    %5457 = vmatpush1.msra.mxu0 0.0
    %5458 = vmatprep.subr.mxu0 0.0
    %5459 = vmatpush1.msra.mxu0 0.0
    %5460 = vmatprep.subr.mxu0 0.0
    %5461 = vmatpush1.msra.mxu0 0.0
    %5462 = vmatprep.subr.mxu0 0.0
    %5463 = vmatpush1.msra.mxu0 0.0
    %5464 = vmatprep.subr.mxu0 0.0
    %5465 = vmatpush1.msra.mxu0 0.0
    %5466 = vmatprep.subr.mxu0 0.0
    %5467 = vmatpush1.msra.mxu0 0.0
    %5468 = vmatprep.subr.mxu0 0.0
    %5469 = vmatpush1.msra.mxu0 0.0
    %5470 = vmatprep.subr.mxu0 0.0
    %5471 = vmatpush1.msra.mxu0 0.0
    %5472 = vmatprep.subr.mxu0 0.0
    %5473 = vmatpush1.msra.mxu0 0.0
    %5474 = vmatprep.subr.mxu0 0.0
    %5475 = vmatpush1.msra.mxu0 0.0
    %5476 = vmatprep.subr.mxu0 0.0
    %5477 = vmatpush1.msra.mxu0 0.0
    %5478 = vmatprep.subr.mxu0 0.0
    %5479 = vmatpush1.msra.mxu0 0.0
    %5480 = vmatprep.subr.mxu0 0.0
    %5481 = vmatpush1.msra.mxu0 0.0
    %5482 = vmatprep.subr.mxu0 0.0
    %5483 = vmatpush1.msra.mxu0 0.0
    %5484 = vmatprep.subr.mxu0 0.0
    %5485 = vmatpush1.msra.mxu0 0.0
    %5486 = vmatprep.subr.mxu0 0.0
    %5487 = vmatpush1.msra.mxu0 0.0
    %5488 = vmatprep.subr.mxu0 0.0
    %5489 = vmatpush1.msra.mxu0 0.0
    %5490 = vmatprep.mubr.f32.mxu0 0.0
    %5491 = vmatmul.mubr.f32.gmra.mrb[0].mxu0 %v4094
    %v5492 = vpop.f32.mrb[0].mxu0
    %v5493 = vadd.f32 0.0, %v5492
    %v5494 = vpop.f32.mrb[0].mxu0
    %5495 = vmatprep.mubr.f32.mxu0 0.0
    %5496 = vmatmul.mubr.f32.gmra.mrb[0].mxu0 %v4097
    %v5497 = vpop.f32.mrb[0].mxu0
    %v5498 = vadd.f32 0.0, %v5497
    %v5499 = vpop.f32.mrb[0].mxu0
    %5500 = vdwg.mxu0
    %v5501 = vmul.f32 %v5175, %v5259
    %v5502 = vmul.f32 %v5180, %v5264
    %v5504 = vsel %vm135, %v5501, 0
    %v5507 = vsel %vm135, %v5502, 0
    %5509 = vmatprep.subr.mxu0 0.0
    %5510 = vmatpush1.msra.mxu0 %v3824
    %5511 = vmatprep.subr.mxu0 0.0
    %5512 = vmatpush1.msra.mxu0 %v3825
    %5513 = vmatprep.subr.mxu0 0.0
    %5514 = vmatpush1.msra.mxu0 %v3826
    %5515 = vmatprep.subr.mxu0 0.0
    %5516 = vmatpush1.msra.mxu0 %v3827
    %5517 = vmatprep.subr.mxu0 0.0
    %5518 = vmatpush1.msra.mxu0 0.0
    %5519 = vmatprep.subr.mxu0 0.0
    %5520 = vmatpush1.msra.mxu0 0.0
    %5521 = vmatprep.subr.mxu0 0.0
    %5522 = vmatpush1.msra.mxu0 0.0
    %5523 = vmatprep.subr.mxu0 0.0
    %5524 = vmatpush1.msra.mxu0 0.0
    %5525 = vmatprep.subr.mxu0 0.0
    %5526 = vmatpush1.msra.mxu0 0.0
    %5527 = vmatprep.subr.mxu0 0.0
    %5528 = vmatpush1.msra.mxu0 0.0
    %5529 = vmatprep.subr.mxu0 0.0
    %5530 = vmatpush1.msra.mxu0 0.0
    %5531 = vmatprep.subr.mxu0 0.0
    %5532 = vmatpush1.msra.mxu0 0.0
    %5533 = vmatprep.subr.mxu0 0.0
    %5534 = vmatpush1.msra.mxu0 0.0
    %5535 = vmatprep.subr.mxu0 0.0
    %5536 = vmatpush1.msra.mxu0 0.0
    %5537 = vmatprep.subr.mxu0 0.0
    %5538 = vmatpush1.msra.mxu0 0.0
    %5539 = vmatprep.subr.mxu0 0.0
    %5540 = vmatpush1.msra.mxu0 0.0
    %5541 = vmatprep.subr.mxu0 0.0
    %5542 = vmatpush1.msra.mxu0 0.0
    %5543 = vmatprep.subr.mxu0 0.0
    %5544 = vmatpush1.msra.mxu0 0.0
    %5545 = vmatprep.subr.mxu0 0.0
    %5546 = vmatpush1.msra.mxu0 0.0
    %5547 = vmatprep.subr.mxu0 0.0
    %5548 = vmatpush1.msra.mxu0 0.0
    %5549 = vmatprep.subr.mxu0 0.0
    %5550 = vmatpush1.msra.mxu0 0.0
    %5551 = vmatprep.subr.mxu0 0.0
    %5552 = vmatpush1.msra.mxu0 0.0
    %5553 = vmatprep.subr.mxu0 0.0
    %5554 = vmatpush1.msra.mxu0 0.0
    %5555 = vmatprep.subr.mxu0 0.0
    %5556 = vmatpush1.msra.mxu0 0.0
    %5557 = vmatprep.subr.mxu0 0.0
    %5558 = vmatpush1.msra.mxu0 0.0
    %5559 = vmatprep.subr.mxu0 0.0
    %5560 = vmatpush1.msra.mxu0 0.0
    %5561 = vmatprep.subr.mxu0 0.0
    %5562 = vmatpush1.msra.mxu0 0.0
    %5563 = vmatprep.subr.mxu0 0.0
    %5564 = vmatpush1.msra.mxu0 0.0
    %5565 = vmatprep.subr.mxu0 0.0
    %5566 = vmatpush1.msra.mxu0 0.0
    %5567 = vmatprep.subr.mxu0 0.0
    %5568 = vmatpush1.msra.mxu0 0.0
    %5569 = vmatprep.subr.mxu0 0.0
    %5570 = vmatpush1.msra.mxu0 0.0
    %5571 = vmatprep.subr.mxu0 0.0
    %5572 = vmatpush1.msra.mxu0 0.0
    %5573 = vmatprep.mubr.f32.mxu0 0.0
    %5574 = vmatmul.mubr.f32.gmra.mrb[0].mxu0 %v5504
    %v5575 = vpop.f32.mrb[0].mxu0
    %v5576 = vadd.f32 0.0, %v5575
    %v5577 = vpop.f32.mrb[0].mxu0
    %5578 = vmatprep.mubr.f32.mxu0 0.0
    %5579 = vmatmul.mubr.f32.gmra.mrb[0].mxu0 %v5507
    %v5580 = vpop.f32.mrb[0].mxu0
    %v5581 = vadd.f32 0.0, %v5580
    %v5582 = vpop.f32.mrb[0].mxu0
    %5583 = vdwg.mxu0
    %v5584 = vmul.f32 %v5175, %v5418
    %v5585 = vmul.f32 %v5180, %v5423
    %v5587 = vsel %vm135, %v5584, 0
    %v5590 = vsel %vm135, %v5585, 0
    %5592 = vmatprep.subr.mxu0 0.0
    %5593 = vmatpush1.msra.mxu0 %v3824
    %5594 = vmatprep.subr.mxu0 0.0
    %5595 = vmatpush1.msra.mxu0 %v3825
    %5596 = vmatprep.subr.mxu0 0.0
    %5597 = vmatpush1.msra.mxu0 %v3826
    %5598 = vmatprep.subr.mxu0 0.0
    %5599 = vmatpush1.msra.mxu0 %v3827
    %5600 = vmatprep.subr.mxu0 0.0
    %5601 = vmatpush1.msra.mxu0 0.0
    %5602 = vmatprep.subr.mxu0 0.0
    %5603 = vmatpush1.msra.mxu0 0.0
    %5604 = vmatprep.subr.mxu0 0.0
    %5605 = vmatpush1.msra.mxu0 0.0
    %5606 = vmatprep.subr.mxu0 0.0
    %5607 = vmatpush1.msra.mxu0 0.0
    %5608 = vmatprep.subr.mxu0 0.0
    %5609 = vmatpush1.msra.mxu0 0.0
    %5610 = vmatprep.subr.mxu0 0.0
    %5611 = vmatpush1.msra.mxu0 0.0
    %5612 = vmatprep.subr.mxu0 0.0
    %5613 = vmatpush1.msra.mxu0 0.0
    %5614 = vmatprep.subr.mxu0 0.0
    %5615 = vmatpush1.msra.mxu0 0.0
    %5616 = vmatprep.subr.mxu0 0.0
    %5617 = vmatpush1.msra.mxu0 0.0
    %5618 = vmatprep.subr.mxu0 0.0
    %5619 = vmatpush1.msra.mxu0 0.0
    %5620 = vmatprep.subr.mxu0 0.0
    %5621 = vmatpush1.msra.mxu0 0.0
    %5622 = vmatprep.subr.mxu0 0.0
    %5623 = vmatpush1.msra.mxu0 0.0
    %5624 = vmatprep.subr.mxu0 0.0
    %5625 = vmatpush1.msra.mxu0 0.0
    %5626 = vmatprep.subr.mxu0 0.0
    %5627 = vmatpush1.msra.mxu0 0.0
    %5628 = vmatprep.subr.mxu0 0.0
    %5629 = vmatpush1.msra.mxu0 0.0
    %5630 = vmatprep.subr.mxu0 0.0
    %5631 = vmatpush1.msra.mxu0 0.0
    %5632 = vmatprep.subr.mxu0 0.0
    %5633 = vmatpush1.msra.mxu0 0.0
    %5634 = vmatprep.subr.mxu0 0.0
    %5635 = vmatpush1.msra.mxu0 0.0
    %5636 = vmatprep.subr.mxu0 0.0
    %5637 = vmatpush1.msra.mxu0 0.0
    %5638 = vmatprep.subr.mxu0 0.0
    %5639 = vmatpush1.msra.mxu0 0.0
    %5640 = vmatprep.subr.mxu0 0.0
    %5641 = vmatpush1.msra.mxu0 0.0
    %5642 = vmatprep.subr.mxu0 0.0
    %5643 = vmatpush1.msra.mxu0 0.0
    %5644 = vmatprep.subr.mxu0 0.0
    %5645 = vmatpush1.msra.mxu0 0.0
    %5646 = vmatprep.subr.mxu0 0.0
    %5647 = vmatpush1.msra.mxu0 0.0
    %5648 = vmatprep.subr.mxu0 0.0
    %5649 = vmatpush1.msra.mxu0 0.0
    %5650 = vmatprep.subr.mxu0 0.0
    %5651 = vmatpush1.msra.mxu0 0.0
    %5652 = vmatprep.subr.mxu0 0.0
    %5653 = vmatpush1.msra.mxu0 0.0
    %5654 = vmatprep.subr.mxu0 0.0
    %5655 = vmatpush1.msra.mxu0 0.0
    %5656 = vmatprep.mubr.f32.mxu0 0.0
    %5657 = vmatmul.mubr.f32.gmra.mrb[0].mxu0 %v5587
    %v5658 = vpop.f32.mrb[0].mxu0
    %v5659 = vadd.f32 0.0, %v5658
    %v5660 = vpop.f32.mrb[0].mxu0
    %5661 = vmatprep.mubr.f32.mxu0 0.0
    %5662 = vmatmul.mubr.f32.gmra.mrb[0].mxu0 %v5590
    %v5663 = vpop.f32.mrb[0].mxu0
    %v5664 = vadd.f32 0.0, %v5663
    %v5665 = vpop.f32.mrb[0].mxu0
    %5666 = vdwg.mxu0
    %v5667 = vmax.f32 %v5576, %v5659
    %v5668 = vmax.f32 %v5581, %v5664
    %v5669 = vsub.f32 %v5576, %v5667
    %v5670 = vsub.f32 %v5581, %v5668
    %v5671 = vmul.f32 %v5669, 1.442695
    %v5672 = vpow.pop %v5671
    %v5673 = vmul.f32 %v5670, 1.442695
    %v5674 = vpow.pop %v5673
    %v5675 = vsub.f32 %v5659, %v5667
    %v5676 = vsub.f32 %v5664, %v5668
    %v5677 = vmul.f32 %v5675, 1.442695
    %v5678 = vpow.pop %v5677
    %v5679 = vmul.f32 %v5676, 1.442695
    %v5680 = vpow.pop %v5679
    %v5681 = vadd.f32 %v5672, %v5678
    %v5682 = vadd.f32 %v5674, %v5680
    %v5683 = vrcp.pop %v5681
    %v5684 = vmul.f32 %v5672, %v5683
    %v5685 = vrcp.pop %v5682
    %v5686 = vmul.f32 %v5674, %v5685
    %v5688 = vsel %vm4435, %v5684, 0
    %v5691 = vsel %vm4435, %v5686, 0
    %5693 = vmatprep.subr.mxu0 0.0
    %5694 = vmatpush1.msra.mxu0 %v3828
    %5695 = vmatprep.subr.mxu0 0.0
    %5696 = vmatpush1.msra.mxu0 0.0
    %5697 = vmatprep.subr.mxu0 0.0
    %5698 = vmatpush1.msra.mxu0 0.0
    %5699 = vmatprep.subr.mxu0 0.0
    %5700 = vmatpush1.msra.mxu0 0.0
    %5701 = vmatprep.subr.mxu0 0.0
    %5702 = vmatpush1.msra.mxu0 0.0
    %5703 = vmatprep.subr.mxu0 0.0
    %5704 = vmatpush1.msra.mxu0 0.0
    %5705 = vmatprep.subr.mxu0 0.0
    %5706 = vmatpush1.msra.mxu0 0.0
    %5707 = vmatprep.subr.mxu0 0.0
    %5708 = vmatpush1.msra.mxu0 0.0
    %5709 = vmatprep.subr.mxu0 0.0
    %5710 = vmatpush1.msra.mxu0 0.0
    %5711 = vmatprep.subr.mxu0 0.0
    %5712 = vmatpush1.msra.mxu0 0.0
    %5713 = vmatprep.subr.mxu0 0.0
    %5714 = vmatpush1.msra.mxu0 0.0
    %5715 = vmatprep.subr.mxu0 0.0
    %5716 = vmatpush1.msra.mxu0 0.0
    %5717 = vmatprep.subr.mxu0 0.0
    %5718 = vmatpush1.msra.mxu0 0.0
    %5719 = vmatprep.subr.mxu0 0.0
    %5720 = vmatpush1.msra.mxu0 0.0
    %5721 = vmatprep.subr.mxu0 0.0
    %5722 = vmatpush1.msra.mxu0 0.0
    %5723 = vmatprep.subr.mxu0 0.0
    %5724 = vmatpush1.msra.mxu0 0.0
    %5725 = vmatprep.subr.mxu0 0.0
    %5726 = vmatpush1.msra.mxu0 0.0
    %5727 = vmatprep.subr.mxu0 0.0
    %5728 = vmatpush1.msra.mxu0 0.0
    %5729 = vmatprep.subr.mxu0 0.0
    %5730 = vmatpush1.msra.mxu0 0.0
    %5731 = vmatprep.subr.mxu0 0.0
    %5732 = vmatpush1.msra.mxu0 0.0
    %5733 = vmatprep.subr.mxu0 0.0
    %5734 = vmatpush1.msra.mxu0 0.0
    %5735 = vmatprep.subr.mxu0 0.0
    %5736 = vmatpush1.msra.mxu0 0.0
    %5737 = vmatprep.subr.mxu0 0.0
    %5738 = vmatpush1.msra.mxu0 0.0
    %5739 = vmatprep.subr.mxu0 0.0
    %5740 = vmatpush1.msra.mxu0 0.0
    %5741 = vmatprep.subr.mxu0 0.0
    %5742 = vmatpush1.msra.mxu0 0.0
    %5743 = vmatprep.subr.mxu0 0.0
    %5744 = vmatpush1.msra.mxu0 0.0
    %5745 = vmatprep.subr.mxu0 0.0
    %5746 = vmatpush1.msra.mxu0 0.0
    %5747 = vmatprep.subr.mxu0 0.0
    %5748 = vmatpush1.msra.mxu0 0.0
    %5749 = vmatprep.subr.mxu0 0.0
    %5750 = vmatpush1.msra.mxu0 0.0
    %5751 = vmatprep.subr.mxu0 0.0
    %5752 = vmatpush1.msra.mxu0 0.0
    %5753 = vmatprep.subr.mxu0 0.0
    %5754 = vmatpush1.msra.mxu0 0.0
    %5755 = vmatprep.subr.mxu0 0.0
    %5756 = vmatpush1.msra.mxu0 0.0
    %5757 = vmatprep.mubr.f32.mxu0 0.0
    %5758 = vmatmul.mubr.f32.gmra.mrb[0].mxu0 %v5688
    %v5759 = vpop.f32.mrb[0].mxu0
    %v5760 = vadd.f32 0.0, %v5759
    %v5761 = vpop.f32.mrb[0].mxu0
    %5762 = vmatprep.mubr.f32.mxu0 0.0
    %5763 = vmatmul.mubr.f32.gmra.mrb[0].mxu0 %v5691
    %v5764 = vpop.f32.mrb[0].mxu0
    %v5765 = vadd.f32 0.0, %v5764
    %v5766 = vpop.f32.mrb[0].mxu0
    %5767 = vdwg.mxu0
    %v5768 = vmul.f32 %v5760, %v5343
    %v5769 = vmul.f32 %v5765, %v5348
    %v5770 = vmul.f32 %v5678, %v5683
    %v5771 = vmul.f32 %v5680, %v5685
    %v5773 = vsel %vm4435, %v5770, 0
    %v5776 = vsel %vm4435, %v5771, 0
    %5778 = vmatprep.subr.mxu0 0.0
    %5779 = vmatpush1.msra.mxu0 %v3828
    %5780 = vmatprep.subr.mxu0 0.0
    %5781 = vmatpush1.msra.mxu0 0.0
    %5782 = vmatprep.subr.mxu0 0.0
    %5783 = vmatpush1.msra.mxu0 0.0
    %5784 = vmatprep.subr.mxu0 0.0
    %5785 = vmatpush1.msra.mxu0 0.0
    %5786 = vmatprep.subr.mxu0 0.0
    %5787 = vmatpush1.msra.mxu0 0.0
    %5788 = vmatprep.subr.mxu0 0.0
    %5789 = vmatpush1.msra.mxu0 0.0
    %5790 = vmatprep.subr.mxu0 0.0
    %5791 = vmatpush1.msra.mxu0 0.0
    %5792 = vmatprep.subr.mxu0 0.0
    %5793 = vmatpush1.msra.mxu0 0.0
    %5794 = vmatprep.subr.mxu0 0.0
    %5795 = vmatpush1.msra.mxu0 0.0
    %5796 = vmatprep.subr.mxu0 0.0
    %5797 = vmatpush1.msra.mxu0 0.0
    %5798 = vmatprep.subr.mxu0 0.0
    %5799 = vmatpush1.msra.mxu0 0.0
    %5800 = vmatprep.subr.mxu0 0.0
    %5801 = vmatpush1.msra.mxu0 0.0
    %5802 = vmatprep.subr.mxu0 0.0
    %5803 = vmatpush1.msra.mxu0 0.0
    %5804 = vmatprep.subr.mxu0 0.0
    %5805 = vmatpush1.msra.mxu0 0.0
    %5806 = vmatprep.subr.mxu0 0.0
    %5807 = vmatpush1.msra.mxu0 0.0
    %5808 = vmatprep.subr.mxu0 0.0
    %5809 = vmatpush1.msra.mxu0 0.0
    %5810 = vmatprep.subr.mxu0 0.0
    %5811 = vmatpush1.msra.mxu0 0.0
    %5812 = vmatprep.subr.mxu0 0.0
    %5813 = vmatpush1.msra.mxu0 0.0
    %5814 = vmatprep.subr.mxu0 0.0
    %5815 = vmatpush1.msra.mxu0 0.0
    %5816 = vmatprep.subr.mxu0 0.0
    %5817 = vmatpush1.msra.mxu0 0.0
    %5818 = vmatprep.subr.mxu0 0.0
    %5819 = vmatpush1.msra.mxu0 0.0
    %5820 = vmatprep.subr.mxu0 0.0
    %5821 = vmatpush1.msra.mxu0 0.0
    %5822 = vmatprep.subr.mxu0 0.0
    %5823 = vmatpush1.msra.mxu0 0.0
    %5824 = vmatprep.subr.mxu0 0.0
    %5825 = vmatpush1.msra.mxu0 0.0
    %5826 = vmatprep.subr.mxu0 0.0
    %5827 = vmatpush1.msra.mxu0 0.0
    %5828 = vmatprep.subr.mxu0 0.0
    %5829 = vmatpush1.msra.mxu0 0.0
    %5830 = vmatprep.subr.mxu0 0.0
    %5831 = vmatpush1.msra.mxu0 0.0
    %5832 = vmatprep.subr.mxu0 0.0
    %5833 = vmatpush1.msra.mxu0 0.0
    %5834 = vmatprep.subr.mxu0 0.0
    %5835 = vmatpush1.msra.mxu0 0.0
    %5836 = vmatprep.subr.mxu0 0.0
    %5837 = vmatpush1.msra.mxu0 0.0
    %5838 = vmatprep.subr.mxu0 0.0
    %5839 = vmatpush1.msra.mxu0 0.0
    %5840 = vmatprep.subr.mxu0 0.0
    %5841 = vmatpush1.msra.mxu0 0.0
    %5842 = vmatprep.mubr.f32.mxu0 0.0
    %5843 = vmatmul.mubr.f32.gmra.mrb[0].mxu0 %v5773
    %v5844 = vpop.f32.mrb[0].mxu0
    %v5845 = vadd.f32 0.0, %v5844
    %v5846 = vpop.f32.mrb[0].mxu0
    %5847 = vmatprep.mubr.f32.mxu0 0.0
    %5848 = vmatmul.mubr.f32.gmra.mrb[0].mxu0 %v5776
    %v5849 = vpop.f32.mrb[0].mxu0
    %v5850 = vadd.f32 0.0, %v5849
    %v5851 = vpop.f32.mrb[0].mxu0
    %5852 = vdwg.mxu0
    %v5853 = vmul.f32 %v5845, %v5493
    %v5854 = vmul.f32 %v5850, %v5498
    %v5855 = vadd.f32 %v5768, %v5853
    %v5856 = vadd.f32 %v5769, %v5854
    %v5857 = vld [vmem:[#allocation2 + $0x510] sm:$0xff]
    %v5858 = vld [vmem:[#allocation2 + $0x518] sm:$0xff]
    %v5859 = vld [vmem:[#allocation2 + $0x520] sm:$0xff]
    %v5860 = vld [vmem:[#allocation2 + $0x528] sm:$0xff]
    %v5861 = vld [vmem:[#allocation2 + $0x530] sm:$0x1]
    %v5862 = vlaneseq
    %v5863 = vshrl.u32 %v5862, 7
    %v5864 = vsub.s32 0, %v5863
    %v5865 = vrot.slane %v5861, %v5864
    %v5867 = vsel %vm135, %v5855, 0
    %v5870 = vsel %vm135, %v5856, 0
    %5872 = vmatprep.subr.mxu0 0.0
    %5873 = vmatpush1.msra.mxu0 %v5857
    %5874 = vmatprep.subr.mxu0 0.0
    %5875 = vmatpush1.msra.mxu0 %v5858
    %5876 = vmatprep.subr.mxu0 0.0
    %5877 = vmatpush1.msra.mxu0 %v5859
    %5878 = vmatprep.subr.mxu0 0.0
    %5879 = vmatpush1.msra.mxu0 %v5860
    %5880 = vmatprep.subr.mxu0 0.0
    %5881 = vmatpush1.msra.mxu0 0.0
    %5882 = vmatprep.subr.mxu0 0.0
    %5883 = vmatpush1.msra.mxu0 0.0
    %5884 = vmatprep.subr.mxu0 0.0
    %5885 = vmatpush1.msra.mxu0 0.0
    %5886 = vmatprep.subr.mxu0 0.0
    %5887 = vmatpush1.msra.mxu0 0.0
    %5888 = vmatprep.subr.mxu0 0.0
    %5889 = vmatpush1.msra.mxu0 0.0
    %5890 = vmatprep.subr.mxu0 0.0
    %5891 = vmatpush1.msra.mxu0 0.0
    %5892 = vmatprep.subr.mxu0 0.0
    %5893 = vmatpush1.msra.mxu0 0.0
    %5894 = vmatprep.subr.mxu0 0.0
    %5895 = vmatpush1.msra.mxu0 0.0
    %5896 = vmatprep.subr.mxu0 0.0
    %5897 = vmatpush1.msra.mxu0 0.0
    %5898 = vmatprep.subr.mxu0 0.0
    %5899 = vmatpush1.msra.mxu0 0.0
    %5900 = vmatprep.subr.mxu0 0.0
    %5901 = vmatpush1.msra.mxu0 0.0
    %5902 = vmatprep.subr.mxu0 0.0
    %5903 = vmatpush1.msra.mxu0 0.0
    %5904 = vmatprep.subr.mxu0 0.0
    %5905 = vmatpush1.msra.mxu0 0.0
    %5906 = vmatprep.subr.mxu0 0.0
    %5907 = vmatpush1.msra.mxu0 0.0
    %5908 = vmatprep.subr.mxu0 0.0
    %5909 = vmatpush1.msra.mxu0 0.0
    %5910 = vmatprep.subr.mxu0 0.0
    %5911 = vmatpush1.msra.mxu0 0.0
    %5912 = vmatprep.subr.mxu0 0.0
    %5913 = vmatpush1.msra.mxu0 0.0
    %5914 = vmatprep.subr.mxu0 0.0
    %5915 = vmatpush1.msra.mxu0 0.0
    %5916 = vmatprep.subr.mxu0 0.0
    %5917 = vmatpush1.msra.mxu0 0.0
    %5918 = vmatprep.subr.mxu0 0.0
    %5919 = vmatpush1.msra.mxu0 0.0
    %5920 = vmatprep.subr.mxu0 0.0
    %5921 = vmatpush1.msra.mxu0 0.0
    %5922 = vmatprep.subr.mxu0 0.0
    %5923 = vmatpush1.msra.mxu0 0.0
    %5924 = vmatprep.subr.mxu0 0.0
    %5925 = vmatpush1.msra.mxu0 0.0
    %5926 = vmatprep.subr.mxu0 0.0
    %5927 = vmatpush1.msra.mxu0 0.0
    %5928 = vmatprep.subr.mxu0 0.0
    %5929 = vmatpush1.msra.mxu0 0.0
    %5930 = vmatprep.subr.mxu0 0.0
    %5931 = vmatpush1.msra.mxu0 0.0
    %5932 = vmatprep.subr.mxu0 0.0
    %5933 = vmatpush1.msra.mxu0 0.0
    %5934 = vmatprep.subr.mxu0 0.0
    %5935 = vmatpush1.msra.mxu0 0.0
    %5936 = vmatprep.mubr.f32.mxu0 0.0
    %5937 = vmatmul.mubr.f32.gmra.mrb[0].mxu0 %v5867
    %v5938 = vpop.f32.mrb[0].mxu0
    %v5939 = vadd.f32 %v5865, %v5938
    %v5940 = vpop.f32.mrb[0].mxu0
    %5941 = vmatprep.mubr.f32.mxu0 0.0
    %5942 = vmatmul.mubr.f32.gmra.mrb[0].mxu0 %v5870
    %v5943 = vpop.f32.mrb[0].mxu0
    %v5944 = vadd.f32 %v5865, %v5943
    %v5945 = vpop.f32.mrb[0].mxu0
    %5946 = vdwg.mxu0
    %v5947 = vld [vmem:[#allocation2 + $0x5b0] sm:$0x3]
    %v5949 = vsel %vm35, %v5947, 0
    %5951 = vmatprep.subr.mxu0 0.0
    %5952 = vmatpush1.msra.mxu0 %v5939
    %5953 = vmatprep.subr.mxu0 0.0
    %5954 = vmatpush1.msra.mxu0 %v5944
    %5955 = vmatprep.subr.mxu0 0.0
    %5956 = vmatpush1.msra.mxu0 0.0
    %5957 = vmatprep.subr.mxu0 0.0
    %5958 = vmatpush1.msra.mxu0 0.0
    %5959 = vmatprep.subr.mxu0 0.0
    %5960 = vmatpush1.msra.mxu0 0.0
    %5961 = vmatprep.subr.mxu0 0.0
    %5962 = vmatpush1.msra.mxu0 0.0
    %5963 = vmatprep.subr.mxu0 0.0
    %5964 = vmatpush1.msra.mxu0 0.0
    %5965 = vmatprep.subr.mxu0 0.0
    %5966 = vmatpush1.msra.mxu0 0.0
    %5967 = vmatprep.subr.mxu0 0.0
    %5968 = vmatpush1.msra.mxu0 0.0
    %5969 = vmatprep.subr.mxu0 0.0
    %5970 = vmatpush1.msra.mxu0 0.0
    %5971 = vmatprep.subr.mxu0 0.0
    %5972 = vmatpush1.msra.mxu0 0.0
    %5973 = vmatprep.subr.mxu0 0.0
    %5974 = vmatpush1.msra.mxu0 0.0
    %5975 = vmatprep.subr.mxu0 0.0
    %5976 = vmatpush1.msra.mxu0 0.0
    %5977 = vmatprep.subr.mxu0 0.0
    %5978 = vmatpush1.msra.mxu0 0.0
    %5979 = vmatprep.subr.mxu0 0.0
    %5980 = vmatpush1.msra.mxu0 0.0
    %5981 = vmatprep.subr.mxu0 0.0
    %5982 = vmatpush1.msra.mxu0 0.0
    %5983 = vmatprep.subr.mxu0 0.0
    %5984 = vmatpush1.msra.mxu0 0.0
    %5985 = vmatprep.subr.mxu0 0.0
    %5986 = vmatpush1.msra.mxu0 0.0
    %5987 = vmatprep.subr.mxu0 0.0
    %5988 = vmatpush1.msra.mxu0 0.0
    %5989 = vmatprep.subr.mxu0 0.0
    %5990 = vmatpush1.msra.mxu0 0.0
    %5991 = vmatprep.subr.mxu0 0.0
    %5992 = vmatpush1.msra.mxu0 0.0
    %5993 = vmatprep.subr.mxu0 0.0
    %5994 = vmatpush1.msra.mxu0 0.0
    %5995 = vmatprep.subr.mxu0 0.0
    %5996 = vmatpush1.msra.mxu0 0.0
    %5997 = vmatprep.subr.mxu0 0.0
    %5998 = vmatpush1.msra.mxu0 0.0
    %5999 = vmatprep.subr.mxu0 0.0
    %6000 = vmatpush1.msra.mxu0 0.0
    %6001 = vmatprep.subr.mxu0 0.0
    %6002 = vmatpush1.msra.mxu0 0.0
    %6003 = vmatprep.subr.mxu0 0.0
    %6004 = vmatpush1.msra.mxu0 0.0
    %6005 = vmatprep.subr.mxu0 0.0
    %6006 = vmatpush1.msra.mxu0 0.0
    %6007 = vmatprep.subr.mxu0 0.0
    %6008 = vmatpush1.msra.mxu0 0.0
    %6009 = vmatprep.subr.mxu0 0.0
    %6010 = vmatpush1.msra.mxu0 0.0
    %6011 = vmatprep.subr.mxu0 0.0
    %6012 = vmatpush1.msra.mxu0 0.0
    %6013 = vmatprep.subr.mxu0 0.0
    %6014 = vmatpush1.msra.mxu0 0.0
    %6015 = vmatprep.mubr.f32.mxu0 0.0
    %6016 = vmatmul.mubr.f32.gmra.mrb[0].mxu0 %v5949
    %v6017 = vpop.f32.mrb[0].mxu0
    %v6018 = vadd.f32 0.0, %v6017
    %v6019 = vpop.f32.mrb[0].mxu0
    %6020 = vdwg.mxu0
    %v6021 = vld [vmem:[#allocation2 + $0x538] sm:$0xff]
    %v6022 = vld [vmem:[#allocation2 + $0x540] sm:$0xff]
    %v6023 = vld [vmem:[#allocation2 + $0x548] sm:$0xff]
    %v6024 = vld [vmem:[#allocation2 + $0x550] sm:$0xff]
    %v6025 = vld [vmem:[#allocation2 + $0x558] sm:$0x1]
    %v6026 = vlaneseq
    %v6027 = vshrl.u32 %v6026, 7
    %v6028 = vsub.s32 0, %v6027
    %v6029 = vrot.slane %v6025, %v6028
    %v6031 = vsel %vm135, %v6018, 0
    %6033 = vmatprep.subr.mxu0 0.0
    %6034 = vmatpush1.msra.mxu0 %v6021
    %6035 = vmatprep.subr.mxu0 0.0
    %6036 = vmatpush1.msra.mxu0 %v6022
    %6037 = vmatprep.subr.mxu0 0.0
    %6038 = vmatpush1.msra.mxu0 %v6023
    %6039 = vmatprep.subr.mxu0 0.0
    %6040 = vmatpush1.msra.mxu0 %v6024
    %6041 = vmatprep.subr.mxu0 0.0
    %6042 = vmatpush1.msra.mxu0 0.0
    %6043 = vmatprep.subr.mxu0 0.0
    %6044 = vmatpush1.msra.mxu0 0.0
    %6045 = vmatprep.subr.mxu0 0.0
    %6046 = vmatpush1.msra.mxu0 0.0
    %6047 = vmatprep.subr.mxu0 0.0
    %6048 = vmatpush1.msra.mxu0 0.0
    %6049 = vmatprep.subr.mxu0 0.0
    %6050 = vmatpush1.msra.mxu0 0.0
    %6051 = vmatprep.subr.mxu0 0.0
    %6052 = vmatpush1.msra.mxu0 0.0
    %6053 = vmatprep.subr.mxu0 0.0
    %6054 = vmatpush1.msra.mxu0 0.0
    %6055 = vmatprep.subr.mxu0 0.0
    %6056 = vmatpush1.msra.mxu0 0.0
    %6057 = vmatprep.subr.mxu0 0.0
    %6058 = vmatpush1.msra.mxu0 0.0
    %6059 = vmatprep.subr.mxu0 0.0
    %6060 = vmatpush1.msra.mxu0 0.0
    %6061 = vmatprep.subr.mxu0 0.0
    %6062 = vmatpush1.msra.mxu0 0.0
    %6063 = vmatprep.subr.mxu0 0.0
    %6064 = vmatpush1.msra.mxu0 0.0
    %6065 = vmatprep.subr.mxu0 0.0
    %6066 = vmatpush1.msra.mxu0 0.0
    %6067 = vmatprep.subr.mxu0 0.0
    %6068 = vmatpush1.msra.mxu0 0.0
    %6069 = vmatprep.subr.mxu0 0.0
    %6070 = vmatpush1.msra.mxu0 0.0
    %6071 = vmatprep.subr.mxu0 0.0
    %6072 = vmatpush1.msra.mxu0 0.0
    %6073 = vmatprep.subr.mxu0 0.0
    %6074 = vmatpush1.msra.mxu0 0.0
    %6075 = vmatprep.subr.mxu0 0.0
    %6076 = vmatpush1.msra.mxu0 0.0
    %6077 = vmatprep.subr.mxu0 0.0
    %6078 = vmatpush1.msra.mxu0 0.0
    %6079 = vmatprep.subr.mxu0 0.0
    %6080 = vmatpush1.msra.mxu0 0.0
    %6081 = vmatprep.subr.mxu0 0.0
    %6082 = vmatpush1.msra.mxu0 0.0
    %6083 = vmatprep.subr.mxu0 0.0
    %6084 = vmatpush1.msra.mxu0 0.0
    %6085 = vmatprep.subr.mxu0 0.0
    %6086 = vmatpush1.msra.mxu0 0.0
    %6087 = vmatprep.subr.mxu0 0.0
    %6088 = vmatpush1.msra.mxu0 0.0
    %6089 = vmatprep.subr.mxu0 0.0
    %6090 = vmatpush1.msra.mxu0 0.0
    %6091 = vmatprep.subr.mxu0 0.0
    %6092 = vmatpush1.msra.mxu0 0.0
    %6093 = vmatprep.subr.mxu0 0.0
    %6094 = vmatpush1.msra.mxu0 0.0
    %6095 = vmatprep.subr.mxu0 0.0
    %6096 = vmatpush1.msra.mxu0 0.0
    %6097 = vmatprep.mubr.f32.mxu0 0.0
    %6098 = vmatmul.mubr.f32.gmra.mrb[0].mxu0 %v6031
    %v6099 = vpop.f32.mrb[0].mxu0
    %v6100 = vadd.f32 %v6029, %v6099
    %v6101 = vpop.f32.mrb[0].mxu0
    %6102 = vdwg.mxu0
    %v6103 = vmax.f32 %v6100, 0.0
    %v6104 = vld [vmem:[#allocation2 + $0x560] sm:$0xff]
    %v6105 = vld [vmem:[#allocation2 + $0x568] sm:$0xff]
    %v6106 = vld [vmem:[#allocation2 + $0x570] sm:$0x1]
    %v6107 = vlaneseq
    %v6108 = vshrl.u32 %v6107, 7
    %v6109 = vsub.s32 0, %v6108
    %v6110 = vrot.slane %v6106, %v6109
    %v6112 = vsel %vm35, %v6103, 0
    %6114 = vmatprep.subr.mxu0 0.0
    %6115 = vmatpush1.msra.mxu0 %v6104
    %6116 = vmatprep.subr.mxu0 0.0
    %6117 = vmatpush1.msra.mxu0 %v6105
    %6118 = vmatprep.subr.mxu0 0.0
    %6119 = vmatpush1.msra.mxu0 0.0
    %6120 = vmatprep.subr.mxu0 0.0
    %6121 = vmatpush1.msra.mxu0 0.0
    %6122 = vmatprep.subr.mxu0 0.0
    %6123 = vmatpush1.msra.mxu0 0.0
    %6124 = vmatprep.subr.mxu0 0.0
    %6125 = vmatpush1.msra.mxu0 0.0
    %6126 = vmatprep.subr.mxu0 0.0
    %6127 = vmatpush1.msra.mxu0 0.0
    %6128 = vmatprep.subr.mxu0 0.0
    %6129 = vmatpush1.msra.mxu0 0.0
    %6130 = vmatprep.subr.mxu0 0.0
    %6131 = vmatpush1.msra.mxu0 0.0
    %6132 = vmatprep.subr.mxu0 0.0
    %6133 = vmatpush1.msra.mxu0 0.0
    %6134 = vmatprep.subr.mxu0 0.0
    %6135 = vmatpush1.msra.mxu0 0.0
    %6136 = vmatprep.subr.mxu0 0.0
    %6137 = vmatpush1.msra.mxu0 0.0
    %6138 = vmatprep.subr.mxu0 0.0
    %6139 = vmatpush1.msra.mxu0 0.0
    %6140 = vmatprep.subr.mxu0 0.0
    %6141 = vmatpush1.msra.mxu0 0.0
    %6142 = vmatprep.subr.mxu0 0.0
    %6143 = vmatpush1.msra.mxu0 0.0
    %6144 = vmatprep.subr.mxu0 0.0
    %6145 = vmatpush1.msra.mxu0 0.0
    %6146 = vmatprep.subr.mxu0 0.0
    %6147 = vmatpush1.msra.mxu0 0.0
    %6148 = vmatprep.subr.mxu0 0.0
    %6149 = vmatpush1.msra.mxu0 0.0
    %6150 = vmatprep.subr.mxu0 0.0
    %6151 = vmatpush1.msra.mxu0 0.0
    %6152 = vmatprep.subr.mxu0 0.0
    %6153 = vmatpush1.msra.mxu0 0.0
    %6154 = vmatprep.subr.mxu0 0.0
    %6155 = vmatpush1.msra.mxu0 0.0
    %6156 = vmatprep.subr.mxu0 0.0
    %6157 = vmatpush1.msra.mxu0 0.0
    %6158 = vmatprep.subr.mxu0 0.0
    %6159 = vmatpush1.msra.mxu0 0.0
    %6160 = vmatprep.subr.mxu0 0.0
    %6161 = vmatpush1.msra.mxu0 0.0
    %6162 = vmatprep.subr.mxu0 0.0
    %6163 = vmatpush1.msra.mxu0 0.0
    %6164 = vmatprep.subr.mxu0 0.0
    %6165 = vmatpush1.msra.mxu0 0.0
    %6166 = vmatprep.subr.mxu0 0.0
    %6167 = vmatpush1.msra.mxu0 0.0
    %6168 = vmatprep.subr.mxu0 0.0
    %6169 = vmatpush1.msra.mxu0 0.0
    %6170 = vmatprep.subr.mxu0 0.0
    %6171 = vmatpush1.msra.mxu0 0.0
    %6172 = vmatprep.subr.mxu0 0.0
    %6173 = vmatpush1.msra.mxu0 0.0
    %6174 = vmatprep.subr.mxu0 0.0
    %6175 = vmatpush1.msra.mxu0 0.0
    %6176 = vmatprep.subr.mxu0 0.0
    %6177 = vmatpush1.msra.mxu0 0.0
    %6178 = vmatprep.mubr.f32.mxu0 0.0
    %6179 = vmatmul.mubr.f32.gmra.mrb[0].mxu0 %v6112
    %v6180 = vpop.f32.mrb[0].mxu0
    %v6181 = vadd.f32 %v6110, %v6180
    %v6182 = vpop.f32.mrb[0].mxu0
    %6183 = vdwg.mxu0
    %vm6184 = vcmask 517120
    %6185 = vst.msk [vmem:[#allocation5] sm:$0x3] %vm6184, %v6181
    // Predicated region
    $region14: #{fwd.1} parent=1 // pred_check
      _
    $region15: #{fwd.1} parent=1 // pred_check_branch
      %6187 = sbr.rel (0) target = $region17
    $region16: #{fwd.1} parent=1 // pred_region
      %s6189 = ssub.s32 32, 32
      %6190 = vsyncadd [#allocation4], %s6189
      %s6192 = sshll.u32 [#allocation5], 4
      %s6193 = int_to_ptr.vmem [resolvable:$true] %s6192
      %6195 = dma.vmem_to_hbm [thread:$0]  %s6193, 32, %s2, [#allocation4]
    $region17: #{fwd.1} parent=1 // pred_fallthru
      _
    // Predicated region
    $region18: #{fwd.1} parent=1 // pred_check
      _
    $region19: #{fwd.1} parent=1 // pred_check_branch
      %6197 = sbr.rel (0) target = $region21
    $region20: #{fwd.1} parent=1 // pred_region
      %6198 = dma.done [#allocation4], 32
    $region21: #{fwd.1} parent=1 // pred_fallthru
      _
    %6199 = vsyncpa [#allocation3], 1
    %6200 = vsyncpa [#allocation4], 1

</llo_original>
